<compile_context>
chip_gen: v6e
topology: v6e:2x2x1
jax: 0.10.0
libtpu: 0.0.40
codegen_flags: <defaults>
</compile_context>

<pallas_src>
import functools

import jax
import jax.numpy as jnp
from jax.experimental import pallas as pl
from jax.experimental.pallas import tpu as pltpu

# Problem constants (from the PyTorch module).
C_IN = C_OUT = 784
G = 49                     # groups
CG = 16                    # channels per group (in == out per group)
KH = KW = 3
NTAPS = KH * KW            # 9
STRIDE = 2
PAD = 1
H = W = 14
OH = OW = 7

GROUPS_PER_CHUNK = 8       # 8 * 16 = 128 lanes per chunk
NUM_CHUNKS_MIN = 7         # ceil(49 / 8)
M_ROWS = 88                # padded 9x9 phase grid (81) rounded up to 8 sublanes
M_OUT = 72                 # matmul M dim: q = oh*9 + ow, oh in [0,8), ow in [0,9)


def _default_num_steps():
    """1 grid step on single-TensorCore chips, 2 ('parallel') on v7x."""
    try:
        kind = jax.devices()[0].device_kind.lower()
    except Exception:
        return 1
    return 2 if ("v7" in kind or "7x" in kind) else 1


def _grouped_conv_kernel(a_ref, w_ref, o_ref):
    # a_ref: (2, 2, 88, cps*128) bf16 -- phase-separated padded activations:
    #        a[ph, pw, i*9 + j, c] = x_pad[2*i + ph, 2*j + pw, c]
    # w_ref: (cps, 9, 128, 128) bf16 -- block-diagonal (16x16) per-tap weights
    # o_ref: (72, cps*128) f32      -- rows q = oh*9 + ow (junk rows cropped later)
    cps = w_ref.shape[0]
    for j in range(cps):                      # unrolled loop over 128-ch chunks
        lo = j * 128
        acc = None
        for kh in range(KH):
            for kw in range(KW):
                t = kh * KW + kw
                ph, pw = kh % 2, kw % 2
                base = (kh // 2) * 9 + (kw // 2)
                # Static (possibly unaligned) slice: 72 rows of this phase plane.
                slab = a_ref[ph, pw, base:base + M_OUT, lo:lo + 128]   # (72,128)
                d = jnp.dot(slab, w_ref[j, t],
                            preferred_element_type=jnp.float32)
                acc = d if acc is None else acc + d
        o_ref[:, lo:lo + 128] = acc


def prepare_weights(weight, total_chunks):
    """Expand grouped OIHW weights [784,16,3,3] into cached block-diagonal
    per-tap matrices [total_chunks, 9, 128, 128] (bf16). Call once; weights are
    static across forward calls."""
    g_pad = total_chunks * GROUPS_PER_CHUNK
    wg = weight.reshape(G, CG, CG, KH, KW)                       # [g, co, ci, kh, kw]
    wg = jnp.pad(wg, ((0, g_pad - G),) + ((0, 0),) * 4)
    wg = jnp.transpose(wg, (3, 4, 0, 2, 1))                      # [kh, kw, g, ci, co]
    wg = wg.reshape(NTAPS, total_chunks, GROUPS_PER_CHUNK, CG, CG)   # [t, c, a, ci, co]
    eye = jnp.eye(GROUPS_PER_CHUNK, dtype=wg.dtype)
    wbd = jnp.einsum('tcaio,ab->ctaibo', wg, eye)                # [c, t, a, ci, b, co]
    wbd = wbd.reshape(total_chunks, NTAPS,
                      GROUPS_PER_CHUNK * CG, GROUPS_PER_CHUNK * CG)  # [c, t, 128, 128]
    return wbd.astype(jnp.bfloat16)


def _prep_activation(x, c_pad):
    # x: [1, 784, 14, 14] f32 -> phase-separated slab [2, 2, 88, c_pad] bf16
    xc = jnp.transpose(x[0].astype(jnp.bfloat16), (1, 2, 0))     # (14, 14, 784)
    xp = jnp.pad(xc, ((PAD, 3), (PAD, 3), (0, c_pad - C_IN)))    # (18, 18, c_pad)
    z = xp.reshape(9, 2, 9, 2, c_pad)                            # [i, ph, j, pw, c]
    z = jnp.transpose(z, (1, 3, 0, 2, 4)).reshape(2, 2, 81, c_pad)
    return jnp.pad(z, ((0, 0), (0, 0), (0, M_ROWS - 81), (0, 0)))  # (2, 2, 88, c_pad)


def _conv(x, wbd, *, num_steps, cps):
    c_pad = num_steps * cps * 128
    z = _prep_activation(x, c_pad)

    out = pl.pallas_call(
        _grouped_conv_kernel,
        out_shape=jax.ShapeDtypeStruct((M_OUT, c_pad), jnp.float32),
        grid=(num_steps,),
        in_specs=[
            pl.BlockSpec((2, 2, M_ROWS, cps * 128), lambda s: (0, 0, 0, s)),
            pl.BlockSpec((cps, NTAPS, 128, 128), lambda s: (s, 0, 0, 0)),
        ],
        out_specs=pl.BlockSpec((M_OUT, cps * 128), lambda s: (0, s)),
        compiler_params=pltpu.CompilerParams(
            dimension_semantics=("parallel",)),
    )(z, wbd)                                                    # (72, c_pad) f32

    # Drop junk rows (oh>=7, ow>=7) and padded channels; back to NCHW.
    out = out.reshape(8, 9, c_pad)[:OH, :OW, :C_OUT]             # (7, 7, 784)
    return jnp.transpose(out, (2, 0, 1))[None]                   # (1, 784, 7, 7)


class GroupedConv2d:
    """Pallas equivalent of Conv2d(784, 784, 3, stride=2, padding=1, groups=49,
    bias=False). Weight preprocessing is done once here, not per forward call."""

    def __init__(self, weight, num_steps=None):
        if num_steps is None:
            num_steps = _default_num_steps()
        self.num_steps = num_steps
        self.cps = -(-NUM_CHUNKS_MIN // num_steps)               # chunks per grid step
        total_chunks = self.num_steps * self.cps                 # 7 (1 step) or 8 (2 steps)
        self.wbd = prepare_weights(jnp.asarray(weight), total_chunks)
        self._fn = jax.jit(functools.partial(
            _conv, num_steps=self.num_steps, cps=self.cps))

    def __call__(self, x):
        return self._fn(x, self.wbd)


if __name__ == "__main__":
    key = jax.random.PRNGKey(0)
    k_x, k_w = jax.random.split(key)

    x = jax.random.normal(k_x, (1, C_IN, H, W), dtype=jnp.float32)

    # Deterministic kaiming-uniform-like init (PyTorch Conv2d default shape/scale).
    fan_in = CG * KH * KW
    bound = 1.0 / (fan_in ** 0.5)
    weight = jax.random.uniform(k_w, (C_OUT, CG, KH, KW), dtype=jnp.float32,
                                minval=-bound, maxval=bound)

    conv = GroupedConv2d(weight)
    out = jax.block_until_ready(conv(x))
    assert out.shape == (1, C_OUT, OH, OW), out.shape

    # Sanity check against XLA's grouped convolution (f32 reference; the kernel
    # uses bf16 MXU inputs with f32 accumulation, hence the loosened tolerance).
    ref = jax.lax.conv_general_dilated(
        x, weight, window_strides=(STRIDE, STRIDE),
        padding=((PAD, PAD), (PAD, PAD)),
        dimension_numbers=("NCHW", "OIHW", "NCHW"),
        feature_group_count=G)
    assert jnp.allclose(out, ref, rtol=2e-2, atol=4e-2), \
        float(jnp.max(jnp.abs(out - ref)))

    print("KERNEL_OK")
</pallas_src>

<mosaic_0001>
module attributes {stable_mosaic.version = 11 : i64} {
  func.func @_grouped_conv_kernel(%arg0: i32, %arg1: memref<2x2x88x896xbf16, #tpu.memory_space<vmem>>, %arg2: memref<7x9x128x128xbf16, #tpu.memory_space<vmem>>, %arg3: memref<72x896xf32, #tpu.memory_space<vmem>>) attributes {dimension_semantics = [#tpu.dimension_semantics<parallel>], iteration_bounds = array<i64: 1>, scalar_prefetch = 0 : i64, scratch_operands = 0 : i64, tpu.core_type = #tpu.core_type<tc>, window_params = [{transform_indices = @transform_0, window_bounds = array<i64: 2, 2, 88, 896>}, {transform_indices = @transform_1, window_bounds = array<i64: 7, 9, 128, 128>}, {transform_indices = @transform_2, window_bounds = array<i64: 72, 896>}]} {
    %c0 = arith.constant 0 : index
    %c0_0 = arith.constant 0 : index
    %c0_1 = arith.constant 0 : index
    %c0_2 = arith.constant 0 : index
    %0 = vector.load %arg1[%c0, %c0_0, %c0_1, %c0_2] : memref<2x2x88x896xbf16, #tpu.memory_space<vmem>>, vector<1x1x72x128xbf16>
    %1 = vector.shape_cast %0 : vector<1x1x72x128xbf16> to vector<72x128xbf16>
    %c0_3 = arith.constant 0 : index
    %c0_4 = arith.constant 0 : index
    %c0_5 = arith.constant 0 : index
    %c0_6 = arith.constant 0 : index
    %2 = vector.load %arg2[%c0_3, %c0_4, %c0_5, %c0_6] : memref<7x9x128x128xbf16, #tpu.memory_space<vmem>>, vector<1x1x128x128xbf16>
    %3 = vector.shape_cast %2 : vector<1x1x128x128xbf16> to vector<128x128xbf16>
    %cst = arith.constant dense<0.000000e+00> : vector<72x128xf32>
    %4 = tpu.matmul %1, %3, %cst {dimension_numbers = #tpu.dot_dimension_numbers<[1], [0], [0], [1], [0, 0, 1, 1], [], []>} : vector<72x128xbf16>, vector<128x128xbf16>, vector<72x128xf32> -> vector<72x128xf32>
    %c0_7 = arith.constant 0 : index
    %c1 = arith.constant 1 : index
    %c0_8 = arith.constant 0 : index
    %c0_9 = arith.constant 0 : index
    %5 = vector.load %arg1[%c0_7, %c1, %c0_8, %c0_9] : memref<2x2x88x896xbf16, #tpu.memory_space<vmem>>, vector<1x1x72x128xbf16>
    %6 = vector.shape_cast %5 : vector<1x1x72x128xbf16> to vector<72x128xbf16>
    %c0_10 = arith.constant 0 : index
    %c1_11 = arith.constant 1 : index
    %c0_12 = arith.constant 0 : index
    %c0_13 = arith.constant 0 : index
    %7 = vector.load %arg2[%c0_10, %c1_11, %c0_12, %c0_13] : memref<7x9x128x128xbf16, #tpu.memory_space<vmem>>, vector<1x1x128x128xbf16>
    %8 = vector.shape_cast %7 : vector<1x1x128x128xbf16> to vector<128x128xbf16>
    %cst_14 = arith.constant dense<0.000000e+00> : vector<72x128xf32>
    %9 = tpu.matmul %6, %8, %cst_14 {dimension_numbers = #tpu.dot_dimension_numbers<[1], [0], [0], [1], [0, 0, 1, 1], [], []>} : vector<72x128xbf16>, vector<128x128xbf16>, vector<72x128xf32> -> vector<72x128xf32>
    %10 = arith.addf %4, %9 : vector<72x128xf32>
    %c0_15 = arith.constant 0 : index
    %c0_16 = arith.constant 0 : index
    %c1_17 = arith.constant 1 : index
    %c0_18 = arith.constant 0 : index
    %11 = vector.load %arg1[%c0_15, %c0_16, %c1_17, %c0_18] : memref<2x2x88x896xbf16, #tpu.memory_space<vmem>>, vector<1x1x72x128xbf16>
    %12 = vector.shape_cast %11 : vector<1x1x72x128xbf16> to vector<72x128xbf16>
    %c0_19 = arith.constant 0 : index
    %c2 = arith.constant 2 : index
    %c0_20 = arith.constant 0 : index
    %c0_21 = arith.constant 0 : index
    %13 = vector.load %arg2[%c0_19, %c2, %c0_20, %c0_21] : memref<7x9x128x128xbf16, #tpu.memory_space<vmem>>, vector<1x1x128x128xbf16>
    %14 = vector.shape_cast %13 : vector<1x1x128x128xbf16> to vector<128x128xbf16>
    %cst_22 = arith.constant dense<0.000000e+00> : vector<72x128xf32>
    %15 = tpu.matmul %12, %14, %cst_22 {dimension_numbers = #tpu.dot_dimension_numbers<[1], [0], [0], [1], [0, 0, 1, 1], [], []>} : vector<72x128xbf16>, vector<128x128xbf16>, vector<72x128xf32> -> vector<72x128xf32>
    %16 = arith.addf %10, %15 : vector<72x128xf32>
    %c1_23 = arith.constant 1 : index
    %c0_24 = arith.constant 0 : index
    %c0_25 = arith.constant 0 : index
    %c0_26 = arith.constant 0 : index
    %17 = vector.load %arg1[%c1_23, %c0_24, %c0_25, %c0_26] : memref<2x2x88x896xbf16, #tpu.memory_space<vmem>>, vector<1x1x72x128xbf16>
    %18 = vector.shape_cast %17 : vector<1x1x72x128xbf16> to vector<72x128xbf16>
    %c0_27 = arith.constant 0 : index
    %c3 = arith.constant 3 : index
    %c0_28 = arith.constant 0 : index
    %c0_29 = arith.constant 0 : index
    %19 = vector.load %arg2[%c0_27, %c3, %c0_28, %c0_29] : memref<7x9x128x128xbf16, #tpu.memory_space<vmem>>, vector<1x1x128x128xbf16>
    %20 = vector.shape_cast %19 : vector<1x1x128x128xbf16> to vector<128x128xbf16>
    %cst_30 = arith.constant dense<0.000000e+00> : vector<72x128xf32>
    %21 = tpu.matmul %18, %20, %cst_30 {dimension_numbers = #tpu.dot_dimension_numbers<[1], [0], [0], [1], [0, 0, 1, 1], [], []>} : vector<72x128xbf16>, vector<128x128xbf16>, vector<72x128xf32> -> vector<72x128xf32>
    %22 = arith.addf %16, %21 : vector<72x128xf32>
    %c1_31 = arith.constant 1 : index
    %c1_32 = arith.constant 1 : index
    %c0_33 = arith.constant 0 : index
    %c0_34 = arith.constant 0 : index
    %23 = vector.load %arg1[%c1_31, %c1_32, %c0_33, %c0_34] : memref<2x2x88x896xbf16, #tpu.memory_space<vmem>>, vector<1x1x72x128xbf16>
    %24 = vector.shape_cast %23 : vector<1x1x72x128xbf16> to vector<72x128xbf16>
    %c0_35 = arith.constant 0 : index
    %c4 = arith.constant 4 : index
    %c0_36 = arith.constant 0 : index
    %c0_37 = arith.constant 0 : index
    %25 = vector.load %arg2[%c0_35, %c4, %c0_36, %c0_37] : memref<7x9x128x128xbf16, #tpu.memory_space<vmem>>, vector<1x1x128x128xbf16>
    %26 = vector.shape_cast %25 : vector<1x1x128x128xbf16> to vector<128x128xbf16>
    %cst_38 = arith.constant dense<0.000000e+00> : vector<72x128xf32>
    %27 = tpu.matmul %24, %26, %cst_38 {dimension_numbers = #tpu.dot_dimension_numbers<[1], [0], [0], [1], [0, 0, 1, 1], [], []>} : vector<72x128xbf16>, vector<128x128xbf16>, vector<72x128xf32> -> vector<72x128xf32>
    %28 = arith.addf %22, %27 : vector<72x128xf32>
    %c1_39 = arith.constant 1 : index
    %c0_40 = arith.constant 0 : index
    %c1_41 = arith.constant 1 : index
    %c0_42 = arith.constant 0 : index
    %29 = vector.load %arg1[%c1_39, %c0_40, %c1_41, %c0_42] : memref<2x2x88x896xbf16, #tpu.memory_space<vmem>>, vector<1x1x72x128xbf16>
    %30 = vector.shape_cast %29 : vector<1x1x72x128xbf16> to vector<72x128xbf16>
    %c0_43 = arith.constant 0 : index
    %c5 = arith.constant 5 : index
    %c0_44 = arith.constant 0 : index
    %c0_45 = arith.constant 0 : index
    %31 = vector.load %arg2[%c0_43, %c5, %c0_44, %c0_45] : memref<7x9x128x128xbf16, #tpu.memory_space<vmem>>, vector<1x1x128x128xbf16>
    %32 = vector.shape_cast %31 : vector<1x1x128x128xbf16> to vector<128x128xbf16>
    %cst_46 = arith.constant dense<0.000000e+00> : vector<72x128xf32>
    %33 = tpu.matmul %30, %32, %cst_46 {dimension_numbers = #tpu.dot_dimension_numbers<[1], [0], [0], [1], [0, 0, 1, 1], [], []>} : vector<72x128xbf16>, vector<128x128xbf16>, vector<72x128xf32> -> vector<72x128xf32>
    %34 = arith.addf %28, %33 : vector<72x128xf32>
    %c0_47 = arith.constant 0 : index
    %c0_48 = arith.constant 0 : index
    %c9 = arith.constant 9 : index
    %c0_49 = arith.constant 0 : index
    %35 = vector.load %arg1[%c0_47, %c0_48, %c9, %c0_49] : memref<2x2x88x896xbf16, #tpu.memory_space<vmem>>, vector<1x1x72x128xbf16>
    %36 = vector.shape_cast %35 : vector<1x1x72x128xbf16> to vector<72x128xbf16>
    %c0_50 = arith.constant 0 : index
    %c6 = arith.constant 6 : index
    %c0_51 = arith.constant 0 : index
    %c0_52 = arith.constant 0 : index
    %37 = vector.load %arg2[%c0_50, %c6, %c0_51, %c0_52] : memref<7x9x128x128xbf16, #tpu.memory_space<vmem>>, vector<1x1x128x128xbf16>
    %38 = vector.shape_cast %37 : vector<1x1x128x128xbf16> to vector<128x128xbf16>
    %cst_53 = arith.constant dense<0.000000e+00> : vector<72x128xf32>
    %39 = tpu.matmul %36, %38, %cst_53 {dimension_numbers = #tpu.dot_dimension_numbers<[1], [0], [0], [1], [0, 0, 1, 1], [], []>} : vector<72x128xbf16>, vector<128x128xbf16>, vector<72x128xf32> -> vector<72x128xf32>
    %40 = arith.addf %34, %39 : vector<72x128xf32>
    %c0_54 = arith.constant 0 : index
    %c1_55 = arith.constant 1 : index
    %c9_56 = arith.constant 9 : index
    %c0_57 = arith.constant 0 : index
    %41 = vector.load %arg1[%c0_54, %c1_55, %c9_56, %c0_57] : memref<2x2x88x896xbf16, #tpu.memory_space<vmem>>, vector<1x1x72x128xbf16>
    %42 = vector.shape_cast %41 : vector<1x1x72x128xbf16> to vector<72x128xbf16>
    %c0_58 = arith.constant 0 : index
    %c7 = arith.constant 7 : index
    %c0_59 = arith.constant 0 : index
    %c0_60 = arith.constant 0 : index
    %43 = vector.load %arg2[%c0_58, %c7, %c0_59, %c0_60] : memref<7x9x128x128xbf16, #tpu.memory_space<vmem>>, vector<1x1x128x128xbf16>
    %44 = vector.shape_cast %43 : vector<1x1x128x128xbf16> to vector<128x128xbf16>
    %cst_61 = arith.constant dense<0.000000e+00> : vector<72x128xf32>
    %45 = tpu.matmul %42, %44, %cst_61 {dimension_numbers = #tpu.dot_dimension_numbers<[1], [0], [0], [1], [0, 0, 1, 1], [], []>} : vector<72x128xbf16>, vector<128x128xbf16>, vector<72x128xf32> -> vector<72x128xf32>
    %46 = arith.addf %40, %45 : vector<72x128xf32>
    %c0_62 = arith.constant 0 : index
    %c0_63 = arith.constant 0 : index
    %c10 = arith.constant 10 : index
    %c0_64 = arith.constant 0 : index
    %47 = vector.load %arg1[%c0_62, %c0_63, %c10, %c0_64] : memref<2x2x88x896xbf16, #tpu.memory_space<vmem>>, vector<1x1x72x128xbf16>
    %48 = vector.shape_cast %47 : vector<1x1x72x128xbf16> to vector<72x128xbf16>
    %c0_65 = arith.constant 0 : index
    %c8 = arith.constant 8 : index
    %c0_66 = arith.constant 0 : index
    %c0_67 = arith.constant 0 : index
    %49 = vector.load %arg2[%c0_65, %c8, %c0_66, %c0_67] : memref<7x9x128x128xbf16, #tpu.memory_space<vmem>>, vector<1x1x128x128xbf16>
    %50 = vector.shape_cast %49 : vector<1x1x128x128xbf16> to vector<128x128xbf16>
    %cst_68 = arith.constant dense<0.000000e+00> : vector<72x128xf32>
    %51 = tpu.matmul %48, %50, %cst_68 {dimension_numbers = #tpu.dot_dimension_numbers<[1], [0], [0], [1], [0, 0, 1, 1], [], []>} : vector<72x128xbf16>, vector<128x128xbf16>, vector<72x128xf32> -> vector<72x128xf32>
    %52 = arith.addf %46, %51 : vector<72x128xf32>
    %c0_69 = arith.constant 0 : index
    %c0_70 = arith.constant 0 : index
    %53 = vector.load %arg3[%c0_69, %c0_70] : memref<72x896xf32, #tpu.memory_space<vmem>>, vector<72x128xf32>
    tpu.vector_store %arg3[%c0_69, %c0_70], %52 {strides = array<i32>} : memref<72x896xf32, #tpu.memory_space<vmem>>, vector<72x128xf32>,
    %c0_71 = arith.constant 0 : index
    %c0_72 = arith.constant 0 : index
    %c0_73 = arith.constant 0 : index
    %c128 = arith.constant 128 : index
    %54 = vector.load %arg1[%c0_71, %c0_72, %c0_73, %c128] : memref<2x2x88x896xbf16, #tpu.memory_space<vmem>>, vector<1x1x72x128xbf16>
    %55 = vector.shape_cast %54 : vector<1x1x72x128xbf16> to vector<72x128xbf16>
    %c1_74 = arith.constant 1 : index
    %c0_75 = arith.constant 0 : index
    %c0_76 = arith.constant 0 : index
    %c0_77 = arith.constant 0 : index
    %56 = vector.load %arg2[%c1_74, %c0_75, %c0_76, %c0_77] : memref<7x9x128x128xbf16, #tpu.memory_space<vmem>>, vector<1x1x128x128xbf16>
    %57 = vector.shape_cast %56 : vector<1x1x128x128xbf16> to vector<128x128xbf16>
    %cst_78 = arith.constant dense<0.000000e+00> : vector<72x128xf32>
    %58 = tpu.matmul %55, %57, %cst_78 {dimension_numbers = #tpu.dot_dimension_numbers<[1], [0], [0], [1], [0, 0, 1, 1], [], []>} : vector<72x128xbf16>, vector<128x128xbf16>, vector<72x128xf32> -> vector<72x128xf32>
    %c0_79 = arith.constant 0 : index
    %c1_80 = arith.constant 1 : index
    %c0_81 = arith.constant 0 : index
    %c128_82 = arith.constant 128 : index
    %59 = vector.load %arg1[%c0_79, %c1_80, %c0_81, %c128_82] : memref<2x2x88x896xbf16, #tpu.memory_space<vmem>>, vector<1x1x72x128xbf16>
    %60 = vector.shape_cast %59 : vector<1x1x72x128xbf16> to vector<72x128xbf16>
    %c1_83 = arith.constant 1 : index
    %c1_84 = arith.constant 1 : index
    %c0_85 = arith.constant 0 : index
    %c0_86 = arith.constant 0 : index
    %61 = vector.load %arg2[%c1_83, %c1_84, %c0_85, %c0_86] : memref<7x9x128x128xbf16, #tpu.memory_space<vmem>>, vector<1x1x128x128xbf16>
    %62 = vector.shape_cast %61 : vector<1x1x128x128xbf16> to vector<128x128xbf16>
    %cst_87 = arith.constant dense<0.000000e+00> : vector<72x128xf32>
    %63 = tpu.matmul %60, %62, %cst_87 {dimension_numbers = #tpu.dot_dimension_numbers<[1], [0], [0], [1], [0, 0, 1, 1], [], []>} : vector<72x128xbf16>, vector<128x128xbf16>, vector<72x128xf32> -> vector<72x128xf32>
    %64 = arith.addf %58, %63 : vector<72x128xf32>
    %c0_88 = arith.constant 0 : index
    %c0_89 = arith.constant 0 : index
    %c1_90 = arith.constant 1 : index
    %c128_91 = arith.constant 128 : index
    %65 = vector.load %arg1[%c0_88, %c0_89, %c1_90, %c128_91] : memref<2x2x88x896xbf16, #tpu.memory_space<vmem>>, vector<1x1x72x128xbf16>
    %66 = vector.shape_cast %65 : vector<1x1x72x128xbf16> to vector<72x128xbf16>
    %c1_92 = arith.constant 1 : index
    %c2_93 = arith.constant 2 : index
    %c0_94 = arith.constant 0 : index
    %c0_95 = arith.constant 0 : index
    %67 = vector.load %arg2[%c1_92, %c2_93, %c0_94, %c0_95] : memref<7x9x128x128xbf16, #tpu.memory_space<vmem>>, vector<1x1x128x128xbf16>
    %68 = vector.shape_cast %67 : vector<1x1x128x128xbf16> to vector<128x128xbf16>
    %cst_96 = arith.constant dense<0.000000e+00> : vector<72x128xf32>
    %69 = tpu.matmul %66, %68, %cst_96 {dimension_numbers = #tpu.dot_dimension_numbers<[1], [0], [0], [1], [0, 0, 1, 1], [], []>} : vector<72x128xbf16>, vector<128x128xbf16>, vector<72x128xf32> -> vector<72x128xf32>
    %70 = arith.addf %64, %69 : vector<72x128xf32>
    %c1_97 = arith.constant 1 : index
    %c0_98 = arith.constant 0 : index
    %c0_99 = arith.constant 0 : index
    %c128_100 = arith.constant 128 : index
    %71 = vector.load %arg1[%c1_97, %c0_98, %c0_99, %c128_100] : memref<2x2x88x896xbf16, #tpu.memory_space<vmem>>, vector<1x1x72x128xbf16>
    %72 = vector.shape_cast %71 : vector<1x1x72x128xbf16> to vector<72x128xbf16>
    %c1_101 = arith.constant 1 : index
    %c3_102 = arith.constant 3 : index
    %c0_103 = arith.constant 0 : index
    %c0_104 = arith.constant 0 : index
    %73 = vector.load %arg2[%c1_101, %c3_102, %c0_103, %c0_104] : memref<7x9x128x128xbf16, #tpu.memory_space<vmem>>, vector<1x1x128x128xbf16>
    %74 = vector.shape_cast %73 : vector<1x1x128x128xbf16> to vector<128x128xbf16>
    %cst_105 = arith.constant dense<0.000000e+00> : vector<72x128xf32>
    %75 = tpu.matmul %72, %74, %cst_105 {dimension_numbers = #tpu.dot_dimension_numbers<[1], [0], [0], [1], [0, 0, 1, 1], [], []>} : vector<72x128xbf16>, vector<128x128xbf16>, vector<72x128xf32> -> vector<72x128xf32>
    %76 = arith.addf %70, %75 : vector<72x128xf32>
    %c1_106 = arith.constant 1 : index
    %c1_107 = arith.constant 1 : index
    %c0_108 = arith.constant 0 : index
    %c128_109 = arith.constant 128 : index
    %77 = vector.load %arg1[%c1_106, %c1_107, %c0_108, %c128_109] : memref<2x2x88x896xbf16, #tpu.memory_space<vmem>>, vector<1x1x72x128xbf16>
    %78 = vector.shape_cast %77 : vector<1x1x72x128xbf16> to vector<72x128xbf16>
    %c1_110 = arith.constant 1 : index
    %c4_111 = arith.constant 4 : index
    %c0_112 = arith.constant 0 : index
    %c0_113 = arith.constant 0 : index
    %79 = vector.load %arg2[%c1_110, %c4_111, %c0_112, %c0_113] : memref<7x9x128x128xbf16, #tpu.memory_space<vmem>>, vector<1x1x128x128xbf16>
    %80 = vector.shape_cast %79 : vector<1x1x128x128xbf16> to vector<128x128xbf16>
    %cst_114 = arith.constant dense<0.000000e+00> : vector<72x128xf32>
    %81 = tpu.matmul %78, %80, %cst_114 {dimension_numbers = #tpu.dot_dimension_numbers<[1], [0], [0], [1], [0, 0, 1, 1], [], []>} : vector<72x128xbf16>, vector<128x128xbf16>, vector<72x128xf32> -> vector<72x128xf32>
    %82 = arith.addf %76, %81 : vector<72x128xf32>
    %c1_115 = arith.constant 1 : index
    %c0_116 = arith.constant 0 : index
    %c1_117 = arith.constant 1 : index
    %c128_118 = arith.constant 128 : index
    %83 = vector.load %arg1[%c1_115, %c0_116, %c1_117, %c128_118] : memref<2x2x88x896xbf16, #tpu.memory_space<vmem>>, vector<1x1x72x128xbf16>
    %84 = vector.shape_cast %83 : vector<1x1x72x128xbf16> to vector<72x128xbf16>
    %c1_119 = arith.constant 1 : index
    %c5_120 = arith.constant 5 : index
    %c0_121 = arith.constant 0 : index
    %c0_122 = arith.constant 0 : index
    %85 = vector.load %arg2[%c1_119, %c5_120, %c0_121, %c0_122] : memref<7x9x128x128xbf16, #tpu.memory_space<vmem>>, vector<1x1x128x128xbf16>
    %86 = vector.shape_cast %85 : vector<1x1x128x128xbf16> to vector<128x128xbf16>
    %cst_123 = arith.constant dense<0.000000e+00> : vector<72x128xf32>
    %87 = tpu.matmul %84, %86, %cst_123 {dimension_numbers = #tpu.dot_dimension_numbers<[1], [0], [0], [1], [0, 0, 1, 1], [], []>} : vector<72x128xbf16>, vector<128x128xbf16>, vector<72x128xf32> -> vector<72x128xf32>
    %88 = arith.addf %82, %87 : vector<72x128xf32>
    %c0_124 = arith.constant 0 : index
    %c0_125 = arith.constant 0 : index
    %c9_126 = arith.constant 9 : index
    %c128_127 = arith.constant 128 : index
    %89 = vector.load %arg1[%c0_124, %c0_125, %c9_126, %c128_127] : memref<2x2x88x896xbf16, #tpu.memory_space<vmem>>, vector<1x1x72x128xbf16>
    %90 = vector.shape_cast %89 : vector<1x1x72x128xbf16> to vector<72x128xbf16>
    %c1_128 = arith.constant 1 : index
    %c6_129 = arith.constant 6 : index
    %c0_130 = arith.constant 0 : index
    %c0_131 = arith.constant 0 : index
    %91 = vector.load %arg2[%c1_128, %c6_129, %c0_130, %c0_131] : memref<7x9x128x128xbf16, #tpu.memory_space<vmem>>, vector<1x1x128x128xbf16>
    %92 = vector.shape_cast %91 : vector<1x1x128x128xbf16> to vector<128x128xbf16>
    %cst_132 = arith.constant dense<0.000000e+00> : vector<72x128xf32>
    %93 = tpu.matmul %90, %92, %cst_132 {dimension_numbers = #tpu.dot_dimension_numbers<[1], [0], [0], [1], [0, 0, 1, 1], [], []>} : vector<72x128xbf16>, vector<128x128xbf16>, vector<72x128xf32> -> vector<72x128xf32>
    %94 = arith.addf %88, %93 : vector<72x128xf32>
    %c0_133 = arith.constant 0 : index
    %c1_134 = arith.constant 1 : index
    %c9_135 = arith.constant 9 : index
    %c128_136 = arith.constant 128 : index
    %95 = vector.load %arg1[%c0_133, %c1_134, %c9_135, %c128_136] : memref<2x2x88x896xbf16, #tpu.memory_space<vmem>>, vector<1x1x72x128xbf16>
    %96 = vector.shape_cast %95 : vector<1x1x72x128xbf16> to vector<72x128xbf16>
    %c1_137 = arith.constant 1 : index
    %c7_138 = arith.constant 7 : index
    %c0_139 = arith.constant 0 : index
    %c0_140 = arith.constant 0 : index
    %97 = vector.load %arg2[%c1_137, %c7_138, %c0_139, %c0_140] : memref<7x9x128x128xbf16, #tpu.memory_space<vmem>>, vector<1x1x128x128xbf16>
    %98 = vector.shape_cast %97 : vector<1x1x128x128xbf16> to vector<128x128xbf16>
    %cst_141 = arith.constant dense<0.000000e+00> : vector<72x128xf32>
    %99 = tpu.matmul %96, %98, %cst_141 {dimension_numbers = #tpu.dot_dimension_numbers<[1], [0], [0], [1], [0, 0, 1, 1], [], []>} : vector<72x128xbf16>, vector<128x128xbf16>, vector<72x128xf32> -> vector<72x128xf32>
    %100 = arith.addf %94, %99 : vector<72x128xf32>
    %c0_142 = arith.constant 0 : index
    %c0_143 = arith.constant 0 : index
    %c10_144 = arith.constant 10 : index
    %c128_145 = arith.constant 128 : index
    %101 = vector.load %arg1[%c0_142, %c0_143, %c10_144, %c128_145] : memref<2x2x88x896xbf16, #tpu.memory_space<vmem>>, vector<1x1x72x128xbf16>
    %102 = vector.shape_cast %101 : vector<1x1x72x128xbf16> to vector<72x128xbf16>
    %c1_146 = arith.constant 1 : index
    %c8_147 = arith.constant 8 : index
    %c0_148 = arith.constant 0 : index
    %c0_149 = arith.constant 0 : index
    %103 = vector.load %arg2[%c1_146, %c8_147, %c0_148, %c0_149] : memref<7x9x128x128xbf16, #tpu.memory_space<vmem>>, vector<1x1x128x128xbf16>
    %104 = vector.shape_cast %103 : vector<1x1x128x128xbf16> to vector<128x128xbf16>
    %cst_150 = arith.constant dense<0.000000e+00> : vector<72x128xf32>
    %105 = tpu.matmul %102, %104, %cst_150 {dimension_numbers = #tpu.dot_dimension_numbers<[1], [0], [0], [1], [0, 0, 1, 1], [], []>} : vector<72x128xbf16>, vector<128x128xbf16>, vector<72x128xf32> -> vector<72x128xf32>
    %106 = arith.addf %100, %105 : vector<72x128xf32>
    %c0_151 = arith.constant 0 : index
    %c128_152 = arith.constant 128 : index
    %107 = vector.load %arg3[%c0_151, %c128_152] : memref<72x896xf32, #tpu.memory_space<vmem>>, vector<72x128xf32>
    tpu.vector_store %arg3[%c0_151, %c128_152], %106 {strides = array<i32>} : memref<72x896xf32, #tpu.memory_space<vmem>>, vector<72x128xf32>,
    %c0_153 = arith.constant 0 : index
    %c0_154 = arith.constant 0 : index
    %c0_155 = arith.constant 0 : index
    %c256 = arith.constant 256 : index
    %108 = vector.load %arg1[%c0_153, %c0_154, %c0_155, %c256] : memref<2x2x88x896xbf16, #tpu.memory_space<vmem>>, vector<1x1x72x128xbf16>
    %109 = vector.shape_cast %108 : vector<1x1x72x128xbf16> to vector<72x128xbf16>
    %c2_156 = arith.constant 2 : index
    %c0_157 = arith.constant 0 : index
    %c0_158 = arith.constant 0 : index
    %c0_159 = arith.constant 0 : index
    %110 = vector.load %arg2[%c2_156, %c0_157, %c0_158, %c0_159] : memref<7x9x128x128xbf16, #tpu.memory_space<vmem>>, vector<1x1x128x128xbf16>
    %111 = vector.shape_cast %110 : vector<1x1x128x128xbf16> to vector<128x128xbf16>
    %cst_160 = arith.constant dense<0.000000e+00> : vector<72x128xf32>
    %112 = tpu.matmul %109, %111, %cst_160 {dimension_numbers = #tpu.dot_dimension_numbers<[1], [0], [0], [1], [0, 0, 1, 1], [], []>} : vector<72x128xbf16>, vector<128x128xbf16>, vector<72x128xf32> -> vector<72x128xf32>
    %c0_161 = arith.constant 0 : index
    %c1_162 = arith.constant 1 : index
    %c0_163 = arith.constant 0 : index
    %c256_164 = arith.constant 256 : index
    %113 = vector.load %arg1[%c0_161, %c1_162, %c0_163, %c256_164] : memref<2x2x88x896xbf16, #tpu.memory_space<vmem>>, vector<1x1x72x128xbf16>
    %114 = vector.shape_cast %113 : vector<1x1x72x128xbf16> to vector<72x128xbf16>
    %c2_165 = arith.constant 2 : index
    %c1_166 = arith.constant 1 : index
    %c0_167 = arith.constant 0 : index
    %c0_168 = arith.constant 0 : index
    %115 = vector.load %arg2[%c2_165, %c1_166, %c0_167, %c0_168] : memref<7x9x128x128xbf16, #tpu.memory_space<vmem>>, vector<1x1x128x128xbf16>
    %116 = vector.shape_cast %115 : vector<1x1x128x128xbf16> to vector<128x128xbf16>
    %cst_169 = arith.constant dense<0.000000e+00> : vector<72x128xf32>
    %117 = tpu.matmul %114, %116, %cst_169 {dimension_numbers = #tpu.dot_dimension_numbers<[1], [0], [0], [1], [0, 0, 1, 1], [], []>} : vector<72x128xbf16>, vector<128x128xbf16>, vector<72x128xf32> -> vector<72x128xf32>
    %118 = arith.addf %112, %117 : vector<72x128xf32>
    %c0_170 = arith.constant 0 : index
    %c0_171 = arith.constant 0 : index
    %c1_172 = arith.constant 1 : index
    %c256_173 = arith.constant 256 : index
    %119 = vector.load %arg1[%c0_170, %c0_171, %c1_172, %c256_173] : memref<2x2x88x896xbf16, #tpu.memory_space<vmem>>, vector<1x1x72x128xbf16>
    %120 = vector.shape_cast %119 : vector<1x1x72x128xbf16> to vector<72x128xbf16>
    %c2_174 = arith.constant 2 : index
    %c2_175 = arith.constant 2 : index
    %c0_176 = arith.constant 0 : index
    %c0_177 = arith.constant 0 : index
    %121 = vector.load %arg2[%c2_174, %c2_175, %c0_176, %c0_177] : memref<7x9x128x128xbf16, #tpu.memory_space<vmem>>, vector<1x1x128x128xbf16>
    %122 = vector.shape_cast %121 : vector<1x1x128x128xbf16> to vector<128x128xbf16>
    %cst_178 = arith.constant dense<0.000000e+00> : vector<72x128xf32>
    %123 = tpu.matmul %120, %122, %cst_178 {dimension_numbers = #tpu.dot_dimension_numbers<[1], [0], [0], [1], [0, 0, 1, 1], [], []>} : vector<72x128xbf16>, vector<128x128xbf16>, vector<72x128xf32> -> vector<72x128xf32>
    %124 = arith.addf %118, %123 : vector<72x128xf32>
    %c1_179 = arith.constant 1 : index
    %c0_180 = arith.constant 0 : index
    %c0_181 = arith.constant 0 : index
    %c256_182 = arith.constant 256 : index
    %125 = vector.load %arg1[%c1_179, %c0_180, %c0_181, %c256_182] : memref<2x2x88x896xbf16, #tpu.memory_space<vmem>>, vector<1x1x72x128xbf16>
    %126 = vector.shape_cast %125 : vector<1x1x72x128xbf16> to vector<72x128xbf16>
    %c2_183 = arith.constant 2 : index
    %c3_184 = arith.constant 3 : index
    %c0_185 = arith.constant 0 : index
    %c0_186 = arith.constant 0 : index
    %127 = vector.load %arg2[%c2_183, %c3_184, %c0_185, %c0_186] : memref<7x9x128x128xbf16, #tpu.memory_space<vmem>>, vector<1x1x128x128xbf16>
    %128 = vector.shape_cast %127 : vector<1x1x128x128xbf16> to vector<128x128xbf16>
    %cst_187 = arith.constant dense<0.000000e+00> : vector<72x128xf32>
    %129 = tpu.matmul %126, %128, %cst_187 {dimension_numbers = #tpu.dot_dimension_numbers<[1], [0], [0], [1], [0, 0, 1, 1], [], []>} : vector<72x128xbf16>, vector<128x128xbf16>, vector<72x128xf32> -> vector<72x128xf32>
    %130 = arith.addf %124, %129 : vector<72x128xf32>
    %c1_188 = arith.constant 1 : index
    %c1_189 = arith.constant 1 : index
    %c0_190 = arith.constant 0 : index
    %c256_191 = arith.constant 256 : index
    %131 = vector.load %arg1[%c1_188, %c1_189, %c0_190, %c256_191] : memref<2x2x88x896xbf16, #tpu.memory_space<vmem>>, vector<1x1x72x128xbf16>
    %132 = vector.shape_cast %131 : vector<1x1x72x128xbf16> to vector<72x128xbf16>
    %c2_192 = arith.constant 2 : index
    %c4_193 = arith.constant 4 : index
    %c0_194 = arith.constant 0 : index
    %c0_195 = arith.constant 0 : index
    %133 = vector.load %arg2[%c2_192, %c4_193, %c0_194, %c0_195] : memref<7x9x128x128xbf16, #tpu.memory_space<vmem>>, vector<1x1x128x128xbf16>
    %134 = vector.shape_cast %133 : vector<1x1x128x128xbf16> to vector<128x128xbf16>
    %cst_196 = arith.constant dense<0.000000e+00> : vector<72x128xf32>
    %135 = tpu.matmul %132, %134, %cst_196 {dimension_numbers = #tpu.dot_dimension_numbers<[1], [0], [0], [1], [0, 0, 1, 1], [], []>} : vector<72x128xbf16>, vector<128x128xbf16>, vector<72x128xf32> -> vector<72x128xf32>
    %136 = arith.addf %130, %135 : vector<72x128xf32>
    %c1_197 = arith.constant 1 : index
    %c0_198 = arith.constant 0 : index
    %c1_199 = arith.constant 1 : index
    %c256_200 = arith.constant 256 : index
    %137 = vector.load %arg1[%c1_197, %c0_198, %c1_199, %c256_200] : memref<2x2x88x896xbf16, #tpu.memory_space<vmem>>, vector<1x1x72x128xbf16>
    %138 = vector.shape_cast %137 : vector<1x1x72x128xbf16> to vector<72x128xbf16>
    %c2_201 = arith.constant 2 : index
    %c5_202 = arith.constant 5 : index
    %c0_203 = arith.constant 0 : index
    %c0_204 = arith.constant 0 : index
    %139 = vector.load %arg2[%c2_201, %c5_202, %c0_203, %c0_204] : memref<7x9x128x128xbf16, #tpu.memory_space<vmem>>, vector<1x1x128x128xbf16>
    %140 = vector.shape_cast %139 : vector<1x1x128x128xbf16> to vector<128x128xbf16>
    %cst_205 = arith.constant dense<0.000000e+00> : vector<72x128xf32>
    %141 = tpu.matmul %138, %140, %cst_205 {dimension_numbers = #tpu.dot_dimension_numbers<[1], [0], [0], [1], [0, 0, 1, 1], [], []>} : vector<72x128xbf16>, vector<128x128xbf16>, vector<72x128xf32> -> vector<72x128xf32>
    %142 = arith.addf %136, %141 : vector<72x128xf32>
    %c0_206 = arith.constant 0 : index
    %c0_207 = arith.constant 0 : index
    %c9_208 = arith.constant 9 : index
    %c256_209 = arith.constant 256 : index
    %143 = vector.load %arg1[%c0_206, %c0_207, %c9_208, %c256_209] : memref<2x2x88x896xbf16, #tpu.memory_space<vmem>>, vector<1x1x72x128xbf16>
    %144 = vector.shape_cast %143 : vector<1x1x72x128xbf16> to vector<72x128xbf16>
    %c2_210 = arith.constant 2 : index
    %c6_211 = arith.constant 6 : index
    %c0_212 = arith.constant 0 : index
    %c0_213 = arith.constant 0 : index
    %145 = vector.load %arg2[%c2_210, %c6_211, %c0_212, %c0_213] : memref<7x9x128x128xbf16, #tpu.memory_space<vmem>>, vector<1x1x128x128xbf16>
    %146 = vector.shape_cast %145 : vector<1x1x128x128xbf16> to vector<128x128xbf16>
    %cst_214 = arith.constant dense<0.000000e+00> : vector<72x128xf32>
    %147 = tpu.matmul %144, %146, %cst_214 {dimension_numbers = #tpu.dot_dimension_numbers<[1], [0], [0], [1], [0, 0, 1, 1], [], []>} : vector<72x128xbf16>, vector<128x128xbf16>, vector<72x128xf32> -> vector<72x128xf32>
    %148 = arith.addf %142, %147 : vector<72x128xf32>
    %c0_215 = arith.constant 0 : index
    %c1_216 = arith.constant 1 : index
    %c9_217 = arith.constant 9 : index
    %c256_218 = arith.constant 256 : index
    %149 = vector.load %arg1[%c0_215, %c1_216, %c9_217, %c256_218] : memref<2x2x88x896xbf16, #tpu.memory_space<vmem>>, vector<1x1x72x128xbf16>
    %150 = vector.shape_cast %149 : vector<1x1x72x128xbf16> to vector<72x128xbf16>
    %c2_219 = arith.constant 2 : index
    %c7_220 = arith.constant 7 : index
    %c0_221 = arith.constant 0 : index
    %c0_222 = arith.constant 0 : index
    %151 = vector.load %arg2[%c2_219, %c7_220, %c0_221, %c0_222] : memref<7x9x128x128xbf16, #tpu.memory_space<vmem>>, vector<1x1x128x128xbf16>
    %152 = vector.shape_cast %151 : vector<1x1x128x128xbf16> to vector<128x128xbf16>
    %cst_223 = arith.constant dense<0.000000e+00> : vector<72x128xf32>
    %153 = tpu.matmul %150, %152, %cst_223 {dimension_numbers = #tpu.dot_dimension_numbers<[1], [0], [0], [1], [0, 0, 1, 1], [], []>} : vector<72x128xbf16>, vector<128x128xbf16>, vector<72x128xf32> -> vector<72x128xf32>
    %154 = arith.addf %148, %153 : vector<72x128xf32>
    %c0_224 = arith.constant 0 : index
    %c0_225 = arith.constant 0 : index
    %c10_226 = arith.constant 10 : index
    %c256_227 = arith.constant 256 : index
    %155 = vector.load %arg1[%c0_224, %c0_225, %c10_226, %c256_227] : memref<2x2x88x896xbf16, #tpu.memory_space<vmem>>, vector<1x1x72x128xbf16>
    %156 = vector.shape_cast %155 : vector<1x1x72x128xbf16> to vector<72x128xbf16>
    %c2_228 = arith.constant 2 : index
    %c8_229 = arith.constant 8 : index
    %c0_230 = arith.constant 0 : index
    %c0_231 = arith.constant 0 : index
    %157 = vector.load %arg2[%c2_228, %c8_229, %c0_230, %c0_231] : memref<7x9x128x128xbf16, #tpu.memory_space<vmem>>, vector<1x1x128x128xbf16>
    %158 = vector.shape_cast %157 : vector<1x1x128x128xbf16> to vector<128x128xbf16>
    %cst_232 = arith.constant dense<0.000000e+00> : vector<72x128xf32>
    %159 = tpu.matmul %156, %158, %cst_232 {dimension_numbers = #tpu.dot_dimension_numbers<[1], [0], [0], [1], [0, 0, 1, 1], [], []>} : vector<72x128xbf16>, vector<128x128xbf16>, vector<72x128xf32> -> vector<72x128xf32>
    %160 = arith.addf %154, %159 : vector<72x128xf32>
    %c0_233 = arith.constant 0 : index
    %c256_234 = arith.constant 256 : index
    %161 = vector.load %arg3[%c0_233, %c256_234] : memref<72x896xf32, #tpu.memory_space<vmem>>, vector<72x128xf32>
    tpu.vector_store %arg3[%c0_233, %c256_234], %160 {strides = array<i32>} : memref<72x896xf32, #tpu.memory_space<vmem>>, vector<72x128xf32>,
    %c0_235 = arith.constant 0 : index
    %c0_236 = arith.constant 0 : index
    %c0_237 = arith.constant 0 : index
    %c384 = arith.constant 384 : index
    %162 = vector.load %arg1[%c0_235, %c0_236, %c0_237, %c384] : memref<2x2x88x896xbf16, #tpu.memory_space<vmem>>, vector<1x1x72x128xbf16>
    %163 = vector.shape_cast %162 : vector<1x1x72x128xbf16> to vector<72x128xbf16>
    %c3_238 = arith.constant 3 : index
    %c0_239 = arith.constant 0 : index
    %c0_240 = arith.constant 0 : index
    %c0_241 = arith.constant 0 : index
    %164 = vector.load %arg2[%c3_238, %c0_239, %c0_240, %c0_241] : memref<7x9x128x128xbf16, #tpu.memory_space<vmem>>, vector<1x1x128x128xbf16>
    %165 = vector.shape_cast %164 : vector<1x1x128x128xbf16> to vector<128x128xbf16>
    %cst_242 = arith.constant dense<0.000000e+00> : vector<72x128xf32>
    %166 = tpu.matmul %163, %165, %cst_242 {dimension_numbers = #tpu.dot_dimension_numbers<[1], [0], [0], [1], [0, 0, 1, 1], [], []>} : vector<72x128xbf16>, vector<128x128xbf16>, vector<72x128xf32> -> vector<72x128xf32>
    %c0_243 = arith.constant 0 : index
    %c1_244 = arith.constant 1 : index
    %c0_245 = arith.constant 0 : index
    %c384_246 = arith.constant 384 : index
    %167 = vector.load %arg1[%c0_243, %c1_244, %c0_245, %c384_246] : memref<2x2x88x896xbf16, #tpu.memory_space<vmem>>, vector<1x1x72x128xbf16>
    %168 = vector.shape_cast %167 : vector<1x1x72x128xbf16> to vector<72x128xbf16>
    %c3_247 = arith.constant 3 : index
    %c1_248 = arith.constant 1 : index
    %c0_249 = arith.constant 0 : index
    %c0_250 = arith.constant 0 : index
    %169 = vector.load %arg2[%c3_247, %c1_248, %c0_249, %c0_250] : memref<7x9x128x128xbf16, #tpu.memory_space<vmem>>, vector<1x1x128x128xbf16>
    %170 = vector.shape_cast %169 : vector<1x1x128x128xbf16> to vector<128x128xbf16>
    %cst_251 = arith.constant dense<0.000000e+00> : vector<72x128xf32>
    %171 = tpu.matmul %168, %170, %cst_251 {dimension_numbers = #tpu.dot_dimension_numbers<[1], [0], [0], [1], [0, 0, 1, 1], [], []>} : vector<72x128xbf16>, vector<128x128xbf16>, vector<72x128xf32> -> vector<72x128xf32>
    %172 = arith.addf %166, %171 : vector<72x128xf32>
    %c0_252 = arith.constant 0 : index
    %c0_253 = arith.constant 0 : index
    %c1_254 = arith.constant 1 : index
    %c384_255 = arith.constant 384 : index
    %173 = vector.load %arg1[%c0_252, %c0_253, %c1_254, %c384_255] : memref<2x2x88x896xbf16, #tpu.memory_space<vmem>>, vector<1x1x72x128xbf16>
    %174 = vector.shape_cast %173 : vector<1x1x72x128xbf16> to vector<72x128xbf16>
    %c3_256 = arith.constant 3 : index
    %c2_257 = arith.constant 2 : index
    %c0_258 = arith.constant 0 : index
    %c0_259 = arith.constant 0 : index
    %175 = vector.load %arg2[%c3_256, %c2_257, %c0_258, %c0_259] : memref<7x9x128x128xbf16, #tpu.memory_space<vmem>>, vector<1x1x128x128xbf16>
    %176 = vector.shape_cast %175 : vector<1x1x128x128xbf16> to vector<128x128xbf16>
    %cst_260 = arith.constant dense<0.000000e+00> : vector<72x128xf32>
    %177 = tpu.matmul %174, %176, %cst_260 {dimension_numbers = #tpu.dot_dimension_numbers<[1], [0], [0], [1], [0, 0, 1, 1], [], []>} : vector<72x128xbf16>, vector<128x128xbf16>, vector<72x128xf32> -> vector<72x128xf32>
    %178 = arith.addf %172, %177 : vector<72x128xf32>
    %c1_261 = arith.constant 1 : index
    %c0_262 = arith.constant 0 : index
    %c0_263 = arith.constant 0 : index
    %c384_264 = arith.constant 384 : index
    %179 = vector.load %arg1[%c1_261, %c0_262, %c0_263, %c384_264] : memref<2x2x88x896xbf16, #tpu.memory_space<vmem>>, vector<1x1x72x128xbf16>
    %180 = vector.shape_cast %179 : vector<1x1x72x128xbf16> to vector<72x128xbf16>
    %c3_265 = arith.constant 3 : index
    %c3_266 = arith.constant 3 : index
    %c0_267 = arith.constant 0 : index
    %c0_268 = arith.constant 0 : index
    %181 = vector.load %arg2[%c3_265, %c3_266, %c0_267, %c0_268] : memref<7x9x128x128xbf16, #tpu.memory_space<vmem>>, vector<1x1x128x128xbf16>
    %182 = vector.shape_cast %181 : vector<1x1x128x128xbf16> to vector<128x128xbf16>
    %cst_269 = arith.constant dense<0.000000e+00> : vector<72x128xf32>
    %183 = tpu.matmul %180, %182, %cst_269 {dimension_numbers = #tpu.dot_dimension_numbers<[1], [0], [0], [1], [0, 0, 1, 1], [], []>} : vector<72x128xbf16>, vector<128x128xbf16>, vector<72x128xf32> -> vector<72x128xf32>
    %184 = arith.addf %178, %183 : vector<72x128xf32>
    %c1_270 = arith.constant 1 : index
    %c1_271 = arith.constant 1 : index
    %c0_272 = arith.constant 0 : index
    %c384_273 = arith.constant 384 : index
    %185 = vector.load %arg1[%c1_270, %c1_271, %c0_272, %c384_273] : memref<2x2x88x896xbf16, #tpu.memory_space<vmem>>, vector<1x1x72x128xbf16>
    %186 = vector.shape_cast %185 : vector<1x1x72x128xbf16> to vector<72x128xbf16>
    %c3_274 = arith.constant 3 : index
    %c4_275 = arith.constant 4 : index
    %c0_276 = arith.constant 0 : index
    %c0_277 = arith.constant 0 : index
    %187 = vector.load %arg2[%c3_274, %c4_275, %c0_276, %c0_277] : memref<7x9x128x128xbf16, #tpu.memory_space<vmem>>, vector<1x1x128x128xbf16>
    %188 = vector.shape_cast %187 : vector<1x1x128x128xbf16> to vector<128x128xbf16>
    %cst_278 = arith.constant dense<0.000000e+00> : vector<72x128xf32>
    %189 = tpu.matmul %186, %188, %cst_278 {dimension_numbers = #tpu.dot_dimension_numbers<[1], [0], [0], [1], [0, 0, 1, 1], [], []>} : vector<72x128xbf16>, vector<128x128xbf16>, vector<72x128xf32> -> vector<72x128xf32>
    %190 = arith.addf %184, %189 : vector<72x128xf32>
    %c1_279 = arith.constant 1 : index
    %c0_280 = arith.constant 0 : index
    %c1_281 = arith.constant 1 : index
    %c384_282 = arith.constant 384 : index
    %191 = vector.load %arg1[%c1_279, %c0_280, %c1_281, %c384_282] : memref<2x2x88x896xbf16, #tpu.memory_space<vmem>>, vector<1x1x72x128xbf16>
    %192 = vector.shape_cast %191 : vector<1x1x72x128xbf16> to vector<72x128xbf16>
    %c3_283 = arith.constant 3 : index
    %c5_284 = arith.constant 5 : index
    %c0_285 = arith.constant 0 : index
    %c0_286 = arith.constant 0 : index
    %193 = vector.load %arg2[%c3_283, %c5_284, %c0_285, %c0_286] : memref<7x9x128x128xbf16, #tpu.memory_space<vmem>>, vector<1x1x128x128xbf16>
    %194 = vector.shape_cast %193 : vector<1x1x128x128xbf16> to vector<128x128xbf16>
    %cst_287 = arith.constant dense<0.000000e+00> : vector<72x128xf32>
    %195 = tpu.matmul %192, %194, %cst_287 {dimension_numbers = #tpu.dot_dimension_numbers<[1], [0], [0], [1], [0, 0, 1, 1], [], []>} : vector<72x128xbf16>, vector<128x128xbf16>, vector<72x128xf32> -> vector<72x128xf32>
    %196 = arith.addf %190, %195 : vector<72x128xf32>
    %c0_288 = arith.constant 0 : index
    %c0_289 = arith.constant 0 : index
    %c9_290 = arith.constant 9 : index
    %c384_291 = arith.constant 384 : index
    %197 = vector.load %arg1[%c0_288, %c0_289, %c9_290, %c384_291] : memref<2x2x88x896xbf16, #tpu.memory_space<vmem>>, vector<1x1x72x128xbf16>
    %198 = vector.shape_cast %197 : vector<1x1x72x128xbf16> to vector<72x128xbf16>
    %c3_292 = arith.constant 3 : index
    %c6_293 = arith.constant 6 : index
    %c0_294 = arith.constant 0 : index
    %c0_295 = arith.constant 0 : index
    %199 = vector.load %arg2[%c3_292, %c6_293, %c0_294, %c0_295] : memref<7x9x128x128xbf16, #tpu.memory_space<vmem>>, vector<1x1x128x128xbf16>
    %200 = vector.shape_cast %199 : vector<1x1x128x128xbf16> to vector<128x128xbf16>
    %cst_296 = arith.constant dense<0.000000e+00> : vector<72x128xf32>
    %201 = tpu.matmul %198, %200, %cst_296 {dimension_numbers = #tpu.dot_dimension_numbers<[1], [0], [0], [1], [0, 0, 1, 1], [], []>} : vector<72x128xbf16>, vector<128x128xbf16>, vector<72x128xf32> -> vector<72x128xf32>
    %202 = arith.addf %196, %201 : vector<72x128xf32>
    %c0_297 = arith.constant 0 : index
    %c1_298 = arith.constant 1 : index
    %c9_299 = arith.constant 9 : index
    %c384_300 = arith.constant 384 : index
    %203 = vector.load %arg1[%c0_297, %c1_298, %c9_299, %c384_300] : memref<2x2x88x896xbf16, #tpu.memory_space<vmem>>, vector<1x1x72x128xbf16>
    %204 = vector.shape_cast %203 : vector<1x1x72x128xbf16> to vector<72x128xbf16>
    %c3_301 = arith.constant 3 : index
    %c7_302 = arith.constant 7 : index
    %c0_303 = arith.constant 0 : index
    %c0_304 = arith.constant 0 : index
    %205 = vector.load %arg2[%c3_301, %c7_302, %c0_303, %c0_304] : memref<7x9x128x128xbf16, #tpu.memory_space<vmem>>, vector<1x1x128x128xbf16>
    %206 = vector.shape_cast %205 : vector<1x1x128x128xbf16> to vector<128x128xbf16>
    %cst_305 = arith.constant dense<0.000000e+00> : vector<72x128xf32>
    %207 = tpu.matmul %204, %206, %cst_305 {dimension_numbers = #tpu.dot_dimension_numbers<[1], [0], [0], [1], [0, 0, 1, 1], [], []>} : vector<72x128xbf16>, vector<128x128xbf16>, vector<72x128xf32> -> vector<72x128xf32>
    %208 = arith.addf %202, %207 : vector<72x128xf32>
    %c0_306 = arith.constant 0 : index
    %c0_307 = arith.constant 0 : index
    %c10_308 = arith.constant 10 : index
    %c384_309 = arith.constant 384 : index
    %209 = vector.load %arg1[%c0_306, %c0_307, %c10_308, %c384_309] : memref<2x2x88x896xbf16, #tpu.memory_space<vmem>>, vector<1x1x72x128xbf16>
    %210 = vector.shape_cast %209 : vector<1x1x72x128xbf16> to vector<72x128xbf16>
    %c3_310 = arith.constant 3 : index
    %c8_311 = arith.constant 8 : index
    %c0_312 = arith.constant 0 : index
    %c0_313 = arith.constant 0 : index
    %211 = vector.load %arg2[%c3_310, %c8_311, %c0_312, %c0_313] : memref<7x9x128x128xbf16, #tpu.memory_space<vmem>>, vector<1x1x128x128xbf16>
    %212 = vector.shape_cast %211 : vector<1x1x128x128xbf16> to vector<128x128xbf16>
    %cst_314 = arith.constant dense<0.000000e+00> : vector<72x128xf32>
    %213 = tpu.matmul %210, %212, %cst_314 {dimension_numbers = #tpu.dot_dimension_numbers<[1], [0], [0], [1], [0, 0, 1, 1], [], []>} : vector<72x128xbf16>, vector<128x128xbf16>, vector<72x128xf32> -> vector<72x128xf32>
    %214 = arith.addf %208, %213 : vector<72x128xf32>
    %c0_315 = arith.constant 0 : index
    %c384_316 = arith.constant 384 : index
    %215 = vector.load %arg3[%c0_315, %c384_316] : memref<72x896xf32, #tpu.memory_space<vmem>>, vector<72x128xf32>
    tpu.vector_store %arg3[%c0_315, %c384_316], %214 {strides = array<i32>} : memref<72x896xf32, #tpu.memory_space<vmem>>, vector<72x128xf32>,
    %c0_317 = arith.constant 0 : index
    %c0_318 = arith.constant 0 : index
    %c0_319 = arith.constant 0 : index
    %c512 = arith.constant 512 : index
    %216 = vector.load %arg1[%c0_317, %c0_318, %c0_319, %c512] : memref<2x2x88x896xbf16, #tpu.memory_space<vmem>>, vector<1x1x72x128xbf16>
    %217 = vector.shape_cast %216 : vector<1x1x72x128xbf16> to vector<72x128xbf16>
    %c4_320 = arith.constant 4 : index
    %c0_321 = arith.constant 0 : index
    %c0_322 = arith.constant 0 : index
    %c0_323 = arith.constant 0 : index
    %218 = vector.load %arg2[%c4_320, %c0_321, %c0_322, %c0_323] : memref<7x9x128x128xbf16, #tpu.memory_space<vmem>>, vector<1x1x128x128xbf16>
    %219 = vector.shape_cast %218 : vector<1x1x128x128xbf16> to vector<128x128xbf16>
    %cst_324 = arith.constant dense<0.000000e+00> : vector<72x128xf32>
    %220 = tpu.matmul %217, %219, %cst_324 {dimension_numbers = #tpu.dot_dimension_numbers<[1], [0], [0], [1], [0, 0, 1, 1], [], []>} : vector<72x128xbf16>, vector<128x128xbf16>, vector<72x128xf32> -> vector<72x128xf32>
    %c0_325 = arith.constant 0 : index
    %c1_326 = arith.constant 1 : index
    %c0_327 = arith.constant 0 : index
    %c512_328 = arith.constant 512 : index
    %221 = vector.load %arg1[%c0_325, %c1_326, %c0_327, %c512_328] : memref<2x2x88x896xbf16, #tpu.memory_space<vmem>>, vector<1x1x72x128xbf16>
    %222 = vector.shape_cast %221 : vector<1x1x72x128xbf16> to vector<72x128xbf16>
    %c4_329 = arith.constant 4 : index
    %c1_330 = arith.constant 1 : index
    %c0_331 = arith.constant 0 : index
    %c0_332 = arith.constant 0 : index
    %223 = vector.load %arg2[%c4_329, %c1_330, %c0_331, %c0_332] : memref<7x9x128x128xbf16, #tpu.memory_space<vmem>>, vector<1x1x128x128xbf16>
    %224 = vector.shape_cast %223 : vector<1x1x128x128xbf16> to vector<128x128xbf16>
    %cst_333 = arith.constant dense<0.000000e+00> : vector<72x128xf32>
    %225 = tpu.matmul %222, %224, %cst_333 {dimension_numbers = #tpu.dot_dimension_numbers<[1], [0], [0], [1], [0, 0, 1, 1], [], []>} : vector<72x128xbf16>, vector<128x128xbf16>, vector<72x128xf32> -> vector<72x128xf32>
    %226 = arith.addf %220, %225 : vector<72x128xf32>
    %c0_334 = arith.constant 0 : index
    %c0_335 = arith.constant 0 : index
    %c1_336 = arith.constant 1 : index
    %c512_337 = arith.constant 512 : index
    %227 = vector.load %arg1[%c0_334, %c0_335, %c1_336, %c512_337] : memref<2x2x88x896xbf16, #tpu.memory_space<vmem>>, vector<1x1x72x128xbf16>
    %228 = vector.shape_cast %227 : vector<1x1x72x128xbf16> to vector<72x128xbf16>
    %c4_338 = arith.constant 4 : index
    %c2_339 = arith.constant 2 : index
    %c0_340 = arith.constant 0 : index
    %c0_341 = arith.constant 0 : index
    %229 = vector.load %arg2[%c4_338, %c2_339, %c0_340, %c0_341] : memref<7x9x128x128xbf16, #tpu.memory_space<vmem>>, vector<1x1x128x128xbf16>
    %230 = vector.shape_cast %229 : vector<1x1x128x128xbf16> to vector<128x128xbf16>
    %cst_342 = arith.constant dense<0.000000e+00> : vector<72x128xf32>
    %231 = tpu.matmul %228, %230, %cst_342 {dimension_numbers = #tpu.dot_dimension_numbers<[1], [0], [0], [1], [0, 0, 1, 1], [], []>} : vector<72x128xbf16>, vector<128x128xbf16>, vector<72x128xf32> -> vector<72x128xf32>
    %232 = arith.addf %226, %231 : vector<72x128xf32>
    %c1_343 = arith.constant 1 : index
    %c0_344 = arith.constant 0 : index
    %c0_345 = arith.constant 0 : index
    %c512_346 = arith.constant 512 : index
    %233 = vector.load %arg1[%c1_343, %c0_344, %c0_345, %c512_346] : memref<2x2x88x896xbf16, #tpu.memory_space<vmem>>, vector<1x1x72x128xbf16>
    %234 = vector.shape_cast %233 : vector<1x1x72x128xbf16> to vector<72x128xbf16>
    %c4_347 = arith.constant 4 : index
    %c3_348 = arith.constant 3 : index
    %c0_349 = arith.constant 0 : index
    %c0_350 = arith.constant 0 : index
    %235 = vector.load %arg2[%c4_347, %c3_348, %c0_349, %c0_350] : memref<7x9x128x128xbf16, #tpu.memory_space<vmem>>, vector<1x1x128x128xbf16>
    %236 = vector.shape_cast %235 : vector<1x1x128x128xbf16> to vector<128x128xbf16>
    %cst_351 = arith.constant dense<0.000000e+00> : vector<72x128xf32>
    %237 = tpu.matmul %234, %236, %cst_351 {dimension_numbers = #tpu.dot_dimension_numbers<[1], [0], [0], [1], [0, 0, 1, 1], [], []>} : vector<72x128xbf16>, vector<128x128xbf16>, vector<72x128xf32> -> vector<72x128xf32>
    %238 = arith.addf %232, %237 : vector<72x128xf32>
    %c1_352 = arith.constant 1 : index
    %c1_353 = arith.constant 1 : index
    %c0_354 = arith.constant 0 : index
    %c512_355 = arith.constant 512 : index
    %239 = vector.load %arg1[%c1_352, %c1_353, %c0_354, %c512_355] : memref<2x2x88x896xbf16, #tpu.memory_space<vmem>>, vector<1x1x72x128xbf16>
    %240 = vector.shape_cast %239 : vector<1x1x72x128xbf16> to vector<72x128xbf16>
    %c4_356 = arith.constant 4 : index
    %c4_357 = arith.constant 4 : index
    %c0_358 = arith.constant 0 : index
    %c0_359 = arith.constant 0 : index
    %241 = vector.load %arg2[%c4_356, %c4_357, %c0_358, %c0_359] : memref<7x9x128x128xbf16, #tpu.memory_space<vmem>>, vector<1x1x128x128xbf16>
    %242 = vector.shape_cast %241 : vector<1x1x128x128xbf16> to vector<128x128xbf16>
    %cst_360 = arith.constant dense<0.000000e+00> : vector<72x128xf32>
    %243 = tpu.matmul %240, %242, %cst_360 {dimension_numbers = #tpu.dot_dimension_numbers<[1], [0], [0], [1], [0, 0, 1, 1], [], []>} : vector<72x128xbf16>, vector<128x128xbf16>, vector<72x128xf32> -> vector<72x128xf32>
    %244 = arith.addf %238, %243 : vector<72x128xf32>
    %c1_361 = arith.constant 1 : index
    %c0_362 = arith.constant 0 : index
    %c1_363 = arith.constant 1 : index
    %c512_364 = arith.constant 512 : index
    %245 = vector.load %arg1[%c1_361, %c0_362, %c1_363, %c512_364] : memref<2x2x88x896xbf16, #tpu.memory_space<vmem>>, vector<1x1x72x128xbf16>
    %246 = vector.shape_cast %245 : vector<1x1x72x128xbf16> to vector<72x128xbf16>
    %c4_365 = arith.constant 4 : index
    %c5_366 = arith.constant 5 : index
    %c0_367 = arith.constant 0 : index
    %c0_368 = arith.constant 0 : index
    %247 = vector.load %arg2[%c4_365, %c5_366, %c0_367, %c0_368] : memref<7x9x128x128xbf16, #tpu.memory_space<vmem>>, vector<1x1x128x128xbf16>
    %248 = vector.shape_cast %247 : vector<1x1x128x128xbf16> to vector<128x128xbf16>
    %cst_369 = arith.constant dense<0.000000e+00> : vector<72x128xf32>
    %249 = tpu.matmul %246, %248, %cst_369 {dimension_numbers = #tpu.dot_dimension_numbers<[1], [0], [0], [1], [0, 0, 1, 1], [], []>} : vector<72x128xbf16>, vector<128x128xbf16>, vector<72x128xf32> -> vector<72x128xf32>
    %250 = arith.addf %244, %249 : vector<72x128xf32>
    %c0_370 = arith.constant 0 : index
    %c0_371 = arith.constant 0 : index
    %c9_372 = arith.constant 9 : index
    %c512_373 = arith.constant 512 : index
    %251 = vector.load %arg1[%c0_370, %c0_371, %c9_372, %c512_373] : memref<2x2x88x896xbf16, #tpu.memory_space<vmem>>, vector<1x1x72x128xbf16>
    %252 = vector.shape_cast %251 : vector<1x1x72x128xbf16> to vector<72x128xbf16>
    %c4_374 = arith.constant 4 : index
    %c6_375 = arith.constant 6 : index
    %c0_376 = arith.constant 0 : index
    %c0_377 = arith.constant 0 : index
    %253 = vector.load %arg2[%c4_374, %c6_375, %c0_376, %c0_377] : memref<7x9x128x128xbf16, #tpu.memory_space<vmem>>, vector<1x1x128x128xbf16>
    %254 = vector.shape_cast %253 : vector<1x1x128x128xbf16> to vector<128x128xbf16>
    %cst_378 = arith.constant dense<0.000000e+00> : vector<72x128xf32>
    %255 = tpu.matmul %252, %254, %cst_378 {dimension_numbers = #tpu.dot_dimension_numbers<[1], [0], [0], [1], [0, 0, 1, 1], [], []>} : vector<72x128xbf16>, vector<128x128xbf16>, vector<72x128xf32> -> vector<72x128xf32>
    %256 = arith.addf %250, %255 : vector<72x128xf32>
    %c0_379 = arith.constant 0 : index
    %c1_380 = arith.constant 1 : index
    %c9_381 = arith.constant 9 : index
    %c512_382 = arith.constant 512 : index
    %257 = vector.load %arg1[%c0_379, %c1_380, %c9_381, %c512_382] : memref<2x2x88x896xbf16, #tpu.memory_space<vmem>>, vector<1x1x72x128xbf16>
    %258 = vector.shape_cast %257 : vector<1x1x72x128xbf16> to vector<72x128xbf16>
    %c4_383 = arith.constant 4 : index
    %c7_384 = arith.constant 7 : index
    %c0_385 = arith.constant 0 : index
    %c0_386 = arith.constant 0 : index
    %259 = vector.load %arg2[%c4_383, %c7_384, %c0_385, %c0_386] : memref<7x9x128x128xbf16, #tpu.memory_space<vmem>>, vector<1x1x128x128xbf16>
    %260 = vector.shape_cast %259 : vector<1x1x128x128xbf16> to vector<128x128xbf16>
    %cst_387 = arith.constant dense<0.000000e+00> : vector<72x128xf32>
    %261 = tpu.matmul %258, %260, %cst_387 {dimension_numbers = #tpu.dot_dimension_numbers<[1], [0], [0], [1], [0, 0, 1, 1], [], []>} : vector<72x128xbf16>, vector<128x128xbf16>, vector<72x128xf32> -> vector<72x128xf32>
    %262 = arith.addf %256, %261 : vector<72x128xf32>
    %c0_388 = arith.constant 0 : index
    %c0_389 = arith.constant 0 : index
    %c10_390 = arith.constant 10 : index
    %c512_391 = arith.constant 512 : index
    %263 = vector.load %arg1[%c0_388, %c0_389, %c10_390, %c512_391] : memref<2x2x88x896xbf16, #tpu.memory_space<vmem>>, vector<1x1x72x128xbf16>
    %264 = vector.shape_cast %263 : vector<1x1x72x128xbf16> to vector<72x128xbf16>
    %c4_392 = arith.constant 4 : index
    %c8_393 = arith.constant 8 : index
    %c0_394 = arith.constant 0 : index
    %c0_395 = arith.constant 0 : index
    %265 = vector.load %arg2[%c4_392, %c8_393, %c0_394, %c0_395] : memref<7x9x128x128xbf16, #tpu.memory_space<vmem>>, vector<1x1x128x128xbf16>
    %266 = vector.shape_cast %265 : vector<1x1x128x128xbf16> to vector<128x128xbf16>
    %cst_396 = arith.constant dense<0.000000e+00> : vector<72x128xf32>
    %267 = tpu.matmul %264, %266, %cst_396 {dimension_numbers = #tpu.dot_dimension_numbers<[1], [0], [0], [1], [0, 0, 1, 1], [], []>} : vector<72x128xbf16>, vector<128x128xbf16>, vector<72x128xf32> -> vector<72x128xf32>
    %268 = arith.addf %262, %267 : vector<72x128xf32>
    %c0_397 = arith.constant 0 : index
    %c512_398 = arith.constant 512 : index
    %269 = vector.load %arg3[%c0_397, %c512_398] : memref<72x896xf32, #tpu.memory_space<vmem>>, vector<72x128xf32>
    tpu.vector_store %arg3[%c0_397, %c512_398], %268 {strides = array<i32>} : memref<72x896xf32, #tpu.memory_space<vmem>>, vector<72x128xf32>,
    %c0_399 = arith.constant 0 : index
    %c0_400 = arith.constant 0 : index
    %c0_401 = arith.constant 0 : index
    %c640 = arith.constant 640 : index
    %270 = vector.load %arg1[%c0_399, %c0_400, %c0_401, %c640] : memref<2x2x88x896xbf16, #tpu.memory_space<vmem>>, vector<1x1x72x128xbf16>
    %271 = vector.shape_cast %270 : vector<1x1x72x128xbf16> to vector<72x128xbf16>
    %c5_402 = arith.constant 5 : index
    %c0_403 = arith.constant 0 : index
    %c0_404 = arith.constant 0 : index
    %c0_405 = arith.constant 0 : index
    %272 = vector.load %arg2[%c5_402, %c0_403, %c0_404, %c0_405] : memref<7x9x128x128xbf16, #tpu.memory_space<vmem>>, vector<1x1x128x128xbf16>
    %273 = vector.shape_cast %272 : vector<1x1x128x128xbf16> to vector<128x128xbf16>
    %cst_406 = arith.constant dense<0.000000e+00> : vector<72x128xf32>
    %274 = tpu.matmul %271, %273, %cst_406 {dimension_numbers = #tpu.dot_dimension_numbers<[1], [0], [0], [1], [0, 0, 1, 1], [], []>} : vector<72x128xbf16>, vector<128x128xbf16>, vector<72x128xf32> -> vector<72x128xf32>
    %c0_407 = arith.constant 0 : index
    %c1_408 = arith.constant 1 : index
    %c0_409 = arith.constant 0 : index
    %c640_410 = arith.constant 640 : index
    %275 = vector.load %arg1[%c0_407, %c1_408, %c0_409, %c640_410] : memref<2x2x88x896xbf16, #tpu.memory_space<vmem>>, vector<1x1x72x128xbf16>
    %276 = vector.shape_cast %275 : vector<1x1x72x128xbf16> to vector<72x128xbf16>
    %c5_411 = arith.constant 5 : index
    %c1_412 = arith.constant 1 : index
    %c0_413 = arith.constant 0 : index
    %c0_414 = arith.constant 0 : index
    %277 = vector.load %arg2[%c5_411, %c1_412, %c0_413, %c0_414] : memref<7x9x128x128xbf16, #tpu.memory_space<vmem>>, vector<1x1x128x128xbf16>
    %278 = vector.shape_cast %277 : vector<1x1x128x128xbf16> to vector<128x128xbf16>
    %cst_415 = arith.constant dense<0.000000e+00> : vector<72x128xf32>
    %279 = tpu.matmul %276, %278, %cst_415 {dimension_numbers = #tpu.dot_dimension_numbers<[1], [0], [0], [1], [0, 0, 1, 1], [], []>} : vector<72x128xbf16>, vector<128x128xbf16>, vector<72x128xf32> -> vector<72x128xf32>
    %280 = arith.addf %274, %279 : vector<72x128xf32>
    %c0_416 = arith.constant 0 : index
    %c0_417 = arith.constant 0 : index
    %c1_418 = arith.constant 1 : index
    %c640_419 = arith.constant 640 : index
    %281 = vector.load %arg1[%c0_416, %c0_417, %c1_418, %c640_419] : memref<2x2x88x896xbf16, #tpu.memory_space<vmem>>, vector<1x1x72x128xbf16>
    %282 = vector.shape_cast %281 : vector<1x1x72x128xbf16> to vector<72x128xbf16>
    %c5_420 = arith.constant 5 : index
    %c2_421 = arith.constant 2 : index
    %c0_422 = arith.constant 0 : index
    %c0_423 = arith.constant 0 : index
    %283 = vector.load %arg2[%c5_420, %c2_421, %c0_422, %c0_423] : memref<7x9x128x128xbf16, #tpu.memory_space<vmem>>, vector<1x1x128x128xbf16>
    %284 = vector.shape_cast %283 : vector<1x1x128x128xbf16> to vector<128x128xbf16>
    %cst_424 = arith.constant dense<0.000000e+00> : vector<72x128xf32>
    %285 = tpu.matmul %282, %284, %cst_424 {dimension_numbers = #tpu.dot_dimension_numbers<[1], [0], [0], [1], [0, 0, 1, 1], [], []>} : vector<72x128xbf16>, vector<128x128xbf16>, vector<72x128xf32> -> vector<72x128xf32>
    %286 = arith.addf %280, %285 : vector<72x128xf32>
    %c1_425 = arith.constant 1 : index
    %c0_426 = arith.constant 0 : index
    %c0_427 = arith.constant 0 : index
    %c640_428 = arith.constant 640 : index
    %287 = vector.load %arg1[%c1_425, %c0_426, %c0_427, %c640_428] : memref<2x2x88x896xbf16, #tpu.memory_space<vmem>>, vector<1x1x72x128xbf16>
    %288 = vector.shape_cast %287 : vector<1x1x72x128xbf16> to vector<72x128xbf16>
    %c5_429 = arith.constant 5 : index
    %c3_430 = arith.constant 3 : index
    %c0_431 = arith.constant 0 : index
    %c0_432 = arith.constant 0 : index
    %289 = vector.load %arg2[%c5_429, %c3_430, %c0_431, %c0_432] : memref<7x9x128x128xbf16, #tpu.memory_space<vmem>>, vector<1x1x128x128xbf16>
    %290 = vector.shape_cast %289 : vector<1x1x128x128xbf16> to vector<128x128xbf16>
    %cst_433 = arith.constant dense<0.000000e+00> : vector<72x128xf32>
    %291 = tpu.matmul %288, %290, %cst_433 {dimension_numbers = #tpu.dot_dimension_numbers<[1], [0], [0], [1], [0, 0, 1, 1], [], []>} : vector<72x128xbf16>, vector<128x128xbf16>, vector<72x128xf32> -> vector<72x128xf32>
    %292 = arith.addf %286, %291 : vector<72x128xf32>
    %c1_434 = arith.constant 1 : index
    %c1_435 = arith.constant 1 : index
    %c0_436 = arith.constant 0 : index
    %c640_437 = arith.constant 640 : index
    %293 = vector.load %arg1[%c1_434, %c1_435, %c0_436, %c640_437] : memref<2x2x88x896xbf16, #tpu.memory_space<vmem>>, vector<1x1x72x128xbf16>
    %294 = vector.shape_cast %293 : vector<1x1x72x128xbf16> to vector<72x128xbf16>
    %c5_438 = arith.constant 5 : index
    %c4_439 = arith.constant 4 : index
    %c0_440 = arith.constant 0 : index
    %c0_441 = arith.constant 0 : index
    %295 = vector.load %arg2[%c5_438, %c4_439, %c0_440, %c0_441] : memref<7x9x128x128xbf16, #tpu.memory_space<vmem>>, vector<1x1x128x128xbf16>
    %296 = vector.shape_cast %295 : vector<1x1x128x128xbf16> to vector<128x128xbf16>
    %cst_442 = arith.constant dense<0.000000e+00> : vector<72x128xf32>
    %297 = tpu.matmul %294, %296, %cst_442 {dimension_numbers = #tpu.dot_dimension_numbers<[1], [0], [0], [1], [0, 0, 1, 1], [], []>} : vector<72x128xbf16>, vector<128x128xbf16>, vector<72x128xf32> -> vector<72x128xf32>
    %298 = arith.addf %292, %297 : vector<72x128xf32>
    %c1_443 = arith.constant 1 : index
    %c0_444 = arith.constant 0 : index
    %c1_445 = arith.constant 1 : index
    %c640_446 = arith.constant 640 : index
    %299 = vector.load %arg1[%c1_443, %c0_444, %c1_445, %c640_446] : memref<2x2x88x896xbf16, #tpu.memory_space<vmem>>, vector<1x1x72x128xbf16>
    %300 = vector.shape_cast %299 : vector<1x1x72x128xbf16> to vector<72x128xbf16>
    %c5_447 = arith.constant 5 : index
    %c5_448 = arith.constant 5 : index
    %c0_449 = arith.constant 0 : index
    %c0_450 = arith.constant 0 : index
    %301 = vector.load %arg2[%c5_447, %c5_448, %c0_449, %c0_450] : memref<7x9x128x128xbf16, #tpu.memory_space<vmem>>, vector<1x1x128x128xbf16>
    %302 = vector.shape_cast %301 : vector<1x1x128x128xbf16> to vector<128x128xbf16>
    %cst_451 = arith.constant dense<0.000000e+00> : vector<72x128xf32>
    %303 = tpu.matmul %300, %302, %cst_451 {dimension_numbers = #tpu.dot_dimension_numbers<[1], [0], [0], [1], [0, 0, 1, 1], [], []>} : vector<72x128xbf16>, vector<128x128xbf16>, vector<72x128xf32> -> vector<72x128xf32>
    %304 = arith.addf %298, %303 : vector<72x128xf32>
    %c0_452 = arith.constant 0 : index
    %c0_453 = arith.constant 0 : index
    %c9_454 = arith.constant 9 : index
    %c640_455 = arith.constant 640 : index
    %305 = vector.load %arg1[%c0_452, %c0_453, %c9_454, %c640_455] : memref<2x2x88x896xbf16, #tpu.memory_space<vmem>>, vector<1x1x72x128xbf16>
    %306 = vector.shape_cast %305 : vector<1x1x72x128xbf16> to vector<72x128xbf16>
    %c5_456 = arith.constant 5 : index
    %c6_457 = arith.constant 6 : index
    %c0_458 = arith.constant 0 : index
    %c0_459 = arith.constant 0 : index
    %307 = vector.load %arg2[%c5_456, %c6_457, %c0_458, %c0_459] : memref<7x9x128x128xbf16, #tpu.memory_space<vmem>>, vector<1x1x128x128xbf16>
    %308 = vector.shape_cast %307 : vector<1x1x128x128xbf16> to vector<128x128xbf16>
    %cst_460 = arith.constant dense<0.000000e+00> : vector<72x128xf32>
    %309 = tpu.matmul %306, %308, %cst_460 {dimension_numbers = #tpu.dot_dimension_numbers<[1], [0], [0], [1], [0, 0, 1, 1], [], []>} : vector<72x128xbf16>, vector<128x128xbf16>, vector<72x128xf32> -> vector<72x128xf32>
    %310 = arith.addf %304, %309 : vector<72x128xf32>
    %c0_461 = arith.constant 0 : index
    %c1_462 = arith.constant 1 : index
    %c9_463 = arith.constant 9 : index
    %c640_464 = arith.constant 640 : index
    %311 = vector.load %arg1[%c0_461, %c1_462, %c9_463, %c640_464] : memref<2x2x88x896xbf16, #tpu.memory_space<vmem>>, vector<1x1x72x128xbf16>
    %312 = vector.shape_cast %311 : vector<1x1x72x128xbf16> to vector<72x128xbf16>
    %c5_465 = arith.constant 5 : index
    %c7_466 = arith.constant 7 : index
    %c0_467 = arith.constant 0 : index
    %c0_468 = arith.constant 0 : index
    %313 = vector.load %arg2[%c5_465, %c7_466, %c0_467, %c0_468] : memref<7x9x128x128xbf16, #tpu.memory_space<vmem>>, vector<1x1x128x128xbf16>
    %314 = vector.shape_cast %313 : vector<1x1x128x128xbf16> to vector<128x128xbf16>
    %cst_469 = arith.constant dense<0.000000e+00> : vector<72x128xf32>
    %315 = tpu.matmul %312, %314, %cst_469 {dimension_numbers = #tpu.dot_dimension_numbers<[1], [0], [0], [1], [0, 0, 1, 1], [], []>} : vector<72x128xbf16>, vector<128x128xbf16>, vector<72x128xf32> -> vector<72x128xf32>
    %316 = arith.addf %310, %315 : vector<72x128xf32>
    %c0_470 = arith.constant 0 : index
    %c0_471 = arith.constant 0 : index
    %c10_472 = arith.constant 10 : index
    %c640_473 = arith.constant 640 : index
    %317 = vector.load %arg1[%c0_470, %c0_471, %c10_472, %c640_473] : memref<2x2x88x896xbf16, #tpu.memory_space<vmem>>, vector<1x1x72x128xbf16>
    %318 = vector.shape_cast %317 : vector<1x1x72x128xbf16> to vector<72x128xbf16>
    %c5_474 = arith.constant 5 : index
    %c8_475 = arith.constant 8 : index
    %c0_476 = arith.constant 0 : index
    %c0_477 = arith.constant 0 : index
    %319 = vector.load %arg2[%c5_474, %c8_475, %c0_476, %c0_477] : memref<7x9x128x128xbf16, #tpu.memory_space<vmem>>, vector<1x1x128x128xbf16>
    %320 = vector.shape_cast %319 : vector<1x1x128x128xbf16> to vector<128x128xbf16>
    %cst_478 = arith.constant dense<0.000000e+00> : vector<72x128xf32>
    %321 = tpu.matmul %318, %320, %cst_478 {dimension_numbers = #tpu.dot_dimension_numbers<[1], [0], [0], [1], [0, 0, 1, 1], [], []>} : vector<72x128xbf16>, vector<128x128xbf16>, vector<72x128xf32> -> vector<72x128xf32>
    %322 = arith.addf %316, %321 : vector<72x128xf32>
    %c0_479 = arith.constant 0 : index
    %c640_480 = arith.constant 640 : index
    %323 = vector.load %arg3[%c0_479, %c640_480] : memref<72x896xf32, #tpu.memory_space<vmem>>, vector<72x128xf32>
    tpu.vector_store %arg3[%c0_479, %c640_480], %322 {strides = array<i32>} : memref<72x896xf32, #tpu.memory_space<vmem>>, vector<72x128xf32>,
    %c0_481 = arith.constant 0 : index
    %c0_482 = arith.constant 0 : index
    %c0_483 = arith.constant 0 : index
    %c768 = arith.constant 768 : index
    %324 = vector.load %arg1[%c0_481, %c0_482, %c0_483, %c768] : memref<2x2x88x896xbf16, #tpu.memory_space<vmem>>, vector<1x1x72x128xbf16>
    %325 = vector.shape_cast %324 : vector<1x1x72x128xbf16> to vector<72x128xbf16>
    %c6_484 = arith.constant 6 : index
    %c0_485 = arith.constant 0 : index
    %c0_486 = arith.constant 0 : index
    %c0_487 = arith.constant 0 : index
    %326 = vector.load %arg2[%c6_484, %c0_485, %c0_486, %c0_487] : memref<7x9x128x128xbf16, #tpu.memory_space<vmem>>, vector<1x1x128x128xbf16>
    %327 = vector.shape_cast %326 : vector<1x1x128x128xbf16> to vector<128x128xbf16>
    %cst_488 = arith.constant dense<0.000000e+00> : vector<72x128xf32>
    %328 = tpu.matmul %325, %327, %cst_488 {dimension_numbers = #tpu.dot_dimension_numbers<[1], [0], [0], [1], [0, 0, 1, 1], [], []>} : vector<72x128xbf16>, vector<128x128xbf16>, vector<72x128xf32> -> vector<72x128xf32>
    %c0_489 = arith.constant 0 : index
    %c1_490 = arith.constant 1 : index
    %c0_491 = arith.constant 0 : index
    %c768_492 = arith.constant 768 : index
    %329 = vector.load %arg1[%c0_489, %c1_490, %c0_491, %c768_492] : memref<2x2x88x896xbf16, #tpu.memory_space<vmem>>, vector<1x1x72x128xbf16>
    %330 = vector.shape_cast %329 : vector<1x1x72x128xbf16> to vector<72x128xbf16>
    %c6_493 = arith.constant 6 : index
    %c1_494 = arith.constant 1 : index
    %c0_495 = arith.constant 0 : index
    %c0_496 = arith.constant 0 : index
    %331 = vector.load %arg2[%c6_493, %c1_494, %c0_495, %c0_496] : memref<7x9x128x128xbf16, #tpu.memory_space<vmem>>, vector<1x1x128x128xbf16>
    %332 = vector.shape_cast %331 : vector<1x1x128x128xbf16> to vector<128x128xbf16>
    %cst_497 = arith.constant dense<0.000000e+00> : vector<72x128xf32>
    %333 = tpu.matmul %330, %332, %cst_497 {dimension_numbers = #tpu.dot_dimension_numbers<[1], [0], [0], [1], [0, 0, 1, 1], [], []>} : vector<72x128xbf16>, vector<128x128xbf16>, vector<72x128xf32> -> vector<72x128xf32>
    %334 = arith.addf %328, %333 : vector<72x128xf32>
    %c0_498 = arith.constant 0 : index
    %c0_499 = arith.constant 0 : index
    %c1_500 = arith.constant 1 : index
    %c768_501 = arith.constant 768 : index
    %335 = vector.load %arg1[%c0_498, %c0_499, %c1_500, %c768_501] : memref<2x2x88x896xbf16, #tpu.memory_space<vmem>>, vector<1x1x72x128xbf16>
    %336 = vector.shape_cast %335 : vector<1x1x72x128xbf16> to vector<72x128xbf16>
    %c6_502 = arith.constant 6 : index
    %c2_503 = arith.constant 2 : index
    %c0_504 = arith.constant 0 : index
    %c0_505 = arith.constant 0 : index
    %337 = vector.load %arg2[%c6_502, %c2_503, %c0_504, %c0_505] : memref<7x9x128x128xbf16, #tpu.memory_space<vmem>>, vector<1x1x128x128xbf16>
    %338 = vector.shape_cast %337 : vector<1x1x128x128xbf16> to vector<128x128xbf16>
    %cst_506 = arith.constant dense<0.000000e+00> : vector<72x128xf32>
    %339 = tpu.matmul %336, %338, %cst_506 {dimension_numbers = #tpu.dot_dimension_numbers<[1], [0], [0], [1], [0, 0, 1, 1], [], []>} : vector<72x128xbf16>, vector<128x128xbf16>, vector<72x128xf32> -> vector<72x128xf32>
    %340 = arith.addf %334, %339 : vector<72x128xf32>
    %c1_507 = arith.constant 1 : index
    %c0_508 = arith.constant 0 : index
    %c0_509 = arith.constant 0 : index
    %c768_510 = arith.constant 768 : index
    %341 = vector.load %arg1[%c1_507, %c0_508, %c0_509, %c768_510] : memref<2x2x88x896xbf16, #tpu.memory_space<vmem>>, vector<1x1x72x128xbf16>
    %342 = vector.shape_cast %341 : vector<1x1x72x128xbf16> to vector<72x128xbf16>
    %c6_511 = arith.constant 6 : index
    %c3_512 = arith.constant 3 : index
    %c0_513 = arith.constant 0 : index
    %c0_514 = arith.constant 0 : index
    %343 = vector.load %arg2[%c6_511, %c3_512, %c0_513, %c0_514] : memref<7x9x128x128xbf16, #tpu.memory_space<vmem>>, vector<1x1x128x128xbf16>
    %344 = vector.shape_cast %343 : vector<1x1x128x128xbf16> to vector<128x128xbf16>
    %cst_515 = arith.constant dense<0.000000e+00> : vector<72x128xf32>
    %345 = tpu.matmul %342, %344, %cst_515 {dimension_numbers = #tpu.dot_dimension_numbers<[1], [0], [0], [1], [0, 0, 1, 1], [], []>} : vector<72x128xbf16>, vector<128x128xbf16>, vector<72x128xf32> -> vector<72x128xf32>
    %346 = arith.addf %340, %345 : vector<72x128xf32>
    %c1_516 = arith.constant 1 : index
    %c1_517 = arith.constant 1 : index
    %c0_518 = arith.constant 0 : index
    %c768_519 = arith.constant 768 : index
    %347 = vector.load %arg1[%c1_516, %c1_517, %c0_518, %c768_519] : memref<2x2x88x896xbf16, #tpu.memory_space<vmem>>, vector<1x1x72x128xbf16>
    %348 = vector.shape_cast %347 : vector<1x1x72x128xbf16> to vector<72x128xbf16>
    %c6_520 = arith.constant 6 : index
    %c4_521 = arith.constant 4 : index
    %c0_522 = arith.constant 0 : index
    %c0_523 = arith.constant 0 : index
    %349 = vector.load %arg2[%c6_520, %c4_521, %c0_522, %c0_523] : memref<7x9x128x128xbf16, #tpu.memory_space<vmem>>, vector<1x1x128x128xbf16>
    %350 = vector.shape_cast %349 : vector<1x1x128x128xbf16> to vector<128x128xbf16>
    %cst_524 = arith.constant dense<0.000000e+00> : vector<72x128xf32>
    %351 = tpu.matmul %348, %350, %cst_524 {dimension_numbers = #tpu.dot_dimension_numbers<[1], [0], [0], [1], [0, 0, 1, 1], [], []>} : vector<72x128xbf16>, vector<128x128xbf16>, vector<72x128xf32> -> vector<72x128xf32>
    %352 = arith.addf %346, %351 : vector<72x128xf32>
    %c1_525 = arith.constant 1 : index
    %c0_526 = arith.constant 0 : index
    %c1_527 = arith.constant 1 : index
    %c768_528 = arith.constant 768 : index
    %353 = vector.load %arg1[%c1_525, %c0_526, %c1_527, %c768_528] : memref<2x2x88x896xbf16, #tpu.memory_space<vmem>>, vector<1x1x72x128xbf16>
    %354 = vector.shape_cast %353 : vector<1x1x72x128xbf16> to vector<72x128xbf16>
    %c6_529 = arith.constant 6 : index
    %c5_530 = arith.constant 5 : index
    %c0_531 = arith.constant 0 : index
    %c0_532 = arith.constant 0 : index
    %355 = vector.load %arg2[%c6_529, %c5_530, %c0_531, %c0_532] : memref<7x9x128x128xbf16, #tpu.memory_space<vmem>>, vector<1x1x128x128xbf16>
    %356 = vector.shape_cast %355 : vector<1x1x128x128xbf16> to vector<128x128xbf16>
    %cst_533 = arith.constant dense<0.000000e+00> : vector<72x128xf32>
    %357 = tpu.matmul %354, %356, %cst_533 {dimension_numbers = #tpu.dot_dimension_numbers<[1], [0], [0], [1], [0, 0, 1, 1], [], []>} : vector<72x128xbf16>, vector<128x128xbf16>, vector<72x128xf32> -> vector<72x128xf32>
    %358 = arith.addf %352, %357 : vector<72x128xf32>
    %c0_534 = arith.constant 0 : index
    %c0_535 = arith.constant 0 : index
    %c9_536 = arith.constant 9 : index
    %c768_537 = arith.constant 768 : index
    %359 = vector.load %arg1[%c0_534, %c0_535, %c9_536, %c768_537] : memref<2x2x88x896xbf16, #tpu.memory_space<vmem>>, vector<1x1x72x128xbf16>
    %360 = vector.shape_cast %359 : vector<1x1x72x128xbf16> to vector<72x128xbf16>
    %c6_538 = arith.constant 6 : index
    %c6_539 = arith.constant 6 : index
    %c0_540 = arith.constant 0 : index
    %c0_541 = arith.constant 0 : index
    %361 = vector.load %arg2[%c6_538, %c6_539, %c0_540, %c0_541] : memref<7x9x128x128xbf16, #tpu.memory_space<vmem>>, vector<1x1x128x128xbf16>
    %362 = vector.shape_cast %361 : vector<1x1x128x128xbf16> to vector<128x128xbf16>
    %cst_542 = arith.constant dense<0.000000e+00> : vector<72x128xf32>
    %363 = tpu.matmul %360, %362, %cst_542 {dimension_numbers = #tpu.dot_dimension_numbers<[1], [0], [0], [1], [0, 0, 1, 1], [], []>} : vector<72x128xbf16>, vector<128x128xbf16>, vector<72x128xf32> -> vector<72x128xf32>
    %364 = arith.addf %358, %363 : vector<72x128xf32>
    %c0_543 = arith.constant 0 : index
    %c1_544 = arith.constant 1 : index
    %c9_545 = arith.constant 9 : index
    %c768_546 = arith.constant 768 : index
    %365 = vector.load %arg1[%c0_543, %c1_544, %c9_545, %c768_546] : memref<2x2x88x896xbf16, #tpu.memory_space<vmem>>, vector<1x1x72x128xbf16>
    %366 = vector.shape_cast %365 : vector<1x1x72x128xbf16> to vector<72x128xbf16>
    %c6_547 = arith.constant 6 : index
    %c7_548 = arith.constant 7 : index
    %c0_549 = arith.constant 0 : index
    %c0_550 = arith.constant 0 : index
    %367 = vector.load %arg2[%c6_547, %c7_548, %c0_549, %c0_550] : memref<7x9x128x128xbf16, #tpu.memory_space<vmem>>, vector<1x1x128x128xbf16>
    %368 = vector.shape_cast %367 : vector<1x1x128x128xbf16> to vector<128x128xbf16>
    %cst_551 = arith.constant dense<0.000000e+00> : vector<72x128xf32>
    %369 = tpu.matmul %366, %368, %cst_551 {dimension_numbers = #tpu.dot_dimension_numbers<[1], [0], [0], [1], [0, 0, 1, 1], [], []>} : vector<72x128xbf16>, vector<128x128xbf16>, vector<72x128xf32> -> vector<72x128xf32>
    %370 = arith.addf %364, %369 : vector<72x128xf32>
    %c0_552 = arith.constant 0 : index
    %c0_553 = arith.constant 0 : index
    %c10_554 = arith.constant 10 : index
    %c768_555 = arith.constant 768 : index
    %371 = vector.load %arg1[%c0_552, %c0_553, %c10_554, %c768_555] : memref<2x2x88x896xbf16, #tpu.memory_space<vmem>>, vector<1x1x72x128xbf16>
    %372 = vector.shape_cast %371 : vector<1x1x72x128xbf16> to vector<72x128xbf16>
    %c6_556 = arith.constant 6 : index
    %c8_557 = arith.constant 8 : index
    %c0_558 = arith.constant 0 : index
    %c0_559 = arith.constant 0 : index
    %373 = vector.load %arg2[%c6_556, %c8_557, %c0_558, %c0_559] : memref<7x9x128x128xbf16, #tpu.memory_space<vmem>>, vector<1x1x128x128xbf16>
    %374 = vector.shape_cast %373 : vector<1x1x128x128xbf16> to vector<128x128xbf16>
    %cst_560 = arith.constant dense<0.000000e+00> : vector<72x128xf32>
    %375 = tpu.matmul %372, %374, %cst_560 {dimension_numbers = #tpu.dot_dimension_numbers<[1], [0], [0], [1], [0, 0, 1, 1], [], []>} : vector<72x128xbf16>, vector<128x128xbf16>, vector<72x128xf32> -> vector<72x128xf32>
    %376 = arith.addf %370, %375 : vector<72x128xf32>
    %c0_561 = arith.constant 0 : index
    %c768_562 = arith.constant 768 : index
    %377 = vector.load %arg3[%c0_561, %c768_562] : memref<72x896xf32, #tpu.memory_space<vmem>>, vector<72x128xf32>
    tpu.vector_store %arg3[%c0_561, %c768_562], %376 {strides = array<i32>} : memref<72x896xf32, #tpu.memory_space<vmem>>, vector<72x128xf32>,
    return
  }
  func.func @transform_0(%arg0: i32) -> (i32, i32, i32, i32) {
    %c0_i32 = arith.constant 0 : i32
    %c0_i32_0 = arith.constant 0 : i32
    %c0_i32_1 = arith.constant 0 : i32
    %c0_i32_2 = arith.constant 0 : i32
    return %c0_i32, %c0_i32_0, %c0_i32_1, %arg0 : i32, i32, i32, i32
  }
  func.func @transform_1(%arg0: i32) -> (i32, i32, i32, i32) {
    %c0_i32 = arith.constant 0 : i32
    %c0_i32_0 = arith.constant 0 : i32
    %c0_i32_1 = arith.constant 0 : i32
    %c0_i32_2 = arith.constant 0 : i32
    return %arg0, %c0_i32, %c0_i32_0, %c0_i32_1 : i32, i32, i32, i32
  }
  func.func @transform_2(%arg0: i32) -> (i32, i32) {
    %c0_i32 = arith.constant 0 : i32
    %c0_i32_0 = arith.constant 0 : i32
    return %c0_i32, %arg0 : i32, i32
  }
}

</mosaic_0001>

<llo_original>
// kernel: _conv.1
$region0: #{_conv.1}
  #allocation0 [shape = 'u32[]', space=smem, size = 0x4, offset = 0x4, fixed_abs, tag = 'smem constant byte address 0x4 - core index']
  #allocation1 [shape = 'u32[144,128]{1,0:T(1,128)}', space=vmem, size = 0x12000, scoped, tag = 'internal scratch']
  %s0 = inlined_call_operand.vmem [shape: bf16[2,2,88,896], index: 0, kind: input, shape index: {}]
  %s1 = inlined_call_operand.vmem [shape: bf16[7,9,128,128], index: 1, kind: input, shape index: {}]
  %s2 = inlined_call_operand.vmem [shape: f32[72,896], index: 2, kind: output, shape index: {}]
  %s3 = sld [smem:[#allocation0]]
  $region18: #{_conv.1} parent=0
    _
  %s5 = ssub.s32 1, %s3
  %s6 = scalar_select 0, %s5, %s3
  // Predicated region
  $region2: #{_conv.1} parent=0 // pred_check
    _
  $region3: #{_conv.1} parent=0 // pred_check_branch
    %8 = sbr.rel (0) target = $region5
  $region4: #{_conv.1} parent=0 // pred_region
    _
  $region5: #{_conv.1} parent=0 // pred_fallthru
    _
  // Predicated region
  $region6: #{_conv.1} parent=0 // pred_check
    _
  $region7: #{_conv.1} parent=0 // pred_check_branch
    %10 = sbr.rel (0) target = $region9
  $region8: #{_conv.1} parent=0 // pred_region
    _
  $region9: #{_conv.1} parent=0 // pred_fallthru
    _
  %v12 = vld [vmem:[%s0] sm:$0xf]
  %v13 = vld [vmem:[%s0 + $0x1c] sm:$0xf]
  %v14 = vld [vmem:[%s0 + $0x38] sm:$0xf]
  %v15 = vld [vmem:[%s0 + $0x54] sm:$0xf]
  %v16 = vld [vmem:[%s0 + $0x70] sm:$0xf]
  %v17 = vld [vmem:[%s0 + $0x8c] sm:$0xf]
  %v18 = vld [vmem:[%s0 + $0xa8] sm:$0xf]
  %v19 = vld [vmem:[%s0 + $0xc4] sm:$0xf]
  %v20 = vld [vmem:[%s0 + $0xe0] sm:$0xf]
  %v21 = vld [vmem:[%s1] sm:$0xf]
  %v22 = vld [vmem:[%s1 + $0x4] sm:$0xf]
  %v23 = vld [vmem:[%s1 + $0x8] sm:$0xf]
  %v24 = vld [vmem:[%s1 + $0xc] sm:$0xf]
  %v25 = vld [vmem:[%s1 + $0x10] sm:$0xf]
  %v26 = vld [vmem:[%s1 + $0x14] sm:$0xf]
  %v27 = vld [vmem:[%s1 + $0x18] sm:$0xf]
  %v28 = vld [vmem:[%s1 + $0x1c] sm:$0xf]
  %v29 = vld [vmem:[%s1 + $0x20] sm:$0xf]
  %v30 = vld [vmem:[%s1 + $0x24] sm:$0xf]
  %v31 = vld [vmem:[%s1 + $0x28] sm:$0xf]
  %v32 = vld [vmem:[%s1 + $0x2c] sm:$0xf]
  %v33 = vld [vmem:[%s1 + $0x30] sm:$0xf]
  %v34 = vld [vmem:[%s1 + $0x34] sm:$0xf]
  %v35 = vld [vmem:[%s1 + $0x38] sm:$0xf]
  %v36 = vld [vmem:[%s1 + $0x3c] sm:$0xf]
  %s37 = scalar_lea.vmem %s0, 308
  %v38 = vld [vmem:[%s37] sm:$0xf]
  %v39 = vld [vmem:[%s37 + $0x1c] sm:$0xf]
  %v40 = vld [vmem:[%s37 + $0x38] sm:$0xf]
  %v41 = vld [vmem:[%s37 + $0x54] sm:$0xf]
  %v42 = vld [vmem:[%s37 + $0x70] sm:$0xf]
  %v43 = vld [vmem:[%s37 + $0x8c] sm:$0xf]
  %v44 = vld [vmem:[%s37 + $0xa8] sm:$0xf]
  %v45 = vld [vmem:[%s37 + $0xc4] sm:$0xf]
  %v46 = vld [vmem:[%s37 + $0xe0] sm:$0xf]
  %s47 = scalar_lea.vmem %s1, 64
  %v48 = vld [vmem:[%s47] sm:$0xf]
  %v49 = vld [vmem:[%s47 + $0x4] sm:$0xf]
  %v50 = vld [vmem:[%s47 + $0x8] sm:$0xf]
  %v51 = vld [vmem:[%s47 + $0xc] sm:$0xf]
  %v52 = vld [vmem:[%s47 + $0x10] sm:$0xf]
  %v53 = vld [vmem:[%s47 + $0x14] sm:$0xf]
  %v54 = vld [vmem:[%s47 + $0x18] sm:$0xf]
  %v55 = vld [vmem:[%s47 + $0x1c] sm:$0xf]
  %v56 = vld [vmem:[%s47 + $0x20] sm:$0xf]
  %v57 = vld [vmem:[%s47 + $0x24] sm:$0xf]
  %v58 = vld [vmem:[%s47 + $0x28] sm:$0xf]
  %v59 = vld [vmem:[%s47 + $0x2c] sm:$0xf]
  %v60 = vld [vmem:[%s47 + $0x30] sm:$0xf]
  %v61 = vld [vmem:[%s47 + $0x34] sm:$0xf]
  %v62 = vld [vmem:[%s47 + $0x38] sm:$0xf]
  %v63 = vld [vmem:[%s47 + $0x3c] sm:$0xf]
  %v73 = vunpack.c.l.b16 %v38
  %v74 = vunpack.c.l.b16 %v39
  %v75 = vunpack.c.l.b16 %v40
  %v76 = vunpack.c.l.b16 %v41
  %v77 = vunpack.c.l.b16 %v42
  %v78 = vunpack.c.l.b16 %v43
  %v79 = vunpack.c.l.b16 %v44
  %v80 = vunpack.c.l.b16 %v45
  %v81 = vunpack.c.l.b16 %v46
  %v82 = vpack.c.b16 %v74, %v73
  %v83 = vpack.c.b16 %v76, %v75
  %v84 = vpack.c.b16 %v78, %v77
  %v85 = vpack.c.b16 %v80, %v79
  %v86 = vpack.c.b16 %v81, %v81
  %v108 = vunpack.c.l.b16 %v48
  %v109 = vunpack.c.l.b16 %v49
  %v110 = vunpack.c.l.b16 %v50
  %v111 = vunpack.c.l.b16 %v51
  %v112 = vunpack.c.l.b16 %v52
  %v113 = vunpack.c.l.b16 %v53
  %v114 = vunpack.c.l.b16 %v54
  %v115 = vunpack.c.l.b16 %v55
  %v116 = vunpack.c.l.b16 %v56
  %v117 = vunpack.c.l.b16 %v57
  %v118 = vunpack.c.l.b16 %v58
  %v119 = vunpack.c.l.b16 %v59
  %v120 = vunpack.c.l.b16 %v60
  %v121 = vunpack.c.l.b16 %v61
  %v122 = vunpack.c.l.b16 %v62
  %v123 = vunpack.c.l.b16 %v63
  %v124 = vpack.c.b16 %v109, %v108
  %v125 = vpack.c.b16 %v111, %v110
  %v126 = vpack.c.b16 %v113, %v112
  %v127 = vpack.c.b16 %v115, %v114
  %v128 = vpack.c.b16 %v117, %v116
  %v129 = vpack.c.b16 %v119, %v118
  %v130 = vpack.c.b16 %v121, %v120
  %v131 = vpack.c.b16 %v123, %v122
  %140 = vmatprep.subr.bf16.mxu0 0
  %141 = vmatpush1.bf16.msra.mxu0 %v131
  %142 = vmatprep.subr.bf16.mxu0 0
  %143 = vmatpush1.bf16.msra.mxu0 %v130
  %144 = vmatprep.subr.bf16.mxu0 0
  %145 = vmatpush1.bf16.msra.mxu0 %v129
  %146 = vmatprep.subr.bf16.mxu0 0
  %147 = vmatpush1.bf16.msra.mxu0 %v128
  %148 = vmatprep.subr.bf16.mxu0 0
  %149 = vmatpush1.bf16.msra.mxu0 %v127
  %150 = vmatprep.subr.bf16.mxu0 0
  %151 = vmatpush1.bf16.msra.mxu0 %v126
  %152 = vmatprep.subr.bf16.mxu0 0
  %153 = vmatpush1.bf16.msra.mxu0 %v125
  %154 = vmatprep.subr.bf16.mxu0 0
  %155 = vmatpush1.bf16.msra.mxu0 %v124
  %156 = vmatprep.subr.bf16.mxu0 0
  %157 = vmatpush2.bf16.msra.mxu0 0
  %158 = vmatprep.subr.bf16.mxu0 0
  %159 = vmatpush2.bf16.msra.mxu0 0
  %160 = vmatprep.subr.bf16.mxu0 0
  %161 = vmatpush2.bf16.msra.mxu0 0
  %162 = vmatprep.subr.bf16.mxu0 0
  %163 = vmatpush2.bf16.msra.mxu0 0
  %164 = vmatprep.subr.bf16.mxu0 0
  %165 = vmatpush2.bf16.msra.mxu0 0
  %166 = vmatprep.subr.bf16.mxu0 0
  %167 = vmatpush2.bf16.msra.mxu0 0
  %168 = vmatprep.subr.bf16.mxu0 0
  %169 = vmatpush2.bf16.msra.mxu0 0
  %170 = vmatprep.subr.bf16.mxu0 0
  %171 = vmatpush2.bf16.msra.mxu0 0
  %172 = vmatprep.mubr.bf16.mxu0 0
  %173 = vmatmul.mubr.bf16.gmra.mxu0 %v82
  %v174 = vpop.f32.mrf.mxu0
  %v175 = vadd.f32 0.0, %v174
  %v176 = vpop.f32.mrf.mxu0
  %v177 = vpop.f32.mrf.mxu0
  %v178 = vadd.f32 0.0, %v177
  %v179 = vpop.f32.mrf.mxu0
  %180 = vmatprep.mubr.bf16.mxu0 0
  %181 = vmatmul.mubr.bf16.gmra.mxu0 %v83
  %v182 = vpop.f32.mrf.mxu0
  %v183 = vadd.f32 0.0, %v182
  %v184 = vpop.f32.mrf.mxu0
  %v185 = vpop.f32.mrf.mxu0
  %v186 = vadd.f32 0.0, %v185
  %v187 = vpop.f32.mrf.mxu0
  %188 = vmatprep.mubr.bf16.mxu0 0
  %189 = vmatmul.mubr.bf16.gmra.mxu0 %v84
  %v190 = vpop.f32.mrf.mxu0
  %v191 = vadd.f32 0.0, %v190
  %v192 = vpop.f32.mrf.mxu0
  %v193 = vpop.f32.mrf.mxu0
  %v194 = vadd.f32 0.0, %v193
  %v195 = vpop.f32.mrf.mxu0
  %196 = vmatprep.mubr.bf16.mxu0 0
  %197 = vmatmul.mubr.bf16.gmra.mxu0 %v85
  %v198 = vpop.f32.mrf.mxu0
  %v199 = vadd.f32 0.0, %v198
  %v200 = vpop.f32.mrf.mxu0
  %v201 = vpop.f32.mrf.mxu0
  %v202 = vadd.f32 0.0, %v201
  %v203 = vpop.f32.mrf.mxu0
  %204 = vmatprep.mubr.bf16.mxu0 0
  %205 = vmatmul.mubr.bf16.gmra.mxu0 %v86
  %v206 = vpop.f32.mrf.mxu0
  %v207 = vadd.f32 0.0, %v206
  %v208 = vpop.f32.mrf.mxu0
  %v209 = vpop.f32.mrf.mxu0
  %v210 = vpop.f32.mrf.mxu0
  %211 = vdwg.mxu0
  %v221 = vunpack.c.l.b16 %v12
  %v222 = vunpack.c.l.b16 %v13
  %v223 = vunpack.c.l.b16 %v14
  %v224 = vunpack.c.l.b16 %v15
  %v225 = vunpack.c.l.b16 %v16
  %v226 = vunpack.c.l.b16 %v17
  %v227 = vunpack.c.l.b16 %v18
  %v228 = vunpack.c.l.b16 %v19
  %v229 = vunpack.c.l.b16 %v20
  %v230 = vpack.c.b16 %v222, %v221
  %v231 = vpack.c.b16 %v224, %v223
  %v232 = vpack.c.b16 %v226, %v225
  %v233 = vpack.c.b16 %v228, %v227
  %v234 = vpack.c.b16 %v229, %v229
  %v256 = vunpack.c.l.b16 %v21
  %v257 = vunpack.c.l.b16 %v22
  %v258 = vunpack.c.l.b16 %v23
  %v259 = vunpack.c.l.b16 %v24
  %v260 = vunpack.c.l.b16 %v25
  %v261 = vunpack.c.l.b16 %v26
  %v262 = vunpack.c.l.b16 %v27
  %v263 = vunpack.c.l.b16 %v28
  %v264 = vunpack.c.l.b16 %v29
  %v265 = vunpack.c.l.b16 %v30
  %v266 = vunpack.c.l.b16 %v31
  %v267 = vunpack.c.l.b16 %v32
  %v268 = vunpack.c.l.b16 %v33
  %v269 = vunpack.c.l.b16 %v34
  %v270 = vunpack.c.l.b16 %v35
  %v271 = vunpack.c.l.b16 %v36
  %v272 = vpack.c.b16 %v257, %v256
  %v273 = vpack.c.b16 %v259, %v258
  %v274 = vpack.c.b16 %v261, %v260
  %v275 = vpack.c.b16 %v263, %v262
  %v276 = vpack.c.b16 %v265, %v264
  %v277 = vpack.c.b16 %v267, %v266
  %v278 = vpack.c.b16 %v269, %v268
  %v279 = vpack.c.b16 %v271, %v270
  %288 = vmatprep.subr.bf16.mxu0 0
  %289 = vmatpush1.bf16.msra.mxu0 %v279
  %290 = vmatprep.subr.bf16.mxu0 0
  %291 = vmatpush1.bf16.msra.mxu0 %v278
  %292 = vmatprep.subr.bf16.mxu0 0
  %293 = vmatpush1.bf16.msra.mxu0 %v277
  %294 = vmatprep.subr.bf16.mxu0 0
  %295 = vmatpush1.bf16.msra.mxu0 %v276
  %296 = vmatprep.subr.bf16.mxu0 0
  %297 = vmatpush1.bf16.msra.mxu0 %v275
  %298 = vmatprep.subr.bf16.mxu0 0
  %299 = vmatpush1.bf16.msra.mxu0 %v274
  %300 = vmatprep.subr.bf16.mxu0 0
  %301 = vmatpush1.bf16.msra.mxu0 %v273
  %302 = vmatprep.subr.bf16.mxu0 0
  %303 = vmatpush1.bf16.msra.mxu0 %v272
  %304 = vmatprep.subr.bf16.mxu0 0
  %305 = vmatpush2.bf16.msra.mxu0 0
  %306 = vmatprep.subr.bf16.mxu0 0
  %307 = vmatpush2.bf16.msra.mxu0 0
  %308 = vmatprep.subr.bf16.mxu0 0
  %309 = vmatpush2.bf16.msra.mxu0 0
  %310 = vmatprep.subr.bf16.mxu0 0
  %311 = vmatpush2.bf16.msra.mxu0 0
  %312 = vmatprep.subr.bf16.mxu0 0
  %313 = vmatpush2.bf16.msra.mxu0 0
  %314 = vmatprep.subr.bf16.mxu0 0
  %315 = vmatpush2.bf16.msra.mxu0 0
  %316 = vmatprep.subr.bf16.mxu0 0
  %317 = vmatpush2.bf16.msra.mxu0 0
  %318 = vmatprep.subr.bf16.mxu0 0
  %319 = vmatpush2.bf16.msra.mxu0 0
  %320 = vmatprep.mubr.bf16.mxu0 0
  %321 = vmatmul.mubr.bf16.gmra.mxu0 %v230
  %v322 = vpop.f32.mrf.mxu0
  %v323 = vadd.f32 %v175, %v322
  %v324 = vpop.f32.mrf.mxu0
  %v325 = vpop.f32.mrf.mxu0
  %v326 = vadd.f32 %v178, %v325
  %v327 = vpop.f32.mrf.mxu0
  %328 = vmatprep.mubr.bf16.mxu0 0
  %329 = vmatmul.mubr.bf16.gmra.mxu0 %v231
  %v330 = vpop.f32.mrf.mxu0
  %v331 = vadd.f32 %v183, %v330
  %v332 = vpop.f32.mrf.mxu0
  %v333 = vpop.f32.mrf.mxu0
  %v334 = vadd.f32 %v186, %v333
  %v335 = vpop.f32.mrf.mxu0
  %336 = vmatprep.mubr.bf16.mxu0 0
  %337 = vmatmul.mubr.bf16.gmra.mxu0 %v232
  %v338 = vpop.f32.mrf.mxu0
  %v339 = vadd.f32 %v191, %v338
  %v340 = vpop.f32.mrf.mxu0
  %v341 = vpop.f32.mrf.mxu0
  %v342 = vadd.f32 %v194, %v341
  %v343 = vpop.f32.mrf.mxu0
  %344 = vmatprep.mubr.bf16.mxu0 0
  %345 = vmatmul.mubr.bf16.gmra.mxu0 %v233
  %v346 = vpop.f32.mrf.mxu0
  %v347 = vadd.f32 %v199, %v346
  %v348 = vpop.f32.mrf.mxu0
  %v349 = vpop.f32.mrf.mxu0
  %v350 = vadd.f32 %v202, %v349
  %v351 = vpop.f32.mrf.mxu0
  %352 = vmatprep.mubr.bf16.mxu0 0
  %353 = vmatmul.mubr.bf16.gmra.mxu0 %v234
  %v354 = vpop.f32.mrf.mxu0
  %v355 = vadd.f32 %v207, %v354
  %v356 = vpop.f32.mrf.mxu0
  %v357 = vpop.f32.mrf.mxu0
  %v358 = vpop.f32.mrf.mxu0
  %359 = vdwg.mxu0
  %v360 = vld [vmem:[%s0] sm:$0xf]
  %v361 = vld [vmem:[%s0 + $0x1c] sm:$0xf]
  %v362 = vld [vmem:[%s0 + $0x38] sm:$0xf]
  %v363 = vld [vmem:[%s0 + $0x54] sm:$0xf]
  %v364 = vld [vmem:[%s0 + $0x70] sm:$0xf]
  %v365 = vld [vmem:[%s0 + $0x8c] sm:$0xf]
  %v366 = vld [vmem:[%s0 + $0xa8] sm:$0xf]
  %v367 = vld [vmem:[%s0 + $0xc4] sm:$0xf]
  %v368 = vld [vmem:[%s0 + $0xe0] sm:$0xf]
  %v369 = vld [vmem:[%s0 + $0xfc] sm:$0x1]
  %s370 = scalar_lea.vmem %s1, 128
  %v371 = vld [vmem:[%s370] sm:$0xf]
  %v372 = vld [vmem:[%s370 + $0x4] sm:$0xf]
  %v373 = vld [vmem:[%s370 + $0x8] sm:$0xf]
  %v374 = vld [vmem:[%s370 + $0xc] sm:$0xf]
  %v375 = vld [vmem:[%s370 + $0x10] sm:$0xf]
  %v376 = vld [vmem:[%s370 + $0x14] sm:$0xf]
  %v377 = vld [vmem:[%s370 + $0x18] sm:$0xf]
  %v378 = vld [vmem:[%s370 + $0x1c] sm:$0xf]
  %v379 = vld [vmem:[%s370 + $0x20] sm:$0xf]
  %v380 = vld [vmem:[%s370 + $0x24] sm:$0xf]
  %v381 = vld [vmem:[%s370 + $0x28] sm:$0xf]
  %v382 = vld [vmem:[%s370 + $0x2c] sm:$0xf]
  %v383 = vld [vmem:[%s370 + $0x30] sm:$0xf]
  %v384 = vld [vmem:[%s370 + $0x34] sm:$0xf]
  %v385 = vld [vmem:[%s370 + $0x38] sm:$0xf]
  %v386 = vld [vmem:[%s370 + $0x3c] sm:$0xf]
  %v397 = vunpack.c.l.b16 %v360
  %v398 = vunpack.c.l.b16 %v361
  %v399 = vunpack.c.l.b16 %v362
  %v400 = vunpack.c.l.b16 %v363
  %v401 = vunpack.c.l.b16 %v364
  %v402 = vunpack.c.l.b16 %v365
  %v403 = vunpack.c.l.b16 %v366
  %v404 = vunpack.c.l.b16 %v367
  %v405 = vunpack.c.l.b16 %v368
  %v406 = vunpack.c.l.b16 %v369
  %v407 = vpack.c.b16 %v398, %v397
  %v408 = vpack.c.b16 %v400, %v399
  %v409 = vpack.c.b16 %v402, %v401
  %v410 = vpack.c.b16 %v404, %v403
  %v411 = vpack.c.b16 %v406, %v405
  %vm412 = vsmask.f32 7424
  %v414 = vshrl.u32 %v407, 16
  %v416 = vshll.u32 %v407, 16
  %v418 = vrot.slane %v416, 1
  %v419 = vor.u32 %v414, %v418
  %v421 = vshll.u32 %v408, 16
  %v423 = vrot.slane %v421, 1
  %v424 = vsel %vm412, %v419, %v423
  %v425 = vshrl.u32 %v408, 16
  %v427 = vor.u32 %v425, %v423
  %v429 = vshll.u32 %v409, 16
  %v431 = vrot.slane %v429, 1
  %v432 = vsel %vm412, %v427, %v431
  %v433 = vshrl.u32 %v409, 16
  %v435 = vor.u32 %v433, %v431
  %v437 = vshll.u32 %v410, 16
  %v439 = vrot.slane %v437, 1
  %v440 = vsel %vm412, %v435, %v439
  %v441 = vshrl.u32 %v410, 16
  %v443 = vor.u32 %v441, %v439
  %v445 = vshll.u32 %v411, 16
  %v447 = vrot.slane %v445, 1
  %v448 = vsel %vm412, %v443, %v447
  %v449 = vshrl.u32 %v411, 16
  %v451 = vor.u32 %v449, %v447
  %v473 = vunpack.c.l.b16 %v371
  %v474 = vunpack.c.l.b16 %v372
  %v475 = vunpack.c.l.b16 %v373
  %v476 = vunpack.c.l.b16 %v374
  %v477 = vunpack.c.l.b16 %v375
  %v478 = vunpack.c.l.b16 %v376
  %v479 = vunpack.c.l.b16 %v377
  %v480 = vunpack.c.l.b16 %v378
  %v481 = vunpack.c.l.b16 %v379
  %v482 = vunpack.c.l.b16 %v380
  %v483 = vunpack.c.l.b16 %v381
  %v484 = vunpack.c.l.b16 %v382
  %v485 = vunpack.c.l.b16 %v383
  %v486 = vunpack.c.l.b16 %v384
  %v487 = vunpack.c.l.b16 %v385
  %v488 = vunpack.c.l.b16 %v386
  %v489 = vpack.c.b16 %v474, %v473
  %v490 = vpack.c.b16 %v476, %v475
  %v491 = vpack.c.b16 %v478, %v477
  %v492 = vpack.c.b16 %v480, %v479
  %v493 = vpack.c.b16 %v482, %v481
  %v494 = vpack.c.b16 %v484, %v483
  %v495 = vpack.c.b16 %v486, %v485
  %v496 = vpack.c.b16 %v488, %v487
  %505 = vmatprep.subr.bf16.mxu0 0
  %506 = vmatpush1.bf16.msra.mxu0 %v496
  %507 = vmatprep.subr.bf16.mxu0 0
  %508 = vmatpush1.bf16.msra.mxu0 %v495
  %509 = vmatprep.subr.bf16.mxu0 0
  %510 = vmatpush1.bf16.msra.mxu0 %v494
  %511 = vmatprep.subr.bf16.mxu0 0
  %512 = vmatpush1.bf16.msra.mxu0 %v493
  %513 = vmatprep.subr.bf16.mxu0 0
  %514 = vmatpush1.bf16.msra.mxu0 %v492
  %515 = vmatprep.subr.bf16.mxu0 0
  %516 = vmatpush1.bf16.msra.mxu0 %v491
  %517 = vmatprep.subr.bf16.mxu0 0
  %518 = vmatpush1.bf16.msra.mxu0 %v490
  %519 = vmatprep.subr.bf16.mxu0 0
  %520 = vmatpush1.bf16.msra.mxu0 %v489
  %521 = vmatprep.subr.bf16.mxu0 0
  %522 = vmatpush2.bf16.msra.mxu0 0
  %523 = vmatprep.subr.bf16.mxu0 0
  %524 = vmatpush2.bf16.msra.mxu0 0
  %525 = vmatprep.subr.bf16.mxu0 0
  %526 = vmatpush2.bf16.msra.mxu0 0
  %527 = vmatprep.subr.bf16.mxu0 0
  %528 = vmatpush2.bf16.msra.mxu0 0
  %529 = vmatprep.subr.bf16.mxu0 0
  %530 = vmatpush2.bf16.msra.mxu0 0
  %531 = vmatprep.subr.bf16.mxu0 0
  %532 = vmatpush2.bf16.msra.mxu0 0
  %533 = vmatprep.subr.bf16.mxu0 0
  %534 = vmatpush2.bf16.msra.mxu0 0
  %535 = vmatprep.subr.bf16.mxu0 0
  %536 = vmatpush2.bf16.msra.mxu0 0
  %537 = vmatprep.mubr.bf16.mxu0 0
  %538 = vmatmul.mubr.bf16.gmra.mxu0 %v424
  %v539 = vpop.f32.mrf.mxu0
  %v540 = vadd.f32 0.0, %v539
  %v541 = vpop.f32.mrf.mxu0
  %v542 = vpop.f32.mrf.mxu0
  %v543 = vadd.f32 0.0, %v542
  %v544 = vpop.f32.mrf.mxu0
  %545 = vmatprep.mubr.bf16.mxu0 0
  %546 = vmatmul.mubr.bf16.gmra.mxu0 %v432
  %v547 = vpop.f32.mrf.mxu0
  %v548 = vadd.f32 0.0, %v547
  %v549 = vpop.f32.mrf.mxu0
  %v550 = vpop.f32.mrf.mxu0
  %v551 = vadd.f32 0.0, %v550
  %v552 = vpop.f32.mrf.mxu0
  %553 = vmatprep.mubr.bf16.mxu0 0
  %554 = vmatmul.mubr.bf16.gmra.mxu0 %v440
  %v555 = vpop.f32.mrf.mxu0
  %v556 = vadd.f32 0.0, %v555
  %v557 = vpop.f32.mrf.mxu0
  %v558 = vpop.f32.mrf.mxu0
  %v559 = vadd.f32 0.0, %v558
  %v560 = vpop.f32.mrf.mxu0
  %561 = vmatprep.mubr.bf16.mxu0 0
  %562 = vmatmul.mubr.bf16.gmra.mxu0 %v448
  %v563 = vpop.f32.mrf.mxu0
  %v564 = vadd.f32 0.0, %v563
  %v565 = vpop.f32.mrf.mxu0
  %v566 = vpop.f32.mrf.mxu0
  %v567 = vadd.f32 0.0, %v566
  %v568 = vpop.f32.mrf.mxu0
  %569 = vmatprep.mubr.bf16.mxu0 0
  %570 = vmatmul.mubr.bf16.gmra.mxu0 %v451
  %v571 = vpop.f32.mrf.mxu0
  %v572 = vadd.f32 0.0, %v571
  %v573 = vpop.f32.mrf.mxu0
  %v574 = vpop.f32.mrf.mxu0
  %v575 = vpop.f32.mrf.mxu0
  %576 = vdwg.mxu0
  %v577 = vadd.f32 %v323, %v540
  %v578 = vadd.f32 %v326, %v543
  %v579 = vadd.f32 %v331, %v548
  %v580 = vadd.f32 %v334, %v551
  %v581 = vadd.f32 %v339, %v556
  %v582 = vadd.f32 %v342, %v559
  %v583 = vadd.f32 %v347, %v564
  %v584 = vadd.f32 %v350, %v567
  %v585 = vadd.f32 %v355, %v572
  %s586 = scalar_lea.vmem %s0, 616
  %v587 = vld [vmem:[%s586] sm:$0xf]
  %v588 = vld [vmem:[%s586 + $0x1c] sm:$0xf]
  %v589 = vld [vmem:[%s586 + $0x38] sm:$0xf]
  %v590 = vld [vmem:[%s586 + $0x54] sm:$0xf]
  %v591 = vld [vmem:[%s586 + $0x70] sm:$0xf]
  %v592 = vld [vmem:[%s586 + $0x8c] sm:$0xf]
  %v593 = vld [vmem:[%s586 + $0xa8] sm:$0xf]
  %v594 = vld [vmem:[%s586 + $0xc4] sm:$0xf]
  %v595 = vld [vmem:[%s586 + $0xe0] sm:$0xf]
  %s596 = scalar_lea.vmem %s1, 192
  %v597 = vld [vmem:[%s596] sm:$0xf]
  %v598 = vld [vmem:[%s596 + $0x4] sm:$0xf]
  %v599 = vld [vmem:[%s596 + $0x8] sm:$0xf]
  %v600 = vld [vmem:[%s596 + $0xc] sm:$0xf]
  %v601 = vld [vmem:[%s596 + $0x10] sm:$0xf]
  %v602 = vld [vmem:[%s596 + $0x14] sm:$0xf]
  %v603 = vld [vmem:[%s596 + $0x18] sm:$0xf]
  %v604 = vld [vmem:[%s596 + $0x1c] sm:$0xf]
  %v605 = vld [vmem:[%s596 + $0x20] sm:$0xf]
  %v606 = vld [vmem:[%s596 + $0x24] sm:$0xf]
  %v607 = vld [vmem:[%s596 + $0x28] sm:$0xf]
  %v608 = vld [vmem:[%s596 + $0x2c] sm:$0xf]
  %v609 = vld [vmem:[%s596 + $0x30] sm:$0xf]
  %v610 = vld [vmem:[%s596 + $0x34] sm:$0xf]
  %v611 = vld [vmem:[%s596 + $0x38] sm:$0xf]
  %v612 = vld [vmem:[%s596 + $0x3c] sm:$0xf]
  %v622 = vunpack.c.l.b16 %v587
  %v623 = vunpack.c.l.b16 %v588
  %v624 = vunpack.c.l.b16 %v589
  %v625 = vunpack.c.l.b16 %v590
  %v626 = vunpack.c.l.b16 %v591
  %v627 = vunpack.c.l.b16 %v592
  %v628 = vunpack.c.l.b16 %v593
  %v629 = vunpack.c.l.b16 %v594
  %v630 = vunpack.c.l.b16 %v595
  %v631 = vpack.c.b16 %v623, %v622
  %v632 = vpack.c.b16 %v625, %v624
  %v633 = vpack.c.b16 %v627, %v626
  %v634 = vpack.c.b16 %v629, %v628
  %v635 = vpack.c.b16 %v630, %v630
  %v657 = vunpack.c.l.b16 %v597
  %v658 = vunpack.c.l.b16 %v598
  %v659 = vunpack.c.l.b16 %v599
  %v660 = vunpack.c.l.b16 %v600
  %v661 = vunpack.c.l.b16 %v601
  %v662 = vunpack.c.l.b16 %v602
  %v663 = vunpack.c.l.b16 %v603
  %v664 = vunpack.c.l.b16 %v604
  %v665 = vunpack.c.l.b16 %v605
  %v666 = vunpack.c.l.b16 %v606
  %v667 = vunpack.c.l.b16 %v607
  %v668 = vunpack.c.l.b16 %v608
  %v669 = vunpack.c.l.b16 %v609
  %v670 = vunpack.c.l.b16 %v610
  %v671 = vunpack.c.l.b16 %v611
  %v672 = vunpack.c.l.b16 %v612
  %v673 = vpack.c.b16 %v658, %v657
  %v674 = vpack.c.b16 %v660, %v659
  %v675 = vpack.c.b16 %v662, %v661
  %v676 = vpack.c.b16 %v664, %v663
  %v677 = vpack.c.b16 %v666, %v665
  %v678 = vpack.c.b16 %v668, %v667
  %v679 = vpack.c.b16 %v670, %v669
  %v680 = vpack.c.b16 %v672, %v671
  %689 = vmatprep.subr.bf16.mxu0 0
  %690 = vmatpush1.bf16.msra.mxu0 %v680
  %691 = vmatprep.subr.bf16.mxu0 0
  %692 = vmatpush1.bf16.msra.mxu0 %v679
  %693 = vmatprep.subr.bf16.mxu0 0
  %694 = vmatpush1.bf16.msra.mxu0 %v678
  %695 = vmatprep.subr.bf16.mxu0 0
  %696 = vmatpush1.bf16.msra.mxu0 %v677
  %697 = vmatprep.subr.bf16.mxu0 0
  %698 = vmatpush1.bf16.msra.mxu0 %v676
  %699 = vmatprep.subr.bf16.mxu0 0
  %700 = vmatpush1.bf16.msra.mxu0 %v675
  %701 = vmatprep.subr.bf16.mxu0 0
  %702 = vmatpush1.bf16.msra.mxu0 %v674
  %703 = vmatprep.subr.bf16.mxu0 0
  %704 = vmatpush1.bf16.msra.mxu0 %v673
  %705 = vmatprep.subr.bf16.mxu0 0
  %706 = vmatpush2.bf16.msra.mxu0 0
  %707 = vmatprep.subr.bf16.mxu0 0
  %708 = vmatpush2.bf16.msra.mxu0 0
  %709 = vmatprep.subr.bf16.mxu0 0
  %710 = vmatpush2.bf16.msra.mxu0 0
  %711 = vmatprep.subr.bf16.mxu0 0
  %712 = vmatpush2.bf16.msra.mxu0 0
  %713 = vmatprep.subr.bf16.mxu0 0
  %714 = vmatpush2.bf16.msra.mxu0 0
  %715 = vmatprep.subr.bf16.mxu0 0
  %716 = vmatpush2.bf16.msra.mxu0 0
  %717 = vmatprep.subr.bf16.mxu0 0
  %718 = vmatpush2.bf16.msra.mxu0 0
  %719 = vmatprep.subr.bf16.mxu0 0
  %720 = vmatpush2.bf16.msra.mxu0 0
  %721 = vmatprep.mubr.bf16.mxu0 0
  %722 = vmatmul.mubr.bf16.gmra.mxu0 %v631
  %v723 = vpop.f32.mrf.mxu0
  %v724 = vadd.f32 0.0, %v723
  %v725 = vpop.f32.mrf.mxu0
  %v726 = vpop.f32.mrf.mxu0
  %v727 = vadd.f32 0.0, %v726
  %v728 = vpop.f32.mrf.mxu0
  %729 = vmatprep.mubr.bf16.mxu0 0
  %730 = vmatmul.mubr.bf16.gmra.mxu0 %v632
  %v731 = vpop.f32.mrf.mxu0
  %v732 = vadd.f32 0.0, %v731
  %v733 = vpop.f32.mrf.mxu0
  %v734 = vpop.f32.mrf.mxu0
  %v735 = vadd.f32 0.0, %v734
  %v736 = vpop.f32.mrf.mxu0
  %737 = vmatprep.mubr.bf16.mxu0 0
  %738 = vmatmul.mubr.bf16.gmra.mxu0 %v633
  %v739 = vpop.f32.mrf.mxu0
  %v740 = vadd.f32 0.0, %v739
  %v741 = vpop.f32.mrf.mxu0
  %v742 = vpop.f32.mrf.mxu0
  %v743 = vadd.f32 0.0, %v742
  %v744 = vpop.f32.mrf.mxu0
  %745 = vmatprep.mubr.bf16.mxu0 0
  %746 = vmatmul.mubr.bf16.gmra.mxu0 %v634
  %v747 = vpop.f32.mrf.mxu0
  %v748 = vadd.f32 0.0, %v747
  %v749 = vpop.f32.mrf.mxu0
  %v750 = vpop.f32.mrf.mxu0
  %v751 = vadd.f32 0.0, %v750
  %v752 = vpop.f32.mrf.mxu0
  %753 = vmatprep.mubr.bf16.mxu0 0
  %754 = vmatmul.mubr.bf16.gmra.mxu0 %v635
  %v755 = vpop.f32.mrf.mxu0
  %v756 = vadd.f32 0.0, %v755
  %v757 = vpop.f32.mrf.mxu0
  %v758 = vpop.f32.mrf.mxu0
  %v759 = vpop.f32.mrf.mxu0
  %760 = vdwg.mxu0
  %v761 = vadd.f32 %v577, %v724
  %v762 = vadd.f32 %v578, %v727
  %v763 = vadd.f32 %v579, %v732
  %v764 = vadd.f32 %v580, %v735
  %v765 = vadd.f32 %v581, %v740
  %v766 = vadd.f32 %v582, %v743
  %v767 = vadd.f32 %v583, %v748
  %v768 = vadd.f32 %v584, %v751
  %v769 = vadd.f32 %v585, %v756
  %s770 = scalar_lea.vmem %s0, 924
  %v771 = vld [vmem:[%s770] sm:$0xf]
  %v772 = vld [vmem:[%s770 + $0x1c] sm:$0xf]
  %v773 = vld [vmem:[%s770 + $0x38] sm:$0xf]
  %v774 = vld [vmem:[%s770 + $0x54] sm:$0xf]
  %v775 = vld [vmem:[%s770 + $0x70] sm:$0xf]
  %v776 = vld [vmem:[%s770 + $0x8c] sm:$0xf]
  %v777 = vld [vmem:[%s770 + $0xa8] sm:$0xf]
  %v778 = vld [vmem:[%s770 + $0xc4] sm:$0xf]
  %v779 = vld [vmem:[%s770 + $0xe0] sm:$0xf]
  %s780 = scalar_lea.vmem %s1, 256
  %v781 = vld [vmem:[%s780] sm:$0xf]
  %v782 = vld [vmem:[%s780 + $0x4] sm:$0xf]
  %v783 = vld [vmem:[%s780 + $0x8] sm:$0xf]
  %v784 = vld [vmem:[%s780 + $0xc] sm:$0xf]
  %v785 = vld [vmem:[%s780 + $0x10] sm:$0xf]
  %v786 = vld [vmem:[%s780 + $0x14] sm:$0xf]
  %v787 = vld [vmem:[%s780 + $0x18] sm:$0xf]
  %v788 = vld [vmem:[%s780 + $0x1c] sm:$0xf]
  %v789 = vld [vmem:[%s780 + $0x20] sm:$0xf]
  %v790 = vld [vmem:[%s780 + $0x24] sm:$0xf]
  %v791 = vld [vmem:[%s780 + $0x28] sm:$0xf]
  %v792 = vld [vmem:[%s780 + $0x2c] sm:$0xf]
  %v793 = vld [vmem:[%s780 + $0x30] sm:$0xf]
  %v794 = vld [vmem:[%s780 + $0x34] sm:$0xf]
  %v795 = vld [vmem:[%s780 + $0x38] sm:$0xf]
  %v796 = vld [vmem:[%s780 + $0x3c] sm:$0xf]
  %v806 = vunpack.c.l.b16 %v771
  %v807 = vunpack.c.l.b16 %v772
  %v808 = vunpack.c.l.b16 %v773
  %v809 = vunpack.c.l.b16 %v774
  %v810 = vunpack.c.l.b16 %v775
  %v811 = vunpack.c.l.b16 %v776
  %v812 = vunpack.c.l.b16 %v777
  %v813 = vunpack.c.l.b16 %v778
  %v814 = vunpack.c.l.b16 %v779
  %v815 = vpack.c.b16 %v807, %v806
  %v816 = vpack.c.b16 %v809, %v808
  %v817 = vpack.c.b16 %v811, %v810
  %v818 = vpack.c.b16 %v813, %v812
  %v819 = vpack.c.b16 %v814, %v814
  %v841 = vunpack.c.l.b16 %v781
  %v842 = vunpack.c.l.b16 %v782
  %v843 = vunpack.c.l.b16 %v783
  %v844 = vunpack.c.l.b16 %v784
  %v845 = vunpack.c.l.b16 %v785
  %v846 = vunpack.c.l.b16 %v786
  %v847 = vunpack.c.l.b16 %v787
  %v848 = vunpack.c.l.b16 %v788
  %v849 = vunpack.c.l.b16 %v789
  %v850 = vunpack.c.l.b16 %v790
  %v851 = vunpack.c.l.b16 %v791
  %v852 = vunpack.c.l.b16 %v792
  %v853 = vunpack.c.l.b16 %v793
  %v854 = vunpack.c.l.b16 %v794
  %v855 = vunpack.c.l.b16 %v795
  %v856 = vunpack.c.l.b16 %v796
  %v857 = vpack.c.b16 %v842, %v841
  %v858 = vpack.c.b16 %v844, %v843
  %v859 = vpack.c.b16 %v846, %v845
  %v860 = vpack.c.b16 %v848, %v847
  %v861 = vpack.c.b16 %v850, %v849
  %v862 = vpack.c.b16 %v852, %v851
  %v863 = vpack.c.b16 %v854, %v853
  %v864 = vpack.c.b16 %v856, %v855
  %873 = vmatprep.subr.bf16.mxu0 0
  %874 = vmatpush1.bf16.msra.mxu0 %v864
  %875 = vmatprep.subr.bf16.mxu0 0
  %876 = vmatpush1.bf16.msra.mxu0 %v863
  %877 = vmatprep.subr.bf16.mxu0 0
  %878 = vmatpush1.bf16.msra.mxu0 %v862
  %879 = vmatprep.subr.bf16.mxu0 0
  %880 = vmatpush1.bf16.msra.mxu0 %v861
  %881 = vmatprep.subr.bf16.mxu0 0
  %882 = vmatpush1.bf16.msra.mxu0 %v860
  %883 = vmatprep.subr.bf16.mxu0 0
  %884 = vmatpush1.bf16.msra.mxu0 %v859
  %885 = vmatprep.subr.bf16.mxu0 0
  %886 = vmatpush1.bf16.msra.mxu0 %v858
  %887 = vmatprep.subr.bf16.mxu0 0
  %888 = vmatpush1.bf16.msra.mxu0 %v857
  %889 = vmatprep.subr.bf16.mxu0 0
  %890 = vmatpush2.bf16.msra.mxu0 0
  %891 = vmatprep.subr.bf16.mxu0 0
  %892 = vmatpush2.bf16.msra.mxu0 0
  %893 = vmatprep.subr.bf16.mxu0 0
  %894 = vmatpush2.bf16.msra.mxu0 0
  %895 = vmatprep.subr.bf16.mxu0 0
  %896 = vmatpush2.bf16.msra.mxu0 0
  %897 = vmatprep.subr.bf16.mxu0 0
  %898 = vmatpush2.bf16.msra.mxu0 0
  %899 = vmatprep.subr.bf16.mxu0 0
  %900 = vmatpush2.bf16.msra.mxu0 0
  %901 = vmatprep.subr.bf16.mxu0 0
  %902 = vmatpush2.bf16.msra.mxu0 0
  %903 = vmatprep.subr.bf16.mxu0 0
  %904 = vmatpush2.bf16.msra.mxu0 0
  %905 = vmatprep.mubr.bf16.mxu0 0
  %906 = vmatmul.mubr.bf16.gmra.mxu0 %v815
  %v907 = vpop.f32.mrf.mxu0
  %v908 = vadd.f32 0.0, %v907
  %v909 = vpop.f32.mrf.mxu0
  %v910 = vpop.f32.mrf.mxu0
  %v911 = vadd.f32 0.0, %v910
  %v912 = vpop.f32.mrf.mxu0
  %913 = vmatprep.mubr.bf16.mxu0 0
  %914 = vmatmul.mubr.bf16.gmra.mxu0 %v816
  %v915 = vpop.f32.mrf.mxu0
  %v916 = vadd.f32 0.0, %v915
  %v917 = vpop.f32.mrf.mxu0
  %v918 = vpop.f32.mrf.mxu0
  %v919 = vadd.f32 0.0, %v918
  %v920 = vpop.f32.mrf.mxu0
  %921 = vmatprep.mubr.bf16.mxu0 0
  %922 = vmatmul.mubr.bf16.gmra.mxu0 %v817
  %v923 = vpop.f32.mrf.mxu0
  %v924 = vadd.f32 0.0, %v923
  %v925 = vpop.f32.mrf.mxu0
  %v926 = vpop.f32.mrf.mxu0
  %v927 = vadd.f32 0.0, %v926
  %v928 = vpop.f32.mrf.mxu0
  %929 = vmatprep.mubr.bf16.mxu0 0
  %930 = vmatmul.mubr.bf16.gmra.mxu0 %v818
  %v931 = vpop.f32.mrf.mxu0
  %v932 = vadd.f32 0.0, %v931
  %v933 = vpop.f32.mrf.mxu0
  %v934 = vpop.f32.mrf.mxu0
  %v935 = vadd.f32 0.0, %v934
  %v936 = vpop.f32.mrf.mxu0
  %937 = vmatprep.mubr.bf16.mxu0 0
  %938 = vmatmul.mubr.bf16.gmra.mxu0 %v819
  %v939 = vpop.f32.mrf.mxu0
  %v940 = vadd.f32 0.0, %v939
  %v941 = vpop.f32.mrf.mxu0
  %v942 = vpop.f32.mrf.mxu0
  %v943 = vpop.f32.mrf.mxu0
  %944 = vdwg.mxu0
  %v945 = vadd.f32 %v761, %v908
  %v946 = vadd.f32 %v762, %v911
  %v947 = vadd.f32 %v763, %v916
  %v948 = vadd.f32 %v764, %v919
  %v949 = vadd.f32 %v765, %v924
  %v950 = vadd.f32 %v766, %v927
  %v951 = vadd.f32 %v767, %v932
  %v952 = vadd.f32 %v768, %v935
  %v953 = vadd.f32 %v769, %v940
  %v954 = vld [vmem:[%s586] sm:$0xf]
  %v955 = vld [vmem:[%s586 + $0x1c] sm:$0xf]
  %v956 = vld [vmem:[%s586 + $0x38] sm:$0xf]
  %v957 = vld [vmem:[%s586 + $0x54] sm:$0xf]
  %v958 = vld [vmem:[%s586 + $0x70] sm:$0xf]
  %v959 = vld [vmem:[%s586 + $0x8c] sm:$0xf]
  %v960 = vld [vmem:[%s586 + $0xa8] sm:$0xf]
  %v961 = vld [vmem:[%s586 + $0xc4] sm:$0xf]
  %v962 = vld [vmem:[%s586 + $0xe0] sm:$0xf]
  %v963 = vld [vmem:[%s586 + $0xfc] sm:$0x1]
  %s964 = scalar_lea.vmem %s1, 320
  %v965 = vld [vmem:[%s964] sm:$0xf]
  %v966 = vld [vmem:[%s964 + $0x4] sm:$0xf]
  %v967 = vld [vmem:[%s964 + $0x8] sm:$0xf]
  %v968 = vld [vmem:[%s964 + $0xc] sm:$0xf]
  %v969 = vld [vmem:[%s964 + $0x10] sm:$0xf]
  %v970 = vld [vmem:[%s964 + $0x14] sm:$0xf]
  %v971 = vld [vmem:[%s964 + $0x18] sm:$0xf]
  %v972 = vld [vmem:[%s964 + $0x1c] sm:$0xf]
  %v973 = vld [vmem:[%s964 + $0x20] sm:$0xf]
  %v974 = vld [vmem:[%s964 + $0x24] sm:$0xf]
  %v975 = vld [vmem:[%s964 + $0x28] sm:$0xf]
  %v976 = vld [vmem:[%s964 + $0x2c] sm:$0xf]
  %v977 = vld [vmem:[%s964 + $0x30] sm:$0xf]
  %v978 = vld [vmem:[%s964 + $0x34] sm:$0xf]
  %v979 = vld [vmem:[%s964 + $0x38] sm:$0xf]
  %v980 = vld [vmem:[%s964 + $0x3c] sm:$0xf]
  %v991 = vunpack.c.l.b16 %v954
  %v992 = vunpack.c.l.b16 %v955
  %v993 = vunpack.c.l.b16 %v956
  %v994 = vunpack.c.l.b16 %v957
  %v995 = vunpack.c.l.b16 %v958
  %v996 = vunpack.c.l.b16 %v959
  %v997 = vunpack.c.l.b16 %v960
  %v998 = vunpack.c.l.b16 %v961
  %v999 = vunpack.c.l.b16 %v962
  %v1000 = vunpack.c.l.b16 %v963
  %v1001 = vpack.c.b16 %v992, %v991
  %v1002 = vpack.c.b16 %v994, %v993
  %v1003 = vpack.c.b16 %v996, %v995
  %v1004 = vpack.c.b16 %v998, %v997
  %v1005 = vpack.c.b16 %v1000, %v999
  %v1007 = vshrl.u32 %v1001, 16
  %v1009 = vshll.u32 %v1001, 16
  %v1011 = vrot.slane %v1009, 1
  %v1012 = vor.u32 %v1007, %v1011
  %v1014 = vshll.u32 %v1002, 16
  %v1016 = vrot.slane %v1014, 1
  %v1017 = vsel %vm412, %v1012, %v1016
  %v1018 = vshrl.u32 %v1002, 16
  %v1020 = vor.u32 %v1018, %v1016
  %v1022 = vshll.u32 %v1003, 16
  %v1024 = vrot.slane %v1022, 1
  %v1025 = vsel %vm412, %v1020, %v1024
  %v1026 = vshrl.u32 %v1003, 16
  %v1028 = vor.u32 %v1026, %v1024
  %v1030 = vshll.u32 %v1004, 16
  %v1032 = vrot.slane %v1030, 1
  %v1033 = vsel %vm412, %v1028, %v1032
  %v1034 = vshrl.u32 %v1004, 16
  %v1036 = vor.u32 %v1034, %v1032
  %v1038 = vshll.u32 %v1005, 16
  %v1040 = vrot.slane %v1038, 1
  %v1041 = vsel %vm412, %v1036, %v1040
  %v1042 = vshrl.u32 %v1005, 16
  %v1044 = vor.u32 %v1042, %v1040
  %v1066 = vunpack.c.l.b16 %v965
  %v1067 = vunpack.c.l.b16 %v966
  %v1068 = vunpack.c.l.b16 %v967
  %v1069 = vunpack.c.l.b16 %v968
  %v1070 = vunpack.c.l.b16 %v969
  %v1071 = vunpack.c.l.b16 %v970
  %v1072 = vunpack.c.l.b16 %v971
  %v1073 = vunpack.c.l.b16 %v972
  %v1074 = vunpack.c.l.b16 %v973
  %v1075 = vunpack.c.l.b16 %v974
  %v1076 = vunpack.c.l.b16 %v975
  %v1077 = vunpack.c.l.b16 %v976
  %v1078 = vunpack.c.l.b16 %v977
  %v1079 = vunpack.c.l.b16 %v978
  %v1080 = vunpack.c.l.b16 %v979
  %v1081 = vunpack.c.l.b16 %v980
  %v1082 = vpack.c.b16 %v1067, %v1066
  %v1083 = vpack.c.b16 %v1069, %v1068
  %v1084 = vpack.c.b16 %v1071, %v1070
  %v1085 = vpack.c.b16 %v1073, %v1072
  %v1086 = vpack.c.b16 %v1075, %v1074
  %v1087 = vpack.c.b16 %v1077, %v1076
  %v1088 = vpack.c.b16 %v1079, %v1078
  %v1089 = vpack.c.b16 %v1081, %v1080
  %1098 = vmatprep.subr.bf16.mxu0 0
  %1099 = vmatpush1.bf16.msra.mxu0 %v1089
  %1100 = vmatprep.subr.bf16.mxu0 0
  %1101 = vmatpush1.bf16.msra.mxu0 %v1088
  %1102 = vmatprep.subr.bf16.mxu0 0
  %1103 = vmatpush1.bf16.msra.mxu0 %v1087
  %1104 = vmatprep.subr.bf16.mxu0 0
  %1105 = vmatpush1.bf16.msra.mxu0 %v1086
  %1106 = vmatprep.subr.bf16.mxu0 0
  %1107 = vmatpush1.bf16.msra.mxu0 %v1085
  %1108 = vmatprep.subr.bf16.mxu0 0
  %1109 = vmatpush1.bf16.msra.mxu0 %v1084
  %1110 = vmatprep.subr.bf16.mxu0 0
  %1111 = vmatpush1.bf16.msra.mxu0 %v1083
  %1112 = vmatprep.subr.bf16.mxu0 0
  %1113 = vmatpush1.bf16.msra.mxu0 %v1082
  %1114 = vmatprep.subr.bf16.mxu0 0
  %1115 = vmatpush2.bf16.msra.mxu0 0
  %1116 = vmatprep.subr.bf16.mxu0 0
  %1117 = vmatpush2.bf16.msra.mxu0 0
  %1118 = vmatprep.subr.bf16.mxu0 0
  %1119 = vmatpush2.bf16.msra.mxu0 0
  %1120 = vmatprep.subr.bf16.mxu0 0
  %1121 = vmatpush2.bf16.msra.mxu0 0
  %1122 = vmatprep.subr.bf16.mxu0 0
  %1123 = vmatpush2.bf16.msra.mxu0 0
  %1124 = vmatprep.subr.bf16.mxu0 0
  %1125 = vmatpush2.bf16.msra.mxu0 0
  %1126 = vmatprep.subr.bf16.mxu0 0
  %1127 = vmatpush2.bf16.msra.mxu0 0
  %1128 = vmatprep.subr.bf16.mxu0 0
  %1129 = vmatpush2.bf16.msra.mxu0 0
  %1130 = vmatprep.mubr.bf16.mxu0 0
  %1131 = vmatmul.mubr.bf16.gmra.mxu0 %v1017
  %v1132 = vpop.f32.mrf.mxu0
  %v1133 = vadd.f32 0.0, %v1132
  %v1134 = vpop.f32.mrf.mxu0
  %v1135 = vpop.f32.mrf.mxu0
  %v1136 = vadd.f32 0.0, %v1135
  %v1137 = vpop.f32.mrf.mxu0
  %1138 = vmatprep.mubr.bf16.mxu0 0
  %1139 = vmatmul.mubr.bf16.gmra.mxu0 %v1025
  %v1140 = vpop.f32.mrf.mxu0
  %v1141 = vadd.f32 0.0, %v1140
  %v1142 = vpop.f32.mrf.mxu0
  %v1143 = vpop.f32.mrf.mxu0
  %v1144 = vadd.f32 0.0, %v1143
  %v1145 = vpop.f32.mrf.mxu0
  %1146 = vmatprep.mubr.bf16.mxu0 0
  %1147 = vmatmul.mubr.bf16.gmra.mxu0 %v1033
  %v1148 = vpop.f32.mrf.mxu0
  %v1149 = vadd.f32 0.0, %v1148
  %v1150 = vpop.f32.mrf.mxu0
  %v1151 = vpop.f32.mrf.mxu0
  %v1152 = vadd.f32 0.0, %v1151
  %v1153 = vpop.f32.mrf.mxu0
  %1154 = vmatprep.mubr.bf16.mxu0 0
  %1155 = vmatmul.mubr.bf16.gmra.mxu0 %v1041
  %v1156 = vpop.f32.mrf.mxu0
  %v1157 = vadd.f32 0.0, %v1156
  %v1158 = vpop.f32.mrf.mxu0
  %v1159 = vpop.f32.mrf.mxu0
  %v1160 = vadd.f32 0.0, %v1159
  %v1161 = vpop.f32.mrf.mxu0
  %1162 = vmatprep.mubr.bf16.mxu0 0
  %1163 = vmatmul.mubr.bf16.gmra.mxu0 %v1044
  %v1164 = vpop.f32.mrf.mxu0
  %v1165 = vadd.f32 0.0, %v1164
  %v1166 = vpop.f32.mrf.mxu0
  %v1167 = vpop.f32.mrf.mxu0
  %v1168 = vpop.f32.mrf.mxu0
  %1169 = vdwg.mxu0
  %v1170 = vadd.f32 %v945, %v1133
  %v1171 = vadd.f32 %v946, %v1136
  %v1172 = vadd.f32 %v947, %v1141
  %v1173 = vadd.f32 %v948, %v1144
  %v1174 = vadd.f32 %v949, %v1149
  %v1175 = vadd.f32 %v950, %v1152
  %v1176 = vadd.f32 %v951, %v1157
  %v1177 = vadd.f32 %v952, %v1160
  %v1178 = vadd.f32 %v953, %v1165
  %v1179 = vld [vmem:[%s0 + $0x1c] sm:$0xf]
  %v1180 = vld [vmem:[%s0 + $0x38] sm:$0xf]
  %v1181 = vld [vmem:[%s0 + $0x54] sm:$0xf]
  %v1182 = vld [vmem:[%s0 + $0x70] sm:$0xf]
  %v1183 = vld [vmem:[%s0 + $0x8c] sm:$0xf]
  %v1184 = vld [vmem:[%s0 + $0xa8] sm:$0xf]
  %v1185 = vld [vmem:[%s0 + $0xc4] sm:$0xf]
  %v1186 = vld [vmem:[%s0 + $0xe0] sm:$0xf]
  %v1187 = vld [vmem:[%s0 + $0xfc] sm:$0xf]
  %v1188 = vld [vmem:[%s0 + $0x118] sm:$0x1]
  %s1189 = scalar_lea.vmem %s1, 384
  %v1190 = vld [vmem:[%s1189] sm:$0xf]
  %v1191 = vld [vmem:[%s1189 + $0x4] sm:$0xf]
  %v1192 = vld [vmem:[%s1189 + $0x8] sm:$0xf]
  %v1193 = vld [vmem:[%s1189 + $0xc] sm:$0xf]
  %v1194 = vld [vmem:[%s1189 + $0x10] sm:$0xf]
  %v1195 = vld [vmem:[%s1189 + $0x14] sm:$0xf]
  %v1196 = vld [vmem:[%s1189 + $0x18] sm:$0xf]
  %v1197 = vld [vmem:[%s1189 + $0x1c] sm:$0xf]
  %v1198 = vld [vmem:[%s1189 + $0x20] sm:$0xf]
  %v1199 = vld [vmem:[%s1189 + $0x24] sm:$0xf]
  %v1200 = vld [vmem:[%s1189 + $0x28] sm:$0xf]
  %v1201 = vld [vmem:[%s1189 + $0x2c] sm:$0xf]
  %v1202 = vld [vmem:[%s1189 + $0x30] sm:$0xf]
  %v1203 = vld [vmem:[%s1189 + $0x34] sm:$0xf]
  %v1204 = vld [vmem:[%s1189 + $0x38] sm:$0xf]
  %v1205 = vld [vmem:[%s1189 + $0x3c] sm:$0xf]
  %v1216 = vunpack.c.l.b16 %v1179
  %v1217 = vunpack.c.l.b16 %v1180
  %v1218 = vunpack.c.l.b16 %v1181
  %v1219 = vunpack.c.l.b16 %v1182
  %v1220 = vunpack.c.l.b16 %v1183
  %v1221 = vunpack.c.l.b16 %v1184
  %v1222 = vunpack.c.l.b16 %v1185
  %v1223 = vunpack.c.l.b16 %v1186
  %v1224 = vunpack.c.l.b16 %v1187
  %v1225 = vunpack.c.l.b16 %v1188
  %v1226 = vpack.c.b16 %v1217, %v1216
  %v1227 = vpack.c.b16 %v1219, %v1218
  %v1228 = vpack.c.b16 %v1221, %v1220
  %v1229 = vpack.c.b16 %v1223, %v1222
  %v1230 = vpack.c.b16 %v1225, %v1224
  %v1232 = vshrl.u32 %v1226, 16
  %v1234 = vshll.u32 %v1226, 16
  %v1236 = vrot.slane %v1234, 1
  %v1237 = vor.u32 %v1232, %v1236
  %v1239 = vshll.u32 %v1227, 16
  %v1241 = vrot.slane %v1239, 1
  %v1242 = vsel %vm412, %v1237, %v1241
  %v1243 = vshrl.u32 %v1227, 16
  %v1245 = vor.u32 %v1243, %v1241
  %v1247 = vshll.u32 %v1228, 16
  %v1249 = vrot.slane %v1247, 1
  %v1250 = vsel %vm412, %v1245, %v1249
  %v1251 = vshrl.u32 %v1228, 16
  %v1253 = vor.u32 %v1251, %v1249
  %v1255 = vshll.u32 %v1229, 16
  %v1257 = vrot.slane %v1255, 1
  %v1258 = vsel %vm412, %v1253, %v1257
  %v1259 = vshrl.u32 %v1229, 16
  %v1261 = vor.u32 %v1259, %v1257
  %v1263 = vshll.u32 %v1230, 16
  %v1265 = vrot.slane %v1263, 1
  %v1266 = vsel %vm412, %v1261, %v1265
  %v1267 = vshrl.u32 %v1230, 16
  %v1269 = vor.u32 %v1267, %v1265
  %v1291 = vunpack.c.l.b16 %v1190
  %v1292 = vunpack.c.l.b16 %v1191
  %v1293 = vunpack.c.l.b16 %v1192
  %v1294 = vunpack.c.l.b16 %v1193
  %v1295 = vunpack.c.l.b16 %v1194
  %v1296 = vunpack.c.l.b16 %v1195
  %v1297 = vunpack.c.l.b16 %v1196
  %v1298 = vunpack.c.l.b16 %v1197
  %v1299 = vunpack.c.l.b16 %v1198
  %v1300 = vunpack.c.l.b16 %v1199
  %v1301 = vunpack.c.l.b16 %v1200
  %v1302 = vunpack.c.l.b16 %v1201
  %v1303 = vunpack.c.l.b16 %v1202
  %v1304 = vunpack.c.l.b16 %v1203
  %v1305 = vunpack.c.l.b16 %v1204
  %v1306 = vunpack.c.l.b16 %v1205
  %v1307 = vpack.c.b16 %v1292, %v1291
  %v1308 = vpack.c.b16 %v1294, %v1293
  %v1309 = vpack.c.b16 %v1296, %v1295
  %v1310 = vpack.c.b16 %v1298, %v1297
  %v1311 = vpack.c.b16 %v1300, %v1299
  %v1312 = vpack.c.b16 %v1302, %v1301
  %v1313 = vpack.c.b16 %v1304, %v1303
  %v1314 = vpack.c.b16 %v1306, %v1305
  %1323 = vmatprep.subr.bf16.mxu0 0
  %1324 = vmatpush1.bf16.msra.mxu0 %v1314
  %1325 = vmatprep.subr.bf16.mxu0 0
  %1326 = vmatpush1.bf16.msra.mxu0 %v1313
  %1327 = vmatprep.subr.bf16.mxu0 0
  %1328 = vmatpush1.bf16.msra.mxu0 %v1312
  %1329 = vmatprep.subr.bf16.mxu0 0
  %1330 = vmatpush1.bf16.msra.mxu0 %v1311
  %1331 = vmatprep.subr.bf16.mxu0 0
  %1332 = vmatpush1.bf16.msra.mxu0 %v1310
  %1333 = vmatprep.subr.bf16.mxu0 0
  %1334 = vmatpush1.bf16.msra.mxu0 %v1309
  %1335 = vmatprep.subr.bf16.mxu0 0
  %1336 = vmatpush1.bf16.msra.mxu0 %v1308
  %1337 = vmatprep.subr.bf16.mxu0 0
  %1338 = vmatpush1.bf16.msra.mxu0 %v1307
  %1339 = vmatprep.subr.bf16.mxu0 0
  %1340 = vmatpush2.bf16.msra.mxu0 0
  %1341 = vmatprep.subr.bf16.mxu0 0
  %1342 = vmatpush2.bf16.msra.mxu0 0
  %1343 = vmatprep.subr.bf16.mxu0 0
  %1344 = vmatpush2.bf16.msra.mxu0 0
  %1345 = vmatprep.subr.bf16.mxu0 0
  %1346 = vmatpush2.bf16.msra.mxu0 0
  %1347 = vmatprep.subr.bf16.mxu0 0
  %1348 = vmatpush2.bf16.msra.mxu0 0
  %1349 = vmatprep.subr.bf16.mxu0 0
  %1350 = vmatpush2.bf16.msra.mxu0 0
  %1351 = vmatprep.subr.bf16.mxu0 0
  %1352 = vmatpush2.bf16.msra.mxu0 0
  %1353 = vmatprep.subr.bf16.mxu0 0
  %1354 = vmatpush2.bf16.msra.mxu0 0
  %1355 = vmatprep.mubr.bf16.mxu0 0
  %1356 = vmatmul.mubr.bf16.gmra.mxu0 %v1242
  %v1357 = vpop.f32.mrf.mxu0
  %v1358 = vadd.f32 0.0, %v1357
  %v1359 = vpop.f32.mrf.mxu0
  %v1360 = vpop.f32.mrf.mxu0
  %v1361 = vadd.f32 0.0, %v1360
  %v1362 = vpop.f32.mrf.mxu0
  %1363 = vmatprep.mubr.bf16.mxu0 0
  %1364 = vmatmul.mubr.bf16.gmra.mxu0 %v1250
  %v1365 = vpop.f32.mrf.mxu0
  %v1366 = vadd.f32 0.0, %v1365
  %v1367 = vpop.f32.mrf.mxu0
  %v1368 = vpop.f32.mrf.mxu0
  %v1369 = vadd.f32 0.0, %v1368
  %v1370 = vpop.f32.mrf.mxu0
  %1371 = vmatprep.mubr.bf16.mxu0 0
  %1372 = vmatmul.mubr.bf16.gmra.mxu0 %v1258
  %v1373 = vpop.f32.mrf.mxu0
  %v1374 = vadd.f32 0.0, %v1373
  %v1375 = vpop.f32.mrf.mxu0
  %v1376 = vpop.f32.mrf.mxu0
  %v1377 = vadd.f32 0.0, %v1376
  %v1378 = vpop.f32.mrf.mxu0
  %1379 = vmatprep.mubr.bf16.mxu0 0
  %1380 = vmatmul.mubr.bf16.gmra.mxu0 %v1266
  %v1381 = vpop.f32.mrf.mxu0
  %v1382 = vadd.f32 0.0, %v1381
  %v1383 = vpop.f32.mrf.mxu0
  %v1384 = vpop.f32.mrf.mxu0
  %v1385 = vadd.f32 0.0, %v1384
  %v1386 = vpop.f32.mrf.mxu0
  %1387 = vmatprep.mubr.bf16.mxu0 0
  %1388 = vmatmul.mubr.bf16.gmra.mxu0 %v1269
  %v1389 = vpop.f32.mrf.mxu0
  %v1390 = vadd.f32 0.0, %v1389
  %v1391 = vpop.f32.mrf.mxu0
  %v1392 = vpop.f32.mrf.mxu0
  %v1393 = vpop.f32.mrf.mxu0
  %1394 = vdwg.mxu0
  %v1395 = vadd.f32 %v1170, %v1358
  %v1396 = vadd.f32 %v1171, %v1361
  %v1397 = vadd.f32 %v1172, %v1366
  %v1398 = vadd.f32 %v1173, %v1369
  %v1399 = vadd.f32 %v1174, %v1374
  %v1400 = vadd.f32 %v1175, %v1377
  %v1401 = vadd.f32 %v1176, %v1382
  %v1402 = vadd.f32 %v1177, %v1385
  %v1403 = vadd.f32 %v1178, %v1390
  %v1404 = vld [vmem:[%s37 + $0x1c] sm:$0xf]
  %v1405 = vld [vmem:[%s37 + $0x38] sm:$0xf]
  %v1406 = vld [vmem:[%s37 + $0x54] sm:$0xf]
  %v1407 = vld [vmem:[%s37 + $0x70] sm:$0xf]
  %v1408 = vld [vmem:[%s37 + $0x8c] sm:$0xf]
  %v1409 = vld [vmem:[%s37 + $0xa8] sm:$0xf]
  %v1410 = vld [vmem:[%s37 + $0xc4] sm:$0xf]
  %v1411 = vld [vmem:[%s37 + $0xe0] sm:$0xf]
  %v1412 = vld [vmem:[%s37 + $0xfc] sm:$0xf]
  %v1413 = vld [vmem:[%s37 + $0x118] sm:$0x1]
  %s1414 = scalar_lea.vmem %s1, 448
  %v1415 = vld [vmem:[%s1414] sm:$0xf]
  %v1416 = vld [vmem:[%s1414 + $0x4] sm:$0xf]
  %v1417 = vld [vmem:[%s1414 + $0x8] sm:$0xf]
  %v1418 = vld [vmem:[%s1414 + $0xc] sm:$0xf]
  %v1419 = vld [vmem:[%s1414 + $0x10] sm:$0xf]
  %v1420 = vld [vmem:[%s1414 + $0x14] sm:$0xf]
  %v1421 = vld [vmem:[%s1414 + $0x18] sm:$0xf]
  %v1422 = vld [vmem:[%s1414 + $0x1c] sm:$0xf]
  %v1423 = vld [vmem:[%s1414 + $0x20] sm:$0xf]
  %v1424 = vld [vmem:[%s1414 + $0x24] sm:$0xf]
  %v1425 = vld [vmem:[%s1414 + $0x28] sm:$0xf]
  %v1426 = vld [vmem:[%s1414 + $0x2c] sm:$0xf]
  %v1427 = vld [vmem:[%s1414 + $0x30] sm:$0xf]
  %v1428 = vld [vmem:[%s1414 + $0x34] sm:$0xf]
  %v1429 = vld [vmem:[%s1414 + $0x38] sm:$0xf]
  %v1430 = vld [vmem:[%s1414 + $0x3c] sm:$0xf]
  %v1441 = vunpack.c.l.b16 %v1404
  %v1442 = vunpack.c.l.b16 %v1405
  %v1443 = vunpack.c.l.b16 %v1406
  %v1444 = vunpack.c.l.b16 %v1407
  %v1445 = vunpack.c.l.b16 %v1408
  %v1446 = vunpack.c.l.b16 %v1409
  %v1447 = vunpack.c.l.b16 %v1410
  %v1448 = vunpack.c.l.b16 %v1411
  %v1449 = vunpack.c.l.b16 %v1412
  %v1450 = vunpack.c.l.b16 %v1413
  %v1451 = vpack.c.b16 %v1442, %v1441
  %v1452 = vpack.c.b16 %v1444, %v1443
  %v1453 = vpack.c.b16 %v1446, %v1445
  %v1454 = vpack.c.b16 %v1448, %v1447
  %v1455 = vpack.c.b16 %v1450, %v1449
  %v1457 = vshrl.u32 %v1451, 16
  %v1459 = vshll.u32 %v1451, 16
  %v1461 = vrot.slane %v1459, 1
  %v1462 = vor.u32 %v1457, %v1461
  %v1464 = vshll.u32 %v1452, 16
  %v1466 = vrot.slane %v1464, 1
  %v1467 = vsel %vm412, %v1462, %v1466
  %v1468 = vshrl.u32 %v1452, 16
  %v1470 = vor.u32 %v1468, %v1466
  %v1472 = vshll.u32 %v1453, 16
  %v1474 = vrot.slane %v1472, 1
  %v1475 = vsel %vm412, %v1470, %v1474
  %v1476 = vshrl.u32 %v1453, 16
  %v1478 = vor.u32 %v1476, %v1474
  %v1480 = vshll.u32 %v1454, 16
  %v1482 = vrot.slane %v1480, 1
  %v1483 = vsel %vm412, %v1478, %v1482
  %v1484 = vshrl.u32 %v1454, 16
  %v1486 = vor.u32 %v1484, %v1482
  %v1488 = vshll.u32 %v1455, 16
  %v1490 = vrot.slane %v1488, 1
  %v1491 = vsel %vm412, %v1486, %v1490
  %v1492 = vshrl.u32 %v1455, 16
  %v1494 = vor.u32 %v1492, %v1490
  %v1516 = vunpack.c.l.b16 %v1415
  %v1517 = vunpack.c.l.b16 %v1416
  %v1518 = vunpack.c.l.b16 %v1417
  %v1519 = vunpack.c.l.b16 %v1418
  %v1520 = vunpack.c.l.b16 %v1419
  %v1521 = vunpack.c.l.b16 %v1420
  %v1522 = vunpack.c.l.b16 %v1421
  %v1523 = vunpack.c.l.b16 %v1422
  %v1524 = vunpack.c.l.b16 %v1423
  %v1525 = vunpack.c.l.b16 %v1424
  %v1526 = vunpack.c.l.b16 %v1425
  %v1527 = vunpack.c.l.b16 %v1426
  %v1528 = vunpack.c.l.b16 %v1427
  %v1529 = vunpack.c.l.b16 %v1428
  %v1530 = vunpack.c.l.b16 %v1429
  %v1531 = vunpack.c.l.b16 %v1430
  %v1532 = vpack.c.b16 %v1517, %v1516
  %v1533 = vpack.c.b16 %v1519, %v1518
  %v1534 = vpack.c.b16 %v1521, %v1520
  %v1535 = vpack.c.b16 %v1523, %v1522
  %v1536 = vpack.c.b16 %v1525, %v1524
  %v1537 = vpack.c.b16 %v1527, %v1526
  %v1538 = vpack.c.b16 %v1529, %v1528
  %v1539 = vpack.c.b16 %v1531, %v1530
  %1548 = vmatprep.subr.bf16.mxu0 0
  %1549 = vmatpush1.bf16.msra.mxu0 %v1539
  %1550 = vmatprep.subr.bf16.mxu0 0
  %1551 = vmatpush1.bf16.msra.mxu0 %v1538
  %1552 = vmatprep.subr.bf16.mxu0 0
  %1553 = vmatpush1.bf16.msra.mxu0 %v1537
  %1554 = vmatprep.subr.bf16.mxu0 0
  %1555 = vmatpush1.bf16.msra.mxu0 %v1536
  %1556 = vmatprep.subr.bf16.mxu0 0
  %1557 = vmatpush1.bf16.msra.mxu0 %v1535
  %1558 = vmatprep.subr.bf16.mxu0 0
  %1559 = vmatpush1.bf16.msra.mxu0 %v1534
  %1560 = vmatprep.subr.bf16.mxu0 0
  %1561 = vmatpush1.bf16.msra.mxu0 %v1533
  %1562 = vmatprep.subr.bf16.mxu0 0
  %1563 = vmatpush1.bf16.msra.mxu0 %v1532
  %1564 = vmatprep.subr.bf16.mxu0 0
  %1565 = vmatpush2.bf16.msra.mxu0 0
  %1566 = vmatprep.subr.bf16.mxu0 0
  %1567 = vmatpush2.bf16.msra.mxu0 0
  %1568 = vmatprep.subr.bf16.mxu0 0
  %1569 = vmatpush2.bf16.msra.mxu0 0
  %1570 = vmatprep.subr.bf16.mxu0 0
  %1571 = vmatpush2.bf16.msra.mxu0 0
  %1572 = vmatprep.subr.bf16.mxu0 0
  %1573 = vmatpush2.bf16.msra.mxu0 0
  %1574 = vmatprep.subr.bf16.mxu0 0
  %1575 = vmatpush2.bf16.msra.mxu0 0
  %1576 = vmatprep.subr.bf16.mxu0 0
  %1577 = vmatpush2.bf16.msra.mxu0 0
  %1578 = vmatprep.subr.bf16.mxu0 0
  %1579 = vmatpush2.bf16.msra.mxu0 0
  %1580 = vmatprep.mubr.bf16.mxu0 0
  %1581 = vmatmul.mubr.bf16.gmra.mxu0 %v1467
  %v1582 = vpop.f32.mrf.mxu0
  %v1583 = vadd.f32 0.0, %v1582
  %v1584 = vpop.f32.mrf.mxu0
  %v1585 = vpop.f32.mrf.mxu0
  %v1586 = vadd.f32 0.0, %v1585
  %v1587 = vpop.f32.mrf.mxu0
  %1588 = vmatprep.mubr.bf16.mxu0 0
  %1589 = vmatmul.mubr.bf16.gmra.mxu0 %v1475
  %v1590 = vpop.f32.mrf.mxu0
  %v1591 = vadd.f32 0.0, %v1590
  %v1592 = vpop.f32.mrf.mxu0
  %v1593 = vpop.f32.mrf.mxu0
  %v1594 = vadd.f32 0.0, %v1593
  %v1595 = vpop.f32.mrf.mxu0
  %1596 = vmatprep.mubr.bf16.mxu0 0
  %1597 = vmatmul.mubr.bf16.gmra.mxu0 %v1483
  %v1598 = vpop.f32.mrf.mxu0
  %v1599 = vadd.f32 0.0, %v1598
  %v1600 = vpop.f32.mrf.mxu0
  %v1601 = vpop.f32.mrf.mxu0
  %v1602 = vadd.f32 0.0, %v1601
  %v1603 = vpop.f32.mrf.mxu0
  %1604 = vmatprep.mubr.bf16.mxu0 0
  %1605 = vmatmul.mubr.bf16.gmra.mxu0 %v1491
  %v1606 = vpop.f32.mrf.mxu0
  %v1607 = vadd.f32 0.0, %v1606
  %v1608 = vpop.f32.mrf.mxu0
  %v1609 = vpop.f32.mrf.mxu0
  %v1610 = vadd.f32 0.0, %v1609
  %v1611 = vpop.f32.mrf.mxu0
  %1612 = vmatprep.mubr.bf16.mxu0 0
  %1613 = vmatmul.mubr.bf16.gmra.mxu0 %v1494
  %v1614 = vpop.f32.mrf.mxu0
  %v1615 = vadd.f32 0.0, %v1614
  %v1616 = vpop.f32.mrf.mxu0
  %v1617 = vpop.f32.mrf.mxu0
  %v1618 = vpop.f32.mrf.mxu0
  %1619 = vdwg.mxu0
  %v1620 = vadd.f32 %v1395, %v1583
  %v1621 = vadd.f32 %v1396, %v1586
  %v1622 = vadd.f32 %v1397, %v1591
  %v1623 = vadd.f32 %v1398, %v1594
  %v1624 = vadd.f32 %v1399, %v1599
  %v1625 = vadd.f32 %v1400, %v1602
  %v1626 = vadd.f32 %v1401, %v1607
  %v1627 = vadd.f32 %v1402, %v1610
  %v1628 = vadd.f32 %v1403, %v1615
  %v1629 = vld [vmem:[%s0 + $0x1c] sm:$0xe]
  %s1630 = scalar_lea.vmem %s1, 512
  %v1631 = vld [vmem:[%s1630] sm:$0xf]
  %v1632 = vld [vmem:[%s1630 + $0x4] sm:$0xf]
  %v1633 = vld [vmem:[%s1630 + $0x8] sm:$0xf]
  %v1634 = vld [vmem:[%s1630 + $0xc] sm:$0xf]
  %v1635 = vld [vmem:[%s1630 + $0x10] sm:$0xf]
  %v1636 = vld [vmem:[%s1630 + $0x14] sm:$0xf]
  %v1637 = vld [vmem:[%s1630 + $0x18] sm:$0xf]
  %v1638 = vld [vmem:[%s1630 + $0x1c] sm:$0xf]
  %v1639 = vld [vmem:[%s1630 + $0x20] sm:$0xf]
  %v1640 = vld [vmem:[%s1630 + $0x24] sm:$0xf]
  %v1641 = vld [vmem:[%s1630 + $0x28] sm:$0xf]
  %v1642 = vld [vmem:[%s1630 + $0x2c] sm:$0xf]
  %v1643 = vld [vmem:[%s1630 + $0x30] sm:$0xf]
  %v1644 = vld [vmem:[%s1630 + $0x34] sm:$0xf]
  %v1645 = vld [vmem:[%s1630 + $0x38] sm:$0xf]
  %v1646 = vld [vmem:[%s1630 + $0x3c] sm:$0xf]
  %v1648 = vunpack.c.l.b16 %v1629
  %v1649 = vpack.c.b16 %v1217, %v1648
  %vm1650 = vcmask 1046528
  %v1651 = vrot.slane %v1649, 1
  %v1652 = vrot.slane %v1227, 1
  %v1653 = vsel %vm1650, %v1651, %v1652
  %v1654 = vrot.slane %v1228, 1
  %v1655 = vsel %vm1650, %v1652, %v1654
  %v1656 = vrot.slane %v1229, 1
  %v1657 = vsel %vm1650, %v1654, %v1656
  %v1658 = vrot.slane %v1230, 1
  %v1659 = vsel %vm1650, %v1656, %v1658
  %v1681 = vunpack.c.l.b16 %v1631
  %v1682 = vunpack.c.l.b16 %v1632
  %v1683 = vunpack.c.l.b16 %v1633
  %v1684 = vunpack.c.l.b16 %v1634
  %v1685 = vunpack.c.l.b16 %v1635
  %v1686 = vunpack.c.l.b16 %v1636
  %v1687 = vunpack.c.l.b16 %v1637
  %v1688 = vunpack.c.l.b16 %v1638
  %v1689 = vunpack.c.l.b16 %v1639
  %v1690 = vunpack.c.l.b16 %v1640
  %v1691 = vunpack.c.l.b16 %v1641
  %v1692 = vunpack.c.l.b16 %v1642
  %v1693 = vunpack.c.l.b16 %v1643
  %v1694 = vunpack.c.l.b16 %v1644
  %v1695 = vunpack.c.l.b16 %v1645
  %v1696 = vunpack.c.l.b16 %v1646
  %v1697 = vpack.c.b16 %v1682, %v1681
  %v1698 = vpack.c.b16 %v1684, %v1683
  %v1699 = vpack.c.b16 %v1686, %v1685
  %v1700 = vpack.c.b16 %v1688, %v1687
  %v1701 = vpack.c.b16 %v1690, %v1689
  %v1702 = vpack.c.b16 %v1692, %v1691
  %v1703 = vpack.c.b16 %v1694, %v1693
  %v1704 = vpack.c.b16 %v1696, %v1695
  %1713 = vmatprep.subr.bf16.mxu0 0
  %1714 = vmatpush1.bf16.msra.mxu0 %v1704
  %1715 = vmatprep.subr.bf16.mxu0 0
  %1716 = vmatpush1.bf16.msra.mxu0 %v1703
  %1717 = vmatprep.subr.bf16.mxu0 0
  %1718 = vmatpush1.bf16.msra.mxu0 %v1702
  %1719 = vmatprep.subr.bf16.mxu0 0
  %1720 = vmatpush1.bf16.msra.mxu0 %v1701
  %1721 = vmatprep.subr.bf16.mxu0 0
  %1722 = vmatpush1.bf16.msra.mxu0 %v1700
  %1723 = vmatprep.subr.bf16.mxu0 0
  %1724 = vmatpush1.bf16.msra.mxu0 %v1699
  %1725 = vmatprep.subr.bf16.mxu0 0
  %1726 = vmatpush1.bf16.msra.mxu0 %v1698
  %1727 = vmatprep.subr.bf16.mxu0 0
  %1728 = vmatpush1.bf16.msra.mxu0 %v1697
  %1729 = vmatprep.subr.bf16.mxu0 0
  %1730 = vmatpush2.bf16.msra.mxu0 0
  %1731 = vmatprep.subr.bf16.mxu0 0
  %1732 = vmatpush2.bf16.msra.mxu0 0
  %1733 = vmatprep.subr.bf16.mxu0 0
  %1734 = vmatpush2.bf16.msra.mxu0 0
  %1735 = vmatprep.subr.bf16.mxu0 0
  %1736 = vmatpush2.bf16.msra.mxu0 0
  %1737 = vmatprep.subr.bf16.mxu0 0
  %1738 = vmatpush2.bf16.msra.mxu0 0
  %1739 = vmatprep.subr.bf16.mxu0 0
  %1740 = vmatpush2.bf16.msra.mxu0 0
  %1741 = vmatprep.subr.bf16.mxu0 0
  %1742 = vmatpush2.bf16.msra.mxu0 0
  %1743 = vmatprep.subr.bf16.mxu0 0
  %1744 = vmatpush2.bf16.msra.mxu0 0
  %1745 = vmatprep.mubr.bf16.mxu0 0
  %1746 = vmatmul.mubr.bf16.gmra.mxu0 %v1653
  %v1747 = vpop.f32.mrf.mxu0
  %v1748 = vadd.f32 0.0, %v1747
  %v1749 = vpop.f32.mrf.mxu0
  %v1750 = vpop.f32.mrf.mxu0
  %v1751 = vadd.f32 0.0, %v1750
  %v1752 = vpop.f32.mrf.mxu0
  %1753 = vmatprep.mubr.bf16.mxu0 0
  %1754 = vmatmul.mubr.bf16.gmra.mxu0 %v1655
  %v1755 = vpop.f32.mrf.mxu0
  %v1756 = vadd.f32 0.0, %v1755
  %v1757 = vpop.f32.mrf.mxu0
  %v1758 = vpop.f32.mrf.mxu0
  %v1759 = vadd.f32 0.0, %v1758
  %v1760 = vpop.f32.mrf.mxu0
  %1761 = vmatprep.mubr.bf16.mxu0 0
  %1762 = vmatmul.mubr.bf16.gmra.mxu0 %v1657
  %v1763 = vpop.f32.mrf.mxu0
  %v1764 = vadd.f32 0.0, %v1763
  %v1765 = vpop.f32.mrf.mxu0
  %v1766 = vpop.f32.mrf.mxu0
  %v1767 = vadd.f32 0.0, %v1766
  %v1768 = vpop.f32.mrf.mxu0
  %1769 = vmatprep.mubr.bf16.mxu0 0
  %1770 = vmatmul.mubr.bf16.gmra.mxu0 %v1659
  %v1771 = vpop.f32.mrf.mxu0
  %v1772 = vadd.f32 0.0, %v1771
  %v1773 = vpop.f32.mrf.mxu0
  %v1774 = vpop.f32.mrf.mxu0
  %v1775 = vadd.f32 0.0, %v1774
  %v1776 = vpop.f32.mrf.mxu0
  %1777 = vmatprep.mubr.bf16.mxu0 0
  %1778 = vmatmul.mubr.bf16.gmra.mxu0 %v1658
  %v1779 = vpop.f32.mrf.mxu0
  %v1780 = vadd.f32 0.0, %v1779
  %v1781 = vpop.f32.mrf.mxu0
  %v1782 = vpop.f32.mrf.mxu0
  %v1783 = vpop.f32.mrf.mxu0
  %1784 = vdwg.mxu0
  %v1785 = vadd.f32 %v1620, %v1748
  %v1786 = vadd.f32 %v1621, %v1751
  %v1787 = vadd.f32 %v1622, %v1756
  %v1788 = vadd.f32 %v1623, %v1759
  %v1789 = vadd.f32 %v1624, %v1764
  %v1790 = vadd.f32 %v1625, %v1767
  %v1791 = vadd.f32 %v1626, %v1772
  %v1792 = vadd.f32 %v1627, %v1775
  %v1793 = vadd.f32 %v1628, %v1780
  %1794 = vst [vmem:[%s2] sm:$0xff] %v1785
  %1795 = vst [vmem:[%s2 + $0x38] sm:$0xff] %v1786
  %1796 = vst [vmem:[%s2 + $0x70] sm:$0xff] %v1787
  %1797 = vst [vmem:[%s2 + $0xa8] sm:$0xff] %v1788
  %1798 = vst [vmem:[%s2 + $0xe0] sm:$0xff] %v1789
  %1799 = vst [vmem:[%s2 + $0x118] sm:$0xff] %v1790
  %1800 = vst [vmem:[%s2 + $0x150] sm:$0xff] %v1791
  %1801 = vst [vmem:[%s2 + $0x188] sm:$0xff] %v1792
  %1802 = vst [vmem:[%s2 + $0x1c0] sm:$0xff] %v1793
  %v1803 = vld [vmem:[%s0 + $0x4] sm:$0xf]
  %v1804 = vld [vmem:[%s0 + $0x20] sm:$0xf]
  %v1805 = vld [vmem:[%s0 + $0x3c] sm:$0xf]
  %v1806 = vld [vmem:[%s0 + $0x58] sm:$0xf]
  %v1807 = vld [vmem:[%s0 + $0x74] sm:$0xf]
  %v1808 = vld [vmem:[%s0 + $0x90] sm:$0xf]
  %v1809 = vld [vmem:[%s0 + $0xac] sm:$0xf]
  %v1810 = vld [vmem:[%s0 + $0xc8] sm:$0xf]
  %v1811 = vld [vmem:[%s0 + $0xe4] sm:$0xf]
  %s1812 = scalar_lea.vmem %s1, 576
  %v1813 = vld [vmem:[%s1812] sm:$0xf]
  %v1814 = vld [vmem:[%s1812 + $0x4] sm:$0xf]
  %v1815 = vld [vmem:[%s1812 + $0x8] sm:$0xf]
  %v1816 = vld [vmem:[%s1812 + $0xc] sm:$0xf]
  %v1817 = vld [vmem:[%s1812 + $0x10] sm:$0xf]
  %v1818 = vld [vmem:[%s1812 + $0x14] sm:$0xf]
  %v1819 = vld [vmem:[%s1812 + $0x18] sm:$0xf]
  %v1820 = vld [vmem:[%s1812 + $0x1c] sm:$0xf]
  %v1821 = vld [vmem:[%s1812 + $0x20] sm:$0xf]
  %v1822 = vld [vmem:[%s1812 + $0x24] sm:$0xf]
  %v1823 = vld [vmem:[%s1812 + $0x28] sm:$0xf]
  %v1824 = vld [vmem:[%s1812 + $0x2c] sm:$0xf]
  %v1825 = vld [vmem:[%s1812 + $0x30] sm:$0xf]
  %v1826 = vld [vmem:[%s1812 + $0x34] sm:$0xf]
  %v1827 = vld [vmem:[%s1812 + $0x38] sm:$0xf]
  %v1828 = vld [vmem:[%s1812 + $0x3c] sm:$0xf]
  %v1829 = vld [vmem:[%s37 + $0x4] sm:$0xf]
  %v1830 = vld [vmem:[%s37 + $0x20] sm:$0xf]
  %v1831 = vld [vmem:[%s37 + $0x3c] sm:$0xf]
  %v1832 = vld [vmem:[%s37 + $0x58] sm:$0xf]
  %v1833 = vld [vmem:[%s37 + $0x74] sm:$0xf]
  %v1834 = vld [vmem:[%s37 + $0x90] sm:$0xf]
  %v1835 = vld [vmem:[%s37 + $0xac] sm:$0xf]
  %v1836 = vld [vmem:[%s37 + $0xc8] sm:$0xf]
  %v1837 = vld [vmem:[%s37 + $0xe4] sm:$0xf]
  %s1838 = scalar_lea.vmem %s1, 640
  %v1839 = vld [vmem:[%s1838] sm:$0xf]
  %v1840 = vld [vmem:[%s1838 + $0x4] sm:$0xf]
  %v1841 = vld [vmem:[%s1838 + $0x8] sm:$0xf]
  %v1842 = vld [vmem:[%s1838 + $0xc] sm:$0xf]
  %v1843 = vld [vmem:[%s1838 + $0x10] sm:$0xf]
  %v1844 = vld [vmem:[%s1838 + $0x14] sm:$0xf]
  %v1845 = vld [vmem:[%s1838 + $0x18] sm:$0xf]
  %v1846 = vld [vmem:[%s1838 + $0x1c] sm:$0xf]
  %v1847 = vld [vmem:[%s1838 + $0x20] sm:$0xf]
  %v1848 = vld [vmem:[%s1838 + $0x24] sm:$0xf]
  %v1849 = vld [vmem:[%s1838 + $0x28] sm:$0xf]
  %v1850 = vld [vmem:[%s1838 + $0x2c] sm:$0xf]
  %v1851 = vld [vmem:[%s1838 + $0x30] sm:$0xf]
  %v1852 = vld [vmem:[%s1838 + $0x34] sm:$0xf]
  %v1853 = vld [vmem:[%s1838 + $0x38] sm:$0xf]
  %v1854 = vld [vmem:[%s1838 + $0x3c] sm:$0xf]
  %v1864 = vunpack.c.l.b16 %v1829
  %v1865 = vunpack.c.l.b16 %v1830
  %v1866 = vunpack.c.l.b16 %v1831
  %v1867 = vunpack.c.l.b16 %v1832
  %v1868 = vunpack.c.l.b16 %v1833
  %v1869 = vunpack.c.l.b16 %v1834
  %v1870 = vunpack.c.l.b16 %v1835
  %v1871 = vunpack.c.l.b16 %v1836
  %v1872 = vunpack.c.l.b16 %v1837
  %v1873 = vpack.c.b16 %v1865, %v1864
  %v1874 = vpack.c.b16 %v1867, %v1866
  %v1875 = vpack.c.b16 %v1869, %v1868
  %v1876 = vpack.c.b16 %v1871, %v1870
  %v1877 = vpack.c.b16 %v1872, %v1872
  %v1899 = vunpack.c.l.b16 %v1839
  %v1900 = vunpack.c.l.b16 %v1840
  %v1901 = vunpack.c.l.b16 %v1841
  %v1902 = vunpack.c.l.b16 %v1842
  %v1903 = vunpack.c.l.b16 %v1843
  %v1904 = vunpack.c.l.b16 %v1844
  %v1905 = vunpack.c.l.b16 %v1845
  %v1906 = vunpack.c.l.b16 %v1846
  %v1907 = vunpack.c.l.b16 %v1847
  %v1908 = vunpack.c.l.b16 %v1848
  %v1909 = vunpack.c.l.b16 %v1849
  %v1910 = vunpack.c.l.b16 %v1850
  %v1911 = vunpack.c.l.b16 %v1851
  %v1912 = vunpack.c.l.b16 %v1852
  %v1913 = vunpack.c.l.b16 %v1853
  %v1914 = vunpack.c.l.b16 %v1854
  %v1915 = vpack.c.b16 %v1900, %v1899
  %v1916 = vpack.c.b16 %v1902, %v1901
  %v1917 = vpack.c.b16 %v1904, %v1903
  %v1918 = vpack.c.b16 %v1906, %v1905
  %v1919 = vpack.c.b16 %v1908, %v1907
  %v1920 = vpack.c.b16 %v1910, %v1909
  %v1921 = vpack.c.b16 %v1912, %v1911
  %v1922 = vpack.c.b16 %v1914, %v1913
  %1931 = vmatprep.subr.bf16.mxu0 0
  %1932 = vmatpush1.bf16.msra.mxu0 %v1922
  %1933 = vmatprep.subr.bf16.mxu0 0
  %1934 = vmatpush1.bf16.msra.mxu0 %v1921
  %1935 = vmatprep.subr.bf16.mxu0 0
  %1936 = vmatpush1.bf16.msra.mxu0 %v1920
  %1937 = vmatprep.subr.bf16.mxu0 0
  %1938 = vmatpush1.bf16.msra.mxu0 %v1919
  %1939 = vmatprep.subr.bf16.mxu0 0
  %1940 = vmatpush1.bf16.msra.mxu0 %v1918
  %1941 = vmatprep.subr.bf16.mxu0 0
  %1942 = vmatpush1.bf16.msra.mxu0 %v1917
  %1943 = vmatprep.subr.bf16.mxu0 0
  %1944 = vmatpush1.bf16.msra.mxu0 %v1916
  %1945 = vmatprep.subr.bf16.mxu0 0
  %1946 = vmatpush1.bf16.msra.mxu0 %v1915
  %1947 = vmatprep.subr.bf16.mxu0 0
  %1948 = vmatpush2.bf16.msra.mxu0 0
  %1949 = vmatprep.subr.bf16.mxu0 0
  %1950 = vmatpush2.bf16.msra.mxu0 0
  %1951 = vmatprep.subr.bf16.mxu0 0
  %1952 = vmatpush2.bf16.msra.mxu0 0
  %1953 = vmatprep.subr.bf16.mxu0 0
  %1954 = vmatpush2.bf16.msra.mxu0 0
  %1955 = vmatprep.subr.bf16.mxu0 0
  %1956 = vmatpush2.bf16.msra.mxu0 0
  %1957 = vmatprep.subr.bf16.mxu0 0
  %1958 = vmatpush2.bf16.msra.mxu0 0
  %1959 = vmatprep.subr.bf16.mxu0 0
  %1960 = vmatpush2.bf16.msra.mxu0 0
  %1961 = vmatprep.subr.bf16.mxu0 0
  %1962 = vmatpush2.bf16.msra.mxu0 0
  %1963 = vmatprep.mubr.bf16.mxu0 0
  %1964 = vmatmul.mubr.bf16.gmra.mxu0 %v1873
  %v1965 = vpop.f32.mrf.mxu0
  %v1966 = vadd.f32 0.0, %v1965
  %v1967 = vpop.f32.mrf.mxu0
  %v1968 = vpop.f32.mrf.mxu0
  %v1969 = vadd.f32 0.0, %v1968
  %v1970 = vpop.f32.mrf.mxu0
  %1971 = vmatprep.mubr.bf16.mxu0 0
  %1972 = vmatmul.mubr.bf16.gmra.mxu0 %v1874
  %v1973 = vpop.f32.mrf.mxu0
  %v1974 = vadd.f32 0.0, %v1973
  %v1975 = vpop.f32.mrf.mxu0
  %v1976 = vpop.f32.mrf.mxu0
  %v1977 = vadd.f32 0.0, %v1976
  %v1978 = vpop.f32.mrf.mxu0
  %1979 = vmatprep.mubr.bf16.mxu0 0
  %1980 = vmatmul.mubr.bf16.gmra.mxu0 %v1875
  %v1981 = vpop.f32.mrf.mxu0
  %v1982 = vadd.f32 0.0, %v1981
  %v1983 = vpop.f32.mrf.mxu0
  %v1984 = vpop.f32.mrf.mxu0
  %v1985 = vadd.f32 0.0, %v1984
  %v1986 = vpop.f32.mrf.mxu0
  %1987 = vmatprep.mubr.bf16.mxu0 0
  %1988 = vmatmul.mubr.bf16.gmra.mxu0 %v1876
  %v1989 = vpop.f32.mrf.mxu0
  %v1990 = vadd.f32 0.0, %v1989
  %v1991 = vpop.f32.mrf.mxu0
  %v1992 = vpop.f32.mrf.mxu0
  %v1993 = vadd.f32 0.0, %v1992
  %v1994 = vpop.f32.mrf.mxu0
  %1995 = vmatprep.mubr.bf16.mxu0 0
  %1996 = vmatmul.mubr.bf16.gmra.mxu0 %v1877
  %v1997 = vpop.f32.mrf.mxu0
  %v1998 = vadd.f32 0.0, %v1997
  %v1999 = vpop.f32.mrf.mxu0
  %v2000 = vpop.f32.mrf.mxu0
  %v2001 = vpop.f32.mrf.mxu0
  %2002 = vdwg.mxu0
  %v2012 = vunpack.c.l.b16 %v1803
  %v2013 = vunpack.c.l.b16 %v1804
  %v2014 = vunpack.c.l.b16 %v1805
  %v2015 = vunpack.c.l.b16 %v1806
  %v2016 = vunpack.c.l.b16 %v1807
  %v2017 = vunpack.c.l.b16 %v1808
  %v2018 = vunpack.c.l.b16 %v1809
  %v2019 = vunpack.c.l.b16 %v1810
  %v2020 = vunpack.c.l.b16 %v1811
  %v2021 = vpack.c.b16 %v2013, %v2012
  %v2022 = vpack.c.b16 %v2015, %v2014
  %v2023 = vpack.c.b16 %v2017, %v2016
  %v2024 = vpack.c.b16 %v2019, %v2018
  %v2025 = vpack.c.b16 %v2020, %v2020
  %v2047 = vunpack.c.l.b16 %v1813
  %v2048 = vunpack.c.l.b16 %v1814
  %v2049 = vunpack.c.l.b16 %v1815
  %v2050 = vunpack.c.l.b16 %v1816
  %v2051 = vunpack.c.l.b16 %v1817
  %v2052 = vunpack.c.l.b16 %v1818
  %v2053 = vunpack.c.l.b16 %v1819
  %v2054 = vunpack.c.l.b16 %v1820
  %v2055 = vunpack.c.l.b16 %v1821
  %v2056 = vunpack.c.l.b16 %v1822
  %v2057 = vunpack.c.l.b16 %v1823
  %v2058 = vunpack.c.l.b16 %v1824
  %v2059 = vunpack.c.l.b16 %v1825
  %v2060 = vunpack.c.l.b16 %v1826
  %v2061 = vunpack.c.l.b16 %v1827
  %v2062 = vunpack.c.l.b16 %v1828
  %v2063 = vpack.c.b16 %v2048, %v2047
  %v2064 = vpack.c.b16 %v2050, %v2049
  %v2065 = vpack.c.b16 %v2052, %v2051
  %v2066 = vpack.c.b16 %v2054, %v2053
  %v2067 = vpack.c.b16 %v2056, %v2055
  %v2068 = vpack.c.b16 %v2058, %v2057
  %v2069 = vpack.c.b16 %v2060, %v2059
  %v2070 = vpack.c.b16 %v2062, %v2061
  %2079 = vmatprep.subr.bf16.mxu0 0
  %2080 = vmatpush1.bf16.msra.mxu0 %v2070
  %2081 = vmatprep.subr.bf16.mxu0 0
  %2082 = vmatpush1.bf16.msra.mxu0 %v2069
  %2083 = vmatprep.subr.bf16.mxu0 0
  %2084 = vmatpush1.bf16.msra.mxu0 %v2068
  %2085 = vmatprep.subr.bf16.mxu0 0
  %2086 = vmatpush1.bf16.msra.mxu0 %v2067
  %2087 = vmatprep.subr.bf16.mxu0 0
  %2088 = vmatpush1.bf16.msra.mxu0 %v2066
  %2089 = vmatprep.subr.bf16.mxu0 0
  %2090 = vmatpush1.bf16.msra.mxu0 %v2065
  %2091 = vmatprep.subr.bf16.mxu0 0
  %2092 = vmatpush1.bf16.msra.mxu0 %v2064
  %2093 = vmatprep.subr.bf16.mxu0 0
  %2094 = vmatpush1.bf16.msra.mxu0 %v2063
  %2095 = vmatprep.subr.bf16.mxu0 0
  %2096 = vmatpush2.bf16.msra.mxu0 0
  %2097 = vmatprep.subr.bf16.mxu0 0
  %2098 = vmatpush2.bf16.msra.mxu0 0
  %2099 = vmatprep.subr.bf16.mxu0 0
  %2100 = vmatpush2.bf16.msra.mxu0 0
  %2101 = vmatprep.subr.bf16.mxu0 0
  %2102 = vmatpush2.bf16.msra.mxu0 0
  %2103 = vmatprep.subr.bf16.mxu0 0
  %2104 = vmatpush2.bf16.msra.mxu0 0
  %2105 = vmatprep.subr.bf16.mxu0 0
  %2106 = vmatpush2.bf16.msra.mxu0 0
  %2107 = vmatprep.subr.bf16.mxu0 0
  %2108 = vmatpush2.bf16.msra.mxu0 0
  %2109 = vmatprep.subr.bf16.mxu0 0
  %2110 = vmatpush2.bf16.msra.mxu0 0
  %2111 = vmatprep.mubr.bf16.mxu0 0
  %2112 = vmatmul.mubr.bf16.gmra.mxu0 %v2021
  %v2113 = vpop.f32.mrf.mxu0
  %v2114 = vadd.f32 %v1966, %v2113
  %v2115 = vpop.f32.mrf.mxu0
  %v2116 = vpop.f32.mrf.mxu0
  %v2117 = vadd.f32 %v1969, %v2116
  %v2118 = vpop.f32.mrf.mxu0
  %2119 = vmatprep.mubr.bf16.mxu0 0
  %2120 = vmatmul.mubr.bf16.gmra.mxu0 %v2022
  %v2121 = vpop.f32.mrf.mxu0
  %v2122 = vadd.f32 %v1974, %v2121
  %v2123 = vpop.f32.mrf.mxu0
  %v2124 = vpop.f32.mrf.mxu0
  %v2125 = vadd.f32 %v1977, %v2124
  %v2126 = vpop.f32.mrf.mxu0
  %2127 = vmatprep.mubr.bf16.mxu0 0
  %2128 = vmatmul.mubr.bf16.gmra.mxu0 %v2023
  %v2129 = vpop.f32.mrf.mxu0
  %v2130 = vadd.f32 %v1982, %v2129
  %v2131 = vpop.f32.mrf.mxu0
  %v2132 = vpop.f32.mrf.mxu0
  %v2133 = vadd.f32 %v1985, %v2132
  %v2134 = vpop.f32.mrf.mxu0
  %2135 = vmatprep.mubr.bf16.mxu0 0
  %2136 = vmatmul.mubr.bf16.gmra.mxu0 %v2024
  %v2137 = vpop.f32.mrf.mxu0
  %v2138 = vadd.f32 %v1990, %v2137
  %v2139 = vpop.f32.mrf.mxu0
  %v2140 = vpop.f32.mrf.mxu0
  %v2141 = vadd.f32 %v1993, %v2140
  %v2142 = vpop.f32.mrf.mxu0
  %2143 = vmatprep.mubr.bf16.mxu0 0
  %2144 = vmatmul.mubr.bf16.gmra.mxu0 %v2025
  %v2145 = vpop.f32.mrf.mxu0
  %v2146 = vadd.f32 %v1998, %v2145
  %v2147 = vpop.f32.mrf.mxu0
  %v2148 = vpop.f32.mrf.mxu0
  %v2149 = vpop.f32.mrf.mxu0
  %2150 = vdwg.mxu0
  %v2151 = vld [vmem:[%s0 + $0x4] sm:$0xf]
  %v2152 = vld [vmem:[%s0 + $0x20] sm:$0xf]
  %v2153 = vld [vmem:[%s0 + $0x3c] sm:$0xf]
  %v2154 = vld [vmem:[%s0 + $0x58] sm:$0xf]
  %v2155 = vld [vmem:[%s0 + $0x74] sm:$0xf]
  %v2156 = vld [vmem:[%s0 + $0x90] sm:$0xf]
  %v2157 = vld [vmem:[%s0 + $0xac] sm:$0xf]
  %v2158 = vld [vmem:[%s0 + $0xc8] sm:$0xf]
  %v2159 = vld [vmem:[%s0 + $0xe4] sm:$0xf]
  %v2160 = vld [vmem:[%s0 + $0x100] sm:$0x1]
  %s2161 = scalar_lea.vmem %s1, 704
  %v2162 = vld [vmem:[%s2161] sm:$0xf]
  %v2163 = vld [vmem:[%s2161 + $0x4] sm:$0xf]
  %v2164 = vld [vmem:[%s2161 + $0x8] sm:$0xf]
  %v2165 = vld [vmem:[%s2161 + $0xc] sm:$0xf]
  %v2166 = vld [vmem:[%s2161 + $0x10] sm:$0xf]
  %v2167 = vld [vmem:[%s2161 + $0x14] sm:$0xf]
  %v2168 = vld [vmem:[%s2161 + $0x18] sm:$0xf]
  %v2169 = vld [vmem:[%s2161 + $0x1c] sm:$0xf]
  %v2170 = vld [vmem:[%s2161 + $0x20] sm:$0xf]
  %v2171 = vld [vmem:[%s2161 + $0x24] sm:$0xf]
  %v2172 = vld [vmem:[%s2161 + $0x28] sm:$0xf]
  %v2173 = vld [vmem:[%s2161 + $0x2c] sm:$0xf]
  %v2174 = vld [vmem:[%s2161 + $0x30] sm:$0xf]
  %v2175 = vld [vmem:[%s2161 + $0x34] sm:$0xf]
  %v2176 = vld [vmem:[%s2161 + $0x38] sm:$0xf]
  %v2177 = vld [vmem:[%s2161 + $0x3c] sm:$0xf]
  %v2188 = vunpack.c.l.b16 %v2151
  %v2189 = vunpack.c.l.b16 %v2152
  %v2190 = vunpack.c.l.b16 %v2153
  %v2191 = vunpack.c.l.b16 %v2154
  %v2192 = vunpack.c.l.b16 %v2155
  %v2193 = vunpack.c.l.b16 %v2156
  %v2194 = vunpack.c.l.b16 %v2157
  %v2195 = vunpack.c.l.b16 %v2158
  %v2196 = vunpack.c.l.b16 %v2159
  %v2197 = vunpack.c.l.b16 %v2160
  %v2198 = vpack.c.b16 %v2189, %v2188
  %v2199 = vpack.c.b16 %v2191, %v2190
  %v2200 = vpack.c.b16 %v2193, %v2192
  %v2201 = vpack.c.b16 %v2195, %v2194
  %v2202 = vpack.c.b16 %v2197, %v2196
  %v2204 = vshrl.u32 %v2198, 16
  %v2206 = vshll.u32 %v2198, 16
  %v2208 = vrot.slane %v2206, 1
  %v2209 = vor.u32 %v2204, %v2208
  %v2211 = vshll.u32 %v2199, 16
  %v2213 = vrot.slane %v2211, 1
  %v2214 = vsel %vm412, %v2209, %v2213
  %v2215 = vshrl.u32 %v2199, 16
  %v2217 = vor.u32 %v2215, %v2213
  %v2219 = vshll.u32 %v2200, 16
  %v2221 = vrot.slane %v2219, 1
  %v2222 = vsel %vm412, %v2217, %v2221
  %v2223 = vshrl.u32 %v2200, 16
  %v2225 = vor.u32 %v2223, %v2221
  %v2227 = vshll.u32 %v2201, 16
  %v2229 = vrot.slane %v2227, 1
  %v2230 = vsel %vm412, %v2225, %v2229
  %v2231 = vshrl.u32 %v2201, 16
  %v2233 = vor.u32 %v2231, %v2229
  %v2235 = vshll.u32 %v2202, 16
  %v2237 = vrot.slane %v2235, 1
  %v2238 = vsel %vm412, %v2233, %v2237
  %v2239 = vshrl.u32 %v2202, 16
  %v2241 = vor.u32 %v2239, %v2237
  %v2263 = vunpack.c.l.b16 %v2162
  %v2264 = vunpack.c.l.b16 %v2163
  %v2265 = vunpack.c.l.b16 %v2164
  %v2266 = vunpack.c.l.b16 %v2165
  %v2267 = vunpack.c.l.b16 %v2166
  %v2268 = vunpack.c.l.b16 %v2167
  %v2269 = vunpack.c.l.b16 %v2168
  %v2270 = vunpack.c.l.b16 %v2169
  %v2271 = vunpack.c.l.b16 %v2170
  %v2272 = vunpack.c.l.b16 %v2171
  %v2273 = vunpack.c.l.b16 %v2172
  %v2274 = vunpack.c.l.b16 %v2173
  %v2275 = vunpack.c.l.b16 %v2174
  %v2276 = vunpack.c.l.b16 %v2175
  %v2277 = vunpack.c.l.b16 %v2176
  %v2278 = vunpack.c.l.b16 %v2177
  %v2279 = vpack.c.b16 %v2264, %v2263
  %v2280 = vpack.c.b16 %v2266, %v2265
  %v2281 = vpack.c.b16 %v2268, %v2267
  %v2282 = vpack.c.b16 %v2270, %v2269
  %v2283 = vpack.c.b16 %v2272, %v2271
  %v2284 = vpack.c.b16 %v2274, %v2273
  %v2285 = vpack.c.b16 %v2276, %v2275
  %v2286 = vpack.c.b16 %v2278, %v2277
  %2295 = vmatprep.subr.bf16.mxu0 0
  %2296 = vmatpush1.bf16.msra.mxu0 %v2286
  %2297 = vmatprep.subr.bf16.mxu0 0
  %2298 = vmatpush1.bf16.msra.mxu0 %v2285
  %2299 = vmatprep.subr.bf16.mxu0 0
  %2300 = vmatpush1.bf16.msra.mxu0 %v2284
  %2301 = vmatprep.subr.bf16.mxu0 0
  %2302 = vmatpush1.bf16.msra.mxu0 %v2283
  %2303 = vmatprep.subr.bf16.mxu0 0
  %2304 = vmatpush1.bf16.msra.mxu0 %v2282
  %2305 = vmatprep.subr.bf16.mxu0 0
  %2306 = vmatpush1.bf16.msra.mxu0 %v2281
  %2307 = vmatprep.subr.bf16.mxu0 0
  %2308 = vmatpush1.bf16.msra.mxu0 %v2280
  %2309 = vmatprep.subr.bf16.mxu0 0
  %2310 = vmatpush1.bf16.msra.mxu0 %v2279
  %2311 = vmatprep.subr.bf16.mxu0 0
  %2312 = vmatpush2.bf16.msra.mxu0 0
  %2313 = vmatprep.subr.bf16.mxu0 0
  %2314 = vmatpush2.bf16.msra.mxu0 0
  %2315 = vmatprep.subr.bf16.mxu0 0
  %2316 = vmatpush2.bf16.msra.mxu0 0
  %2317 = vmatprep.subr.bf16.mxu0 0
  %2318 = vmatpush2.bf16.msra.mxu0 0
  %2319 = vmatprep.subr.bf16.mxu0 0
  %2320 = vmatpush2.bf16.msra.mxu0 0
  %2321 = vmatprep.subr.bf16.mxu0 0
  %2322 = vmatpush2.bf16.msra.mxu0 0
  %2323 = vmatprep.subr.bf16.mxu0 0
  %2324 = vmatpush2.bf16.msra.mxu0 0
  %2325 = vmatprep.subr.bf16.mxu0 0
  %2326 = vmatpush2.bf16.msra.mxu0 0
  %2327 = vmatprep.mubr.bf16.mxu0 0
  %2328 = vmatmul.mubr.bf16.gmra.mxu0 %v2214
  %v2329 = vpop.f32.mrf.mxu0
  %v2330 = vadd.f32 0.0, %v2329
  %v2331 = vpop.f32.mrf.mxu0
  %v2332 = vpop.f32.mrf.mxu0
  %v2333 = vadd.f32 0.0, %v2332
  %v2334 = vpop.f32.mrf.mxu0
  %2335 = vmatprep.mubr.bf16.mxu0 0
  %2336 = vmatmul.mubr.bf16.gmra.mxu0 %v2222
  %v2337 = vpop.f32.mrf.mxu0
  %v2338 = vadd.f32 0.0, %v2337
  %v2339 = vpop.f32.mrf.mxu0
  %v2340 = vpop.f32.mrf.mxu0
  %v2341 = vadd.f32 0.0, %v2340
  %v2342 = vpop.f32.mrf.mxu0
  %2343 = vmatprep.mubr.bf16.mxu0 0
  %2344 = vmatmul.mubr.bf16.gmra.mxu0 %v2230
  %v2345 = vpop.f32.mrf.mxu0
  %v2346 = vadd.f32 0.0, %v2345
  %v2347 = vpop.f32.mrf.mxu0
  %v2348 = vpop.f32.mrf.mxu0
  %v2349 = vadd.f32 0.0, %v2348
  %v2350 = vpop.f32.mrf.mxu0
  %2351 = vmatprep.mubr.bf16.mxu0 0
  %2352 = vmatmul.mubr.bf16.gmra.mxu0 %v2238
  %v2353 = vpop.f32.mrf.mxu0
  %v2354 = vadd.f32 0.0, %v2353
  %v2355 = vpop.f32.mrf.mxu0
  %v2356 = vpop.f32.mrf.mxu0
  %v2357 = vadd.f32 0.0, %v2356
  %v2358 = vpop.f32.mrf.mxu0
  %2359 = vmatprep.mubr.bf16.mxu0 0
  %2360 = vmatmul.mubr.bf16.gmra.mxu0 %v2241
  %v2361 = vpop.f32.mrf.mxu0
  %v2362 = vadd.f32 0.0, %v2361
  %v2363 = vpop.f32.mrf.mxu0
  %v2364 = vpop.f32.mrf.mxu0
  %v2365 = vpop.f32.mrf.mxu0
  %2366 = vdwg.mxu0
  %v2367 = vadd.f32 %v2114, %v2330
  %v2368 = vadd.f32 %v2117, %v2333
  %v2369 = vadd.f32 %v2122, %v2338
  %v2370 = vadd.f32 %v2125, %v2341
  %v2371 = vadd.f32 %v2130, %v2346
  %v2372 = vadd.f32 %v2133, %v2349
  %v2373 = vadd.f32 %v2138, %v2354
  %v2374 = vadd.f32 %v2141, %v2357
  %v2375 = vadd.f32 %v2146, %v2362
  %v2376 = vld [vmem:[%s586 + $0x4] sm:$0xf]
  %v2377 = vld [vmem:[%s586 + $0x20] sm:$0xf]
  %v2378 = vld [vmem:[%s586 + $0x3c] sm:$0xf]
  %v2379 = vld [vmem:[%s586 + $0x58] sm:$0xf]
  %v2380 = vld [vmem:[%s586 + $0x74] sm:$0xf]
  %v2381 = vld [vmem:[%s586 + $0x90] sm:$0xf]
  %v2382 = vld [vmem:[%s586 + $0xac] sm:$0xf]
  %v2383 = vld [vmem:[%s586 + $0xc8] sm:$0xf]
  %v2384 = vld [vmem:[%s586 + $0xe4] sm:$0xf]
  %s2385 = scalar_lea.vmem %s1, 768
  %v2386 = vld [vmem:[%s2385] sm:$0xf]
  %v2387 = vld [vmem:[%s2385 + $0x4] sm:$0xf]
  %v2388 = vld [vmem:[%s2385 + $0x8] sm:$0xf]
  %v2389 = vld [vmem:[%s2385 + $0xc] sm:$0xf]
  %v2390 = vld [vmem:[%s2385 + $0x10] sm:$0xf]
  %v2391 = vld [vmem:[%s2385 + $0x14] sm:$0xf]
  %v2392 = vld [vmem:[%s2385 + $0x18] sm:$0xf]
  %v2393 = vld [vmem:[%s2385 + $0x1c] sm:$0xf]
  %v2394 = vld [vmem:[%s2385 + $0x20] sm:$0xf]
  %v2395 = vld [vmem:[%s2385 + $0x24] sm:$0xf]
  %v2396 = vld [vmem:[%s2385 + $0x28] sm:$0xf]
  %v2397 = vld [vmem:[%s2385 + $0x2c] sm:$0xf]
  %v2398 = vld [vmem:[%s2385 + $0x30] sm:$0xf]
  %v2399 = vld [vmem:[%s2385 + $0x34] sm:$0xf]
  %v2400 = vld [vmem:[%s2385 + $0x38] sm:$0xf]
  %v2401 = vld [vmem:[%s2385 + $0x3c] sm:$0xf]
  %v2411 = vunpack.c.l.b16 %v2376
  %v2412 = vunpack.c.l.b16 %v2377
  %v2413 = vunpack.c.l.b16 %v2378
  %v2414 = vunpack.c.l.b16 %v2379
  %v2415 = vunpack.c.l.b16 %v2380
  %v2416 = vunpack.c.l.b16 %v2381
  %v2417 = vunpack.c.l.b16 %v2382
  %v2418 = vunpack.c.l.b16 %v2383
  %v2419 = vunpack.c.l.b16 %v2384
  %v2420 = vpack.c.b16 %v2412, %v2411
  %v2421 = vpack.c.b16 %v2414, %v2413
  %v2422 = vpack.c.b16 %v2416, %v2415
  %v2423 = vpack.c.b16 %v2418, %v2417
  %v2424 = vpack.c.b16 %v2419, %v2419
  %v2446 = vunpack.c.l.b16 %v2386
  %v2447 = vunpack.c.l.b16 %v2387
  %v2448 = vunpack.c.l.b16 %v2388
  %v2449 = vunpack.c.l.b16 %v2389
  %v2450 = vunpack.c.l.b16 %v2390
  %v2451 = vunpack.c.l.b16 %v2391
  %v2452 = vunpack.c.l.b16 %v2392
  %v2453 = vunpack.c.l.b16 %v2393
  %v2454 = vunpack.c.l.b16 %v2394
  %v2455 = vunpack.c.l.b16 %v2395
  %v2456 = vunpack.c.l.b16 %v2396
  %v2457 = vunpack.c.l.b16 %v2397
  %v2458 = vunpack.c.l.b16 %v2398
  %v2459 = vunpack.c.l.b16 %v2399
  %v2460 = vunpack.c.l.b16 %v2400
  %v2461 = vunpack.c.l.b16 %v2401
  %v2462 = vpack.c.b16 %v2447, %v2446
  %v2463 = vpack.c.b16 %v2449, %v2448
  %v2464 = vpack.c.b16 %v2451, %v2450
  %v2465 = vpack.c.b16 %v2453, %v2452
  %v2466 = vpack.c.b16 %v2455, %v2454
  %v2467 = vpack.c.b16 %v2457, %v2456
  %v2468 = vpack.c.b16 %v2459, %v2458
  %v2469 = vpack.c.b16 %v2461, %v2460
  %2478 = vmatprep.subr.bf16.mxu0 0
  %2479 = vmatpush1.bf16.msra.mxu0 %v2469
  %2480 = vmatprep.subr.bf16.mxu0 0
  %2481 = vmatpush1.bf16.msra.mxu0 %v2468
  %2482 = vmatprep.subr.bf16.mxu0 0
  %2483 = vmatpush1.bf16.msra.mxu0 %v2467
  %2484 = vmatprep.subr.bf16.mxu0 0
  %2485 = vmatpush1.bf16.msra.mxu0 %v2466
  %2486 = vmatprep.subr.bf16.mxu0 0
  %2487 = vmatpush1.bf16.msra.mxu0 %v2465
  %2488 = vmatprep.subr.bf16.mxu0 0
  %2489 = vmatpush1.bf16.msra.mxu0 %v2464
  %2490 = vmatprep.subr.bf16.mxu0 0
  %2491 = vmatpush1.bf16.msra.mxu0 %v2463
  %2492 = vmatprep.subr.bf16.mxu0 0
  %2493 = vmatpush1.bf16.msra.mxu0 %v2462
  %2494 = vmatprep.subr.bf16.mxu0 0
  %2495 = vmatpush2.bf16.msra.mxu0 0
  %2496 = vmatprep.subr.bf16.mxu0 0
  %2497 = vmatpush2.bf16.msra.mxu0 0
  %2498 = vmatprep.subr.bf16.mxu0 0
  %2499 = vmatpush2.bf16.msra.mxu0 0
  %2500 = vmatprep.subr.bf16.mxu0 0
  %2501 = vmatpush2.bf16.msra.mxu0 0
  %2502 = vmatprep.subr.bf16.mxu0 0
  %2503 = vmatpush2.bf16.msra.mxu0 0
  %2504 = vmatprep.subr.bf16.mxu0 0
  %2505 = vmatpush2.bf16.msra.mxu0 0
  %2506 = vmatprep.subr.bf16.mxu0 0
  %2507 = vmatpush2.bf16.msra.mxu0 0
  %2508 = vmatprep.subr.bf16.mxu0 0
  %2509 = vmatpush2.bf16.msra.mxu0 0
  %2510 = vmatprep.mubr.bf16.mxu0 0
  %2511 = vmatmul.mubr.bf16.gmra.mxu0 %v2420
  %v2512 = vpop.f32.mrf.mxu0
  %v2513 = vadd.f32 0.0, %v2512
  %v2514 = vpop.f32.mrf.mxu0
  %v2515 = vpop.f32.mrf.mxu0
  %v2516 = vadd.f32 0.0, %v2515
  %v2517 = vpop.f32.mrf.mxu0
  %2518 = vmatprep.mubr.bf16.mxu0 0
  %2519 = vmatmul.mubr.bf16.gmra.mxu0 %v2421
  %v2520 = vpop.f32.mrf.mxu0
  %v2521 = vadd.f32 0.0, %v2520
  %v2522 = vpop.f32.mrf.mxu0
  %v2523 = vpop.f32.mrf.mxu0
  %v2524 = vadd.f32 0.0, %v2523
  %v2525 = vpop.f32.mrf.mxu0
  %2526 = vmatprep.mubr.bf16.mxu0 0
  %2527 = vmatmul.mubr.bf16.gmra.mxu0 %v2422
  %v2528 = vpop.f32.mrf.mxu0
  %v2529 = vadd.f32 0.0, %v2528
  %v2530 = vpop.f32.mrf.mxu0
  %v2531 = vpop.f32.mrf.mxu0
  %v2532 = vadd.f32 0.0, %v2531
  %v2533 = vpop.f32.mrf.mxu0
  %2534 = vmatprep.mubr.bf16.mxu0 0
  %2535 = vmatmul.mubr.bf16.gmra.mxu0 %v2423
  %v2536 = vpop.f32.mrf.mxu0
  %v2537 = vadd.f32 0.0, %v2536
  %v2538 = vpop.f32.mrf.mxu0
  %v2539 = vpop.f32.mrf.mxu0
  %v2540 = vadd.f32 0.0, %v2539
  %v2541 = vpop.f32.mrf.mxu0
  %2542 = vmatprep.mubr.bf16.mxu0 0
  %2543 = vmatmul.mubr.bf16.gmra.mxu0 %v2424
  %v2544 = vpop.f32.mrf.mxu0
  %v2545 = vadd.f32 0.0, %v2544
  %v2546 = vpop.f32.mrf.mxu0
  %v2547 = vpop.f32.mrf.mxu0
  %v2548 = vpop.f32.mrf.mxu0
  %2549 = vdwg.mxu0
  %v2550 = vadd.f32 %v2367, %v2513
  %v2551 = vadd.f32 %v2368, %v2516
  %v2552 = vadd.f32 %v2369, %v2521
  %v2553 = vadd.f32 %v2370, %v2524
  %v2554 = vadd.f32 %v2371, %v2529
  %v2555 = vadd.f32 %v2372, %v2532
  %v2556 = vadd.f32 %v2373, %v2537
  %v2557 = vadd.f32 %v2374, %v2540
  %v2558 = vadd.f32 %v2375, %v2545
  %v2559 = vld [vmem:[%s770 + $0x4] sm:$0xf]
  %v2560 = vld [vmem:[%s770 + $0x20] sm:$0xf]
  %v2561 = vld [vmem:[%s770 + $0x3c] sm:$0xf]
  %v2562 = vld [vmem:[%s770 + $0x58] sm:$0xf]
  %v2563 = vld [vmem:[%s770 + $0x74] sm:$0xf]
  %v2564 = vld [vmem:[%s770 + $0x90] sm:$0xf]
  %v2565 = vld [vmem:[%s770 + $0xac] sm:$0xf]
  %v2566 = vld [vmem:[%s770 + $0xc8] sm:$0xf]
  %v2567 = vld [vmem:[%s770 + $0xe4] sm:$0xf]
  %s2568 = scalar_lea.vmem %s1, 832
  %v2569 = vld [vmem:[%s2568] sm:$0xf]
  %v2570 = vld [vmem:[%s2568 + $0x4] sm:$0xf]
  %v2571 = vld [vmem:[%s2568 + $0x8] sm:$0xf]
  %v2572 = vld [vmem:[%s2568 + $0xc] sm:$0xf]
  %v2573 = vld [vmem:[%s2568 + $0x10] sm:$0xf]
  %v2574 = vld [vmem:[%s2568 + $0x14] sm:$0xf]
  %v2575 = vld [vmem:[%s2568 + $0x18] sm:$0xf]
  %v2576 = vld [vmem:[%s2568 + $0x1c] sm:$0xf]
  %v2577 = vld [vmem:[%s2568 + $0x20] sm:$0xf]
  %v2578 = vld [vmem:[%s2568 + $0x24] sm:$0xf]
  %v2579 = vld [vmem:[%s2568 + $0x28] sm:$0xf]
  %v2580 = vld [vmem:[%s2568 + $0x2c] sm:$0xf]
  %v2581 = vld [vmem:[%s2568 + $0x30] sm:$0xf]
  %v2582 = vld [vmem:[%s2568 + $0x34] sm:$0xf]
  %v2583 = vld [vmem:[%s2568 + $0x38] sm:$0xf]
  %v2584 = vld [vmem:[%s2568 + $0x3c] sm:$0xf]
  %v2594 = vunpack.c.l.b16 %v2559
  %v2595 = vunpack.c.l.b16 %v2560
  %v2596 = vunpack.c.l.b16 %v2561
  %v2597 = vunpack.c.l.b16 %v2562
  %v2598 = vunpack.c.l.b16 %v2563
  %v2599 = vunpack.c.l.b16 %v2564
  %v2600 = vunpack.c.l.b16 %v2565
  %v2601 = vunpack.c.l.b16 %v2566
  %v2602 = vunpack.c.l.b16 %v2567
  %v2603 = vpack.c.b16 %v2595, %v2594
  %v2604 = vpack.c.b16 %v2597, %v2596
  %v2605 = vpack.c.b16 %v2599, %v2598
  %v2606 = vpack.c.b16 %v2601, %v2600
  %v2607 = vpack.c.b16 %v2602, %v2602
  %v2629 = vunpack.c.l.b16 %v2569
  %v2630 = vunpack.c.l.b16 %v2570
  %v2631 = vunpack.c.l.b16 %v2571
  %v2632 = vunpack.c.l.b16 %v2572
  %v2633 = vunpack.c.l.b16 %v2573
  %v2634 = vunpack.c.l.b16 %v2574
  %v2635 = vunpack.c.l.b16 %v2575
  %v2636 = vunpack.c.l.b16 %v2576
  %v2637 = vunpack.c.l.b16 %v2577
  %v2638 = vunpack.c.l.b16 %v2578
  %v2639 = vunpack.c.l.b16 %v2579
  %v2640 = vunpack.c.l.b16 %v2580
  %v2641 = vunpack.c.l.b16 %v2581
  %v2642 = vunpack.c.l.b16 %v2582
  %v2643 = vunpack.c.l.b16 %v2583
  %v2644 = vunpack.c.l.b16 %v2584
  %v2645 = vpack.c.b16 %v2630, %v2629
  %v2646 = vpack.c.b16 %v2632, %v2631
  %v2647 = vpack.c.b16 %v2634, %v2633
  %v2648 = vpack.c.b16 %v2636, %v2635
  %v2649 = vpack.c.b16 %v2638, %v2637
  %v2650 = vpack.c.b16 %v2640, %v2639
  %v2651 = vpack.c.b16 %v2642, %v2641
  %v2652 = vpack.c.b16 %v2644, %v2643
  %2661 = vmatprep.subr.bf16.mxu0 0
  %2662 = vmatpush1.bf16.msra.mxu0 %v2652
  %2663 = vmatprep.subr.bf16.mxu0 0
  %2664 = vmatpush1.bf16.msra.mxu0 %v2651
  %2665 = vmatprep.subr.bf16.mxu0 0
  %2666 = vmatpush1.bf16.msra.mxu0 %v2650
  %2667 = vmatprep.subr.bf16.mxu0 0
  %2668 = vmatpush1.bf16.msra.mxu0 %v2649
  %2669 = vmatprep.subr.bf16.mxu0 0
  %2670 = vmatpush1.bf16.msra.mxu0 %v2648
  %2671 = vmatprep.subr.bf16.mxu0 0
  %2672 = vmatpush1.bf16.msra.mxu0 %v2647
  %2673 = vmatprep.subr.bf16.mxu0 0
  %2674 = vmatpush1.bf16.msra.mxu0 %v2646
  %2675 = vmatprep.subr.bf16.mxu0 0
  %2676 = vmatpush1.bf16.msra.mxu0 %v2645
  %2677 = vmatprep.subr.bf16.mxu0 0
  %2678 = vmatpush2.bf16.msra.mxu0 0
  %2679 = vmatprep.subr.bf16.mxu0 0
  %2680 = vmatpush2.bf16.msra.mxu0 0
  %2681 = vmatprep.subr.bf16.mxu0 0
  %2682 = vmatpush2.bf16.msra.mxu0 0
  %2683 = vmatprep.subr.bf16.mxu0 0
  %2684 = vmatpush2.bf16.msra.mxu0 0
  %2685 = vmatprep.subr.bf16.mxu0 0
  %2686 = vmatpush2.bf16.msra.mxu0 0
  %2687 = vmatprep.subr.bf16.mxu0 0
  %2688 = vmatpush2.bf16.msra.mxu0 0
  %2689 = vmatprep.subr.bf16.mxu0 0
  %2690 = vmatpush2.bf16.msra.mxu0 0
  %2691 = vmatprep.subr.bf16.mxu0 0
  %2692 = vmatpush2.bf16.msra.mxu0 0
  %2693 = vmatprep.mubr.bf16.mxu0 0
  %2694 = vmatmul.mubr.bf16.gmra.mxu0 %v2603
  %v2695 = vpop.f32.mrf.mxu0
  %v2696 = vadd.f32 0.0, %v2695
  %v2697 = vpop.f32.mrf.mxu0
  %v2698 = vpop.f32.mrf.mxu0
  %v2699 = vadd.f32 0.0, %v2698
  %v2700 = vpop.f32.mrf.mxu0
  %2701 = vmatprep.mubr.bf16.mxu0 0
  %2702 = vmatmul.mubr.bf16.gmra.mxu0 %v2604
  %v2703 = vpop.f32.mrf.mxu0
  %v2704 = vadd.f32 0.0, %v2703
  %v2705 = vpop.f32.mrf.mxu0
  %v2706 = vpop.f32.mrf.mxu0
  %v2707 = vadd.f32 0.0, %v2706
  %v2708 = vpop.f32.mrf.mxu0
  %2709 = vmatprep.mubr.bf16.mxu0 0
  %2710 = vmatmul.mubr.bf16.gmra.mxu0 %v2605
  %v2711 = vpop.f32.mrf.mxu0
  %v2712 = vadd.f32 0.0, %v2711
  %v2713 = vpop.f32.mrf.mxu0
  %v2714 = vpop.f32.mrf.mxu0
  %v2715 = vadd.f32 0.0, %v2714
  %v2716 = vpop.f32.mrf.mxu0
  %2717 = vmatprep.mubr.bf16.mxu0 0
  %2718 = vmatmul.mubr.bf16.gmra.mxu0 %v2606
  %v2719 = vpop.f32.mrf.mxu0
  %v2720 = vadd.f32 0.0, %v2719
  %v2721 = vpop.f32.mrf.mxu0
  %v2722 = vpop.f32.mrf.mxu0
  %v2723 = vadd.f32 0.0, %v2722
  %v2724 = vpop.f32.mrf.mxu0
  %2725 = vmatprep.mubr.bf16.mxu0 0
  %2726 = vmatmul.mubr.bf16.gmra.mxu0 %v2607
  %v2727 = vpop.f32.mrf.mxu0
  %v2728 = vadd.f32 0.0, %v2727
  %v2729 = vpop.f32.mrf.mxu0
  %v2730 = vpop.f32.mrf.mxu0
  %v2731 = vpop.f32.mrf.mxu0
  %2732 = vdwg.mxu0
  %v2733 = vadd.f32 %v2550, %v2696
  %v2734 = vadd.f32 %v2551, %v2699
  %v2735 = vadd.f32 %v2552, %v2704
  %v2736 = vadd.f32 %v2553, %v2707
  %v2737 = vadd.f32 %v2554, %v2712
  %v2738 = vadd.f32 %v2555, %v2715
  %v2739 = vadd.f32 %v2556, %v2720
  %v2740 = vadd.f32 %v2557, %v2723
  %v2741 = vadd.f32 %v2558, %v2728
  %v2742 = vld [vmem:[%s586 + $0x4] sm:$0xf]
  %v2743 = vld [vmem:[%s586 + $0x20] sm:$0xf]
  %v2744 = vld [vmem:[%s586 + $0x3c] sm:$0xf]
  %v2745 = vld [vmem:[%s586 + $0x58] sm:$0xf]
  %v2746 = vld [vmem:[%s586 + $0x74] sm:$0xf]
  %v2747 = vld [vmem:[%s586 + $0x90] sm:$0xf]
  %v2748 = vld [vmem:[%s586 + $0xac] sm:$0xf]
  %v2749 = vld [vmem:[%s586 + $0xc8] sm:$0xf]
  %v2750 = vld [vmem:[%s586 + $0xe4] sm:$0xf]
  %v2751 = vld [vmem:[%s586 + $0x100] sm:$0x1]
  %s2752 = scalar_lea.vmem %s1, 896
  %v2753 = vld [vmem:[%s2752] sm:$0xf]
  %v2754 = vld [vmem:[%s2752 + $0x4] sm:$0xf]
  %v2755 = vld [vmem:[%s2752 + $0x8] sm:$0xf]
  %v2756 = vld [vmem:[%s2752 + $0xc] sm:$0xf]
  %v2757 = vld [vmem:[%s2752 + $0x10] sm:$0xf]
  %v2758 = vld [vmem:[%s2752 + $0x14] sm:$0xf]
  %v2759 = vld [vmem:[%s2752 + $0x18] sm:$0xf]
  %v2760 = vld [vmem:[%s2752 + $0x1c] sm:$0xf]
  %v2761 = vld [vmem:[%s2752 + $0x20] sm:$0xf]
  %v2762 = vld [vmem:[%s2752 + $0x24] sm:$0xf]
  %v2763 = vld [vmem:[%s2752 + $0x28] sm:$0xf]
  %v2764 = vld [vmem:[%s2752 + $0x2c] sm:$0xf]
  %v2765 = vld [vmem:[%s2752 + $0x30] sm:$0xf]
  %v2766 = vld [vmem:[%s2752 + $0x34] sm:$0xf]
  %v2767 = vld [vmem:[%s2752 + $0x38] sm:$0xf]
  %v2768 = vld [vmem:[%s2752 + $0x3c] sm:$0xf]
  %v2779 = vunpack.c.l.b16 %v2742
  %v2780 = vunpack.c.l.b16 %v2743
  %v2781 = vunpack.c.l.b16 %v2744
  %v2782 = vunpack.c.l.b16 %v2745
  %v2783 = vunpack.c.l.b16 %v2746
  %v2784 = vunpack.c.l.b16 %v2747
  %v2785 = vunpack.c.l.b16 %v2748
  %v2786 = vunpack.c.l.b16 %v2749
  %v2787 = vunpack.c.l.b16 %v2750
  %v2788 = vunpack.c.l.b16 %v2751
  %v2789 = vpack.c.b16 %v2780, %v2779
  %v2790 = vpack.c.b16 %v2782, %v2781
  %v2791 = vpack.c.b16 %v2784, %v2783
  %v2792 = vpack.c.b16 %v2786, %v2785
  %v2793 = vpack.c.b16 %v2788, %v2787
  %v2795 = vshrl.u32 %v2789, 16
  %v2797 = vshll.u32 %v2789, 16
  %v2799 = vrot.slane %v2797, 1
  %v2800 = vor.u32 %v2795, %v2799
  %v2802 = vshll.u32 %v2790, 16
  %v2804 = vrot.slane %v2802, 1
  %v2805 = vsel %vm412, %v2800, %v2804
  %v2806 = vshrl.u32 %v2790, 16
  %v2808 = vor.u32 %v2806, %v2804
  %v2810 = vshll.u32 %v2791, 16
  %v2812 = vrot.slane %v2810, 1
  %v2813 = vsel %vm412, %v2808, %v2812
  %v2814 = vshrl.u32 %v2791, 16
  %v2816 = vor.u32 %v2814, %v2812
  %v2818 = vshll.u32 %v2792, 16
  %v2820 = vrot.slane %v2818, 1
  %v2821 = vsel %vm412, %v2816, %v2820
  %v2822 = vshrl.u32 %v2792, 16
  %v2824 = vor.u32 %v2822, %v2820
  %v2826 = vshll.u32 %v2793, 16
  %v2828 = vrot.slane %v2826, 1
  %v2829 = vsel %vm412, %v2824, %v2828
  %v2830 = vshrl.u32 %v2793, 16
  %v2832 = vor.u32 %v2830, %v2828
  %v2854 = vunpack.c.l.b16 %v2753
  %v2855 = vunpack.c.l.b16 %v2754
  %v2856 = vunpack.c.l.b16 %v2755
  %v2857 = vunpack.c.l.b16 %v2756
  %v2858 = vunpack.c.l.b16 %v2757
  %v2859 = vunpack.c.l.b16 %v2758
  %v2860 = vunpack.c.l.b16 %v2759
  %v2861 = vunpack.c.l.b16 %v2760
  %v2862 = vunpack.c.l.b16 %v2761
  %v2863 = vunpack.c.l.b16 %v2762
  %v2864 = vunpack.c.l.b16 %v2763
  %v2865 = vunpack.c.l.b16 %v2764
  %v2866 = vunpack.c.l.b16 %v2765
  %v2867 = vunpack.c.l.b16 %v2766
  %v2868 = vunpack.c.l.b16 %v2767
  %v2869 = vunpack.c.l.b16 %v2768
  %v2870 = vpack.c.b16 %v2855, %v2854
  %v2871 = vpack.c.b16 %v2857, %v2856
  %v2872 = vpack.c.b16 %v2859, %v2858
  %v2873 = vpack.c.b16 %v2861, %v2860
  %v2874 = vpack.c.b16 %v2863, %v2862
  %v2875 = vpack.c.b16 %v2865, %v2864
  %v2876 = vpack.c.b16 %v2867, %v2866
  %v2877 = vpack.c.b16 %v2869, %v2868
  %2886 = vmatprep.subr.bf16.mxu0 0
  %2887 = vmatpush1.bf16.msra.mxu0 %v2877
  %2888 = vmatprep.subr.bf16.mxu0 0
  %2889 = vmatpush1.bf16.msra.mxu0 %v2876
  %2890 = vmatprep.subr.bf16.mxu0 0
  %2891 = vmatpush1.bf16.msra.mxu0 %v2875
  %2892 = vmatprep.subr.bf16.mxu0 0
  %2893 = vmatpush1.bf16.msra.mxu0 %v2874
  %2894 = vmatprep.subr.bf16.mxu0 0
  %2895 = vmatpush1.bf16.msra.mxu0 %v2873
  %2896 = vmatprep.subr.bf16.mxu0 0
  %2897 = vmatpush1.bf16.msra.mxu0 %v2872
  %2898 = vmatprep.subr.bf16.mxu0 0
  %2899 = vmatpush1.bf16.msra.mxu0 %v2871
  %2900 = vmatprep.subr.bf16.mxu0 0
  %2901 = vmatpush1.bf16.msra.mxu0 %v2870
  %2902 = vmatprep.subr.bf16.mxu0 0
  %2903 = vmatpush2.bf16.msra.mxu0 0
  %2904 = vmatprep.subr.bf16.mxu0 0
  %2905 = vmatpush2.bf16.msra.mxu0 0
  %2906 = vmatprep.subr.bf16.mxu0 0
  %2907 = vmatpush2.bf16.msra.mxu0 0
  %2908 = vmatprep.subr.bf16.mxu0 0
  %2909 = vmatpush2.bf16.msra.mxu0 0
  %2910 = vmatprep.subr.bf16.mxu0 0
  %2911 = vmatpush2.bf16.msra.mxu0 0
  %2912 = vmatprep.subr.bf16.mxu0 0
  %2913 = vmatpush2.bf16.msra.mxu0 0
  %2914 = vmatprep.subr.bf16.mxu0 0
  %2915 = vmatpush2.bf16.msra.mxu0 0
  %2916 = vmatprep.subr.bf16.mxu0 0
  %2917 = vmatpush2.bf16.msra.mxu0 0
  %2918 = vmatprep.mubr.bf16.mxu0 0
  %2919 = vmatmul.mubr.bf16.gmra.mxu0 %v2805
  %v2920 = vpop.f32.mrf.mxu0
  %v2921 = vadd.f32 0.0, %v2920
  %v2922 = vpop.f32.mrf.mxu0
  %v2923 = vpop.f32.mrf.mxu0
  %v2924 = vadd.f32 0.0, %v2923
  %v2925 = vpop.f32.mrf.mxu0
  %2926 = vmatprep.mubr.bf16.mxu0 0
  %2927 = vmatmul.mubr.bf16.gmra.mxu0 %v2813
  %v2928 = vpop.f32.mrf.mxu0
  %v2929 = vadd.f32 0.0, %v2928
  %v2930 = vpop.f32.mrf.mxu0
  %v2931 = vpop.f32.mrf.mxu0
  %v2932 = vadd.f32 0.0, %v2931
  %v2933 = vpop.f32.mrf.mxu0
  %2934 = vmatprep.mubr.bf16.mxu0 0
  %2935 = vmatmul.mubr.bf16.gmra.mxu0 %v2821
  %v2936 = vpop.f32.mrf.mxu0
  %v2937 = vadd.f32 0.0, %v2936
  %v2938 = vpop.f32.mrf.mxu0
  %v2939 = vpop.f32.mrf.mxu0
  %v2940 = vadd.f32 0.0, %v2939
  %v2941 = vpop.f32.mrf.mxu0
  %2942 = vmatprep.mubr.bf16.mxu0 0
  %2943 = vmatmul.mubr.bf16.gmra.mxu0 %v2829
  %v2944 = vpop.f32.mrf.mxu0
  %v2945 = vadd.f32 0.0, %v2944
  %v2946 = vpop.f32.mrf.mxu0
  %v2947 = vpop.f32.mrf.mxu0
  %v2948 = vadd.f32 0.0, %v2947
  %v2949 = vpop.f32.mrf.mxu0
  %2950 = vmatprep.mubr.bf16.mxu0 0
  %2951 = vmatmul.mubr.bf16.gmra.mxu0 %v2832
  %v2952 = vpop.f32.mrf.mxu0
  %v2953 = vadd.f32 0.0, %v2952
  %v2954 = vpop.f32.mrf.mxu0
  %v2955 = vpop.f32.mrf.mxu0
  %v2956 = vpop.f32.mrf.mxu0
  %2957 = vdwg.mxu0
  %v2958 = vadd.f32 %v2733, %v2921
  %v2959 = vadd.f32 %v2734, %v2924
  %v2960 = vadd.f32 %v2735, %v2929
  %v2961 = vadd.f32 %v2736, %v2932
  %v2962 = vadd.f32 %v2737, %v2937
  %v2963 = vadd.f32 %v2738, %v2940
  %v2964 = vadd.f32 %v2739, %v2945
  %v2965 = vadd.f32 %v2740, %v2948
  %v2966 = vadd.f32 %v2741, %v2953
  %v2967 = vld [vmem:[%s0 + $0x20] sm:$0xf]
  %v2968 = vld [vmem:[%s0 + $0x3c] sm:$0xf]
  %v2969 = vld [vmem:[%s0 + $0x58] sm:$0xf]
  %v2970 = vld [vmem:[%s0 + $0x74] sm:$0xf]
  %v2971 = vld [vmem:[%s0 + $0x90] sm:$0xf]
  %v2972 = vld [vmem:[%s0 + $0xac] sm:$0xf]
  %v2973 = vld [vmem:[%s0 + $0xc8] sm:$0xf]
  %v2974 = vld [vmem:[%s0 + $0xe4] sm:$0xf]
  %v2975 = vld [vmem:[%s0 + $0x100] sm:$0xf]
  %v2976 = vld [vmem:[%s0 + $0x11c] sm:$0x1]
  %s2977 = scalar_lea.vmem %s1, 960
  %v2978 = vld [vmem:[%s2977] sm:$0xf]
  %v2979 = vld [vmem:[%s2977 + $0x4] sm:$0xf]
  %v2980 = vld [vmem:[%s2977 + $0x8] sm:$0xf]
  %v2981 = vld [vmem:[%s2977 + $0xc] sm:$0xf]
  %v2982 = vld [vmem:[%s2977 + $0x10] sm:$0xf]
  %v2983 = vld [vmem:[%s2977 + $0x14] sm:$0xf]
  %v2984 = vld [vmem:[%s2977 + $0x18] sm:$0xf]
  %v2985 = vld [vmem:[%s2977 + $0x1c] sm:$0xf]
  %v2986 = vld [vmem:[%s2977 + $0x20] sm:$0xf]
  %v2987 = vld [vmem:[%s2977 + $0x24] sm:$0xf]
  %v2988 = vld [vmem:[%s2977 + $0x28] sm:$0xf]
  %v2989 = vld [vmem:[%s2977 + $0x2c] sm:$0xf]
  %v2990 = vld [vmem:[%s2977 + $0x30] sm:$0xf]
  %v2991 = vld [vmem:[%s2977 + $0x34] sm:$0xf]
  %v2992 = vld [vmem:[%s2977 + $0x38] sm:$0xf]
  %v2993 = vld [vmem:[%s2977 + $0x3c] sm:$0xf]
  %v3004 = vunpack.c.l.b16 %v2967
  %v3005 = vunpack.c.l.b16 %v2968
  %v3006 = vunpack.c.l.b16 %v2969
  %v3007 = vunpack.c.l.b16 %v2970
  %v3008 = vunpack.c.l.b16 %v2971
  %v3009 = vunpack.c.l.b16 %v2972
  %v3010 = vunpack.c.l.b16 %v2973
  %v3011 = vunpack.c.l.b16 %v2974
  %v3012 = vunpack.c.l.b16 %v2975
  %v3013 = vunpack.c.l.b16 %v2976
  %v3014 = vpack.c.b16 %v3005, %v3004
  %v3015 = vpack.c.b16 %v3007, %v3006
  %v3016 = vpack.c.b16 %v3009, %v3008
  %v3017 = vpack.c.b16 %v3011, %v3010
  %v3018 = vpack.c.b16 %v3013, %v3012
  %v3020 = vshrl.u32 %v3014, 16
  %v3022 = vshll.u32 %v3014, 16
  %v3024 = vrot.slane %v3022, 1
  %v3025 = vor.u32 %v3020, %v3024
  %v3027 = vshll.u32 %v3015, 16
  %v3029 = vrot.slane %v3027, 1
  %v3030 = vsel %vm412, %v3025, %v3029
  %v3031 = vshrl.u32 %v3015, 16
  %v3033 = vor.u32 %v3031, %v3029
  %v3035 = vshll.u32 %v3016, 16
  %v3037 = vrot.slane %v3035, 1
  %v3038 = vsel %vm412, %v3033, %v3037
  %v3039 = vshrl.u32 %v3016, 16
  %v3041 = vor.u32 %v3039, %v3037
  %v3043 = vshll.u32 %v3017, 16
  %v3045 = vrot.slane %v3043, 1
  %v3046 = vsel %vm412, %v3041, %v3045
  %v3047 = vshrl.u32 %v3017, 16
  %v3049 = vor.u32 %v3047, %v3045
  %v3051 = vshll.u32 %v3018, 16
  %v3053 = vrot.slane %v3051, 1
  %v3054 = vsel %vm412, %v3049, %v3053
  %v3055 = vshrl.u32 %v3018, 16
  %v3057 = vor.u32 %v3055, %v3053
  %v3079 = vunpack.c.l.b16 %v2978
  %v3080 = vunpack.c.l.b16 %v2979
  %v3081 = vunpack.c.l.b16 %v2980
  %v3082 = vunpack.c.l.b16 %v2981
  %v3083 = vunpack.c.l.b16 %v2982
  %v3084 = vunpack.c.l.b16 %v2983
  %v3085 = vunpack.c.l.b16 %v2984
  %v3086 = vunpack.c.l.b16 %v2985
  %v3087 = vunpack.c.l.b16 %v2986
  %v3088 = vunpack.c.l.b16 %v2987
  %v3089 = vunpack.c.l.b16 %v2988
  %v3090 = vunpack.c.l.b16 %v2989
  %v3091 = vunpack.c.l.b16 %v2990
  %v3092 = vunpack.c.l.b16 %v2991
  %v3093 = vunpack.c.l.b16 %v2992
  %v3094 = vunpack.c.l.b16 %v2993
  %v3095 = vpack.c.b16 %v3080, %v3079
  %v3096 = vpack.c.b16 %v3082, %v3081
  %v3097 = vpack.c.b16 %v3084, %v3083
  %v3098 = vpack.c.b16 %v3086, %v3085
  %v3099 = vpack.c.b16 %v3088, %v3087
  %v3100 = vpack.c.b16 %v3090, %v3089
  %v3101 = vpack.c.b16 %v3092, %v3091
  %v3102 = vpack.c.b16 %v3094, %v3093
  %3111 = vmatprep.subr.bf16.mxu0 0
  %3112 = vmatpush1.bf16.msra.mxu0 %v3102
  %3113 = vmatprep.subr.bf16.mxu0 0
  %3114 = vmatpush1.bf16.msra.mxu0 %v3101
  %3115 = vmatprep.subr.bf16.mxu0 0
  %3116 = vmatpush1.bf16.msra.mxu0 %v3100
  %3117 = vmatprep.subr.bf16.mxu0 0
  %3118 = vmatpush1.bf16.msra.mxu0 %v3099
  %3119 = vmatprep.subr.bf16.mxu0 0
  %3120 = vmatpush1.bf16.msra.mxu0 %v3098
  %3121 = vmatprep.subr.bf16.mxu0 0
  %3122 = vmatpush1.bf16.msra.mxu0 %v3097
  %3123 = vmatprep.subr.bf16.mxu0 0
  %3124 = vmatpush1.bf16.msra.mxu0 %v3096
  %3125 = vmatprep.subr.bf16.mxu0 0
  %3126 = vmatpush1.bf16.msra.mxu0 %v3095
  %3127 = vmatprep.subr.bf16.mxu0 0
  %3128 = vmatpush2.bf16.msra.mxu0 0
  %3129 = vmatprep.subr.bf16.mxu0 0
  %3130 = vmatpush2.bf16.msra.mxu0 0
  %3131 = vmatprep.subr.bf16.mxu0 0
  %3132 = vmatpush2.bf16.msra.mxu0 0
  %3133 = vmatprep.subr.bf16.mxu0 0
  %3134 = vmatpush2.bf16.msra.mxu0 0
  %3135 = vmatprep.subr.bf16.mxu0 0
  %3136 = vmatpush2.bf16.msra.mxu0 0
  %3137 = vmatprep.subr.bf16.mxu0 0
  %3138 = vmatpush2.bf16.msra.mxu0 0
  %3139 = vmatprep.subr.bf16.mxu0 0
  %3140 = vmatpush2.bf16.msra.mxu0 0
  %3141 = vmatprep.subr.bf16.mxu0 0
  %3142 = vmatpush2.bf16.msra.mxu0 0
  %3143 = vmatprep.mubr.bf16.mxu0 0
  %3144 = vmatmul.mubr.bf16.gmra.mxu0 %v3030
  %v3145 = vpop.f32.mrf.mxu0
  %v3146 = vadd.f32 0.0, %v3145
  %v3147 = vpop.f32.mrf.mxu0
  %v3148 = vpop.f32.mrf.mxu0
  %v3149 = vadd.f32 0.0, %v3148
  %v3150 = vpop.f32.mrf.mxu0
  %3151 = vmatprep.mubr.bf16.mxu0 0
  %3152 = vmatmul.mubr.bf16.gmra.mxu0 %v3038
  %v3153 = vpop.f32.mrf.mxu0
  %v3154 = vadd.f32 0.0, %v3153
  %v3155 = vpop.f32.mrf.mxu0
  %v3156 = vpop.f32.mrf.mxu0
  %v3157 = vadd.f32 0.0, %v3156
  %v3158 = vpop.f32.mrf.mxu0
  %3159 = vmatprep.mubr.bf16.mxu0 0
  %3160 = vmatmul.mubr.bf16.gmra.mxu0 %v3046
  %v3161 = vpop.f32.mrf.mxu0
  %v3162 = vadd.f32 0.0, %v3161
  %v3163 = vpop.f32.mrf.mxu0
  %v3164 = vpop.f32.mrf.mxu0
  %v3165 = vadd.f32 0.0, %v3164
  %v3166 = vpop.f32.mrf.mxu0
  %3167 = vmatprep.mubr.bf16.mxu0 0
  %3168 = vmatmul.mubr.bf16.gmra.mxu0 %v3054
  %v3169 = vpop.f32.mrf.mxu0
  %v3170 = vadd.f32 0.0, %v3169
  %v3171 = vpop.f32.mrf.mxu0
  %v3172 = vpop.f32.mrf.mxu0
  %v3173 = vadd.f32 0.0, %v3172
  %v3174 = vpop.f32.mrf.mxu0
  %3175 = vmatprep.mubr.bf16.mxu0 0
  %3176 = vmatmul.mubr.bf16.gmra.mxu0 %v3057
  %v3177 = vpop.f32.mrf.mxu0
  %v3178 = vadd.f32 0.0, %v3177
  %v3179 = vpop.f32.mrf.mxu0
  %v3180 = vpop.f32.mrf.mxu0
  %v3181 = vpop.f32.mrf.mxu0
  %3182 = vdwg.mxu0
  %v3183 = vadd.f32 %v2958, %v3146
  %v3184 = vadd.f32 %v2959, %v3149
  %v3185 = vadd.f32 %v2960, %v3154
  %v3186 = vadd.f32 %v2961, %v3157
  %v3187 = vadd.f32 %v2962, %v3162
  %v3188 = vadd.f32 %v2963, %v3165
  %v3189 = vadd.f32 %v2964, %v3170
  %v3190 = vadd.f32 %v2965, %v3173
  %v3191 = vadd.f32 %v2966, %v3178
  %v3192 = vld [vmem:[%s37 + $0x20] sm:$0xf]
  %v3193 = vld [vmem:[%s37 + $0x3c] sm:$0xf]
  %v3194 = vld [vmem:[%s37 + $0x58] sm:$0xf]
  %v3195 = vld [vmem:[%s37 + $0x74] sm:$0xf]
  %v3196 = vld [vmem:[%s37 + $0x90] sm:$0xf]
  %v3197 = vld [vmem:[%s37 + $0xac] sm:$0xf]
  %v3198 = vld [vmem:[%s37 + $0xc8] sm:$0xf]
  %v3199 = vld [vmem:[%s37 + $0xe4] sm:$0xf]
  %v3200 = vld [vmem:[%s37 + $0x100] sm:$0xf]
  %v3201 = vld [vmem:[%s37 + $0x11c] sm:$0x1]
  %s3202 = scalar_lea.vmem %s1, 1024
  %v3203 = vld [vmem:[%s3202] sm:$0xf]
  %v3204 = vld [vmem:[%s3202 + $0x4] sm:$0xf]
  %v3205 = vld [vmem:[%s3202 + $0x8] sm:$0xf]
  %v3206 = vld [vmem:[%s3202 + $0xc] sm:$0xf]
  %v3207 = vld [vmem:[%s3202 + $0x10] sm:$0xf]
  %v3208 = vld [vmem:[%s3202 + $0x14] sm:$0xf]
  %v3209 = vld [vmem:[%s3202 + $0x18] sm:$0xf]
  %v3210 = vld [vmem:[%s3202 + $0x1c] sm:$0xf]
  %v3211 = vld [vmem:[%s3202 + $0x20] sm:$0xf]
  %v3212 = vld [vmem:[%s3202 + $0x24] sm:$0xf]
  %v3213 = vld [vmem:[%s3202 + $0x28] sm:$0xf]
  %v3214 = vld [vmem:[%s3202 + $0x2c] sm:$0xf]
  %v3215 = vld [vmem:[%s3202 + $0x30] sm:$0xf]
  %v3216 = vld [vmem:[%s3202 + $0x34] sm:$0xf]
  %v3217 = vld [vmem:[%s3202 + $0x38] sm:$0xf]
  %v3218 = vld [vmem:[%s3202 + $0x3c] sm:$0xf]
  %v3229 = vunpack.c.l.b16 %v3192
  %v3230 = vunpack.c.l.b16 %v3193
  %v3231 = vunpack.c.l.b16 %v3194
  %v3232 = vunpack.c.l.b16 %v3195
  %v3233 = vunpack.c.l.b16 %v3196
  %v3234 = vunpack.c.l.b16 %v3197
  %v3235 = vunpack.c.l.b16 %v3198
  %v3236 = vunpack.c.l.b16 %v3199
  %v3237 = vunpack.c.l.b16 %v3200
  %v3238 = vunpack.c.l.b16 %v3201
  %v3239 = vpack.c.b16 %v3230, %v3229
  %v3240 = vpack.c.b16 %v3232, %v3231
  %v3241 = vpack.c.b16 %v3234, %v3233
  %v3242 = vpack.c.b16 %v3236, %v3235
  %v3243 = vpack.c.b16 %v3238, %v3237
  %v3245 = vshrl.u32 %v3239, 16
  %v3247 = vshll.u32 %v3239, 16
  %v3249 = vrot.slane %v3247, 1
  %v3250 = vor.u32 %v3245, %v3249
  %v3252 = vshll.u32 %v3240, 16
  %v3254 = vrot.slane %v3252, 1
  %v3255 = vsel %vm412, %v3250, %v3254
  %v3256 = vshrl.u32 %v3240, 16
  %v3258 = vor.u32 %v3256, %v3254
  %v3260 = vshll.u32 %v3241, 16
  %v3262 = vrot.slane %v3260, 1
  %v3263 = vsel %vm412, %v3258, %v3262
  %v3264 = vshrl.u32 %v3241, 16
  %v3266 = vor.u32 %v3264, %v3262
  %v3268 = vshll.u32 %v3242, 16
  %v3270 = vrot.slane %v3268, 1
  %v3271 = vsel %vm412, %v3266, %v3270
  %v3272 = vshrl.u32 %v3242, 16
  %v3274 = vor.u32 %v3272, %v3270
  %v3276 = vshll.u32 %v3243, 16
  %v3278 = vrot.slane %v3276, 1
  %v3279 = vsel %vm412, %v3274, %v3278
  %v3280 = vshrl.u32 %v3243, 16
  %v3282 = vor.u32 %v3280, %v3278
  %v3304 = vunpack.c.l.b16 %v3203
  %v3305 = vunpack.c.l.b16 %v3204
  %v3306 = vunpack.c.l.b16 %v3205
  %v3307 = vunpack.c.l.b16 %v3206
  %v3308 = vunpack.c.l.b16 %v3207
  %v3309 = vunpack.c.l.b16 %v3208
  %v3310 = vunpack.c.l.b16 %v3209
  %v3311 = vunpack.c.l.b16 %v3210
  %v3312 = vunpack.c.l.b16 %v3211
  %v3313 = vunpack.c.l.b16 %v3212
  %v3314 = vunpack.c.l.b16 %v3213
  %v3315 = vunpack.c.l.b16 %v3214
  %v3316 = vunpack.c.l.b16 %v3215
  %v3317 = vunpack.c.l.b16 %v3216
  %v3318 = vunpack.c.l.b16 %v3217
  %v3319 = vunpack.c.l.b16 %v3218
  %v3320 = vpack.c.b16 %v3305, %v3304
  %v3321 = vpack.c.b16 %v3307, %v3306
  %v3322 = vpack.c.b16 %v3309, %v3308
  %v3323 = vpack.c.b16 %v3311, %v3310
  %v3324 = vpack.c.b16 %v3313, %v3312
  %v3325 = vpack.c.b16 %v3315, %v3314
  %v3326 = vpack.c.b16 %v3317, %v3316
  %v3327 = vpack.c.b16 %v3319, %v3318
  %3336 = vmatprep.subr.bf16.mxu0 0
  %3337 = vmatpush1.bf16.msra.mxu0 %v3327
  %3338 = vmatprep.subr.bf16.mxu0 0
  %3339 = vmatpush1.bf16.msra.mxu0 %v3326
  %3340 = vmatprep.subr.bf16.mxu0 0
  %3341 = vmatpush1.bf16.msra.mxu0 %v3325
  %3342 = vmatprep.subr.bf16.mxu0 0
  %3343 = vmatpush1.bf16.msra.mxu0 %v3324
  %3344 = vmatprep.subr.bf16.mxu0 0
  %3345 = vmatpush1.bf16.msra.mxu0 %v3323
  %3346 = vmatprep.subr.bf16.mxu0 0
  %3347 = vmatpush1.bf16.msra.mxu0 %v3322
  %3348 = vmatprep.subr.bf16.mxu0 0
  %3349 = vmatpush1.bf16.msra.mxu0 %v3321
  %3350 = vmatprep.subr.bf16.mxu0 0
  %3351 = vmatpush1.bf16.msra.mxu0 %v3320
  %3352 = vmatprep.subr.bf16.mxu0 0
  %3353 = vmatpush2.bf16.msra.mxu0 0
  %3354 = vmatprep.subr.bf16.mxu0 0
  %3355 = vmatpush2.bf16.msra.mxu0 0
  %3356 = vmatprep.subr.bf16.mxu0 0
  %3357 = vmatpush2.bf16.msra.mxu0 0
  %3358 = vmatprep.subr.bf16.mxu0 0
  %3359 = vmatpush2.bf16.msra.mxu0 0
  %3360 = vmatprep.subr.bf16.mxu0 0
  %3361 = vmatpush2.bf16.msra.mxu0 0
  %3362 = vmatprep.subr.bf16.mxu0 0
  %3363 = vmatpush2.bf16.msra.mxu0 0
  %3364 = vmatprep.subr.bf16.mxu0 0
  %3365 = vmatpush2.bf16.msra.mxu0 0
  %3366 = vmatprep.subr.bf16.mxu0 0
  %3367 = vmatpush2.bf16.msra.mxu0 0
  %3368 = vmatprep.mubr.bf16.mxu0 0
  %3369 = vmatmul.mubr.bf16.gmra.mxu0 %v3255
  %v3370 = vpop.f32.mrf.mxu0
  %v3371 = vadd.f32 0.0, %v3370
  %v3372 = vpop.f32.mrf.mxu0
  %v3373 = vpop.f32.mrf.mxu0
  %v3374 = vadd.f32 0.0, %v3373
  %v3375 = vpop.f32.mrf.mxu0
  %3376 = vmatprep.mubr.bf16.mxu0 0
  %3377 = vmatmul.mubr.bf16.gmra.mxu0 %v3263
  %v3378 = vpop.f32.mrf.mxu0
  %v3379 = vadd.f32 0.0, %v3378
  %v3380 = vpop.f32.mrf.mxu0
  %v3381 = vpop.f32.mrf.mxu0
  %v3382 = vadd.f32 0.0, %v3381
  %v3383 = vpop.f32.mrf.mxu0
  %3384 = vmatprep.mubr.bf16.mxu0 0
  %3385 = vmatmul.mubr.bf16.gmra.mxu0 %v3271
  %v3386 = vpop.f32.mrf.mxu0
  %v3387 = vadd.f32 0.0, %v3386
  %v3388 = vpop.f32.mrf.mxu0
  %v3389 = vpop.f32.mrf.mxu0
  %v3390 = vadd.f32 0.0, %v3389
  %v3391 = vpop.f32.mrf.mxu0
  %3392 = vmatprep.mubr.bf16.mxu0 0
  %3393 = vmatmul.mubr.bf16.gmra.mxu0 %v3279
  %v3394 = vpop.f32.mrf.mxu0
  %v3395 = vadd.f32 0.0, %v3394
  %v3396 = vpop.f32.mrf.mxu0
  %v3397 = vpop.f32.mrf.mxu0
  %v3398 = vadd.f32 0.0, %v3397
  %v3399 = vpop.f32.mrf.mxu0
  %3400 = vmatprep.mubr.bf16.mxu0 0
  %3401 = vmatmul.mubr.bf16.gmra.mxu0 %v3282
  %v3402 = vpop.f32.mrf.mxu0
  %v3403 = vadd.f32 0.0, %v3402
  %v3404 = vpop.f32.mrf.mxu0
  %v3405 = vpop.f32.mrf.mxu0
  %v3406 = vpop.f32.mrf.mxu0
  %3407 = vdwg.mxu0
  %v3408 = vadd.f32 %v3183, %v3371
  %v3409 = vadd.f32 %v3184, %v3374
  %v3410 = vadd.f32 %v3185, %v3379
  %v3411 = vadd.f32 %v3186, %v3382
  %v3412 = vadd.f32 %v3187, %v3387
  %v3413 = vadd.f32 %v3188, %v3390
  %v3414 = vadd.f32 %v3189, %v3395
  %v3415 = vadd.f32 %v3190, %v3398
  %v3416 = vadd.f32 %v3191, %v3403
  %v3417 = vld [vmem:[%s0 + $0x20] sm:$0xe]
  %s3418 = scalar_lea.vmem %s1, 1088
  %v3419 = vld [vmem:[%s3418] sm:$0xf]
  %v3420 = vld [vmem:[%s3418 + $0x4] sm:$0xf]
  %v3421 = vld [vmem:[%s3418 + $0x8] sm:$0xf]
  %v3422 = vld [vmem:[%s3418 + $0xc] sm:$0xf]
  %v3423 = vld [vmem:[%s3418 + $0x10] sm:$0xf]
  %v3424 = vld [vmem:[%s3418 + $0x14] sm:$0xf]
  %v3425 = vld [vmem:[%s3418 + $0x18] sm:$0xf]
  %v3426 = vld [vmem:[%s3418 + $0x1c] sm:$0xf]
  %v3427 = vld [vmem:[%s3418 + $0x20] sm:$0xf]
  %v3428 = vld [vmem:[%s3418 + $0x24] sm:$0xf]
  %v3429 = vld [vmem:[%s3418 + $0x28] sm:$0xf]
  %v3430 = vld [vmem:[%s3418 + $0x2c] sm:$0xf]
  %v3431 = vld [vmem:[%s3418 + $0x30] sm:$0xf]
  %v3432 = vld [vmem:[%s3418 + $0x34] sm:$0xf]
  %v3433 = vld [vmem:[%s3418 + $0x38] sm:$0xf]
  %v3434 = vld [vmem:[%s3418 + $0x3c] sm:$0xf]
  %v3436 = vunpack.c.l.b16 %v3417
  %v3437 = vpack.c.b16 %v3005, %v3436
  %v3438 = vrot.slane %v3437, 1
  %v3439 = vrot.slane %v3015, 1
  %v3440 = vsel %vm1650, %v3438, %v3439
  %v3441 = vrot.slane %v3016, 1
  %v3442 = vsel %vm1650, %v3439, %v3441
  %v3443 = vrot.slane %v3017, 1
  %v3444 = vsel %vm1650, %v3441, %v3443
  %v3445 = vrot.slane %v3018, 1
  %v3446 = vsel %vm1650, %v3443, %v3445
  %v3468 = vunpack.c.l.b16 %v3419
  %v3469 = vunpack.c.l.b16 %v3420
  %v3470 = vunpack.c.l.b16 %v3421
  %v3471 = vunpack.c.l.b16 %v3422
  %v3472 = vunpack.c.l.b16 %v3423
  %v3473 = vunpack.c.l.b16 %v3424
  %v3474 = vunpack.c.l.b16 %v3425
  %v3475 = vunpack.c.l.b16 %v3426
  %v3476 = vunpack.c.l.b16 %v3427
  %v3477 = vunpack.c.l.b16 %v3428
  %v3478 = vunpack.c.l.b16 %v3429
  %v3479 = vunpack.c.l.b16 %v3430
  %v3480 = vunpack.c.l.b16 %v3431
  %v3481 = vunpack.c.l.b16 %v3432
  %v3482 = vunpack.c.l.b16 %v3433
  %v3483 = vunpack.c.l.b16 %v3434
  %v3484 = vpack.c.b16 %v3469, %v3468
  %v3485 = vpack.c.b16 %v3471, %v3470
  %v3486 = vpack.c.b16 %v3473, %v3472
  %v3487 = vpack.c.b16 %v3475, %v3474
  %v3488 = vpack.c.b16 %v3477, %v3476
  %v3489 = vpack.c.b16 %v3479, %v3478
  %v3490 = vpack.c.b16 %v3481, %v3480
  %v3491 = vpack.c.b16 %v3483, %v3482
  %3500 = vmatprep.subr.bf16.mxu0 0
  %3501 = vmatpush1.bf16.msra.mxu0 %v3491
  %3502 = vmatprep.subr.bf16.mxu0 0
  %3503 = vmatpush1.bf16.msra.mxu0 %v3490
  %3504 = vmatprep.subr.bf16.mxu0 0
  %3505 = vmatpush1.bf16.msra.mxu0 %v3489
  %3506 = vmatprep.subr.bf16.mxu0 0
  %3507 = vmatpush1.bf16.msra.mxu0 %v3488
  %3508 = vmatprep.subr.bf16.mxu0 0
  %3509 = vmatpush1.bf16.msra.mxu0 %v3487
  %3510 = vmatprep.subr.bf16.mxu0 0
  %3511 = vmatpush1.bf16.msra.mxu0 %v3486
  %3512 = vmatprep.subr.bf16.mxu0 0
  %3513 = vmatpush1.bf16.msra.mxu0 %v3485
  %3514 = vmatprep.subr.bf16.mxu0 0
  %3515 = vmatpush1.bf16.msra.mxu0 %v3484
  %3516 = vmatprep.subr.bf16.mxu0 0
  %3517 = vmatpush2.bf16.msra.mxu0 0
  %3518 = vmatprep.subr.bf16.mxu0 0
  %3519 = vmatpush2.bf16.msra.mxu0 0
  %3520 = vmatprep.subr.bf16.mxu0 0
  %3521 = vmatpush2.bf16.msra.mxu0 0
  %3522 = vmatprep.subr.bf16.mxu0 0
  %3523 = vmatpush2.bf16.msra.mxu0 0
  %3524 = vmatprep.subr.bf16.mxu0 0
  %3525 = vmatpush2.bf16.msra.mxu0 0
  %3526 = vmatprep.subr.bf16.mxu0 0
  %3527 = vmatpush2.bf16.msra.mxu0 0
  %3528 = vmatprep.subr.bf16.mxu0 0
  %3529 = vmatpush2.bf16.msra.mxu0 0
  %3530 = vmatprep.subr.bf16.mxu0 0
  %3531 = vmatpush2.bf16.msra.mxu0 0
  %3532 = vmatprep.mubr.bf16.mxu0 0
  %3533 = vmatmul.mubr.bf16.gmra.mxu0 %v3440
  %v3534 = vpop.f32.mrf.mxu0
  %v3535 = vadd.f32 0.0, %v3534
  %v3536 = vpop.f32.mrf.mxu0
  %v3537 = vpop.f32.mrf.mxu0
  %v3538 = vadd.f32 0.0, %v3537
  %v3539 = vpop.f32.mrf.mxu0
  %3540 = vmatprep.mubr.bf16.mxu0 0
  %3541 = vmatmul.mubr.bf16.gmra.mxu0 %v3442
  %v3542 = vpop.f32.mrf.mxu0
  %v3543 = vadd.f32 0.0, %v3542
  %v3544 = vpop.f32.mrf.mxu0
  %v3545 = vpop.f32.mrf.mxu0
  %v3546 = vadd.f32 0.0, %v3545
  %v3547 = vpop.f32.mrf.mxu0
  %3548 = vmatprep.mubr.bf16.mxu0 0
  %3549 = vmatmul.mubr.bf16.gmra.mxu0 %v3444
  %v3550 = vpop.f32.mrf.mxu0
  %v3551 = vadd.f32 0.0, %v3550
  %v3552 = vpop.f32.mrf.mxu0
  %v3553 = vpop.f32.mrf.mxu0
  %v3554 = vadd.f32 0.0, %v3553
  %v3555 = vpop.f32.mrf.mxu0
  %3556 = vmatprep.mubr.bf16.mxu0 0
  %3557 = vmatmul.mubr.bf16.gmra.mxu0 %v3446
  %v3558 = vpop.f32.mrf.mxu0
  %v3559 = vadd.f32 0.0, %v3558
  %v3560 = vpop.f32.mrf.mxu0
  %v3561 = vpop.f32.mrf.mxu0
  %v3562 = vadd.f32 0.0, %v3561
  %v3563 = vpop.f32.mrf.mxu0
  %3564 = vmatprep.mubr.bf16.mxu0 0
  %3565 = vmatmul.mubr.bf16.gmra.mxu0 %v3445
  %v3566 = vpop.f32.mrf.mxu0
  %v3567 = vadd.f32 0.0, %v3566
  %v3568 = vpop.f32.mrf.mxu0
  %v3569 = vpop.f32.mrf.mxu0
  %v3570 = vpop.f32.mrf.mxu0
  %3571 = vdwg.mxu0
  %v3572 = vadd.f32 %v3408, %v3535
  %v3573 = vadd.f32 %v3409, %v3538
  %v3574 = vadd.f32 %v3410, %v3543
  %v3575 = vadd.f32 %v3411, %v3546
  %v3576 = vadd.f32 %v3412, %v3551
  %v3577 = vadd.f32 %v3413, %v3554
  %v3578 = vadd.f32 %v3414, %v3559
  %v3579 = vadd.f32 %v3415, %v3562
  %v3580 = vadd.f32 %v3416, %v3567
  %3581 = vst [vmem:[%s2 + $0x8] sm:$0xff] %v3572
  %3582 = vst [vmem:[%s2 + $0x40] sm:$0xff] %v3573
  %3583 = vst [vmem:[%s2 + $0x78] sm:$0xff] %v3574
  %3584 = vst [vmem:[%s2 + $0xb0] sm:$0xff] %v3575
  %3585 = vst [vmem:[%s2 + $0xe8] sm:$0xff] %v3576
  %3586 = vst [vmem:[%s2 + $0x120] sm:$0xff] %v3577
  %3587 = vst [vmem:[%s2 + $0x158] sm:$0xff] %v3578
  %3588 = vst [vmem:[%s2 + $0x190] sm:$0xff] %v3579
  %3589 = vst [vmem:[%s2 + $0x1c8] sm:$0xff] %v3580
  %v3590 = vld [vmem:[%s0 + $0x8] sm:$0xf]
  %v3591 = vld [vmem:[%s0 + $0x24] sm:$0xf]
  %v3592 = vld [vmem:[%s0 + $0x40] sm:$0xf]
  %v3593 = vld [vmem:[%s0 + $0x5c] sm:$0xf]
  %v3594 = vld [vmem:[%s0 + $0x78] sm:$0xf]
  %v3595 = vld [vmem:[%s0 + $0x94] sm:$0xf]
  %v3596 = vld [vmem:[%s0 + $0xb0] sm:$0xf]
  %v3597 = vld [vmem:[%s0 + $0xcc] sm:$0xf]
  %v3598 = vld [vmem:[%s0 + $0xe8] sm:$0xf]
  %s3599 = scalar_lea.vmem %s1, 1152
  %v3600 = vld [vmem:[%s3599] sm:$0xf]
  %v3601 = vld [vmem:[%s3599 + $0x4] sm:$0xf]
  %v3602 = vld [vmem:[%s3599 + $0x8] sm:$0xf]
  %v3603 = vld [vmem:[%s3599 + $0xc] sm:$0xf]
  %v3604 = vld [vmem:[%s3599 + $0x10] sm:$0xf]
  %v3605 = vld [vmem:[%s3599 + $0x14] sm:$0xf]
  %v3606 = vld [vmem:[%s3599 + $0x18] sm:$0xf]
  %v3607 = vld [vmem:[%s3599 + $0x1c] sm:$0xf]
  %v3608 = vld [vmem:[%s3599 + $0x20] sm:$0xf]
  %v3609 = vld [vmem:[%s3599 + $0x24] sm:$0xf]
  %v3610 = vld [vmem:[%s3599 + $0x28] sm:$0xf]
  %v3611 = vld [vmem:[%s3599 + $0x2c] sm:$0xf]
  %v3612 = vld [vmem:[%s3599 + $0x30] sm:$0xf]
  %v3613 = vld [vmem:[%s3599 + $0x34] sm:$0xf]
  %v3614 = vld [vmem:[%s3599 + $0x38] sm:$0xf]
  %v3615 = vld [vmem:[%s3599 + $0x3c] sm:$0xf]
  %v3616 = vld [vmem:[%s37 + $0x8] sm:$0xf]
  %v3617 = vld [vmem:[%s37 + $0x24] sm:$0xf]
  %v3618 = vld [vmem:[%s37 + $0x40] sm:$0xf]
  %v3619 = vld [vmem:[%s37 + $0x5c] sm:$0xf]
  %v3620 = vld [vmem:[%s37 + $0x78] sm:$0xf]
  %v3621 = vld [vmem:[%s37 + $0x94] sm:$0xf]
  %v3622 = vld [vmem:[%s37 + $0xb0] sm:$0xf]
  %v3623 = vld [vmem:[%s37 + $0xcc] sm:$0xf]
  %v3624 = vld [vmem:[%s37 + $0xe8] sm:$0xf]
  %s3625 = scalar_lea.vmem %s1, 1216
  %v3626 = vld [vmem:[%s3625] sm:$0xf]
  %v3627 = vld [vmem:[%s3625 + $0x4] sm:$0xf]
  %v3628 = vld [vmem:[%s3625 + $0x8] sm:$0xf]
  %v3629 = vld [vmem:[%s3625 + $0xc] sm:$0xf]
  %v3630 = vld [vmem:[%s3625 + $0x10] sm:$0xf]
  %v3631 = vld [vmem:[%s3625 + $0x14] sm:$0xf]
  %v3632 = vld [vmem:[%s3625 + $0x18] sm:$0xf]
  %v3633 = vld [vmem:[%s3625 + $0x1c] sm:$0xf]
  %v3634 = vld [vmem:[%s3625 + $0x20] sm:$0xf]
  %v3635 = vld [vmem:[%s3625 + $0x24] sm:$0xf]
  %v3636 = vld [vmem:[%s3625 + $0x28] sm:$0xf]
  %v3637 = vld [vmem:[%s3625 + $0x2c] sm:$0xf]
  %v3638 = vld [vmem:[%s3625 + $0x30] sm:$0xf]
  %v3639 = vld [vmem:[%s3625 + $0x34] sm:$0xf]
  %v3640 = vld [vmem:[%s3625 + $0x38] sm:$0xf]
  %v3641 = vld [vmem:[%s3625 + $0x3c] sm:$0xf]
  %v3651 = vunpack.c.l.b16 %v3616
  %v3652 = vunpack.c.l.b16 %v3617
  %v3653 = vunpack.c.l.b16 %v3618
  %v3654 = vunpack.c.l.b16 %v3619
  %v3655 = vunpack.c.l.b16 %v3620
  %v3656 = vunpack.c.l.b16 %v3621
  %v3657 = vunpack.c.l.b16 %v3622
  %v3658 = vunpack.c.l.b16 %v3623
  %v3659 = vunpack.c.l.b16 %v3624
  %v3660 = vpack.c.b16 %v3652, %v3651
  %v3661 = vpack.c.b16 %v3654, %v3653
  %v3662 = vpack.c.b16 %v3656, %v3655
  %v3663 = vpack.c.b16 %v3658, %v3657
  %v3664 = vpack.c.b16 %v3659, %v3659
  %v3686 = vunpack.c.l.b16 %v3626
  %v3687 = vunpack.c.l.b16 %v3627
  %v3688 = vunpack.c.l.b16 %v3628
  %v3689 = vunpack.c.l.b16 %v3629
  %v3690 = vunpack.c.l.b16 %v3630
  %v3691 = vunpack.c.l.b16 %v3631
  %v3692 = vunpack.c.l.b16 %v3632
  %v3693 = vunpack.c.l.b16 %v3633
  %v3694 = vunpack.c.l.b16 %v3634
  %v3695 = vunpack.c.l.b16 %v3635
  %v3696 = vunpack.c.l.b16 %v3636
  %v3697 = vunpack.c.l.b16 %v3637
  %v3698 = vunpack.c.l.b16 %v3638
  %v3699 = vunpack.c.l.b16 %v3639
  %v3700 = vunpack.c.l.b16 %v3640
  %v3701 = vunpack.c.l.b16 %v3641
  %v3702 = vpack.c.b16 %v3687, %v3686
  %v3703 = vpack.c.b16 %v3689, %v3688
  %v3704 = vpack.c.b16 %v3691, %v3690
  %v3705 = vpack.c.b16 %v3693, %v3692
  %v3706 = vpack.c.b16 %v3695, %v3694
  %v3707 = vpack.c.b16 %v3697, %v3696
  %v3708 = vpack.c.b16 %v3699, %v3698
  %v3709 = vpack.c.b16 %v3701, %v3700
  %3718 = vmatprep.subr.bf16.mxu0 0
  %3719 = vmatpush1.bf16.msra.mxu0 %v3709
  %3720 = vmatprep.subr.bf16.mxu0 0
  %3721 = vmatpush1.bf16.msra.mxu0 %v3708
  %3722 = vmatprep.subr.bf16.mxu0 0
  %3723 = vmatpush1.bf16.msra.mxu0 %v3707
  %3724 = vmatprep.subr.bf16.mxu0 0
  %3725 = vmatpush1.bf16.msra.mxu0 %v3706
  %3726 = vmatprep.subr.bf16.mxu0 0
  %3727 = vmatpush1.bf16.msra.mxu0 %v3705
  %3728 = vmatprep.subr.bf16.mxu0 0
  %3729 = vmatpush1.bf16.msra.mxu0 %v3704
  %3730 = vmatprep.subr.bf16.mxu0 0
  %3731 = vmatpush1.bf16.msra.mxu0 %v3703
  %3732 = vmatprep.subr.bf16.mxu0 0
  %3733 = vmatpush1.bf16.msra.mxu0 %v3702
  %3734 = vmatprep.subr.bf16.mxu0 0
  %3735 = vmatpush2.bf16.msra.mxu0 0
  %3736 = vmatprep.subr.bf16.mxu0 0
  %3737 = vmatpush2.bf16.msra.mxu0 0
  %3738 = vmatprep.subr.bf16.mxu0 0
  %3739 = vmatpush2.bf16.msra.mxu0 0
  %3740 = vmatprep.subr.bf16.mxu0 0
  %3741 = vmatpush2.bf16.msra.mxu0 0
  %3742 = vmatprep.subr.bf16.mxu0 0
  %3743 = vmatpush2.bf16.msra.mxu0 0
  %3744 = vmatprep.subr.bf16.mxu0 0
  %3745 = vmatpush2.bf16.msra.mxu0 0
  %3746 = vmatprep.subr.bf16.mxu0 0
  %3747 = vmatpush2.bf16.msra.mxu0 0
  %3748 = vmatprep.subr.bf16.mxu0 0
  %3749 = vmatpush2.bf16.msra.mxu0 0
  %3750 = vmatprep.mubr.bf16.mxu0 0
  %3751 = vmatmul.mubr.bf16.gmra.mxu0 %v3660
  %v3752 = vpop.f32.mrf.mxu0
  %v3753 = vadd.f32 0.0, %v3752
  %v3754 = vpop.f32.mrf.mxu0
  %v3755 = vpop.f32.mrf.mxu0
  %v3756 = vadd.f32 0.0, %v3755
  %v3757 = vpop.f32.mrf.mxu0
  %3758 = vmatprep.mubr.bf16.mxu0 0
  %3759 = vmatmul.mubr.bf16.gmra.mxu0 %v3661
  %v3760 = vpop.f32.mrf.mxu0
  %v3761 = vadd.f32 0.0, %v3760
  %v3762 = vpop.f32.mrf.mxu0
  %v3763 = vpop.f32.mrf.mxu0
  %v3764 = vadd.f32 0.0, %v3763
  %v3765 = vpop.f32.mrf.mxu0
  %3766 = vmatprep.mubr.bf16.mxu0 0
  %3767 = vmatmul.mubr.bf16.gmra.mxu0 %v3662
  %v3768 = vpop.f32.mrf.mxu0
  %v3769 = vadd.f32 0.0, %v3768
  %v3770 = vpop.f32.mrf.mxu0
  %v3771 = vpop.f32.mrf.mxu0
  %v3772 = vadd.f32 0.0, %v3771
  %v3773 = vpop.f32.mrf.mxu0
  %3774 = vmatprep.mubr.bf16.mxu0 0
  %3775 = vmatmul.mubr.bf16.gmra.mxu0 %v3663
  %v3776 = vpop.f32.mrf.mxu0
  %v3777 = vadd.f32 0.0, %v3776
  %v3778 = vpop.f32.mrf.mxu0
  %v3779 = vpop.f32.mrf.mxu0
  %v3780 = vadd.f32 0.0, %v3779
  %v3781 = vpop.f32.mrf.mxu0
  %3782 = vmatprep.mubr.bf16.mxu0 0
  %3783 = vmatmul.mubr.bf16.gmra.mxu0 %v3664
  %v3784 = vpop.f32.mrf.mxu0
  %v3785 = vadd.f32 0.0, %v3784
  %v3786 = vpop.f32.mrf.mxu0
  %v3787 = vpop.f32.mrf.mxu0
  %v3788 = vpop.f32.mrf.mxu0
  %3789 = vdwg.mxu0
  %v3799 = vunpack.c.l.b16 %v3590
  %v3800 = vunpack.c.l.b16 %v3591
  %v3801 = vunpack.c.l.b16 %v3592
  %v3802 = vunpack.c.l.b16 %v3593
  %v3803 = vunpack.c.l.b16 %v3594
  %v3804 = vunpack.c.l.b16 %v3595
  %v3805 = vunpack.c.l.b16 %v3596
  %v3806 = vunpack.c.l.b16 %v3597
  %v3807 = vunpack.c.l.b16 %v3598
  %v3808 = vpack.c.b16 %v3800, %v3799
  %v3809 = vpack.c.b16 %v3802, %v3801
  %v3810 = vpack.c.b16 %v3804, %v3803
  %v3811 = vpack.c.b16 %v3806, %v3805
  %v3812 = vpack.c.b16 %v3807, %v3807
  %v3834 = vunpack.c.l.b16 %v3600
  %v3835 = vunpack.c.l.b16 %v3601
  %v3836 = vunpack.c.l.b16 %v3602
  %v3837 = vunpack.c.l.b16 %v3603
  %v3838 = vunpack.c.l.b16 %v3604
  %v3839 = vunpack.c.l.b16 %v3605
  %v3840 = vunpack.c.l.b16 %v3606
  %v3841 = vunpack.c.l.b16 %v3607
  %v3842 = vunpack.c.l.b16 %v3608
  %v3843 = vunpack.c.l.b16 %v3609
  %v3844 = vunpack.c.l.b16 %v3610
  %v3845 = vunpack.c.l.b16 %v3611
  %v3846 = vunpack.c.l.b16 %v3612
  %v3847 = vunpack.c.l.b16 %v3613
  %v3848 = vunpack.c.l.b16 %v3614
  %v3849 = vunpack.c.l.b16 %v3615
  %v3850 = vpack.c.b16 %v3835, %v3834
  %v3851 = vpack.c.b16 %v3837, %v3836
  %v3852 = vpack.c.b16 %v3839, %v3838
  %v3853 = vpack.c.b16 %v3841, %v3840
  %v3854 = vpack.c.b16 %v3843, %v3842
  %v3855 = vpack.c.b16 %v3845, %v3844
  %v3856 = vpack.c.b16 %v3847, %v3846
  %v3857 = vpack.c.b16 %v3849, %v3848
  %3866 = vmatprep.subr.bf16.mxu0 0
  %3867 = vmatpush1.bf16.msra.mxu0 %v3857
  %3868 = vmatprep.subr.bf16.mxu0 0
  %3869 = vmatpush1.bf16.msra.mxu0 %v3856
  %3870 = vmatprep.subr.bf16.mxu0 0
  %3871 = vmatpush1.bf16.msra.mxu0 %v3855
  %3872 = vmatprep.subr.bf16.mxu0 0
  %3873 = vmatpush1.bf16.msra.mxu0 %v3854
  %3874 = vmatprep.subr.bf16.mxu0 0
  %3875 = vmatpush1.bf16.msra.mxu0 %v3853
  %3876 = vmatprep.subr.bf16.mxu0 0
  %3877 = vmatpush1.bf16.msra.mxu0 %v3852
  %3878 = vmatprep.subr.bf16.mxu0 0
  %3879 = vmatpush1.bf16.msra.mxu0 %v3851
  %3880 = vmatprep.subr.bf16.mxu0 0
  %3881 = vmatpush1.bf16.msra.mxu0 %v3850
  %3882 = vmatprep.subr.bf16.mxu0 0
  %3883 = vmatpush2.bf16.msra.mxu0 0
  %3884 = vmatprep.subr.bf16.mxu0 0
  %3885 = vmatpush2.bf16.msra.mxu0 0
  %3886 = vmatprep.subr.bf16.mxu0 0
  %3887 = vmatpush2.bf16.msra.mxu0 0
  %3888 = vmatprep.subr.bf16.mxu0 0
  %3889 = vmatpush2.bf16.msra.mxu0 0
  %3890 = vmatprep.subr.bf16.mxu0 0
  %3891 = vmatpush2.bf16.msra.mxu0 0
  %3892 = vmatprep.subr.bf16.mxu0 0
  %3893 = vmatpush2.bf16.msra.mxu0 0
  %3894 = vmatprep.subr.bf16.mxu0 0
  %3895 = vmatpush2.bf16.msra.mxu0 0
  %3896 = vmatprep.subr.bf16.mxu0 0
  %3897 = vmatpush2.bf16.msra.mxu0 0
  %3898 = vmatprep.mubr.bf16.mxu0 0
  %3899 = vmatmul.mubr.bf16.gmra.mxu0 %v3808
  %v3900 = vpop.f32.mrf.mxu0
  %v3901 = vadd.f32 %v3753, %v3900
  %v3902 = vpop.f32.mrf.mxu0
  %v3903 = vpop.f32.mrf.mxu0
  %v3904 = vadd.f32 %v3756, %v3903
  %v3905 = vpop.f32.mrf.mxu0
  %3906 = vmatprep.mubr.bf16.mxu0 0
  %3907 = vmatmul.mubr.bf16.gmra.mxu0 %v3809
  %v3908 = vpop.f32.mrf.mxu0
  %v3909 = vadd.f32 %v3761, %v3908
  %v3910 = vpop.f32.mrf.mxu0
  %v3911 = vpop.f32.mrf.mxu0
  %v3912 = vadd.f32 %v3764, %v3911
  %v3913 = vpop.f32.mrf.mxu0
  %3914 = vmatprep.mubr.bf16.mxu0 0
  %3915 = vmatmul.mubr.bf16.gmra.mxu0 %v3810
  %v3916 = vpop.f32.mrf.mxu0
  %v3917 = vadd.f32 %v3769, %v3916
  %v3918 = vpop.f32.mrf.mxu0
  %v3919 = vpop.f32.mrf.mxu0
  %v3920 = vadd.f32 %v3772, %v3919
  %v3921 = vpop.f32.mrf.mxu0
  %3922 = vmatprep.mubr.bf16.mxu0 0
  %3923 = vmatmul.mubr.bf16.gmra.mxu0 %v3811
  %v3924 = vpop.f32.mrf.mxu0
  %v3925 = vadd.f32 %v3777, %v3924
  %v3926 = vpop.f32.mrf.mxu0
  %v3927 = vpop.f32.mrf.mxu0
  %v3928 = vadd.f32 %v3780, %v3927
  %v3929 = vpop.f32.mrf.mxu0
  %3930 = vmatprep.mubr.bf16.mxu0 0
  %3931 = vmatmul.mubr.bf16.gmra.mxu0 %v3812
  %v3932 = vpop.f32.mrf.mxu0
  %v3933 = vadd.f32 %v3785, %v3932
  %v3934 = vpop.f32.mrf.mxu0
  %v3935 = vpop.f32.mrf.mxu0
  %v3936 = vpop.f32.mrf.mxu0
  %3937 = vdwg.mxu0
  %v3938 = vld [vmem:[%s0 + $0x8] sm:$0xf]
  %v3939 = vld [vmem:[%s0 + $0x24] sm:$0xf]
  %v3940 = vld [vmem:[%s0 + $0x40] sm:$0xf]
  %v3941 = vld [vmem:[%s0 + $0x5c] sm:$0xf]
  %v3942 = vld [vmem:[%s0 + $0x78] sm:$0xf]
  %v3943 = vld [vmem:[%s0 + $0x94] sm:$0xf]
  %v3944 = vld [vmem:[%s0 + $0xb0] sm:$0xf]
  %v3945 = vld [vmem:[%s0 + $0xcc] sm:$0xf]
  %v3946 = vld [vmem:[%s0 + $0xe8] sm:$0xf]
  %v3947 = vld [vmem:[%s0 + $0x104] sm:$0x1]
  %s3948 = scalar_lea.vmem %s1, 1280
  %v3949 = vld [vmem:[%s3948] sm:$0xf]
  %v3950 = vld [vmem:[%s3948 + $0x4] sm:$0xf]
  %v3951 = vld [vmem:[%s3948 + $0x8] sm:$0xf]
  %v3952 = vld [vmem:[%s3948 + $0xc] sm:$0xf]
  %v3953 = vld [vmem:[%s3948 + $0x10] sm:$0xf]
  %v3954 = vld [vmem:[%s3948 + $0x14] sm:$0xf]
  %v3955 = vld [vmem:[%s3948 + $0x18] sm:$0xf]
  %v3956 = vld [vmem:[%s3948 + $0x1c] sm:$0xf]
  %v3957 = vld [vmem:[%s3948 + $0x20] sm:$0xf]
  %v3958 = vld [vmem:[%s3948 + $0x24] sm:$0xf]
  %v3959 = vld [vmem:[%s3948 + $0x28] sm:$0xf]
  %v3960 = vld [vmem:[%s3948 + $0x2c] sm:$0xf]
  %v3961 = vld [vmem:[%s3948 + $0x30] sm:$0xf]
  %v3962 = vld [vmem:[%s3948 + $0x34] sm:$0xf]
  %v3963 = vld [vmem:[%s3948 + $0x38] sm:$0xf]
  %v3964 = vld [vmem:[%s3948 + $0x3c] sm:$0xf]
  %v3975 = vunpack.c.l.b16 %v3938
  %v3976 = vunpack.c.l.b16 %v3939
  %v3977 = vunpack.c.l.b16 %v3940
  %v3978 = vunpack.c.l.b16 %v3941
  %v3979 = vunpack.c.l.b16 %v3942
  %v3980 = vunpack.c.l.b16 %v3943
  %v3981 = vunpack.c.l.b16 %v3944
  %v3982 = vunpack.c.l.b16 %v3945
  %v3983 = vunpack.c.l.b16 %v3946
  %v3984 = vunpack.c.l.b16 %v3947
  %v3985 = vpack.c.b16 %v3976, %v3975
  %v3986 = vpack.c.b16 %v3978, %v3977
  %v3987 = vpack.c.b16 %v3980, %v3979
  %v3988 = vpack.c.b16 %v3982, %v3981
  %v3989 = vpack.c.b16 %v3984, %v3983
  %v3991 = vshrl.u32 %v3985, 16
  %v3993 = vshll.u32 %v3985, 16
  %v3995 = vrot.slane %v3993, 1
  %v3996 = vor.u32 %v3991, %v3995
  %v3998 = vshll.u32 %v3986, 16
  %v4000 = vrot.slane %v3998, 1
  %v4001 = vsel %vm412, %v3996, %v4000
  %v4002 = vshrl.u32 %v3986, 16
  %v4004 = vor.u32 %v4002, %v4000
  %v4006 = vshll.u32 %v3987, 16
  %v4008 = vrot.slane %v4006, 1
  %v4009 = vsel %vm412, %v4004, %v4008
  %v4010 = vshrl.u32 %v3987, 16
  %v4012 = vor.u32 %v4010, %v4008
  %v4014 = vshll.u32 %v3988, 16
  %v4016 = vrot.slane %v4014, 1
  %v4017 = vsel %vm412, %v4012, %v4016
  %v4018 = vshrl.u32 %v3988, 16
  %v4020 = vor.u32 %v4018, %v4016
  %v4022 = vshll.u32 %v3989, 16
  %v4024 = vrot.slane %v4022, 1
  %v4025 = vsel %vm412, %v4020, %v4024
  %v4026 = vshrl.u32 %v3989, 16
  %v4028 = vor.u32 %v4026, %v4024
  %v4050 = vunpack.c.l.b16 %v3949
  %v4051 = vunpack.c.l.b16 %v3950
  %v4052 = vunpack.c.l.b16 %v3951
  %v4053 = vunpack.c.l.b16 %v3952
  %v4054 = vunpack.c.l.b16 %v3953
  %v4055 = vunpack.c.l.b16 %v3954
  %v4056 = vunpack.c.l.b16 %v3955
  %v4057 = vunpack.c.l.b16 %v3956
  %v4058 = vunpack.c.l.b16 %v3957
  %v4059 = vunpack.c.l.b16 %v3958
  %v4060 = vunpack.c.l.b16 %v3959
  %v4061 = vunpack.c.l.b16 %v3960
  %v4062 = vunpack.c.l.b16 %v3961
  %v4063 = vunpack.c.l.b16 %v3962
  %v4064 = vunpack.c.l.b16 %v3963
  %v4065 = vunpack.c.l.b16 %v3964
  %v4066 = vpack.c.b16 %v4051, %v4050
  %v4067 = vpack.c.b16 %v4053, %v4052
  %v4068 = vpack.c.b16 %v4055, %v4054
  %v4069 = vpack.c.b16 %v4057, %v4056
  %v4070 = vpack.c.b16 %v4059, %v4058
  %v4071 = vpack.c.b16 %v4061, %v4060
  %v4072 = vpack.c.b16 %v4063, %v4062
  %v4073 = vpack.c.b16 %v4065, %v4064
  %4082 = vmatprep.subr.bf16.mxu0 0
  %4083 = vmatpush1.bf16.msra.mxu0 %v4073
  %4084 = vmatprep.subr.bf16.mxu0 0
  %4085 = vmatpush1.bf16.msra.mxu0 %v4072
  %4086 = vmatprep.subr.bf16.mxu0 0
  %4087 = vmatpush1.bf16.msra.mxu0 %v4071
  %4088 = vmatprep.subr.bf16.mxu0 0
  %4089 = vmatpush1.bf16.msra.mxu0 %v4070
  %4090 = vmatprep.subr.bf16.mxu0 0
  %4091 = vmatpush1.bf16.msra.mxu0 %v4069
  %4092 = vmatprep.subr.bf16.mxu0 0
  %4093 = vmatpush1.bf16.msra.mxu0 %v4068
  %4094 = vmatprep.subr.bf16.mxu0 0
  %4095 = vmatpush1.bf16.msra.mxu0 %v4067
  %4096 = vmatprep.subr.bf16.mxu0 0
  %4097 = vmatpush1.bf16.msra.mxu0 %v4066
  %4098 = vmatprep.subr.bf16.mxu0 0
  %4099 = vmatpush2.bf16.msra.mxu0 0
  %4100 = vmatprep.subr.bf16.mxu0 0
  %4101 = vmatpush2.bf16.msra.mxu0 0
  %4102 = vmatprep.subr.bf16.mxu0 0
  %4103 = vmatpush2.bf16.msra.mxu0 0
  %4104 = vmatprep.subr.bf16.mxu0 0
  %4105 = vmatpush2.bf16.msra.mxu0 0
  %4106 = vmatprep.subr.bf16.mxu0 0
  %4107 = vmatpush2.bf16.msra.mxu0 0
  %4108 = vmatprep.subr.bf16.mxu0 0
  %4109 = vmatpush2.bf16.msra.mxu0 0
  %4110 = vmatprep.subr.bf16.mxu0 0
  %4111 = vmatpush2.bf16.msra.mxu0 0
  %4112 = vmatprep.subr.bf16.mxu0 0
  %4113 = vmatpush2.bf16.msra.mxu0 0
  %4114 = vmatprep.mubr.bf16.mxu0 0
  %4115 = vmatmul.mubr.bf16.gmra.mxu0 %v4001
  %v4116 = vpop.f32.mrf.mxu0
  %v4117 = vadd.f32 0.0, %v4116
  %v4118 = vpop.f32.mrf.mxu0
  %v4119 = vpop.f32.mrf.mxu0
  %v4120 = vadd.f32 0.0, %v4119
  %v4121 = vpop.f32.mrf.mxu0
  %4122 = vmatprep.mubr.bf16.mxu0 0
  %4123 = vmatmul.mubr.bf16.gmra.mxu0 %v4009
  %v4124 = vpop.f32.mrf.mxu0
  %v4125 = vadd.f32 0.0, %v4124
  %v4126 = vpop.f32.mrf.mxu0
  %v4127 = vpop.f32.mrf.mxu0
  %v4128 = vadd.f32 0.0, %v4127
  %v4129 = vpop.f32.mrf.mxu0
  %4130 = vmatprep.mubr.bf16.mxu0 0
  %4131 = vmatmul.mubr.bf16.gmra.mxu0 %v4017
  %v4132 = vpop.f32.mrf.mxu0
  %v4133 = vadd.f32 0.0, %v4132
  %v4134 = vpop.f32.mrf.mxu0
  %v4135 = vpop.f32.mrf.mxu0
  %v4136 = vadd.f32 0.0, %v4135
  %v4137 = vpop.f32.mrf.mxu0
  %4138 = vmatprep.mubr.bf16.mxu0 0
  %4139 = vmatmul.mubr.bf16.gmra.mxu0 %v4025
  %v4140 = vpop.f32.mrf.mxu0
  %v4141 = vadd.f32 0.0, %v4140
  %v4142 = vpop.f32.mrf.mxu0
  %v4143 = vpop.f32.mrf.mxu0
  %v4144 = vadd.f32 0.0, %v4143
  %v4145 = vpop.f32.mrf.mxu0
  %4146 = vmatprep.mubr.bf16.mxu0 0
  %4147 = vmatmul.mubr.bf16.gmra.mxu0 %v4028
  %v4148 = vpop.f32.mrf.mxu0
  %v4149 = vadd.f32 0.0, %v4148
  %v4150 = vpop.f32.mrf.mxu0
  %v4151 = vpop.f32.mrf.mxu0
  %v4152 = vpop.f32.mrf.mxu0
  %4153 = vdwg.mxu0
  %v4154 = vadd.f32 %v3901, %v4117
  %v4155 = vadd.f32 %v3904, %v4120
  %v4156 = vadd.f32 %v3909, %v4125
  %v4157 = vadd.f32 %v3912, %v4128
  %v4158 = vadd.f32 %v3917, %v4133
  %v4159 = vadd.f32 %v3920, %v4136
  %v4160 = vadd.f32 %v3925, %v4141
  %v4161 = vadd.f32 %v3928, %v4144
  %v4162 = vadd.f32 %v3933, %v4149
  %v4163 = vld [vmem:[%s586 + $0x8] sm:$0xf]
  %v4164 = vld [vmem:[%s586 + $0x24] sm:$0xf]
  %v4165 = vld [vmem:[%s586 + $0x40] sm:$0xf]
  %v4166 = vld [vmem:[%s586 + $0x5c] sm:$0xf]
  %v4167 = vld [vmem:[%s586 + $0x78] sm:$0xf]
  %v4168 = vld [vmem:[%s586 + $0x94] sm:$0xf]
  %v4169 = vld [vmem:[%s586 + $0xb0] sm:$0xf]
  %v4170 = vld [vmem:[%s586 + $0xcc] sm:$0xf]
  %v4171 = vld [vmem:[%s586 + $0xe8] sm:$0xf]
  %s4172 = scalar_lea.vmem %s1, 1344
  %v4173 = vld [vmem:[%s4172] sm:$0xf]
  %v4174 = vld [vmem:[%s4172 + $0x4] sm:$0xf]
  %v4175 = vld [vmem:[%s4172 + $0x8] sm:$0xf]
  %v4176 = vld [vmem:[%s4172 + $0xc] sm:$0xf]
  %v4177 = vld [vmem:[%s4172 + $0x10] sm:$0xf]
  %v4178 = vld [vmem:[%s4172 + $0x14] sm:$0xf]
  %v4179 = vld [vmem:[%s4172 + $0x18] sm:$0xf]
  %v4180 = vld [vmem:[%s4172 + $0x1c] sm:$0xf]
  %v4181 = vld [vmem:[%s4172 + $0x20] sm:$0xf]
  %v4182 = vld [vmem:[%s4172 + $0x24] sm:$0xf]
  %v4183 = vld [vmem:[%s4172 + $0x28] sm:$0xf]
  %v4184 = vld [vmem:[%s4172 + $0x2c] sm:$0xf]
  %v4185 = vld [vmem:[%s4172 + $0x30] sm:$0xf]
  %v4186 = vld [vmem:[%s4172 + $0x34] sm:$0xf]
  %v4187 = vld [vmem:[%s4172 + $0x38] sm:$0xf]
  %v4188 = vld [vmem:[%s4172 + $0x3c] sm:$0xf]
  %v4198 = vunpack.c.l.b16 %v4163
  %v4199 = vunpack.c.l.b16 %v4164
  %v4200 = vunpack.c.l.b16 %v4165
  %v4201 = vunpack.c.l.b16 %v4166
  %v4202 = vunpack.c.l.b16 %v4167
  %v4203 = vunpack.c.l.b16 %v4168
  %v4204 = vunpack.c.l.b16 %v4169
  %v4205 = vunpack.c.l.b16 %v4170
  %v4206 = vunpack.c.l.b16 %v4171
  %v4207 = vpack.c.b16 %v4199, %v4198
  %v4208 = vpack.c.b16 %v4201, %v4200
  %v4209 = vpack.c.b16 %v4203, %v4202
  %v4210 = vpack.c.b16 %v4205, %v4204
  %v4211 = vpack.c.b16 %v4206, %v4206
  %v4233 = vunpack.c.l.b16 %v4173
  %v4234 = vunpack.c.l.b16 %v4174
  %v4235 = vunpack.c.l.b16 %v4175
  %v4236 = vunpack.c.l.b16 %v4176
  %v4237 = vunpack.c.l.b16 %v4177
  %v4238 = vunpack.c.l.b16 %v4178
  %v4239 = vunpack.c.l.b16 %v4179
  %v4240 = vunpack.c.l.b16 %v4180
  %v4241 = vunpack.c.l.b16 %v4181
  %v4242 = vunpack.c.l.b16 %v4182
  %v4243 = vunpack.c.l.b16 %v4183
  %v4244 = vunpack.c.l.b16 %v4184
  %v4245 = vunpack.c.l.b16 %v4185
  %v4246 = vunpack.c.l.b16 %v4186
  %v4247 = vunpack.c.l.b16 %v4187
  %v4248 = vunpack.c.l.b16 %v4188
  %v4249 = vpack.c.b16 %v4234, %v4233
  %v4250 = vpack.c.b16 %v4236, %v4235
  %v4251 = vpack.c.b16 %v4238, %v4237
  %v4252 = vpack.c.b16 %v4240, %v4239
  %v4253 = vpack.c.b16 %v4242, %v4241
  %v4254 = vpack.c.b16 %v4244, %v4243
  %v4255 = vpack.c.b16 %v4246, %v4245
  %v4256 = vpack.c.b16 %v4248, %v4247
  %4265 = vmatprep.subr.bf16.mxu0 0
  %4266 = vmatpush1.bf16.msra.mxu0 %v4256
  %4267 = vmatprep.subr.bf16.mxu0 0
  %4268 = vmatpush1.bf16.msra.mxu0 %v4255
  %4269 = vmatprep.subr.bf16.mxu0 0
  %4270 = vmatpush1.bf16.msra.mxu0 %v4254
  %4271 = vmatprep.subr.bf16.mxu0 0
  %4272 = vmatpush1.bf16.msra.mxu0 %v4253
  %4273 = vmatprep.subr.bf16.mxu0 0
  %4274 = vmatpush1.bf16.msra.mxu0 %v4252
  %4275 = vmatprep.subr.bf16.mxu0 0
  %4276 = vmatpush1.bf16.msra.mxu0 %v4251
  %4277 = vmatprep.subr.bf16.mxu0 0
  %4278 = vmatpush1.bf16.msra.mxu0 %v4250
  %4279 = vmatprep.subr.bf16.mxu0 0
  %4280 = vmatpush1.bf16.msra.mxu0 %v4249
  %4281 = vmatprep.subr.bf16.mxu0 0
  %4282 = vmatpush2.bf16.msra.mxu0 0
  %4283 = vmatprep.subr.bf16.mxu0 0
  %4284 = vmatpush2.bf16.msra.mxu0 0
  %4285 = vmatprep.subr.bf16.mxu0 0
  %4286 = vmatpush2.bf16.msra.mxu0 0
  %4287 = vmatprep.subr.bf16.mxu0 0
  %4288 = vmatpush2.bf16.msra.mxu0 0
  %4289 = vmatprep.subr.bf16.mxu0 0
  %4290 = vmatpush2.bf16.msra.mxu0 0
  %4291 = vmatprep.subr.bf16.mxu0 0
  %4292 = vmatpush2.bf16.msra.mxu0 0
  %4293 = vmatprep.subr.bf16.mxu0 0
  %4294 = vmatpush2.bf16.msra.mxu0 0
  %4295 = vmatprep.subr.bf16.mxu0 0
  %4296 = vmatpush2.bf16.msra.mxu0 0
  %4297 = vmatprep.mubr.bf16.mxu0 0
  %4298 = vmatmul.mubr.bf16.gmra.mxu0 %v4207
  %v4299 = vpop.f32.mrf.mxu0
  %v4300 = vadd.f32 0.0, %v4299
  %v4301 = vpop.f32.mrf.mxu0
  %v4302 = vpop.f32.mrf.mxu0
  %v4303 = vadd.f32 0.0, %v4302
  %v4304 = vpop.f32.mrf.mxu0
  %4305 = vmatprep.mubr.bf16.mxu0 0
  %4306 = vmatmul.mubr.bf16.gmra.mxu0 %v4208
  %v4307 = vpop.f32.mrf.mxu0
  %v4308 = vadd.f32 0.0, %v4307
  %v4309 = vpop.f32.mrf.mxu0
  %v4310 = vpop.f32.mrf.mxu0
  %v4311 = vadd.f32 0.0, %v4310
  %v4312 = vpop.f32.mrf.mxu0
  %4313 = vmatprep.mubr.bf16.mxu0 0
  %4314 = vmatmul.mubr.bf16.gmra.mxu0 %v4209
  %v4315 = vpop.f32.mrf.mxu0
  %v4316 = vadd.f32 0.0, %v4315
  %v4317 = vpop.f32.mrf.mxu0
  %v4318 = vpop.f32.mrf.mxu0
  %v4319 = vadd.f32 0.0, %v4318
  %v4320 = vpop.f32.mrf.mxu0
  %4321 = vmatprep.mubr.bf16.mxu0 0
  %4322 = vmatmul.mubr.bf16.gmra.mxu0 %v4210
  %v4323 = vpop.f32.mrf.mxu0
  %v4324 = vadd.f32 0.0, %v4323
  %v4325 = vpop.f32.mrf.mxu0
  %v4326 = vpop.f32.mrf.mxu0
  %v4327 = vadd.f32 0.0, %v4326
  %v4328 = vpop.f32.mrf.mxu0
  %4329 = vmatprep.mubr.bf16.mxu0 0
  %4330 = vmatmul.mubr.bf16.gmra.mxu0 %v4211
  %v4331 = vpop.f32.mrf.mxu0
  %v4332 = vadd.f32 0.0, %v4331
  %v4333 = vpop.f32.mrf.mxu0
  %v4334 = vpop.f32.mrf.mxu0
  %v4335 = vpop.f32.mrf.mxu0
  %4336 = vdwg.mxu0
  %v4337 = vadd.f32 %v4154, %v4300
  %v4338 = vadd.f32 %v4155, %v4303
  %v4339 = vadd.f32 %v4156, %v4308
  %v4340 = vadd.f32 %v4157, %v4311
  %v4341 = vadd.f32 %v4158, %v4316
  %v4342 = vadd.f32 %v4159, %v4319
  %v4343 = vadd.f32 %v4160, %v4324
  %v4344 = vadd.f32 %v4161, %v4327
  %v4345 = vadd.f32 %v4162, %v4332
  %v4346 = vld [vmem:[%s770 + $0x8] sm:$0xf]
  %v4347 = vld [vmem:[%s770 + $0x24] sm:$0xf]
  %v4348 = vld [vmem:[%s770 + $0x40] sm:$0xf]
  %v4349 = vld [vmem:[%s770 + $0x5c] sm:$0xf]
  %v4350 = vld [vmem:[%s770 + $0x78] sm:$0xf]
  %v4351 = vld [vmem:[%s770 + $0x94] sm:$0xf]
  %v4352 = vld [vmem:[%s770 + $0xb0] sm:$0xf]
  %v4353 = vld [vmem:[%s770 + $0xcc] sm:$0xf]
  %v4354 = vld [vmem:[%s770 + $0xe8] sm:$0xf]
  %s4355 = scalar_lea.vmem %s1, 1408
  %v4356 = vld [vmem:[%s4355] sm:$0xf]
  %v4357 = vld [vmem:[%s4355 + $0x4] sm:$0xf]
  %v4358 = vld [vmem:[%s4355 + $0x8] sm:$0xf]
  %v4359 = vld [vmem:[%s4355 + $0xc] sm:$0xf]
  %v4360 = vld [vmem:[%s4355 + $0x10] sm:$0xf]
  %v4361 = vld [vmem:[%s4355 + $0x14] sm:$0xf]
  %v4362 = vld [vmem:[%s4355 + $0x18] sm:$0xf]
  %v4363 = vld [vmem:[%s4355 + $0x1c] sm:$0xf]
  %v4364 = vld [vmem:[%s4355 + $0x20] sm:$0xf]
  %v4365 = vld [vmem:[%s4355 + $0x24] sm:$0xf]
  %v4366 = vld [vmem:[%s4355 + $0x28] sm:$0xf]
  %v4367 = vld [vmem:[%s4355 + $0x2c] sm:$0xf]
  %v4368 = vld [vmem:[%s4355 + $0x30] sm:$0xf]
  %v4369 = vld [vmem:[%s4355 + $0x34] sm:$0xf]
  %v4370 = vld [vmem:[%s4355 + $0x38] sm:$0xf]
  %v4371 = vld [vmem:[%s4355 + $0x3c] sm:$0xf]
  %v4381 = vunpack.c.l.b16 %v4346
  %v4382 = vunpack.c.l.b16 %v4347
  %v4383 = vunpack.c.l.b16 %v4348
  %v4384 = vunpack.c.l.b16 %v4349
  %v4385 = vunpack.c.l.b16 %v4350
  %v4386 = vunpack.c.l.b16 %v4351
  %v4387 = vunpack.c.l.b16 %v4352
  %v4388 = vunpack.c.l.b16 %v4353
  %v4389 = vunpack.c.l.b16 %v4354
  %v4390 = vpack.c.b16 %v4382, %v4381
  %v4391 = vpack.c.b16 %v4384, %v4383
  %v4392 = vpack.c.b16 %v4386, %v4385
  %v4393 = vpack.c.b16 %v4388, %v4387
  %v4394 = vpack.c.b16 %v4389, %v4389
  %v4416 = vunpack.c.l.b16 %v4356
  %v4417 = vunpack.c.l.b16 %v4357
  %v4418 = vunpack.c.l.b16 %v4358
  %v4419 = vunpack.c.l.b16 %v4359
  %v4420 = vunpack.c.l.b16 %v4360
  %v4421 = vunpack.c.l.b16 %v4361
  %v4422 = vunpack.c.l.b16 %v4362
  %v4423 = vunpack.c.l.b16 %v4363
  %v4424 = vunpack.c.l.b16 %v4364
  %v4425 = vunpack.c.l.b16 %v4365
  %v4426 = vunpack.c.l.b16 %v4366
  %v4427 = vunpack.c.l.b16 %v4367
  %v4428 = vunpack.c.l.b16 %v4368
  %v4429 = vunpack.c.l.b16 %v4369
  %v4430 = vunpack.c.l.b16 %v4370
  %v4431 = vunpack.c.l.b16 %v4371
  %v4432 = vpack.c.b16 %v4417, %v4416
  %v4433 = vpack.c.b16 %v4419, %v4418
  %v4434 = vpack.c.b16 %v4421, %v4420
  %v4435 = vpack.c.b16 %v4423, %v4422
  %v4436 = vpack.c.b16 %v4425, %v4424
  %v4437 = vpack.c.b16 %v4427, %v4426
  %v4438 = vpack.c.b16 %v4429, %v4428
  %v4439 = vpack.c.b16 %v4431, %v4430
  %4448 = vmatprep.subr.bf16.mxu0 0
  %4449 = vmatpush1.bf16.msra.mxu0 %v4439
  %4450 = vmatprep.subr.bf16.mxu0 0
  %4451 = vmatpush1.bf16.msra.mxu0 %v4438
  %4452 = vmatprep.subr.bf16.mxu0 0
  %4453 = vmatpush1.bf16.msra.mxu0 %v4437
  %4454 = vmatprep.subr.bf16.mxu0 0
  %4455 = vmatpush1.bf16.msra.mxu0 %v4436
  %4456 = vmatprep.subr.bf16.mxu0 0
  %4457 = vmatpush1.bf16.msra.mxu0 %v4435
  %4458 = vmatprep.subr.bf16.mxu0 0
  %4459 = vmatpush1.bf16.msra.mxu0 %v4434
  %4460 = vmatprep.subr.bf16.mxu0 0
  %4461 = vmatpush1.bf16.msra.mxu0 %v4433
  %4462 = vmatprep.subr.bf16.mxu0 0
  %4463 = vmatpush1.bf16.msra.mxu0 %v4432
  %4464 = vmatprep.subr.bf16.mxu0 0
  %4465 = vmatpush2.bf16.msra.mxu0 0
  %4466 = vmatprep.subr.bf16.mxu0 0
  %4467 = vmatpush2.bf16.msra.mxu0 0
  %4468 = vmatprep.subr.bf16.mxu0 0
  %4469 = vmatpush2.bf16.msra.mxu0 0
  %4470 = vmatprep.subr.bf16.mxu0 0
  %4471 = vmatpush2.bf16.msra.mxu0 0
  %4472 = vmatprep.subr.bf16.mxu0 0
  %4473 = vmatpush2.bf16.msra.mxu0 0
  %4474 = vmatprep.subr.bf16.mxu0 0
  %4475 = vmatpush2.bf16.msra.mxu0 0
  %4476 = vmatprep.subr.bf16.mxu0 0
  %4477 = vmatpush2.bf16.msra.mxu0 0
  %4478 = vmatprep.subr.bf16.mxu0 0
  %4479 = vmatpush2.bf16.msra.mxu0 0
  %4480 = vmatprep.mubr.bf16.mxu0 0
  %4481 = vmatmul.mubr.bf16.gmra.mxu0 %v4390
  %v4482 = vpop.f32.mrf.mxu0
  %v4483 = vadd.f32 0.0, %v4482
  %v4484 = vpop.f32.mrf.mxu0
  %v4485 = vpop.f32.mrf.mxu0
  %v4486 = vadd.f32 0.0, %v4485
  %v4487 = vpop.f32.mrf.mxu0
  %4488 = vmatprep.mubr.bf16.mxu0 0
  %4489 = vmatmul.mubr.bf16.gmra.mxu0 %v4391
  %v4490 = vpop.f32.mrf.mxu0
  %v4491 = vadd.f32 0.0, %v4490
  %v4492 = vpop.f32.mrf.mxu0
  %v4493 = vpop.f32.mrf.mxu0
  %v4494 = vadd.f32 0.0, %v4493
  %v4495 = vpop.f32.mrf.mxu0
  %4496 = vmatprep.mubr.bf16.mxu0 0
  %4497 = vmatmul.mubr.bf16.gmra.mxu0 %v4392
  %v4498 = vpop.f32.mrf.mxu0
  %v4499 = vadd.f32 0.0, %v4498
  %v4500 = vpop.f32.mrf.mxu0
  %v4501 = vpop.f32.mrf.mxu0
  %v4502 = vadd.f32 0.0, %v4501
  %v4503 = vpop.f32.mrf.mxu0
  %4504 = vmatprep.mubr.bf16.mxu0 0
  %4505 = vmatmul.mubr.bf16.gmra.mxu0 %v4393
  %v4506 = vpop.f32.mrf.mxu0
  %v4507 = vadd.f32 0.0, %v4506
  %v4508 = vpop.f32.mrf.mxu0
  %v4509 = vpop.f32.mrf.mxu0
  %v4510 = vadd.f32 0.0, %v4509
  %v4511 = vpop.f32.mrf.mxu0
  %4512 = vmatprep.mubr.bf16.mxu0 0
  %4513 = vmatmul.mubr.bf16.gmra.mxu0 %v4394
  %v4514 = vpop.f32.mrf.mxu0
  %v4515 = vadd.f32 0.0, %v4514
  %v4516 = vpop.f32.mrf.mxu0
  %v4517 = vpop.f32.mrf.mxu0
  %v4518 = vpop.f32.mrf.mxu0
  %4519 = vdwg.mxu0
  %v4520 = vadd.f32 %v4337, %v4483
  %v4521 = vadd.f32 %v4338, %v4486
  %v4522 = vadd.f32 %v4339, %v4491
  %v4523 = vadd.f32 %v4340, %v4494
  %v4524 = vadd.f32 %v4341, %v4499
  %v4525 = vadd.f32 %v4342, %v4502
  %v4526 = vadd.f32 %v4343, %v4507
  %v4527 = vadd.f32 %v4344, %v4510
  %v4528 = vadd.f32 %v4345, %v4515
  %v4529 = vld [vmem:[%s586 + $0x8] sm:$0xf]
  %v4530 = vld [vmem:[%s586 + $0x24] sm:$0xf]
  %v4531 = vld [vmem:[%s586 + $0x40] sm:$0xf]
  %v4532 = vld [vmem:[%s586 + $0x5c] sm:$0xf]
  %v4533 = vld [vmem:[%s586 + $0x78] sm:$0xf]
  %v4534 = vld [vmem:[%s586 + $0x94] sm:$0xf]
  %v4535 = vld [vmem:[%s586 + $0xb0] sm:$0xf]
  %v4536 = vld [vmem:[%s586 + $0xcc] sm:$0xf]
  %v4537 = vld [vmem:[%s586 + $0xe8] sm:$0xf]
  %v4538 = vld [vmem:[%s586 + $0x104] sm:$0x1]
  %s4539 = scalar_lea.vmem %s1, 1472
  %v4540 = vld [vmem:[%s4539] sm:$0xf]
  %v4541 = vld [vmem:[%s4539 + $0x4] sm:$0xf]
  %v4542 = vld [vmem:[%s4539 + $0x8] sm:$0xf]
  %v4543 = vld [vmem:[%s4539 + $0xc] sm:$0xf]
  %v4544 = vld [vmem:[%s4539 + $0x10] sm:$0xf]
  %v4545 = vld [vmem:[%s4539 + $0x14] sm:$0xf]
  %v4546 = vld [vmem:[%s4539 + $0x18] sm:$0xf]
  %v4547 = vld [vmem:[%s4539 + $0x1c] sm:$0xf]
  %v4548 = vld [vmem:[%s4539 + $0x20] sm:$0xf]
  %v4549 = vld [vmem:[%s4539 + $0x24] sm:$0xf]
  %v4550 = vld [vmem:[%s4539 + $0x28] sm:$0xf]
  %v4551 = vld [vmem:[%s4539 + $0x2c] sm:$0xf]
  %v4552 = vld [vmem:[%s4539 + $0x30] sm:$0xf]
  %v4553 = vld [vmem:[%s4539 + $0x34] sm:$0xf]
  %v4554 = vld [vmem:[%s4539 + $0x38] sm:$0xf]
  %v4555 = vld [vmem:[%s4539 + $0x3c] sm:$0xf]
  %v4566 = vunpack.c.l.b16 %v4529
  %v4567 = vunpack.c.l.b16 %v4530
  %v4568 = vunpack.c.l.b16 %v4531
  %v4569 = vunpack.c.l.b16 %v4532
  %v4570 = vunpack.c.l.b16 %v4533
  %v4571 = vunpack.c.l.b16 %v4534
  %v4572 = vunpack.c.l.b16 %v4535
  %v4573 = vunpack.c.l.b16 %v4536
  %v4574 = vunpack.c.l.b16 %v4537
  %v4575 = vunpack.c.l.b16 %v4538
  %v4576 = vpack.c.b16 %v4567, %v4566
  %v4577 = vpack.c.b16 %v4569, %v4568
  %v4578 = vpack.c.b16 %v4571, %v4570
  %v4579 = vpack.c.b16 %v4573, %v4572
  %v4580 = vpack.c.b16 %v4575, %v4574
  %v4582 = vshrl.u32 %v4576, 16
  %v4584 = vshll.u32 %v4576, 16
  %v4586 = vrot.slane %v4584, 1
  %v4587 = vor.u32 %v4582, %v4586
  %v4589 = vshll.u32 %v4577, 16
  %v4591 = vrot.slane %v4589, 1
  %v4592 = vsel %vm412, %v4587, %v4591
  %v4593 = vshrl.u32 %v4577, 16
  %v4595 = vor.u32 %v4593, %v4591
  %v4597 = vshll.u32 %v4578, 16
  %v4599 = vrot.slane %v4597, 1
  %v4600 = vsel %vm412, %v4595, %v4599
  %v4601 = vshrl.u32 %v4578, 16
  %v4603 = vor.u32 %v4601, %v4599
  %v4605 = vshll.u32 %v4579, 16
  %v4607 = vrot.slane %v4605, 1
  %v4608 = vsel %vm412, %v4603, %v4607
  %v4609 = vshrl.u32 %v4579, 16
  %v4611 = vor.u32 %v4609, %v4607
  %v4613 = vshll.u32 %v4580, 16
  %v4615 = vrot.slane %v4613, 1
  %v4616 = vsel %vm412, %v4611, %v4615
  %v4617 = vshrl.u32 %v4580, 16
  %v4619 = vor.u32 %v4617, %v4615
  %v4641 = vunpack.c.l.b16 %v4540
  %v4642 = vunpack.c.l.b16 %v4541
  %v4643 = vunpack.c.l.b16 %v4542
  %v4644 = vunpack.c.l.b16 %v4543
  %v4645 = vunpack.c.l.b16 %v4544
  %v4646 = vunpack.c.l.b16 %v4545
  %v4647 = vunpack.c.l.b16 %v4546
  %v4648 = vunpack.c.l.b16 %v4547
  %v4649 = vunpack.c.l.b16 %v4548
  %v4650 = vunpack.c.l.b16 %v4549
  %v4651 = vunpack.c.l.b16 %v4550
  %v4652 = vunpack.c.l.b16 %v4551
  %v4653 = vunpack.c.l.b16 %v4552
  %v4654 = vunpack.c.l.b16 %v4553
  %v4655 = vunpack.c.l.b16 %v4554
  %v4656 = vunpack.c.l.b16 %v4555
  %v4657 = vpack.c.b16 %v4642, %v4641
  %v4658 = vpack.c.b16 %v4644, %v4643
  %v4659 = vpack.c.b16 %v4646, %v4645
  %v4660 = vpack.c.b16 %v4648, %v4647
  %v4661 = vpack.c.b16 %v4650, %v4649
  %v4662 = vpack.c.b16 %v4652, %v4651
  %v4663 = vpack.c.b16 %v4654, %v4653
  %v4664 = vpack.c.b16 %v4656, %v4655
  %4673 = vmatprep.subr.bf16.mxu0 0
  %4674 = vmatpush1.bf16.msra.mxu0 %v4664
  %4675 = vmatprep.subr.bf16.mxu0 0
  %4676 = vmatpush1.bf16.msra.mxu0 %v4663
  %4677 = vmatprep.subr.bf16.mxu0 0
  %4678 = vmatpush1.bf16.msra.mxu0 %v4662
  %4679 = vmatprep.subr.bf16.mxu0 0
  %4680 = vmatpush1.bf16.msra.mxu0 %v4661
  %4681 = vmatprep.subr.bf16.mxu0 0
  %4682 = vmatpush1.bf16.msra.mxu0 %v4660
  %4683 = vmatprep.subr.bf16.mxu0 0
  %4684 = vmatpush1.bf16.msra.mxu0 %v4659
  %4685 = vmatprep.subr.bf16.mxu0 0
  %4686 = vmatpush1.bf16.msra.mxu0 %v4658
  %4687 = vmatprep.subr.bf16.mxu0 0
  %4688 = vmatpush1.bf16.msra.mxu0 %v4657
  %4689 = vmatprep.subr.bf16.mxu0 0
  %4690 = vmatpush2.bf16.msra.mxu0 0
  %4691 = vmatprep.subr.bf16.mxu0 0
  %4692 = vmatpush2.bf16.msra.mxu0 0
  %4693 = vmatprep.subr.bf16.mxu0 0
  %4694 = vmatpush2.bf16.msra.mxu0 0
  %4695 = vmatprep.subr.bf16.mxu0 0
  %4696 = vmatpush2.bf16.msra.mxu0 0
  %4697 = vmatprep.subr.bf16.mxu0 0
  %4698 = vmatpush2.bf16.msra.mxu0 0
  %4699 = vmatprep.subr.bf16.mxu0 0
  %4700 = vmatpush2.bf16.msra.mxu0 0
  %4701 = vmatprep.subr.bf16.mxu0 0
  %4702 = vmatpush2.bf16.msra.mxu0 0
  %4703 = vmatprep.subr.bf16.mxu0 0
  %4704 = vmatpush2.bf16.msra.mxu0 0
  %4705 = vmatprep.mubr.bf16.mxu0 0
  %4706 = vmatmul.mubr.bf16.gmra.mxu0 %v4592
  %v4707 = vpop.f32.mrf.mxu0
  %v4708 = vadd.f32 0.0, %v4707
  %v4709 = vpop.f32.mrf.mxu0
  %v4710 = vpop.f32.mrf.mxu0
  %v4711 = vadd.f32 0.0, %v4710
  %v4712 = vpop.f32.mrf.mxu0
  %4713 = vmatprep.mubr.bf16.mxu0 0
  %4714 = vmatmul.mubr.bf16.gmra.mxu0 %v4600
  %v4715 = vpop.f32.mrf.mxu0
  %v4716 = vadd.f32 0.0, %v4715
  %v4717 = vpop.f32.mrf.mxu0
  %v4718 = vpop.f32.mrf.mxu0
  %v4719 = vadd.f32 0.0, %v4718
  %v4720 = vpop.f32.mrf.mxu0
  %4721 = vmatprep.mubr.bf16.mxu0 0
  %4722 = vmatmul.mubr.bf16.gmra.mxu0 %v4608
  %v4723 = vpop.f32.mrf.mxu0
  %v4724 = vadd.f32 0.0, %v4723
  %v4725 = vpop.f32.mrf.mxu0
  %v4726 = vpop.f32.mrf.mxu0
  %v4727 = vadd.f32 0.0, %v4726
  %v4728 = vpop.f32.mrf.mxu0
  %4729 = vmatprep.mubr.bf16.mxu0 0
  %4730 = vmatmul.mubr.bf16.gmra.mxu0 %v4616
  %v4731 = vpop.f32.mrf.mxu0
  %v4732 = vadd.f32 0.0, %v4731
  %v4733 = vpop.f32.mrf.mxu0
  %v4734 = vpop.f32.mrf.mxu0
  %v4735 = vadd.f32 0.0, %v4734
  %v4736 = vpop.f32.mrf.mxu0
  %4737 = vmatprep.mubr.bf16.mxu0 0
  %4738 = vmatmul.mubr.bf16.gmra.mxu0 %v4619
  %v4739 = vpop.f32.mrf.mxu0
  %v4740 = vadd.f32 0.0, %v4739
  %v4741 = vpop.f32.mrf.mxu0
  %v4742 = vpop.f32.mrf.mxu0
  %v4743 = vpop.f32.mrf.mxu0
  %4744 = vdwg.mxu0
  %v4745 = vadd.f32 %v4520, %v4708
  %v4746 = vadd.f32 %v4521, %v4711
  %v4747 = vadd.f32 %v4522, %v4716
  %v4748 = vadd.f32 %v4523, %v4719
  %v4749 = vadd.f32 %v4524, %v4724
  %v4750 = vadd.f32 %v4525, %v4727
  %v4751 = vadd.f32 %v4526, %v4732
  %v4752 = vadd.f32 %v4527, %v4735
  %v4753 = vadd.f32 %v4528, %v4740
  %v4754 = vld [vmem:[%s0 + $0x24] sm:$0xf]
  %v4755 = vld [vmem:[%s0 + $0x40] sm:$0xf]
  %v4756 = vld [vmem:[%s0 + $0x5c] sm:$0xf]
  %v4757 = vld [vmem:[%s0 + $0x78] sm:$0xf]
  %v4758 = vld [vmem:[%s0 + $0x94] sm:$0xf]
  %v4759 = vld [vmem:[%s0 + $0xb0] sm:$0xf]
  %v4760 = vld [vmem:[%s0 + $0xcc] sm:$0xf]
  %v4761 = vld [vmem:[%s0 + $0xe8] sm:$0xf]
  %v4762 = vld [vmem:[%s0 + $0x104] sm:$0xf]
  %v4763 = vld [vmem:[%s0 + $0x120] sm:$0x1]
  %s4764 = scalar_lea.vmem %s1, 1536
  %v4765 = vld [vmem:[%s4764] sm:$0xf]
  %v4766 = vld [vmem:[%s4764 + $0x4] sm:$0xf]
  %v4767 = vld [vmem:[%s4764 + $0x8] sm:$0xf]
  %v4768 = vld [vmem:[%s4764 + $0xc] sm:$0xf]
  %v4769 = vld [vmem:[%s4764 + $0x10] sm:$0xf]
  %v4770 = vld [vmem:[%s4764 + $0x14] sm:$0xf]
  %v4771 = vld [vmem:[%s4764 + $0x18] sm:$0xf]
  %v4772 = vld [vmem:[%s4764 + $0x1c] sm:$0xf]
  %v4773 = vld [vmem:[%s4764 + $0x20] sm:$0xf]
  %v4774 = vld [vmem:[%s4764 + $0x24] sm:$0xf]
  %v4775 = vld [vmem:[%s4764 + $0x28] sm:$0xf]
  %v4776 = vld [vmem:[%s4764 + $0x2c] sm:$0xf]
  %v4777 = vld [vmem:[%s4764 + $0x30] sm:$0xf]
  %v4778 = vld [vmem:[%s4764 + $0x34] sm:$0xf]
  %v4779 = vld [vmem:[%s4764 + $0x38] sm:$0xf]
  %v4780 = vld [vmem:[%s4764 + $0x3c] sm:$0xf]
  %v4791 = vunpack.c.l.b16 %v4754
  %v4792 = vunpack.c.l.b16 %v4755
  %v4793 = vunpack.c.l.b16 %v4756
  %v4794 = vunpack.c.l.b16 %v4757
  %v4795 = vunpack.c.l.b16 %v4758
  %v4796 = vunpack.c.l.b16 %v4759
  %v4797 = vunpack.c.l.b16 %v4760
  %v4798 = vunpack.c.l.b16 %v4761
  %v4799 = vunpack.c.l.b16 %v4762
  %v4800 = vunpack.c.l.b16 %v4763
  %v4801 = vpack.c.b16 %v4792, %v4791
  %v4802 = vpack.c.b16 %v4794, %v4793
  %v4803 = vpack.c.b16 %v4796, %v4795
  %v4804 = vpack.c.b16 %v4798, %v4797
  %v4805 = vpack.c.b16 %v4800, %v4799
  %v4807 = vshrl.u32 %v4801, 16
  %v4809 = vshll.u32 %v4801, 16
  %v4811 = vrot.slane %v4809, 1
  %v4812 = vor.u32 %v4807, %v4811
  %v4814 = vshll.u32 %v4802, 16
  %v4816 = vrot.slane %v4814, 1
  %v4817 = vsel %vm412, %v4812, %v4816
  %v4818 = vshrl.u32 %v4802, 16
  %v4820 = vor.u32 %v4818, %v4816
  %v4822 = vshll.u32 %v4803, 16
  %v4824 = vrot.slane %v4822, 1
  %v4825 = vsel %vm412, %v4820, %v4824
  %v4826 = vshrl.u32 %v4803, 16
  %v4828 = vor.u32 %v4826, %v4824
  %v4830 = vshll.u32 %v4804, 16
  %v4832 = vrot.slane %v4830, 1
  %v4833 = vsel %vm412, %v4828, %v4832
  %v4834 = vshrl.u32 %v4804, 16
  %v4836 = vor.u32 %v4834, %v4832
  %v4838 = vshll.u32 %v4805, 16
  %v4840 = vrot.slane %v4838, 1
  %v4841 = vsel %vm412, %v4836, %v4840
  %v4842 = vshrl.u32 %v4805, 16
  %v4844 = vor.u32 %v4842, %v4840
  %v4866 = vunpack.c.l.b16 %v4765
  %v4867 = vunpack.c.l.b16 %v4766
  %v4868 = vunpack.c.l.b16 %v4767
  %v4869 = vunpack.c.l.b16 %v4768
  %v4870 = vunpack.c.l.b16 %v4769
  %v4871 = vunpack.c.l.b16 %v4770
  %v4872 = vunpack.c.l.b16 %v4771
  %v4873 = vunpack.c.l.b16 %v4772
  %v4874 = vunpack.c.l.b16 %v4773
  %v4875 = vunpack.c.l.b16 %v4774
  %v4876 = vunpack.c.l.b16 %v4775
  %v4877 = vunpack.c.l.b16 %v4776
  %v4878 = vunpack.c.l.b16 %v4777
  %v4879 = vunpack.c.l.b16 %v4778
  %v4880 = vunpack.c.l.b16 %v4779
  %v4881 = vunpack.c.l.b16 %v4780
  %v4882 = vpack.c.b16 %v4867, %v4866
  %v4883 = vpack.c.b16 %v4869, %v4868
  %v4884 = vpack.c.b16 %v4871, %v4870
  %v4885 = vpack.c.b16 %v4873, %v4872
  %v4886 = vpack.c.b16 %v4875, %v4874
  %v4887 = vpack.c.b16 %v4877, %v4876
  %v4888 = vpack.c.b16 %v4879, %v4878
  %v4889 = vpack.c.b16 %v4881, %v4880
  %4898 = vmatprep.subr.bf16.mxu0 0
  %4899 = vmatpush1.bf16.msra.mxu0 %v4889
  %4900 = vmatprep.subr.bf16.mxu0 0
  %4901 = vmatpush1.bf16.msra.mxu0 %v4888
  %4902 = vmatprep.subr.bf16.mxu0 0
  %4903 = vmatpush1.bf16.msra.mxu0 %v4887
  %4904 = vmatprep.subr.bf16.mxu0 0
  %4905 = vmatpush1.bf16.msra.mxu0 %v4886
  %4906 = vmatprep.subr.bf16.mxu0 0
  %4907 = vmatpush1.bf16.msra.mxu0 %v4885
  %4908 = vmatprep.subr.bf16.mxu0 0
  %4909 = vmatpush1.bf16.msra.mxu0 %v4884
  %4910 = vmatprep.subr.bf16.mxu0 0
  %4911 = vmatpush1.bf16.msra.mxu0 %v4883
  %4912 = vmatprep.subr.bf16.mxu0 0
  %4913 = vmatpush1.bf16.msra.mxu0 %v4882
  %4914 = vmatprep.subr.bf16.mxu0 0
  %4915 = vmatpush2.bf16.msra.mxu0 0
  %4916 = vmatprep.subr.bf16.mxu0 0
  %4917 = vmatpush2.bf16.msra.mxu0 0
  %4918 = vmatprep.subr.bf16.mxu0 0
  %4919 = vmatpush2.bf16.msra.mxu0 0
  %4920 = vmatprep.subr.bf16.mxu0 0
  %4921 = vmatpush2.bf16.msra.mxu0 0
  %4922 = vmatprep.subr.bf16.mxu0 0
  %4923 = vmatpush2.bf16.msra.mxu0 0
  %4924 = vmatprep.subr.bf16.mxu0 0
  %4925 = vmatpush2.bf16.msra.mxu0 0
  %4926 = vmatprep.subr.bf16.mxu0 0
  %4927 = vmatpush2.bf16.msra.mxu0 0
  %4928 = vmatprep.subr.bf16.mxu0 0
  %4929 = vmatpush2.bf16.msra.mxu0 0
  %4930 = vmatprep.mubr.bf16.mxu0 0
  %4931 = vmatmul.mubr.bf16.gmra.mxu0 %v4817
  %v4932 = vpop.f32.mrf.mxu0
  %v4933 = vadd.f32 0.0, %v4932
  %v4934 = vpop.f32.mrf.mxu0
  %v4935 = vpop.f32.mrf.mxu0
  %v4936 = vadd.f32 0.0, %v4935
  %v4937 = vpop.f32.mrf.mxu0
  %4938 = vmatprep.mubr.bf16.mxu0 0
  %4939 = vmatmul.mubr.bf16.gmra.mxu0 %v4825
  %v4940 = vpop.f32.mrf.mxu0
  %v4941 = vadd.f32 0.0, %v4940
  %v4942 = vpop.f32.mrf.mxu0
  %v4943 = vpop.f32.mrf.mxu0
  %v4944 = vadd.f32 0.0, %v4943
  %v4945 = vpop.f32.mrf.mxu0
  %4946 = vmatprep.mubr.bf16.mxu0 0
  %4947 = vmatmul.mubr.bf16.gmra.mxu0 %v4833
  %v4948 = vpop.f32.mrf.mxu0
  %v4949 = vadd.f32 0.0, %v4948
  %v4950 = vpop.f32.mrf.mxu0
  %v4951 = vpop.f32.mrf.mxu0
  %v4952 = vadd.f32 0.0, %v4951
  %v4953 = vpop.f32.mrf.mxu0
  %4954 = vmatprep.mubr.bf16.mxu0 0
  %4955 = vmatmul.mubr.bf16.gmra.mxu0 %v4841
  %v4956 = vpop.f32.mrf.mxu0
  %v4957 = vadd.f32 0.0, %v4956
  %v4958 = vpop.f32.mrf.mxu0
  %v4959 = vpop.f32.mrf.mxu0
  %v4960 = vadd.f32 0.0, %v4959
  %v4961 = vpop.f32.mrf.mxu0
  %4962 = vmatprep.mubr.bf16.mxu0 0
  %4963 = vmatmul.mubr.bf16.gmra.mxu0 %v4844
  %v4964 = vpop.f32.mrf.mxu0
  %v4965 = vadd.f32 0.0, %v4964
  %v4966 = vpop.f32.mrf.mxu0
  %v4967 = vpop.f32.mrf.mxu0
  %v4968 = vpop.f32.mrf.mxu0
  %4969 = vdwg.mxu0
  %v4970 = vadd.f32 %v4745, %v4933
  %v4971 = vadd.f32 %v4746, %v4936
  %v4972 = vadd.f32 %v4747, %v4941
  %v4973 = vadd.f32 %v4748, %v4944
  %v4974 = vadd.f32 %v4749, %v4949
  %v4975 = vadd.f32 %v4750, %v4952
  %v4976 = vadd.f32 %v4751, %v4957
  %v4977 = vadd.f32 %v4752, %v4960
  %v4978 = vadd.f32 %v4753, %v4965
  %v4979 = vld [vmem:[%s37 + $0x24] sm:$0xf]
  %v4980 = vld [vmem:[%s37 + $0x40] sm:$0xf]
  %v4981 = vld [vmem:[%s37 + $0x5c] sm:$0xf]
  %v4982 = vld [vmem:[%s37 + $0x78] sm:$0xf]
  %v4983 = vld [vmem:[%s37 + $0x94] sm:$0xf]
  %v4984 = vld [vmem:[%s37 + $0xb0] sm:$0xf]
  %v4985 = vld [vmem:[%s37 + $0xcc] sm:$0xf]
  %v4986 = vld [vmem:[%s37 + $0xe8] sm:$0xf]
  %v4987 = vld [vmem:[%s37 + $0x104] sm:$0xf]
  %v4988 = vld [vmem:[%s37 + $0x120] sm:$0x1]
  %s4989 = scalar_lea.vmem %s1, 1600
  %v4990 = vld [vmem:[%s4989] sm:$0xf]
  %v4991 = vld [vmem:[%s4989 + $0x4] sm:$0xf]
  %v4992 = vld [vmem:[%s4989 + $0x8] sm:$0xf]
  %v4993 = vld [vmem:[%s4989 + $0xc] sm:$0xf]
  %v4994 = vld [vmem:[%s4989 + $0x10] sm:$0xf]
  %v4995 = vld [vmem:[%s4989 + $0x14] sm:$0xf]
  %v4996 = vld [vmem:[%s4989 + $0x18] sm:$0xf]
  %v4997 = vld [vmem:[%s4989 + $0x1c] sm:$0xf]
  %v4998 = vld [vmem:[%s4989 + $0x20] sm:$0xf]
  %v4999 = vld [vmem:[%s4989 + $0x24] sm:$0xf]
  %v5000 = vld [vmem:[%s4989 + $0x28] sm:$0xf]
  %v5001 = vld [vmem:[%s4989 + $0x2c] sm:$0xf]
  %v5002 = vld [vmem:[%s4989 + $0x30] sm:$0xf]
  %v5003 = vld [vmem:[%s4989 + $0x34] sm:$0xf]
  %v5004 = vld [vmem:[%s4989 + $0x38] sm:$0xf]
  %v5005 = vld [vmem:[%s4989 + $0x3c] sm:$0xf]
  %v5016 = vunpack.c.l.b16 %v4979
  %v5017 = vunpack.c.l.b16 %v4980
  %v5018 = vunpack.c.l.b16 %v4981
  %v5019 = vunpack.c.l.b16 %v4982
  %v5020 = vunpack.c.l.b16 %v4983
  %v5021 = vunpack.c.l.b16 %v4984
  %v5022 = vunpack.c.l.b16 %v4985
  %v5023 = vunpack.c.l.b16 %v4986
  %v5024 = vunpack.c.l.b16 %v4987
  %v5025 = vunpack.c.l.b16 %v4988
  %v5026 = vpack.c.b16 %v5017, %v5016
  %v5027 = vpack.c.b16 %v5019, %v5018
  %v5028 = vpack.c.b16 %v5021, %v5020
  %v5029 = vpack.c.b16 %v5023, %v5022
  %v5030 = vpack.c.b16 %v5025, %v5024
  %v5032 = vshrl.u32 %v5026, 16
  %v5034 = vshll.u32 %v5026, 16
  %v5036 = vrot.slane %v5034, 1
  %v5037 = vor.u32 %v5032, %v5036
  %v5039 = vshll.u32 %v5027, 16
  %v5041 = vrot.slane %v5039, 1
  %v5042 = vsel %vm412, %v5037, %v5041
  %v5043 = vshrl.u32 %v5027, 16
  %v5045 = vor.u32 %v5043, %v5041
  %v5047 = vshll.u32 %v5028, 16
  %v5049 = vrot.slane %v5047, 1
  %v5050 = vsel %vm412, %v5045, %v5049
  %v5051 = vshrl.u32 %v5028, 16
  %v5053 = vor.u32 %v5051, %v5049
  %v5055 = vshll.u32 %v5029, 16
  %v5057 = vrot.slane %v5055, 1
  %v5058 = vsel %vm412, %v5053, %v5057
  %v5059 = vshrl.u32 %v5029, 16
  %v5061 = vor.u32 %v5059, %v5057
  %v5063 = vshll.u32 %v5030, 16
  %v5065 = vrot.slane %v5063, 1
  %v5066 = vsel %vm412, %v5061, %v5065
  %v5067 = vshrl.u32 %v5030, 16
  %v5069 = vor.u32 %v5067, %v5065
  %v5091 = vunpack.c.l.b16 %v4990
  %v5092 = vunpack.c.l.b16 %v4991
  %v5093 = vunpack.c.l.b16 %v4992
  %v5094 = vunpack.c.l.b16 %v4993
  %v5095 = vunpack.c.l.b16 %v4994
  %v5096 = vunpack.c.l.b16 %v4995
  %v5097 = vunpack.c.l.b16 %v4996
  %v5098 = vunpack.c.l.b16 %v4997
  %v5099 = vunpack.c.l.b16 %v4998
  %v5100 = vunpack.c.l.b16 %v4999
  %v5101 = vunpack.c.l.b16 %v5000
  %v5102 = vunpack.c.l.b16 %v5001
  %v5103 = vunpack.c.l.b16 %v5002
  %v5104 = vunpack.c.l.b16 %v5003
  %v5105 = vunpack.c.l.b16 %v5004
  %v5106 = vunpack.c.l.b16 %v5005
  %v5107 = vpack.c.b16 %v5092, %v5091
  %v5108 = vpack.c.b16 %v5094, %v5093
  %v5109 = vpack.c.b16 %v5096, %v5095
  %v5110 = vpack.c.b16 %v5098, %v5097
  %v5111 = vpack.c.b16 %v5100, %v5099
  %v5112 = vpack.c.b16 %v5102, %v5101
  %v5113 = vpack.c.b16 %v5104, %v5103
  %v5114 = vpack.c.b16 %v5106, %v5105
  %5123 = vmatprep.subr.bf16.mxu0 0
  %5124 = vmatpush1.bf16.msra.mxu0 %v5114
  %5125 = vmatprep.subr.bf16.mxu0 0
  %5126 = vmatpush1.bf16.msra.mxu0 %v5113
  %5127 = vmatprep.subr.bf16.mxu0 0
  %5128 = vmatpush1.bf16.msra.mxu0 %v5112
  %5129 = vmatprep.subr.bf16.mxu0 0
  %5130 = vmatpush1.bf16.msra.mxu0 %v5111
  %5131 = vmatprep.subr.bf16.mxu0 0
  %5132 = vmatpush1.bf16.msra.mxu0 %v5110
  %5133 = vmatprep.subr.bf16.mxu0 0
  %5134 = vmatpush1.bf16.msra.mxu0 %v5109
  %5135 = vmatprep.subr.bf16.mxu0 0
  %5136 = vmatpush1.bf16.msra.mxu0 %v5108
  %5137 = vmatprep.subr.bf16.mxu0 0
  %5138 = vmatpush1.bf16.msra.mxu0 %v5107
  %5139 = vmatprep.subr.bf16.mxu0 0
  %5140 = vmatpush2.bf16.msra.mxu0 0
  %5141 = vmatprep.subr.bf16.mxu0 0
  %5142 = vmatpush2.bf16.msra.mxu0 0
  %5143 = vmatprep.subr.bf16.mxu0 0
  %5144 = vmatpush2.bf16.msra.mxu0 0
  %5145 = vmatprep.subr.bf16.mxu0 0
  %5146 = vmatpush2.bf16.msra.mxu0 0
  %5147 = vmatprep.subr.bf16.mxu0 0
  %5148 = vmatpush2.bf16.msra.mxu0 0
  %5149 = vmatprep.subr.bf16.mxu0 0
  %5150 = vmatpush2.bf16.msra.mxu0 0
  %5151 = vmatprep.subr.bf16.mxu0 0
  %5152 = vmatpush2.bf16.msra.mxu0 0
  %5153 = vmatprep.subr.bf16.mxu0 0
  %5154 = vmatpush2.bf16.msra.mxu0 0
  %5155 = vmatprep.mubr.bf16.mxu0 0
  %5156 = vmatmul.mubr.bf16.gmra.mxu0 %v5042
  %v5157 = vpop.f32.mrf.mxu0
  %v5158 = vadd.f32 0.0, %v5157
  %v5159 = vpop.f32.mrf.mxu0
  %v5160 = vpop.f32.mrf.mxu0
  %v5161 = vadd.f32 0.0, %v5160
  %v5162 = vpop.f32.mrf.mxu0
  %5163 = vmatprep.mubr.bf16.mxu0 0
  %5164 = vmatmul.mubr.bf16.gmra.mxu0 %v5050
  %v5165 = vpop.f32.mrf.mxu0
  %v5166 = vadd.f32 0.0, %v5165
  %v5167 = vpop.f32.mrf.mxu0
  %v5168 = vpop.f32.mrf.mxu0
  %v5169 = vadd.f32 0.0, %v5168
  %v5170 = vpop.f32.mrf.mxu0
  %5171 = vmatprep.mubr.bf16.mxu0 0
  %5172 = vmatmul.mubr.bf16.gmra.mxu0 %v5058
  %v5173 = vpop.f32.mrf.mxu0
  %v5174 = vadd.f32 0.0, %v5173
  %v5175 = vpop.f32.mrf.mxu0
  %v5176 = vpop.f32.mrf.mxu0
  %v5177 = vadd.f32 0.0, %v5176
  %v5178 = vpop.f32.mrf.mxu0
  %5179 = vmatprep.mubr.bf16.mxu0 0
  %5180 = vmatmul.mubr.bf16.gmra.mxu0 %v5066
  %v5181 = vpop.f32.mrf.mxu0
  %v5182 = vadd.f32 0.0, %v5181
  %v5183 = vpop.f32.mrf.mxu0
  %v5184 = vpop.f32.mrf.mxu0
  %v5185 = vadd.f32 0.0, %v5184
  %v5186 = vpop.f32.mrf.mxu0
  %5187 = vmatprep.mubr.bf16.mxu0 0
  %5188 = vmatmul.mubr.bf16.gmra.mxu0 %v5069
  %v5189 = vpop.f32.mrf.mxu0
  %v5190 = vadd.f32 0.0, %v5189
  %v5191 = vpop.f32.mrf.mxu0
  %v5192 = vpop.f32.mrf.mxu0
  %v5193 = vpop.f32.mrf.mxu0
  %5194 = vdwg.mxu0
  %v5195 = vadd.f32 %v4970, %v5158
  %v5196 = vadd.f32 %v4971, %v5161
  %v5197 = vadd.f32 %v4972, %v5166
  %v5198 = vadd.f32 %v4973, %v5169
  %v5199 = vadd.f32 %v4974, %v5174
  %v5200 = vadd.f32 %v4975, %v5177
  %v5201 = vadd.f32 %v4976, %v5182
  %v5202 = vadd.f32 %v4977, %v5185
  %v5203 = vadd.f32 %v4978, %v5190
  %v5204 = vld [vmem:[%s0 + $0x24] sm:$0xe]
  %s5205 = scalar_lea.vmem %s1, 1664
  %v5206 = vld [vmem:[%s5205] sm:$0xf]
  %v5207 = vld [vmem:[%s5205 + $0x4] sm:$0xf]
  %v5208 = vld [vmem:[%s5205 + $0x8] sm:$0xf]
  %v5209 = vld [vmem:[%s5205 + $0xc] sm:$0xf]
  %v5210 = vld [vmem:[%s5205 + $0x10] sm:$0xf]
  %v5211 = vld [vmem:[%s5205 + $0x14] sm:$0xf]
  %v5212 = vld [vmem:[%s5205 + $0x18] sm:$0xf]
  %v5213 = vld [vmem:[%s5205 + $0x1c] sm:$0xf]
  %v5214 = vld [vmem:[%s5205 + $0x20] sm:$0xf]
  %v5215 = vld [vmem:[%s5205 + $0x24] sm:$0xf]
  %v5216 = vld [vmem:[%s5205 + $0x28] sm:$0xf]
  %v5217 = vld [vmem:[%s5205 + $0x2c] sm:$0xf]
  %v5218 = vld [vmem:[%s5205 + $0x30] sm:$0xf]
  %v5219 = vld [vmem:[%s5205 + $0x34] sm:$0xf]
  %v5220 = vld [vmem:[%s5205 + $0x38] sm:$0xf]
  %v5221 = vld [vmem:[%s5205 + $0x3c] sm:$0xf]
  %v5223 = vunpack.c.l.b16 %v5204
  %v5224 = vpack.c.b16 %v4792, %v5223
  %v5225 = vrot.slane %v5224, 1
  %v5226 = vrot.slane %v4802, 1
  %v5227 = vsel %vm1650, %v5225, %v5226
  %v5228 = vrot.slane %v4803, 1
  %v5229 = vsel %vm1650, %v5226, %v5228
  %v5230 = vrot.slane %v4804, 1
  %v5231 = vsel %vm1650, %v5228, %v5230
  %v5232 = vrot.slane %v4805, 1
  %v5233 = vsel %vm1650, %v5230, %v5232
  %v5255 = vunpack.c.l.b16 %v5206
  %v5256 = vunpack.c.l.b16 %v5207
  %v5257 = vunpack.c.l.b16 %v5208
  %v5258 = vunpack.c.l.b16 %v5209
  %v5259 = vunpack.c.l.b16 %v5210
  %v5260 = vunpack.c.l.b16 %v5211
  %v5261 = vunpack.c.l.b16 %v5212
  %v5262 = vunpack.c.l.b16 %v5213
  %v5263 = vunpack.c.l.b16 %v5214
  %v5264 = vunpack.c.l.b16 %v5215
  %v5265 = vunpack.c.l.b16 %v5216
  %v5266 = vunpack.c.l.b16 %v5217
  %v5267 = vunpack.c.l.b16 %v5218
  %v5268 = vunpack.c.l.b16 %v5219
  %v5269 = vunpack.c.l.b16 %v5220
  %v5270 = vunpack.c.l.b16 %v5221
  %v5271 = vpack.c.b16 %v5256, %v5255
  %v5272 = vpack.c.b16 %v5258, %v5257
  %v5273 = vpack.c.b16 %v5260, %v5259
  %v5274 = vpack.c.b16 %v5262, %v5261
  %v5275 = vpack.c.b16 %v5264, %v5263
  %v5276 = vpack.c.b16 %v5266, %v5265
  %v5277 = vpack.c.b16 %v5268, %v5267
  %v5278 = vpack.c.b16 %v5270, %v5269
  %5287 = vmatprep.subr.bf16.mxu0 0
  %5288 = vmatpush1.bf16.msra.mxu0 %v5278
  %5289 = vmatprep.subr.bf16.mxu0 0
  %5290 = vmatpush1.bf16.msra.mxu0 %v5277
  %5291 = vmatprep.subr.bf16.mxu0 0
  %5292 = vmatpush1.bf16.msra.mxu0 %v5276
  %5293 = vmatprep.subr.bf16.mxu0 0
  %5294 = vmatpush1.bf16.msra.mxu0 %v5275
  %5295 = vmatprep.subr.bf16.mxu0 0
  %5296 = vmatpush1.bf16.msra.mxu0 %v5274
  %5297 = vmatprep.subr.bf16.mxu0 0
  %5298 = vmatpush1.bf16.msra.mxu0 %v5273
  %5299 = vmatprep.subr.bf16.mxu0 0
  %5300 = vmatpush1.bf16.msra.mxu0 %v5272
  %5301 = vmatprep.subr.bf16.mxu0 0
  %5302 = vmatpush1.bf16.msra.mxu0 %v5271
  %5303 = vmatprep.subr.bf16.mxu0 0
  %5304 = vmatpush2.bf16.msra.mxu0 0
  %5305 = vmatprep.subr.bf16.mxu0 0
  %5306 = vmatpush2.bf16.msra.mxu0 0
  %5307 = vmatprep.subr.bf16.mxu0 0
  %5308 = vmatpush2.bf16.msra.mxu0 0
  %5309 = vmatprep.subr.bf16.mxu0 0
  %5310 = vmatpush2.bf16.msra.mxu0 0
  %5311 = vmatprep.subr.bf16.mxu0 0
  %5312 = vmatpush2.bf16.msra.mxu0 0
  %5313 = vmatprep.subr.bf16.mxu0 0
  %5314 = vmatpush2.bf16.msra.mxu0 0
  %5315 = vmatprep.subr.bf16.mxu0 0
  %5316 = vmatpush2.bf16.msra.mxu0 0
  %5317 = vmatprep.subr.bf16.mxu0 0
  %5318 = vmatpush2.bf16.msra.mxu0 0
  %5319 = vmatprep.mubr.bf16.mxu0 0
  %5320 = vmatmul.mubr.bf16.gmra.mxu0 %v5227
  %v5321 = vpop.f32.mrf.mxu0
  %v5322 = vadd.f32 0.0, %v5321
  %v5323 = vpop.f32.mrf.mxu0
  %v5324 = vpop.f32.mrf.mxu0
  %v5325 = vadd.f32 0.0, %v5324
  %v5326 = vpop.f32.mrf.mxu0
  %5327 = vmatprep.mubr.bf16.mxu0 0
  %5328 = vmatmul.mubr.bf16.gmra.mxu0 %v5229
  %v5329 = vpop.f32.mrf.mxu0
  %v5330 = vadd.f32 0.0, %v5329
  %v5331 = vpop.f32.mrf.mxu0
  %v5332 = vpop.f32.mrf.mxu0
  %v5333 = vadd.f32 0.0, %v5332
  %v5334 = vpop.f32.mrf.mxu0
  %5335 = vmatprep.mubr.bf16.mxu0 0
  %5336 = vmatmul.mubr.bf16.gmra.mxu0 %v5231
  %v5337 = vpop.f32.mrf.mxu0
  %v5338 = vadd.f32 0.0, %v5337
  %v5339 = vpop.f32.mrf.mxu0
  %v5340 = vpop.f32.mrf.mxu0
  %v5341 = vadd.f32 0.0, %v5340
  %v5342 = vpop.f32.mrf.mxu0
  %5343 = vmatprep.mubr.bf16.mxu0 0
  %5344 = vmatmul.mubr.bf16.gmra.mxu0 %v5233
  %v5345 = vpop.f32.mrf.mxu0
  %v5346 = vadd.f32 0.0, %v5345
  %v5347 = vpop.f32.mrf.mxu0
  %v5348 = vpop.f32.mrf.mxu0
  %v5349 = vadd.f32 0.0, %v5348
  %v5350 = vpop.f32.mrf.mxu0
  %5351 = vmatprep.mubr.bf16.mxu0 0
  %5352 = vmatmul.mubr.bf16.gmra.mxu0 %v5232
  %v5353 = vpop.f32.mrf.mxu0
  %v5354 = vadd.f32 0.0, %v5353
  %v5355 = vpop.f32.mrf.mxu0
  %v5356 = vpop.f32.mrf.mxu0
  %v5357 = vpop.f32.mrf.mxu0
  %5358 = vdwg.mxu0
  %v5359 = vadd.f32 %v5195, %v5322
  %v5360 = vadd.f32 %v5196, %v5325
  %v5361 = vadd.f32 %v5197, %v5330
  %v5362 = vadd.f32 %v5198, %v5333
  %v5363 = vadd.f32 %v5199, %v5338
  %v5364 = vadd.f32 %v5200, %v5341
  %v5365 = vadd.f32 %v5201, %v5346
  %v5366 = vadd.f32 %v5202, %v5349
  %v5367 = vadd.f32 %v5203, %v5354
  %5368 = vst [vmem:[%s2 + $0x10] sm:$0xff] %v5359
  %5369 = vst [vmem:[%s2 + $0x48] sm:$0xff] %v5360
  %5370 = vst [vmem:[%s2 + $0x80] sm:$0xff] %v5361
  %5371 = vst [vmem:[%s2 + $0xb8] sm:$0xff] %v5362
  %5372 = vst [vmem:[%s2 + $0xf0] sm:$0xff] %v5363
  %5373 = vst [vmem:[%s2 + $0x128] sm:$0xff] %v5364
  %5374 = vst [vmem:[%s2 + $0x160] sm:$0xff] %v5365
  %5375 = vst [vmem:[%s2 + $0x198] sm:$0xff] %v5366
  %5376 = vst [vmem:[%s2 + $0x1d0] sm:$0xff] %v5367
  %v5377 = vld [vmem:[%s0 + $0xc] sm:$0xf]
  %v5378 = vld [vmem:[%s0 + $0x28] sm:$0xf]
  %v5379 = vld [vmem:[%s0 + $0x44] sm:$0xf]
  %v5380 = vld [vmem:[%s0 + $0x60] sm:$0xf]
  %v5381 = vld [vmem:[%s0 + $0x7c] sm:$0xf]
  %v5382 = vld [vmem:[%s0 + $0x98] sm:$0xf]
  %v5383 = vld [vmem:[%s0 + $0xb4] sm:$0xf]
  %v5384 = vld [vmem:[%s0 + $0xd0] sm:$0xf]
  %v5385 = vld [vmem:[%s0 + $0xec] sm:$0xf]
  %s5386 = scalar_lea.vmem %s1, 1728
  %v5387 = vld [vmem:[%s5386] sm:$0xf]
  %v5388 = vld [vmem:[%s5386 + $0x4] sm:$0xf]
  %v5389 = vld [vmem:[%s5386 + $0x8] sm:$0xf]
  %v5390 = vld [vmem:[%s5386 + $0xc] sm:$0xf]
  %v5391 = vld [vmem:[%s5386 + $0x10] sm:$0xf]
  %v5392 = vld [vmem:[%s5386 + $0x14] sm:$0xf]
  %v5393 = vld [vmem:[%s5386 + $0x18] sm:$0xf]
  %v5394 = vld [vmem:[%s5386 + $0x1c] sm:$0xf]
  %v5395 = vld [vmem:[%s5386 + $0x20] sm:$0xf]
  %v5396 = vld [vmem:[%s5386 + $0x24] sm:$0xf]
  %v5397 = vld [vmem:[%s5386 + $0x28] sm:$0xf]
  %v5398 = vld [vmem:[%s5386 + $0x2c] sm:$0xf]
  %v5399 = vld [vmem:[%s5386 + $0x30] sm:$0xf]
  %v5400 = vld [vmem:[%s5386 + $0x34] sm:$0xf]
  %v5401 = vld [vmem:[%s5386 + $0x38] sm:$0xf]
  %v5402 = vld [vmem:[%s5386 + $0x3c] sm:$0xf]
  %v5403 = vld [vmem:[%s37 + $0xc] sm:$0xf]
  %v5404 = vld [vmem:[%s37 + $0x28] sm:$0xf]
  %v5405 = vld [vmem:[%s37 + $0x44] sm:$0xf]
  %v5406 = vld [vmem:[%s37 + $0x60] sm:$0xf]
  %v5407 = vld [vmem:[%s37 + $0x7c] sm:$0xf]
  %v5408 = vld [vmem:[%s37 + $0x98] sm:$0xf]
  %v5409 = vld [vmem:[%s37 + $0xb4] sm:$0xf]
  %v5410 = vld [vmem:[%s37 + $0xd0] sm:$0xf]
  %v5411 = vld [vmem:[%s37 + $0xec] sm:$0xf]
  %s5412 = scalar_lea.vmem %s1, 1792
  %v5413 = vld [vmem:[%s5412] sm:$0xf]
  %v5414 = vld [vmem:[%s5412 + $0x4] sm:$0xf]
  %v5415 = vld [vmem:[%s5412 + $0x8] sm:$0xf]
  %v5416 = vld [vmem:[%s5412 + $0xc] sm:$0xf]
  %v5417 = vld [vmem:[%s5412 + $0x10] sm:$0xf]
  %v5418 = vld [vmem:[%s5412 + $0x14] sm:$0xf]
  %v5419 = vld [vmem:[%s5412 + $0x18] sm:$0xf]
  %v5420 = vld [vmem:[%s5412 + $0x1c] sm:$0xf]
  %v5421 = vld [vmem:[%s5412 + $0x20] sm:$0xf]
  %v5422 = vld [vmem:[%s5412 + $0x24] sm:$0xf]
  %v5423 = vld [vmem:[%s5412 + $0x28] sm:$0xf]
  %v5424 = vld [vmem:[%s5412 + $0x2c] sm:$0xf]
  %v5425 = vld [vmem:[%s5412 + $0x30] sm:$0xf]
  %v5426 = vld [vmem:[%s5412 + $0x34] sm:$0xf]
  %v5427 = vld [vmem:[%s5412 + $0x38] sm:$0xf]
  %v5428 = vld [vmem:[%s5412 + $0x3c] sm:$0xf]
  %v5438 = vunpack.c.l.b16 %v5403
  %v5439 = vunpack.c.l.b16 %v5404
  %v5440 = vunpack.c.l.b16 %v5405
  %v5441 = vunpack.c.l.b16 %v5406
  %v5442 = vunpack.c.l.b16 %v5407
  %v5443 = vunpack.c.l.b16 %v5408
  %v5444 = vunpack.c.l.b16 %v5409
  %v5445 = vunpack.c.l.b16 %v5410
  %v5446 = vunpack.c.l.b16 %v5411
  %v5447 = vpack.c.b16 %v5439, %v5438
  %v5448 = vpack.c.b16 %v5441, %v5440
  %v5449 = vpack.c.b16 %v5443, %v5442
  %v5450 = vpack.c.b16 %v5445, %v5444
  %v5451 = vpack.c.b16 %v5446, %v5446
  %v5473 = vunpack.c.l.b16 %v5413
  %v5474 = vunpack.c.l.b16 %v5414
  %v5475 = vunpack.c.l.b16 %v5415
  %v5476 = vunpack.c.l.b16 %v5416
  %v5477 = vunpack.c.l.b16 %v5417
  %v5478 = vunpack.c.l.b16 %v5418
  %v5479 = vunpack.c.l.b16 %v5419
  %v5480 = vunpack.c.l.b16 %v5420
  %v5481 = vunpack.c.l.b16 %v5421
  %v5482 = vunpack.c.l.b16 %v5422
  %v5483 = vunpack.c.l.b16 %v5423
  %v5484 = vunpack.c.l.b16 %v5424
  %v5485 = vunpack.c.l.b16 %v5425
  %v5486 = vunpack.c.l.b16 %v5426
  %v5487 = vunpack.c.l.b16 %v5427
  %v5488 = vunpack.c.l.b16 %v5428
  %v5489 = vpack.c.b16 %v5474, %v5473
  %v5490 = vpack.c.b16 %v5476, %v5475
  %v5491 = vpack.c.b16 %v5478, %v5477
  %v5492 = vpack.c.b16 %v5480, %v5479
  %v5493 = vpack.c.b16 %v5482, %v5481
  %v5494 = vpack.c.b16 %v5484, %v5483
  %v5495 = vpack.c.b16 %v5486, %v5485
  %v5496 = vpack.c.b16 %v5488, %v5487
  %5505 = vmatprep.subr.bf16.mxu0 0
  %5506 = vmatpush1.bf16.msra.mxu0 %v5496
  %5507 = vmatprep.subr.bf16.mxu0 0
  %5508 = vmatpush1.bf16.msra.mxu0 %v5495
  %5509 = vmatprep.subr.bf16.mxu0 0
  %5510 = vmatpush1.bf16.msra.mxu0 %v5494
  %5511 = vmatprep.subr.bf16.mxu0 0
  %5512 = vmatpush1.bf16.msra.mxu0 %v5493
  %5513 = vmatprep.subr.bf16.mxu0 0
  %5514 = vmatpush1.bf16.msra.mxu0 %v5492
  %5515 = vmatprep.subr.bf16.mxu0 0
  %5516 = vmatpush1.bf16.msra.mxu0 %v5491
  %5517 = vmatprep.subr.bf16.mxu0 0
  %5518 = vmatpush1.bf16.msra.mxu0 %v5490
  %5519 = vmatprep.subr.bf16.mxu0 0
  %5520 = vmatpush1.bf16.msra.mxu0 %v5489
  %5521 = vmatprep.subr.bf16.mxu0 0
  %5522 = vmatpush2.bf16.msra.mxu0 0
  %5523 = vmatprep.subr.bf16.mxu0 0
  %5524 = vmatpush2.bf16.msra.mxu0 0
  %5525 = vmatprep.subr.bf16.mxu0 0
  %5526 = vmatpush2.bf16.msra.mxu0 0
  %5527 = vmatprep.subr.bf16.mxu0 0
  %5528 = vmatpush2.bf16.msra.mxu0 0
  %5529 = vmatprep.subr.bf16.mxu0 0
  %5530 = vmatpush2.bf16.msra.mxu0 0
  %5531 = vmatprep.subr.bf16.mxu0 0
  %5532 = vmatpush2.bf16.msra.mxu0 0
  %5533 = vmatprep.subr.bf16.mxu0 0
  %5534 = vmatpush2.bf16.msra.mxu0 0
  %5535 = vmatprep.subr.bf16.mxu0 0
  %5536 = vmatpush2.bf16.msra.mxu0 0
  %5537 = vmatprep.mubr.bf16.mxu0 0
  %5538 = vmatmul.mubr.bf16.gmra.mxu0 %v5447
  %v5539 = vpop.f32.mrf.mxu0
  %v5540 = vadd.f32 0.0, %v5539
  %v5541 = vpop.f32.mrf.mxu0
  %v5542 = vpop.f32.mrf.mxu0
  %v5543 = vadd.f32 0.0, %v5542
  %v5544 = vpop.f32.mrf.mxu0
  %5545 = vmatprep.mubr.bf16.mxu0 0
  %5546 = vmatmul.mubr.bf16.gmra.mxu0 %v5448
  %v5547 = vpop.f32.mrf.mxu0
  %v5548 = vadd.f32 0.0, %v5547
  %v5549 = vpop.f32.mrf.mxu0
  %v5550 = vpop.f32.mrf.mxu0
  %v5551 = vadd.f32 0.0, %v5550
  %v5552 = vpop.f32.mrf.mxu0
  %5553 = vmatprep.mubr.bf16.mxu0 0
  %5554 = vmatmul.mubr.bf16.gmra.mxu0 %v5449
  %v5555 = vpop.f32.mrf.mxu0
  %v5556 = vadd.f32 0.0, %v5555
  %v5557 = vpop.f32.mrf.mxu0
  %v5558 = vpop.f32.mrf.mxu0
  %v5559 = vadd.f32 0.0, %v5558
  %v5560 = vpop.f32.mrf.mxu0
  %5561 = vmatprep.mubr.bf16.mxu0 0
  %5562 = vmatmul.mubr.bf16.gmra.mxu0 %v5450
  %v5563 = vpop.f32.mrf.mxu0
  %v5564 = vadd.f32 0.0, %v5563
  %v5565 = vpop.f32.mrf.mxu0
  %v5566 = vpop.f32.mrf.mxu0
  %v5567 = vadd.f32 0.0, %v5566
  %v5568 = vpop.f32.mrf.mxu0
  %5569 = vmatprep.mubr.bf16.mxu0 0
  %5570 = vmatmul.mubr.bf16.gmra.mxu0 %v5451
  %v5571 = vpop.f32.mrf.mxu0
  %v5572 = vadd.f32 0.0, %v5571
  %v5573 = vpop.f32.mrf.mxu0
  %v5574 = vpop.f32.mrf.mxu0
  %v5575 = vpop.f32.mrf.mxu0
  %5576 = vdwg.mxu0
  %v5586 = vunpack.c.l.b16 %v5377
  %v5587 = vunpack.c.l.b16 %v5378
  %v5588 = vunpack.c.l.b16 %v5379
  %v5589 = vunpack.c.l.b16 %v5380
  %v5590 = vunpack.c.l.b16 %v5381
  %v5591 = vunpack.c.l.b16 %v5382
  %v5592 = vunpack.c.l.b16 %v5383
  %v5593 = vunpack.c.l.b16 %v5384
  %v5594 = vunpack.c.l.b16 %v5385
  %v5595 = vpack.c.b16 %v5587, %v5586
  %v5596 = vpack.c.b16 %v5589, %v5588
  %v5597 = vpack.c.b16 %v5591, %v5590
  %v5598 = vpack.c.b16 %v5593, %v5592
  %v5599 = vpack.c.b16 %v5594, %v5594
  %v5621 = vunpack.c.l.b16 %v5387
  %v5622 = vunpack.c.l.b16 %v5388
  %v5623 = vunpack.c.l.b16 %v5389
  %v5624 = vunpack.c.l.b16 %v5390
  %v5625 = vunpack.c.l.b16 %v5391
  %v5626 = vunpack.c.l.b16 %v5392
  %v5627 = vunpack.c.l.b16 %v5393
  %v5628 = vunpack.c.l.b16 %v5394
  %v5629 = vunpack.c.l.b16 %v5395
  %v5630 = vunpack.c.l.b16 %v5396
  %v5631 = vunpack.c.l.b16 %v5397
  %v5632 = vunpack.c.l.b16 %v5398
  %v5633 = vunpack.c.l.b16 %v5399
  %v5634 = vunpack.c.l.b16 %v5400
  %v5635 = vunpack.c.l.b16 %v5401
  %v5636 = vunpack.c.l.b16 %v5402
  %v5637 = vpack.c.b16 %v5622, %v5621
  %v5638 = vpack.c.b16 %v5624, %v5623
  %v5639 = vpack.c.b16 %v5626, %v5625
  %v5640 = vpack.c.b16 %v5628, %v5627
  %v5641 = vpack.c.b16 %v5630, %v5629
  %v5642 = vpack.c.b16 %v5632, %v5631
  %v5643 = vpack.c.b16 %v5634, %v5633
  %v5644 = vpack.c.b16 %v5636, %v5635
  %5653 = vmatprep.subr.bf16.mxu0 0
  %5654 = vmatpush1.bf16.msra.mxu0 %v5644
  %5655 = vmatprep.subr.bf16.mxu0 0
  %5656 = vmatpush1.bf16.msra.mxu0 %v5643
  %5657 = vmatprep.subr.bf16.mxu0 0
  %5658 = vmatpush1.bf16.msra.mxu0 %v5642
  %5659 = vmatprep.subr.bf16.mxu0 0
  %5660 = vmatpush1.bf16.msra.mxu0 %v5641
  %5661 = vmatprep.subr.bf16.mxu0 0
  %5662 = vmatpush1.bf16.msra.mxu0 %v5640
  %5663 = vmatprep.subr.bf16.mxu0 0
  %5664 = vmatpush1.bf16.msra.mxu0 %v5639
  %5665 = vmatprep.subr.bf16.mxu0 0
  %5666 = vmatpush1.bf16.msra.mxu0 %v5638
  %5667 = vmatprep.subr.bf16.mxu0 0
  %5668 = vmatpush1.bf16.msra.mxu0 %v5637
  %5669 = vmatprep.subr.bf16.mxu0 0
  %5670 = vmatpush2.bf16.msra.mxu0 0
  %5671 = vmatprep.subr.bf16.mxu0 0
  %5672 = vmatpush2.bf16.msra.mxu0 0
  %5673 = vmatprep.subr.bf16.mxu0 0
  %5674 = vmatpush2.bf16.msra.mxu0 0
  %5675 = vmatprep.subr.bf16.mxu0 0
  %5676 = vmatpush2.bf16.msra.mxu0 0
  %5677 = vmatprep.subr.bf16.mxu0 0
  %5678 = vmatpush2.bf16.msra.mxu0 0
  %5679 = vmatprep.subr.bf16.mxu0 0
  %5680 = vmatpush2.bf16.msra.mxu0 0
  %5681 = vmatprep.subr.bf16.mxu0 0
  %5682 = vmatpush2.bf16.msra.mxu0 0
  %5683 = vmatprep.subr.bf16.mxu0 0
  %5684 = vmatpush2.bf16.msra.mxu0 0
  %5685 = vmatprep.mubr.bf16.mxu0 0
  %5686 = vmatmul.mubr.bf16.gmra.mxu0 %v5595
  %v5687 = vpop.f32.mrf.mxu0
  %v5688 = vadd.f32 %v5540, %v5687
  %v5689 = vpop.f32.mrf.mxu0
  %v5690 = vpop.f32.mrf.mxu0
  %v5691 = vadd.f32 %v5543, %v5690
  %v5692 = vpop.f32.mrf.mxu0
  %5693 = vmatprep.mubr.bf16.mxu0 0
  %5694 = vmatmul.mubr.bf16.gmra.mxu0 %v5596
  %v5695 = vpop.f32.mrf.mxu0
  %v5696 = vadd.f32 %v5548, %v5695
  %v5697 = vpop.f32.mrf.mxu0
  %v5698 = vpop.f32.mrf.mxu0
  %v5699 = vadd.f32 %v5551, %v5698
  %v5700 = vpop.f32.mrf.mxu0
  %5701 = vmatprep.mubr.bf16.mxu0 0
  %5702 = vmatmul.mubr.bf16.gmra.mxu0 %v5597
  %v5703 = vpop.f32.mrf.mxu0
  %v5704 = vadd.f32 %v5556, %v5703
  %v5705 = vpop.f32.mrf.mxu0
  %v5706 = vpop.f32.mrf.mxu0
  %v5707 = vadd.f32 %v5559, %v5706
  %v5708 = vpop.f32.mrf.mxu0
  %5709 = vmatprep.mubr.bf16.mxu0 0
  %5710 = vmatmul.mubr.bf16.gmra.mxu0 %v5598
  %v5711 = vpop.f32.mrf.mxu0
  %v5712 = vadd.f32 %v5564, %v5711
  %v5713 = vpop.f32.mrf.mxu0
  %v5714 = vpop.f32.mrf.mxu0
  %v5715 = vadd.f32 %v5567, %v5714
  %v5716 = vpop.f32.mrf.mxu0
  %5717 = vmatprep.mubr.bf16.mxu0 0
  %5718 = vmatmul.mubr.bf16.gmra.mxu0 %v5599
  %v5719 = vpop.f32.mrf.mxu0
  %v5720 = vadd.f32 %v5572, %v5719
  %v5721 = vpop.f32.mrf.mxu0
  %v5722 = vpop.f32.mrf.mxu0
  %v5723 = vpop.f32.mrf.mxu0
  %5724 = vdwg.mxu0
  %v5725 = vld [vmem:[%s0 + $0xc] sm:$0xf]
  %v5726 = vld [vmem:[%s0 + $0x28] sm:$0xf]
  %v5727 = vld [vmem:[%s0 + $0x44] sm:$0xf]
  %v5728 = vld [vmem:[%s0 + $0x60] sm:$0xf]
  %v5729 = vld [vmem:[%s0 + $0x7c] sm:$0xf]
  %v5730 = vld [vmem:[%s0 + $0x98] sm:$0xf]
  %v5731 = vld [vmem:[%s0 + $0xb4] sm:$0xf]
  %v5732 = vld [vmem:[%s0 + $0xd0] sm:$0xf]
  %v5733 = vld [vmem:[%s0 + $0xec] sm:$0xf]
  %v5734 = vld [vmem:[%s0 + $0x108] sm:$0x1]
  %s5735 = scalar_lea.vmem %s1, 1856
  %v5736 = vld [vmem:[%s5735] sm:$0xf]
  %v5737 = vld [vmem:[%s5735 + $0x4] sm:$0xf]
  %v5738 = vld [vmem:[%s5735 + $0x8] sm:$0xf]
  %v5739 = vld [vmem:[%s5735 + $0xc] sm:$0xf]
  %v5740 = vld [vmem:[%s5735 + $0x10] sm:$0xf]
  %v5741 = vld [vmem:[%s5735 + $0x14] sm:$0xf]
  %v5742 = vld [vmem:[%s5735 + $0x18] sm:$0xf]
  %v5743 = vld [vmem:[%s5735 + $0x1c] sm:$0xf]
  %v5744 = vld [vmem:[%s5735 + $0x20] sm:$0xf]
  %v5745 = vld [vmem:[%s5735 + $0x24] sm:$0xf]
  %v5746 = vld [vmem:[%s5735 + $0x28] sm:$0xf]
  %v5747 = vld [vmem:[%s5735 + $0x2c] sm:$0xf]
  %v5748 = vld [vmem:[%s5735 + $0x30] sm:$0xf]
  %v5749 = vld [vmem:[%s5735 + $0x34] sm:$0xf]
  %v5750 = vld [vmem:[%s5735 + $0x38] sm:$0xf]
  %v5751 = vld [vmem:[%s5735 + $0x3c] sm:$0xf]
  %v5762 = vunpack.c.l.b16 %v5725
  %v5763 = vunpack.c.l.b16 %v5726
  %v5764 = vunpack.c.l.b16 %v5727
  %v5765 = vunpack.c.l.b16 %v5728
  %v5766 = vunpack.c.l.b16 %v5729
  %v5767 = vunpack.c.l.b16 %v5730
  %v5768 = vunpack.c.l.b16 %v5731
  %v5769 = vunpack.c.l.b16 %v5732
  %v5770 = vunpack.c.l.b16 %v5733
  %v5771 = vunpack.c.l.b16 %v5734
  %v5772 = vpack.c.b16 %v5763, %v5762
  %v5773 = vpack.c.b16 %v5765, %v5764
  %v5774 = vpack.c.b16 %v5767, %v5766
  %v5775 = vpack.c.b16 %v5769, %v5768
  %v5776 = vpack.c.b16 %v5771, %v5770
  %v5778 = vshrl.u32 %v5772, 16
  %v5780 = vshll.u32 %v5772, 16
  %v5782 = vrot.slane %v5780, 1
  %v5783 = vor.u32 %v5778, %v5782
  %v5785 = vshll.u32 %v5773, 16
  %v5787 = vrot.slane %v5785, 1
  %v5788 = vsel %vm412, %v5783, %v5787
  %v5789 = vshrl.u32 %v5773, 16
  %v5791 = vor.u32 %v5789, %v5787
  %v5793 = vshll.u32 %v5774, 16
  %v5795 = vrot.slane %v5793, 1
  %v5796 = vsel %vm412, %v5791, %v5795
  %v5797 = vshrl.u32 %v5774, 16
  %v5799 = vor.u32 %v5797, %v5795
  %v5801 = vshll.u32 %v5775, 16
  %v5803 = vrot.slane %v5801, 1
  %v5804 = vsel %vm412, %v5799, %v5803
  %v5805 = vshrl.u32 %v5775, 16
  %v5807 = vor.u32 %v5805, %v5803
  %v5809 = vshll.u32 %v5776, 16
  %v5811 = vrot.slane %v5809, 1
  %v5812 = vsel %vm412, %v5807, %v5811
  %v5813 = vshrl.u32 %v5776, 16
  %v5815 = vor.u32 %v5813, %v5811
  %v5837 = vunpack.c.l.b16 %v5736
  %v5838 = vunpack.c.l.b16 %v5737
  %v5839 = vunpack.c.l.b16 %v5738
  %v5840 = vunpack.c.l.b16 %v5739
  %v5841 = vunpack.c.l.b16 %v5740
  %v5842 = vunpack.c.l.b16 %v5741
  %v5843 = vunpack.c.l.b16 %v5742
  %v5844 = vunpack.c.l.b16 %v5743
  %v5845 = vunpack.c.l.b16 %v5744
  %v5846 = vunpack.c.l.b16 %v5745
  %v5847 = vunpack.c.l.b16 %v5746
  %v5848 = vunpack.c.l.b16 %v5747
  %v5849 = vunpack.c.l.b16 %v5748
  %v5850 = vunpack.c.l.b16 %v5749
  %v5851 = vunpack.c.l.b16 %v5750
  %v5852 = vunpack.c.l.b16 %v5751
  %v5853 = vpack.c.b16 %v5838, %v5837
  %v5854 = vpack.c.b16 %v5840, %v5839
  %v5855 = vpack.c.b16 %v5842, %v5841
  %v5856 = vpack.c.b16 %v5844, %v5843
  %v5857 = vpack.c.b16 %v5846, %v5845
  %v5858 = vpack.c.b16 %v5848, %v5847
  %v5859 = vpack.c.b16 %v5850, %v5849
  %v5860 = vpack.c.b16 %v5852, %v5851
  %5869 = vmatprep.subr.bf16.mxu0 0
  %5870 = vmatpush1.bf16.msra.mxu0 %v5860
  %5871 = vmatprep.subr.bf16.mxu0 0
  %5872 = vmatpush1.bf16.msra.mxu0 %v5859
  %5873 = vmatprep.subr.bf16.mxu0 0
  %5874 = vmatpush1.bf16.msra.mxu0 %v5858
  %5875 = vmatprep.subr.bf16.mxu0 0
  %5876 = vmatpush1.bf16.msra.mxu0 %v5857
  %5877 = vmatprep.subr.bf16.mxu0 0
  %5878 = vmatpush1.bf16.msra.mxu0 %v5856
  %5879 = vmatprep.subr.bf16.mxu0 0
  %5880 = vmatpush1.bf16.msra.mxu0 %v5855
  %5881 = vmatprep.subr.bf16.mxu0 0
  %5882 = vmatpush1.bf16.msra.mxu0 %v5854
  %5883 = vmatprep.subr.bf16.mxu0 0
  %5884 = vmatpush1.bf16.msra.mxu0 %v5853
  %5885 = vmatprep.subr.bf16.mxu0 0
  %5886 = vmatpush2.bf16.msra.mxu0 0
  %5887 = vmatprep.subr.bf16.mxu0 0
  %5888 = vmatpush2.bf16.msra.mxu0 0
  %5889 = vmatprep.subr.bf16.mxu0 0
  %5890 = vmatpush2.bf16.msra.mxu0 0
  %5891 = vmatprep.subr.bf16.mxu0 0
  %5892 = vmatpush2.bf16.msra.mxu0 0
  %5893 = vmatprep.subr.bf16.mxu0 0
  %5894 = vmatpush2.bf16.msra.mxu0 0
  %5895 = vmatprep.subr.bf16.mxu0 0
  %5896 = vmatpush2.bf16.msra.mxu0 0
  %5897 = vmatprep.subr.bf16.mxu0 0
  %5898 = vmatpush2.bf16.msra.mxu0 0
  %5899 = vmatprep.subr.bf16.mxu0 0
  %5900 = vmatpush2.bf16.msra.mxu0 0
  %5901 = vmatprep.mubr.bf16.mxu0 0
  %5902 = vmatmul.mubr.bf16.gmra.mxu0 %v5788
  %v5903 = vpop.f32.mrf.mxu0
  %v5904 = vadd.f32 0.0, %v5903
  %v5905 = vpop.f32.mrf.mxu0
  %v5906 = vpop.f32.mrf.mxu0
  %v5907 = vadd.f32 0.0, %v5906
  %v5908 = vpop.f32.mrf.mxu0
  %5909 = vmatprep.mubr.bf16.mxu0 0
  %5910 = vmatmul.mubr.bf16.gmra.mxu0 %v5796
  %v5911 = vpop.f32.mrf.mxu0
  %v5912 = vadd.f32 0.0, %v5911
  %v5913 = vpop.f32.mrf.mxu0
  %v5914 = vpop.f32.mrf.mxu0
  %v5915 = vadd.f32 0.0, %v5914
  %v5916 = vpop.f32.mrf.mxu0
  %5917 = vmatprep.mubr.bf16.mxu0 0
  %5918 = vmatmul.mubr.bf16.gmra.mxu0 %v5804
  %v5919 = vpop.f32.mrf.mxu0
  %v5920 = vadd.f32 0.0, %v5919
  %v5921 = vpop.f32.mrf.mxu0
  %v5922 = vpop.f32.mrf.mxu0
  %v5923 = vadd.f32 0.0, %v5922
  %v5924 = vpop.f32.mrf.mxu0
  %5925 = vmatprep.mubr.bf16.mxu0 0
  %5926 = vmatmul.mubr.bf16.gmra.mxu0 %v5812
  %v5927 = vpop.f32.mrf.mxu0
  %v5928 = vadd.f32 0.0, %v5927
  %v5929 = vpop.f32.mrf.mxu0
  %v5930 = vpop.f32.mrf.mxu0
  %v5931 = vadd.f32 0.0, %v5930
  %v5932 = vpop.f32.mrf.mxu0
  %5933 = vmatprep.mubr.bf16.mxu0 0
  %5934 = vmatmul.mubr.bf16.gmra.mxu0 %v5815
  %v5935 = vpop.f32.mrf.mxu0
  %v5936 = vadd.f32 0.0, %v5935
  %v5937 = vpop.f32.mrf.mxu0
  %v5938 = vpop.f32.mrf.mxu0
  %v5939 = vpop.f32.mrf.mxu0
  %5940 = vdwg.mxu0
  %v5941 = vadd.f32 %v5688, %v5904
  %v5942 = vadd.f32 %v5691, %v5907
  %v5943 = vadd.f32 %v5696, %v5912
  %v5944 = vadd.f32 %v5699, %v5915
  %v5945 = vadd.f32 %v5704, %v5920
  %v5946 = vadd.f32 %v5707, %v5923
  %v5947 = vadd.f32 %v5712, %v5928
  %v5948 = vadd.f32 %v5715, %v5931
  %v5949 = vadd.f32 %v5720, %v5936
  %v5950 = vld [vmem:[%s586 + $0xc] sm:$0xf]
  %v5951 = vld [vmem:[%s586 + $0x28] sm:$0xf]
  %v5952 = vld [vmem:[%s586 + $0x44] sm:$0xf]
  %v5953 = vld [vmem:[%s586 + $0x60] sm:$0xf]
  %v5954 = vld [vmem:[%s586 + $0x7c] sm:$0xf]
  %v5955 = vld [vmem:[%s586 + $0x98] sm:$0xf]
  %v5956 = vld [vmem:[%s586 + $0xb4] sm:$0xf]
  %v5957 = vld [vmem:[%s586 + $0xd0] sm:$0xf]
  %v5958 = vld [vmem:[%s586 + $0xec] sm:$0xf]
  %s5959 = scalar_lea.vmem %s1, 1920
  %v5960 = vld [vmem:[%s5959] sm:$0xf]
  %v5961 = vld [vmem:[%s5959 + $0x4] sm:$0xf]
  %v5962 = vld [vmem:[%s5959 + $0x8] sm:$0xf]
  %v5963 = vld [vmem:[%s5959 + $0xc] sm:$0xf]
  %v5964 = vld [vmem:[%s5959 + $0x10] sm:$0xf]
  %v5965 = vld [vmem:[%s5959 + $0x14] sm:$0xf]
  %v5966 = vld [vmem:[%s5959 + $0x18] sm:$0xf]
  %v5967 = vld [vmem:[%s5959 + $0x1c] sm:$0xf]
  %v5968 = vld [vmem:[%s5959 + $0x20] sm:$0xf]
  %v5969 = vld [vmem:[%s5959 + $0x24] sm:$0xf]
  %v5970 = vld [vmem:[%s5959 + $0x28] sm:$0xf]
  %v5971 = vld [vmem:[%s5959 + $0x2c] sm:$0xf]
  %v5972 = vld [vmem:[%s5959 + $0x30] sm:$0xf]
  %v5973 = vld [vmem:[%s5959 + $0x34] sm:$0xf]
  %v5974 = vld [vmem:[%s5959 + $0x38] sm:$0xf]
  %v5975 = vld [vmem:[%s5959 + $0x3c] sm:$0xf]
  %v5985 = vunpack.c.l.b16 %v5950
  %v5986 = vunpack.c.l.b16 %v5951
  %v5987 = vunpack.c.l.b16 %v5952
  %v5988 = vunpack.c.l.b16 %v5953
  %v5989 = vunpack.c.l.b16 %v5954
  %v5990 = vunpack.c.l.b16 %v5955
  %v5991 = vunpack.c.l.b16 %v5956
  %v5992 = vunpack.c.l.b16 %v5957
  %v5993 = vunpack.c.l.b16 %v5958
  %v5994 = vpack.c.b16 %v5986, %v5985
  %v5995 = vpack.c.b16 %v5988, %v5987
  %v5996 = vpack.c.b16 %v5990, %v5989
  %v5997 = vpack.c.b16 %v5992, %v5991
  %v5998 = vpack.c.b16 %v5993, %v5993
  %v6020 = vunpack.c.l.b16 %v5960
  %v6021 = vunpack.c.l.b16 %v5961
  %v6022 = vunpack.c.l.b16 %v5962
  %v6023 = vunpack.c.l.b16 %v5963
  %v6024 = vunpack.c.l.b16 %v5964
  %v6025 = vunpack.c.l.b16 %v5965
  %v6026 = vunpack.c.l.b16 %v5966
  %v6027 = vunpack.c.l.b16 %v5967
  %v6028 = vunpack.c.l.b16 %v5968
  %v6029 = vunpack.c.l.b16 %v5969
  %v6030 = vunpack.c.l.b16 %v5970
  %v6031 = vunpack.c.l.b16 %v5971
  %v6032 = vunpack.c.l.b16 %v5972
  %v6033 = vunpack.c.l.b16 %v5973
  %v6034 = vunpack.c.l.b16 %v5974
  %v6035 = vunpack.c.l.b16 %v5975
  %v6036 = vpack.c.b16 %v6021, %v6020
  %v6037 = vpack.c.b16 %v6023, %v6022
  %v6038 = vpack.c.b16 %v6025, %v6024
  %v6039 = vpack.c.b16 %v6027, %v6026
  %v6040 = vpack.c.b16 %v6029, %v6028
  %v6041 = vpack.c.b16 %v6031, %v6030
  %v6042 = vpack.c.b16 %v6033, %v6032
  %v6043 = vpack.c.b16 %v6035, %v6034
  %6052 = vmatprep.subr.bf16.mxu0 0
  %6053 = vmatpush1.bf16.msra.mxu0 %v6043
  %6054 = vmatprep.subr.bf16.mxu0 0
  %6055 = vmatpush1.bf16.msra.mxu0 %v6042
  %6056 = vmatprep.subr.bf16.mxu0 0
  %6057 = vmatpush1.bf16.msra.mxu0 %v6041
  %6058 = vmatprep.subr.bf16.mxu0 0
  %6059 = vmatpush1.bf16.msra.mxu0 %v6040
  %6060 = vmatprep.subr.bf16.mxu0 0
  %6061 = vmatpush1.bf16.msra.mxu0 %v6039
  %6062 = vmatprep.subr.bf16.mxu0 0
  %6063 = vmatpush1.bf16.msra.mxu0 %v6038
  %6064 = vmatprep.subr.bf16.mxu0 0
  %6065 = vmatpush1.bf16.msra.mxu0 %v6037
  %6066 = vmatprep.subr.bf16.mxu0 0
  %6067 = vmatpush1.bf16.msra.mxu0 %v6036
  %6068 = vmatprep.subr.bf16.mxu0 0
  %6069 = vmatpush2.bf16.msra.mxu0 0
  %6070 = vmatprep.subr.bf16.mxu0 0
  %6071 = vmatpush2.bf16.msra.mxu0 0
  %6072 = vmatprep.subr.bf16.mxu0 0
  %6073 = vmatpush2.bf16.msra.mxu0 0
  %6074 = vmatprep.subr.bf16.mxu0 0
  %6075 = vmatpush2.bf16.msra.mxu0 0
  %6076 = vmatprep.subr.bf16.mxu0 0
  %6077 = vmatpush2.bf16.msra.mxu0 0
  %6078 = vmatprep.subr.bf16.mxu0 0
  %6079 = vmatpush2.bf16.msra.mxu0 0
  %6080 = vmatprep.subr.bf16.mxu0 0
  %6081 = vmatpush2.bf16.msra.mxu0 0
  %6082 = vmatprep.subr.bf16.mxu0 0
  %6083 = vmatpush2.bf16.msra.mxu0 0
  %6084 = vmatprep.mubr.bf16.mxu0 0
  %6085 = vmatmul.mubr.bf16.gmra.mxu0 %v5994
  %v6086 = vpop.f32.mrf.mxu0
  %v6087 = vadd.f32 0.0, %v6086
  %v6088 = vpop.f32.mrf.mxu0
  %v6089 = vpop.f32.mrf.mxu0
  %v6090 = vadd.f32 0.0, %v6089
  %v6091 = vpop.f32.mrf.mxu0
  %6092 = vmatprep.mubr.bf16.mxu0 0
  %6093 = vmatmul.mubr.bf16.gmra.mxu0 %v5995
  %v6094 = vpop.f32.mrf.mxu0
  %v6095 = vadd.f32 0.0, %v6094
  %v6096 = vpop.f32.mrf.mxu0
  %v6097 = vpop.f32.mrf.mxu0
  %v6098 = vadd.f32 0.0, %v6097
  %v6099 = vpop.f32.mrf.mxu0
  %6100 = vmatprep.mubr.bf16.mxu0 0
  %6101 = vmatmul.mubr.bf16.gmra.mxu0 %v5996
  %v6102 = vpop.f32.mrf.mxu0
  %v6103 = vadd.f32 0.0, %v6102
  %v6104 = vpop.f32.mrf.mxu0
  %v6105 = vpop.f32.mrf.mxu0
  %v6106 = vadd.f32 0.0, %v6105
  %v6107 = vpop.f32.mrf.mxu0
  %6108 = vmatprep.mubr.bf16.mxu0 0
  %6109 = vmatmul.mubr.bf16.gmra.mxu0 %v5997
  %v6110 = vpop.f32.mrf.mxu0
  %v6111 = vadd.f32 0.0, %v6110
  %v6112 = vpop.f32.mrf.mxu0
  %v6113 = vpop.f32.mrf.mxu0
  %v6114 = vadd.f32 0.0, %v6113
  %v6115 = vpop.f32.mrf.mxu0
  %6116 = vmatprep.mubr.bf16.mxu0 0
  %6117 = vmatmul.mubr.bf16.gmra.mxu0 %v5998
  %v6118 = vpop.f32.mrf.mxu0
  %v6119 = vadd.f32 0.0, %v6118
  %v6120 = vpop.f32.mrf.mxu0
  %v6121 = vpop.f32.mrf.mxu0
  %v6122 = vpop.f32.mrf.mxu0
  %6123 = vdwg.mxu0
  %v6124 = vadd.f32 %v5941, %v6087
  %v6125 = vadd.f32 %v5942, %v6090
  %v6126 = vadd.f32 %v5943, %v6095
  %v6127 = vadd.f32 %v5944, %v6098
  %v6128 = vadd.f32 %v5945, %v6103
  %v6129 = vadd.f32 %v5946, %v6106
  %v6130 = vadd.f32 %v5947, %v6111
  %v6131 = vadd.f32 %v5948, %v6114
  %v6132 = vadd.f32 %v5949, %v6119
  %v6133 = vld [vmem:[%s770 + $0xc] sm:$0xf]
  %v6134 = vld [vmem:[%s770 + $0x28] sm:$0xf]
  %v6135 = vld [vmem:[%s770 + $0x44] sm:$0xf]
  %v6136 = vld [vmem:[%s770 + $0x60] sm:$0xf]
  %v6137 = vld [vmem:[%s770 + $0x7c] sm:$0xf]
  %v6138 = vld [vmem:[%s770 + $0x98] sm:$0xf]
  %v6139 = vld [vmem:[%s770 + $0xb4] sm:$0xf]
  %v6140 = vld [vmem:[%s770 + $0xd0] sm:$0xf]
  %v6141 = vld [vmem:[%s770 + $0xec] sm:$0xf]
  %s6142 = scalar_lea.vmem %s1, 1984
  %v6143 = vld [vmem:[%s6142] sm:$0xf]
  %v6144 = vld [vmem:[%s6142 + $0x4] sm:$0xf]
  %v6145 = vld [vmem:[%s6142 + $0x8] sm:$0xf]
  %v6146 = vld [vmem:[%s6142 + $0xc] sm:$0xf]
  %v6147 = vld [vmem:[%s6142 + $0x10] sm:$0xf]
  %v6148 = vld [vmem:[%s6142 + $0x14] sm:$0xf]
  %v6149 = vld [vmem:[%s6142 + $0x18] sm:$0xf]
  %v6150 = vld [vmem:[%s6142 + $0x1c] sm:$0xf]
  %v6151 = vld [vmem:[%s6142 + $0x20] sm:$0xf]
  %v6152 = vld [vmem:[%s6142 + $0x24] sm:$0xf]
  %v6153 = vld [vmem:[%s6142 + $0x28] sm:$0xf]
  %v6154 = vld [vmem:[%s6142 + $0x2c] sm:$0xf]
  %v6155 = vld [vmem:[%s6142 + $0x30] sm:$0xf]
  %v6156 = vld [vmem:[%s6142 + $0x34] sm:$0xf]
  %v6157 = vld [vmem:[%s6142 + $0x38] sm:$0xf]
  %v6158 = vld [vmem:[%s6142 + $0x3c] sm:$0xf]
  %v6168 = vunpack.c.l.b16 %v6133
  %v6169 = vunpack.c.l.b16 %v6134
  %v6170 = vunpack.c.l.b16 %v6135
  %v6171 = vunpack.c.l.b16 %v6136
  %v6172 = vunpack.c.l.b16 %v6137
  %v6173 = vunpack.c.l.b16 %v6138
  %v6174 = vunpack.c.l.b16 %v6139
  %v6175 = vunpack.c.l.b16 %v6140
  %v6176 = vunpack.c.l.b16 %v6141
  %v6177 = vpack.c.b16 %v6169, %v6168
  %v6178 = vpack.c.b16 %v6171, %v6170
  %v6179 = vpack.c.b16 %v6173, %v6172
  %v6180 = vpack.c.b16 %v6175, %v6174
  %v6181 = vpack.c.b16 %v6176, %v6176
  %v6203 = vunpack.c.l.b16 %v6143
  %v6204 = vunpack.c.l.b16 %v6144
  %v6205 = vunpack.c.l.b16 %v6145
  %v6206 = vunpack.c.l.b16 %v6146
  %v6207 = vunpack.c.l.b16 %v6147
  %v6208 = vunpack.c.l.b16 %v6148
  %v6209 = vunpack.c.l.b16 %v6149
  %v6210 = vunpack.c.l.b16 %v6150
  %v6211 = vunpack.c.l.b16 %v6151
  %v6212 = vunpack.c.l.b16 %v6152
  %v6213 = vunpack.c.l.b16 %v6153
  %v6214 = vunpack.c.l.b16 %v6154
  %v6215 = vunpack.c.l.b16 %v6155
  %v6216 = vunpack.c.l.b16 %v6156
  %v6217 = vunpack.c.l.b16 %v6157
  %v6218 = vunpack.c.l.b16 %v6158
  %v6219 = vpack.c.b16 %v6204, %v6203
  %v6220 = vpack.c.b16 %v6206, %v6205
  %v6221 = vpack.c.b16 %v6208, %v6207
  %v6222 = vpack.c.b16 %v6210, %v6209
  %v6223 = vpack.c.b16 %v6212, %v6211
  %v6224 = vpack.c.b16 %v6214, %v6213
  %v6225 = vpack.c.b16 %v6216, %v6215
  %v6226 = vpack.c.b16 %v6218, %v6217
  %6235 = vmatprep.subr.bf16.mxu0 0
  %6236 = vmatpush1.bf16.msra.mxu0 %v6226
  %6237 = vmatprep.subr.bf16.mxu0 0
  %6238 = vmatpush1.bf16.msra.mxu0 %v6225
  %6239 = vmatprep.subr.bf16.mxu0 0
  %6240 = vmatpush1.bf16.msra.mxu0 %v6224
  %6241 = vmatprep.subr.bf16.mxu0 0
  %6242 = vmatpush1.bf16.msra.mxu0 %v6223
  %6243 = vmatprep.subr.bf16.mxu0 0
  %6244 = vmatpush1.bf16.msra.mxu0 %v6222
  %6245 = vmatprep.subr.bf16.mxu0 0
  %6246 = vmatpush1.bf16.msra.mxu0 %v6221
  %6247 = vmatprep.subr.bf16.mxu0 0
  %6248 = vmatpush1.bf16.msra.mxu0 %v6220
  %6249 = vmatprep.subr.bf16.mxu0 0
  %6250 = vmatpush1.bf16.msra.mxu0 %v6219
  %6251 = vmatprep.subr.bf16.mxu0 0
  %6252 = vmatpush2.bf16.msra.mxu0 0
  %6253 = vmatprep.subr.bf16.mxu0 0
  %6254 = vmatpush2.bf16.msra.mxu0 0
  %6255 = vmatprep.subr.bf16.mxu0 0
  %6256 = vmatpush2.bf16.msra.mxu0 0
  %6257 = vmatprep.subr.bf16.mxu0 0
  %6258 = vmatpush2.bf16.msra.mxu0 0
  %6259 = vmatprep.subr.bf16.mxu0 0
  %6260 = vmatpush2.bf16.msra.mxu0 0
  %6261 = vmatprep.subr.bf16.mxu0 0
  %6262 = vmatpush2.bf16.msra.mxu0 0
  %6263 = vmatprep.subr.bf16.mxu0 0
  %6264 = vmatpush2.bf16.msra.mxu0 0
  %6265 = vmatprep.subr.bf16.mxu0 0
  %6266 = vmatpush2.bf16.msra.mxu0 0
  %6267 = vmatprep.mubr.bf16.mxu0 0
  %6268 = vmatmul.mubr.bf16.gmra.mxu0 %v6177
  %v6269 = vpop.f32.mrf.mxu0
  %v6270 = vadd.f32 0.0, %v6269
  %v6271 = vpop.f32.mrf.mxu0
  %v6272 = vpop.f32.mrf.mxu0
  %v6273 = vadd.f32 0.0, %v6272
  %v6274 = vpop.f32.mrf.mxu0
  %6275 = vmatprep.mubr.bf16.mxu0 0
  %6276 = vmatmul.mubr.bf16.gmra.mxu0 %v6178
  %v6277 = vpop.f32.mrf.mxu0
  %v6278 = vadd.f32 0.0, %v6277
  %v6279 = vpop.f32.mrf.mxu0
  %v6280 = vpop.f32.mrf.mxu0
  %v6281 = vadd.f32 0.0, %v6280
  %v6282 = vpop.f32.mrf.mxu0
  %6283 = vmatprep.mubr.bf16.mxu0 0
  %6284 = vmatmul.mubr.bf16.gmra.mxu0 %v6179
  %v6285 = vpop.f32.mrf.mxu0
  %v6286 = vadd.f32 0.0, %v6285
  %v6287 = vpop.f32.mrf.mxu0
  %v6288 = vpop.f32.mrf.mxu0
  %v6289 = vadd.f32 0.0, %v6288
  %v6290 = vpop.f32.mrf.mxu0
  %6291 = vmatprep.mubr.bf16.mxu0 0
  %6292 = vmatmul.mubr.bf16.gmra.mxu0 %v6180
  %v6293 = vpop.f32.mrf.mxu0
  %v6294 = vadd.f32 0.0, %v6293
  %v6295 = vpop.f32.mrf.mxu0
  %v6296 = vpop.f32.mrf.mxu0
  %v6297 = vadd.f32 0.0, %v6296
  %v6298 = vpop.f32.mrf.mxu0
  %6299 = vmatprep.mubr.bf16.mxu0 0
  %6300 = vmatmul.mubr.bf16.gmra.mxu0 %v6181
  %v6301 = vpop.f32.mrf.mxu0
  %v6302 = vadd.f32 0.0, %v6301
  %v6303 = vpop.f32.mrf.mxu0
  %v6304 = vpop.f32.mrf.mxu0
  %v6305 = vpop.f32.mrf.mxu0
  %6306 = vdwg.mxu0
  %v6307 = vadd.f32 %v6124, %v6270
  %v6308 = vadd.f32 %v6125, %v6273
  %v6309 = vadd.f32 %v6126, %v6278
  %v6310 = vadd.f32 %v6127, %v6281
  %v6311 = vadd.f32 %v6128, %v6286
  %v6312 = vadd.f32 %v6129, %v6289
  %v6313 = vadd.f32 %v6130, %v6294
  %v6314 = vadd.f32 %v6131, %v6297
  %v6315 = vadd.f32 %v6132, %v6302
  %v6316 = vld [vmem:[%s586 + $0xc] sm:$0xf]
  %v6317 = vld [vmem:[%s586 + $0x28] sm:$0xf]
  %v6318 = vld [vmem:[%s586 + $0x44] sm:$0xf]
  %v6319 = vld [vmem:[%s586 + $0x60] sm:$0xf]
  %v6320 = vld [vmem:[%s586 + $0x7c] sm:$0xf]
  %v6321 = vld [vmem:[%s586 + $0x98] sm:$0xf]
  %v6322 = vld [vmem:[%s586 + $0xb4] sm:$0xf]
  %v6323 = vld [vmem:[%s586 + $0xd0] sm:$0xf]
  %v6324 = vld [vmem:[%s586 + $0xec] sm:$0xf]
  %v6325 = vld [vmem:[%s586 + $0x108] sm:$0x1]
  %s6326 = scalar_lea.vmem %s1, 2048
  %v6327 = vld [vmem:[%s6326] sm:$0xf]
  %v6328 = vld [vmem:[%s6326 + $0x4] sm:$0xf]
  %v6329 = vld [vmem:[%s6326 + $0x8] sm:$0xf]
  %v6330 = vld [vmem:[%s6326 + $0xc] sm:$0xf]
  %v6331 = vld [vmem:[%s6326 + $0x10] sm:$0xf]
  %v6332 = vld [vmem:[%s6326 + $0x14] sm:$0xf]
  %v6333 = vld [vmem:[%s6326 + $0x18] sm:$0xf]
  %v6334 = vld [vmem:[%s6326 + $0x1c] sm:$0xf]
  %v6335 = vld [vmem:[%s6326 + $0x20] sm:$0xf]
  %v6336 = vld [vmem:[%s6326 + $0x24] sm:$0xf]
  %v6337 = vld [vmem:[%s6326 + $0x28] sm:$0xf]
  %v6338 = vld [vmem:[%s6326 + $0x2c] sm:$0xf]
  %v6339 = vld [vmem:[%s6326 + $0x30] sm:$0xf]
  %v6340 = vld [vmem:[%s6326 + $0x34] sm:$0xf]
  %v6341 = vld [vmem:[%s6326 + $0x38] sm:$0xf]
  %v6342 = vld [vmem:[%s6326 + $0x3c] sm:$0xf]
  %v6353 = vunpack.c.l.b16 %v6316
  %v6354 = vunpack.c.l.b16 %v6317
  %v6355 = vunpack.c.l.b16 %v6318
  %v6356 = vunpack.c.l.b16 %v6319
  %v6357 = vunpack.c.l.b16 %v6320
  %v6358 = vunpack.c.l.b16 %v6321
  %v6359 = vunpack.c.l.b16 %v6322
  %v6360 = vunpack.c.l.b16 %v6323
  %v6361 = vunpack.c.l.b16 %v6324
  %v6362 = vunpack.c.l.b16 %v6325
  %v6363 = vpack.c.b16 %v6354, %v6353
  %v6364 = vpack.c.b16 %v6356, %v6355
  %v6365 = vpack.c.b16 %v6358, %v6357
  %v6366 = vpack.c.b16 %v6360, %v6359
  %v6367 = vpack.c.b16 %v6362, %v6361
  %v6369 = vshrl.u32 %v6363, 16
  %v6371 = vshll.u32 %v6363, 16
  %v6373 = vrot.slane %v6371, 1
  %v6374 = vor.u32 %v6369, %v6373
  %v6376 = vshll.u32 %v6364, 16
  %v6378 = vrot.slane %v6376, 1
  %v6379 = vsel %vm412, %v6374, %v6378
  %v6380 = vshrl.u32 %v6364, 16
  %v6382 = vor.u32 %v6380, %v6378
  %v6384 = vshll.u32 %v6365, 16
  %v6386 = vrot.slane %v6384, 1
  %v6387 = vsel %vm412, %v6382, %v6386
  %v6388 = vshrl.u32 %v6365, 16
  %v6390 = vor.u32 %v6388, %v6386
  %v6392 = vshll.u32 %v6366, 16
  %v6394 = vrot.slane %v6392, 1
  %v6395 = vsel %vm412, %v6390, %v6394
  %v6396 = vshrl.u32 %v6366, 16
  %v6398 = vor.u32 %v6396, %v6394
  %v6400 = vshll.u32 %v6367, 16
  %v6402 = vrot.slane %v6400, 1
  %v6403 = vsel %vm412, %v6398, %v6402
  %v6404 = vshrl.u32 %v6367, 16
  %v6406 = vor.u32 %v6404, %v6402
  %v6428 = vunpack.c.l.b16 %v6327
  %v6429 = vunpack.c.l.b16 %v6328
  %v6430 = vunpack.c.l.b16 %v6329
  %v6431 = vunpack.c.l.b16 %v6330
  %v6432 = vunpack.c.l.b16 %v6331
  %v6433 = vunpack.c.l.b16 %v6332
  %v6434 = vunpack.c.l.b16 %v6333
  %v6435 = vunpack.c.l.b16 %v6334
  %v6436 = vunpack.c.l.b16 %v6335
  %v6437 = vunpack.c.l.b16 %v6336
  %v6438 = vunpack.c.l.b16 %v6337
  %v6439 = vunpack.c.l.b16 %v6338
  %v6440 = vunpack.c.l.b16 %v6339
  %v6441 = vunpack.c.l.b16 %v6340
  %v6442 = vunpack.c.l.b16 %v6341
  %v6443 = vunpack.c.l.b16 %v6342
  %v6444 = vpack.c.b16 %v6429, %v6428
  %v6445 = vpack.c.b16 %v6431, %v6430
  %v6446 = vpack.c.b16 %v6433, %v6432
  %v6447 = vpack.c.b16 %v6435, %v6434
  %v6448 = vpack.c.b16 %v6437, %v6436
  %v6449 = vpack.c.b16 %v6439, %v6438
  %v6450 = vpack.c.b16 %v6441, %v6440
  %v6451 = vpack.c.b16 %v6443, %v6442
  %6460 = vmatprep.subr.bf16.mxu0 0
  %6461 = vmatpush1.bf16.msra.mxu0 %v6451
  %6462 = vmatprep.subr.bf16.mxu0 0
  %6463 = vmatpush1.bf16.msra.mxu0 %v6450
  %6464 = vmatprep.subr.bf16.mxu0 0
  %6465 = vmatpush1.bf16.msra.mxu0 %v6449
  %6466 = vmatprep.subr.bf16.mxu0 0
  %6467 = vmatpush1.bf16.msra.mxu0 %v6448
  %6468 = vmatprep.subr.bf16.mxu0 0
  %6469 = vmatpush1.bf16.msra.mxu0 %v6447
  %6470 = vmatprep.subr.bf16.mxu0 0
  %6471 = vmatpush1.bf16.msra.mxu0 %v6446
  %6472 = vmatprep.subr.bf16.mxu0 0
  %6473 = vmatpush1.bf16.msra.mxu0 %v6445
  %6474 = vmatprep.subr.bf16.mxu0 0
  %6475 = vmatpush1.bf16.msra.mxu0 %v6444
  %6476 = vmatprep.subr.bf16.mxu0 0
  %6477 = vmatpush2.bf16.msra.mxu0 0
  %6478 = vmatprep.subr.bf16.mxu0 0
  %6479 = vmatpush2.bf16.msra.mxu0 0
  %6480 = vmatprep.subr.bf16.mxu0 0
  %6481 = vmatpush2.bf16.msra.mxu0 0
  %6482 = vmatprep.subr.bf16.mxu0 0
  %6483 = vmatpush2.bf16.msra.mxu0 0
  %6484 = vmatprep.subr.bf16.mxu0 0
  %6485 = vmatpush2.bf16.msra.mxu0 0
  %6486 = vmatprep.subr.bf16.mxu0 0
  %6487 = vmatpush2.bf16.msra.mxu0 0
  %6488 = vmatprep.subr.bf16.mxu0 0
  %6489 = vmatpush2.bf16.msra.mxu0 0
  %6490 = vmatprep.subr.bf16.mxu0 0
  %6491 = vmatpush2.bf16.msra.mxu0 0
  %6492 = vmatprep.mubr.bf16.mxu0 0
  %6493 = vmatmul.mubr.bf16.gmra.mxu0 %v6379
  %v6494 = vpop.f32.mrf.mxu0
  %v6495 = vadd.f32 0.0, %v6494
  %v6496 = vpop.f32.mrf.mxu0
  %v6497 = vpop.f32.mrf.mxu0
  %v6498 = vadd.f32 0.0, %v6497
  %v6499 = vpop.f32.mrf.mxu0
  %6500 = vmatprep.mubr.bf16.mxu0 0
  %6501 = vmatmul.mubr.bf16.gmra.mxu0 %v6387
  %v6502 = vpop.f32.mrf.mxu0
  %v6503 = vadd.f32 0.0, %v6502
  %v6504 = vpop.f32.mrf.mxu0
  %v6505 = vpop.f32.mrf.mxu0
  %v6506 = vadd.f32 0.0, %v6505
  %v6507 = vpop.f32.mrf.mxu0
  %6508 = vmatprep.mubr.bf16.mxu0 0
  %6509 = vmatmul.mubr.bf16.gmra.mxu0 %v6395
  %v6510 = vpop.f32.mrf.mxu0
  %v6511 = vadd.f32 0.0, %v6510
  %v6512 = vpop.f32.mrf.mxu0
  %v6513 = vpop.f32.mrf.mxu0
  %v6514 = vadd.f32 0.0, %v6513
  %v6515 = vpop.f32.mrf.mxu0
  %6516 = vmatprep.mubr.bf16.mxu0 0
  %6517 = vmatmul.mubr.bf16.gmra.mxu0 %v6403
  %v6518 = vpop.f32.mrf.mxu0
  %v6519 = vadd.f32 0.0, %v6518
  %v6520 = vpop.f32.mrf.mxu0
  %v6521 = vpop.f32.mrf.mxu0
  %v6522 = vadd.f32 0.0, %v6521
  %v6523 = vpop.f32.mrf.mxu0
  %6524 = vmatprep.mubr.bf16.mxu0 0
  %6525 = vmatmul.mubr.bf16.gmra.mxu0 %v6406
  %v6526 = vpop.f32.mrf.mxu0
  %v6527 = vadd.f32 0.0, %v6526
  %v6528 = vpop.f32.mrf.mxu0
  %v6529 = vpop.f32.mrf.mxu0
  %v6530 = vpop.f32.mrf.mxu0
  %6531 = vdwg.mxu0
  %v6532 = vadd.f32 %v6307, %v6495
  %v6533 = vadd.f32 %v6308, %v6498
  %v6534 = vadd.f32 %v6309, %v6503
  %v6535 = vadd.f32 %v6310, %v6506
  %v6536 = vadd.f32 %v6311, %v6511
  %v6537 = vadd.f32 %v6312, %v6514
  %v6538 = vadd.f32 %v6313, %v6519
  %v6539 = vadd.f32 %v6314, %v6522
  %v6540 = vadd.f32 %v6315, %v6527
  %v6541 = vld [vmem:[%s0 + $0x28] sm:$0xf]
  %v6542 = vld [vmem:[%s0 + $0x44] sm:$0xf]
  %v6543 = vld [vmem:[%s0 + $0x60] sm:$0xf]
  %v6544 = vld [vmem:[%s0 + $0x7c] sm:$0xf]
  %v6545 = vld [vmem:[%s0 + $0x98] sm:$0xf]
  %v6546 = vld [vmem:[%s0 + $0xb4] sm:$0xf]
  %v6547 = vld [vmem:[%s0 + $0xd0] sm:$0xf]
  %v6548 = vld [vmem:[%s0 + $0xec] sm:$0xf]
  %v6549 = vld [vmem:[%s0 + $0x108] sm:$0xf]
  %v6550 = vld [vmem:[%s0 + $0x124] sm:$0x1]
  %s6551 = scalar_lea.vmem %s1, 2112
  %v6552 = vld [vmem:[%s6551] sm:$0xf]
  %v6553 = vld [vmem:[%s6551 + $0x4] sm:$0xf]
  %v6554 = vld [vmem:[%s6551 + $0x8] sm:$0xf]
  %v6555 = vld [vmem:[%s6551 + $0xc] sm:$0xf]
  %v6556 = vld [vmem:[%s6551 + $0x10] sm:$0xf]
  %v6557 = vld [vmem:[%s6551 + $0x14] sm:$0xf]
  %v6558 = vld [vmem:[%s6551 + $0x18] sm:$0xf]
  %v6559 = vld [vmem:[%s6551 + $0x1c] sm:$0xf]
  %v6560 = vld [vmem:[%s6551 + $0x20] sm:$0xf]
  %v6561 = vld [vmem:[%s6551 + $0x24] sm:$0xf]
  %v6562 = vld [vmem:[%s6551 + $0x28] sm:$0xf]
  %v6563 = vld [vmem:[%s6551 + $0x2c] sm:$0xf]
  %v6564 = vld [vmem:[%s6551 + $0x30] sm:$0xf]
  %v6565 = vld [vmem:[%s6551 + $0x34] sm:$0xf]
  %v6566 = vld [vmem:[%s6551 + $0x38] sm:$0xf]
  %v6567 = vld [vmem:[%s6551 + $0x3c] sm:$0xf]
  %v6578 = vunpack.c.l.b16 %v6541
  %v6579 = vunpack.c.l.b16 %v6542
  %v6580 = vunpack.c.l.b16 %v6543
  %v6581 = vunpack.c.l.b16 %v6544
  %v6582 = vunpack.c.l.b16 %v6545
  %v6583 = vunpack.c.l.b16 %v6546
  %v6584 = vunpack.c.l.b16 %v6547
  %v6585 = vunpack.c.l.b16 %v6548
  %v6586 = vunpack.c.l.b16 %v6549
  %v6587 = vunpack.c.l.b16 %v6550
  %v6588 = vpack.c.b16 %v6579, %v6578
  %v6589 = vpack.c.b16 %v6581, %v6580
  %v6590 = vpack.c.b16 %v6583, %v6582
  %v6591 = vpack.c.b16 %v6585, %v6584
  %v6592 = vpack.c.b16 %v6587, %v6586
  %v6594 = vshrl.u32 %v6588, 16
  %v6596 = vshll.u32 %v6588, 16
  %v6598 = vrot.slane %v6596, 1
  %v6599 = vor.u32 %v6594, %v6598
  %v6601 = vshll.u32 %v6589, 16
  %v6603 = vrot.slane %v6601, 1
  %v6604 = vsel %vm412, %v6599, %v6603
  %v6605 = vshrl.u32 %v6589, 16
  %v6607 = vor.u32 %v6605, %v6603
  %v6609 = vshll.u32 %v6590, 16
  %v6611 = vrot.slane %v6609, 1
  %v6612 = vsel %vm412, %v6607, %v6611
  %v6613 = vshrl.u32 %v6590, 16
  %v6615 = vor.u32 %v6613, %v6611
  %v6617 = vshll.u32 %v6591, 16
  %v6619 = vrot.slane %v6617, 1
  %v6620 = vsel %vm412, %v6615, %v6619
  %v6621 = vshrl.u32 %v6591, 16
  %v6623 = vor.u32 %v6621, %v6619
  %v6625 = vshll.u32 %v6592, 16
  %v6627 = vrot.slane %v6625, 1
  %v6628 = vsel %vm412, %v6623, %v6627
  %v6629 = vshrl.u32 %v6592, 16
  %v6631 = vor.u32 %v6629, %v6627
  %v6653 = vunpack.c.l.b16 %v6552
  %v6654 = vunpack.c.l.b16 %v6553
  %v6655 = vunpack.c.l.b16 %v6554
  %v6656 = vunpack.c.l.b16 %v6555
  %v6657 = vunpack.c.l.b16 %v6556
  %v6658 = vunpack.c.l.b16 %v6557
  %v6659 = vunpack.c.l.b16 %v6558
  %v6660 = vunpack.c.l.b16 %v6559
  %v6661 = vunpack.c.l.b16 %v6560
  %v6662 = vunpack.c.l.b16 %v6561
  %v6663 = vunpack.c.l.b16 %v6562
  %v6664 = vunpack.c.l.b16 %v6563
  %v6665 = vunpack.c.l.b16 %v6564
  %v6666 = vunpack.c.l.b16 %v6565
  %v6667 = vunpack.c.l.b16 %v6566
  %v6668 = vunpack.c.l.b16 %v6567
  %v6669 = vpack.c.b16 %v6654, %v6653
  %v6670 = vpack.c.b16 %v6656, %v6655
  %v6671 = vpack.c.b16 %v6658, %v6657
  %v6672 = vpack.c.b16 %v6660, %v6659
  %v6673 = vpack.c.b16 %v6662, %v6661
  %v6674 = vpack.c.b16 %v6664, %v6663
  %v6675 = vpack.c.b16 %v6666, %v6665
  %v6676 = vpack.c.b16 %v6668, %v6667
  %6685 = vmatprep.subr.bf16.mxu0 0
  %6686 = vmatpush1.bf16.msra.mxu0 %v6676
  %6687 = vmatprep.subr.bf16.mxu0 0
  %6688 = vmatpush1.bf16.msra.mxu0 %v6675
  %6689 = vmatprep.subr.bf16.mxu0 0
  %6690 = vmatpush1.bf16.msra.mxu0 %v6674
  %6691 = vmatprep.subr.bf16.mxu0 0
  %6692 = vmatpush1.bf16.msra.mxu0 %v6673
  %6693 = vmatprep.subr.bf16.mxu0 0
  %6694 = vmatpush1.bf16.msra.mxu0 %v6672
  %6695 = vmatprep.subr.bf16.mxu0 0
  %6696 = vmatpush1.bf16.msra.mxu0 %v6671
  %6697 = vmatprep.subr.bf16.mxu0 0
  %6698 = vmatpush1.bf16.msra.mxu0 %v6670
  %6699 = vmatprep.subr.bf16.mxu0 0
  %6700 = vmatpush1.bf16.msra.mxu0 %v6669
  %6701 = vmatprep.subr.bf16.mxu0 0
  %6702 = vmatpush2.bf16.msra.mxu0 0
  %6703 = vmatprep.subr.bf16.mxu0 0
  %6704 = vmatpush2.bf16.msra.mxu0 0
  %6705 = vmatprep.subr.bf16.mxu0 0
  %6706 = vmatpush2.bf16.msra.mxu0 0
  %6707 = vmatprep.subr.bf16.mxu0 0
  %6708 = vmatpush2.bf16.msra.mxu0 0
  %6709 = vmatprep.subr.bf16.mxu0 0
  %6710 = vmatpush2.bf16.msra.mxu0 0
  %6711 = vmatprep.subr.bf16.mxu0 0
  %6712 = vmatpush2.bf16.msra.mxu0 0
  %6713 = vmatprep.subr.bf16.mxu0 0
  %6714 = vmatpush2.bf16.msra.mxu0 0
  %6715 = vmatprep.subr.bf16.mxu0 0
  %6716 = vmatpush2.bf16.msra.mxu0 0
  %6717 = vmatprep.mubr.bf16.mxu0 0
  %6718 = vmatmul.mubr.bf16.gmra.mxu0 %v6604
  %v6719 = vpop.f32.mrf.mxu0
  %v6720 = vadd.f32 0.0, %v6719
  %v6721 = vpop.f32.mrf.mxu0
  %v6722 = vpop.f32.mrf.mxu0
  %v6723 = vadd.f32 0.0, %v6722
  %v6724 = vpop.f32.mrf.mxu0
  %6725 = vmatprep.mubr.bf16.mxu0 0
  %6726 = vmatmul.mubr.bf16.gmra.mxu0 %v6612
  %v6727 = vpop.f32.mrf.mxu0
  %v6728 = vadd.f32 0.0, %v6727
  %v6729 = vpop.f32.mrf.mxu0
  %v6730 = vpop.f32.mrf.mxu0
  %v6731 = vadd.f32 0.0, %v6730
  %v6732 = vpop.f32.mrf.mxu0
  %6733 = vmatprep.mubr.bf16.mxu0 0
  %6734 = vmatmul.mubr.bf16.gmra.mxu0 %v6620
  %v6735 = vpop.f32.mrf.mxu0
  %v6736 = vadd.f32 0.0, %v6735
  %v6737 = vpop.f32.mrf.mxu0
  %v6738 = vpop.f32.mrf.mxu0
  %v6739 = vadd.f32 0.0, %v6738
  %v6740 = vpop.f32.mrf.mxu0
  %6741 = vmatprep.mubr.bf16.mxu0 0
  %6742 = vmatmul.mubr.bf16.gmra.mxu0 %v6628
  %v6743 = vpop.f32.mrf.mxu0
  %v6744 = vadd.f32 0.0, %v6743
  %v6745 = vpop.f32.mrf.mxu0
  %v6746 = vpop.f32.mrf.mxu0
  %v6747 = vadd.f32 0.0, %v6746
  %v6748 = vpop.f32.mrf.mxu0
  %6749 = vmatprep.mubr.bf16.mxu0 0
  %6750 = vmatmul.mubr.bf16.gmra.mxu0 %v6631
  %v6751 = vpop.f32.mrf.mxu0
  %v6752 = vadd.f32 0.0, %v6751
  %v6753 = vpop.f32.mrf.mxu0
  %v6754 = vpop.f32.mrf.mxu0
  %v6755 = vpop.f32.mrf.mxu0
  %6756 = vdwg.mxu0
  %v6757 = vadd.f32 %v6532, %v6720
  %v6758 = vadd.f32 %v6533, %v6723
  %v6759 = vadd.f32 %v6534, %v6728
  %v6760 = vadd.f32 %v6535, %v6731
  %v6761 = vadd.f32 %v6536, %v6736
  %v6762 = vadd.f32 %v6537, %v6739
  %v6763 = vadd.f32 %v6538, %v6744
  %v6764 = vadd.f32 %v6539, %v6747
  %v6765 = vadd.f32 %v6540, %v6752
  %v6766 = vld [vmem:[%s37 + $0x28] sm:$0xf]
  %v6767 = vld [vmem:[%s37 + $0x44] sm:$0xf]
  %v6768 = vld [vmem:[%s37 + $0x60] sm:$0xf]
  %v6769 = vld [vmem:[%s37 + $0x7c] sm:$0xf]
  %v6770 = vld [vmem:[%s37 + $0x98] sm:$0xf]
  %v6771 = vld [vmem:[%s37 + $0xb4] sm:$0xf]
  %v6772 = vld [vmem:[%s37 + $0xd0] sm:$0xf]
  %v6773 = vld [vmem:[%s37 + $0xec] sm:$0xf]
  %v6774 = vld [vmem:[%s37 + $0x108] sm:$0xf]
  %v6775 = vld [vmem:[%s37 + $0x124] sm:$0x1]
  %s6776 = scalar_lea.vmem %s1, 2176
  %v6777 = vld [vmem:[%s6776] sm:$0xf]
  %v6778 = vld [vmem:[%s6776 + $0x4] sm:$0xf]
  %v6779 = vld [vmem:[%s6776 + $0x8] sm:$0xf]
  %v6780 = vld [vmem:[%s6776 + $0xc] sm:$0xf]
  %v6781 = vld [vmem:[%s6776 + $0x10] sm:$0xf]
  %v6782 = vld [vmem:[%s6776 + $0x14] sm:$0xf]
  %v6783 = vld [vmem:[%s6776 + $0x18] sm:$0xf]
  %v6784 = vld [vmem:[%s6776 + $0x1c] sm:$0xf]
  %v6785 = vld [vmem:[%s6776 + $0x20] sm:$0xf]
  %v6786 = vld [vmem:[%s6776 + $0x24] sm:$0xf]
  %v6787 = vld [vmem:[%s6776 + $0x28] sm:$0xf]
  %v6788 = vld [vmem:[%s6776 + $0x2c] sm:$0xf]
  %v6789 = vld [vmem:[%s6776 + $0x30] sm:$0xf]
  %v6790 = vld [vmem:[%s6776 + $0x34] sm:$0xf]
  %v6791 = vld [vmem:[%s6776 + $0x38] sm:$0xf]
  %v6792 = vld [vmem:[%s6776 + $0x3c] sm:$0xf]
  %v6803 = vunpack.c.l.b16 %v6766
  %v6804 = vunpack.c.l.b16 %v6767
  %v6805 = vunpack.c.l.b16 %v6768
  %v6806 = vunpack.c.l.b16 %v6769
  %v6807 = vunpack.c.l.b16 %v6770
  %v6808 = vunpack.c.l.b16 %v6771
  %v6809 = vunpack.c.l.b16 %v6772
  %v6810 = vunpack.c.l.b16 %v6773
  %v6811 = vunpack.c.l.b16 %v6774
  %v6812 = vunpack.c.l.b16 %v6775
  %v6813 = vpack.c.b16 %v6804, %v6803
  %v6814 = vpack.c.b16 %v6806, %v6805
  %v6815 = vpack.c.b16 %v6808, %v6807
  %v6816 = vpack.c.b16 %v6810, %v6809
  %v6817 = vpack.c.b16 %v6812, %v6811
  %v6819 = vshrl.u32 %v6813, 16
  %v6821 = vshll.u32 %v6813, 16
  %v6823 = vrot.slane %v6821, 1
  %v6824 = vor.u32 %v6819, %v6823
  %v6826 = vshll.u32 %v6814, 16
  %v6828 = vrot.slane %v6826, 1
  %v6829 = vsel %vm412, %v6824, %v6828
  %v6830 = vshrl.u32 %v6814, 16
  %v6832 = vor.u32 %v6830, %v6828
  %v6834 = vshll.u32 %v6815, 16
  %v6836 = vrot.slane %v6834, 1
  %v6837 = vsel %vm412, %v6832, %v6836
  %v6838 = vshrl.u32 %v6815, 16
  %v6840 = vor.u32 %v6838, %v6836
  %v6842 = vshll.u32 %v6816, 16
  %v6844 = vrot.slane %v6842, 1
  %v6845 = vsel %vm412, %v6840, %v6844
  %v6846 = vshrl.u32 %v6816, 16
  %v6848 = vor.u32 %v6846, %v6844
  %v6850 = vshll.u32 %v6817, 16
  %v6852 = vrot.slane %v6850, 1
  %v6853 = vsel %vm412, %v6848, %v6852
  %v6854 = vshrl.u32 %v6817, 16
  %v6856 = vor.u32 %v6854, %v6852
  %v6878 = vunpack.c.l.b16 %v6777
  %v6879 = vunpack.c.l.b16 %v6778
  %v6880 = vunpack.c.l.b16 %v6779
  %v6881 = vunpack.c.l.b16 %v6780
  %v6882 = vunpack.c.l.b16 %v6781
  %v6883 = vunpack.c.l.b16 %v6782
  %v6884 = vunpack.c.l.b16 %v6783
  %v6885 = vunpack.c.l.b16 %v6784
  %v6886 = vunpack.c.l.b16 %v6785
  %v6887 = vunpack.c.l.b16 %v6786
  %v6888 = vunpack.c.l.b16 %v6787
  %v6889 = vunpack.c.l.b16 %v6788
  %v6890 = vunpack.c.l.b16 %v6789
  %v6891 = vunpack.c.l.b16 %v6790
  %v6892 = vunpack.c.l.b16 %v6791
  %v6893 = vunpack.c.l.b16 %v6792
  %v6894 = vpack.c.b16 %v6879, %v6878
  %v6895 = vpack.c.b16 %v6881, %v6880
  %v6896 = vpack.c.b16 %v6883, %v6882
  %v6897 = vpack.c.b16 %v6885, %v6884
  %v6898 = vpack.c.b16 %v6887, %v6886
  %v6899 = vpack.c.b16 %v6889, %v6888
  %v6900 = vpack.c.b16 %v6891, %v6890
  %v6901 = vpack.c.b16 %v6893, %v6892
  %6910 = vmatprep.subr.bf16.mxu0 0
  %6911 = vmatpush1.bf16.msra.mxu0 %v6901
  %6912 = vmatprep.subr.bf16.mxu0 0
  %6913 = vmatpush1.bf16.msra.mxu0 %v6900
  %6914 = vmatprep.subr.bf16.mxu0 0
  %6915 = vmatpush1.bf16.msra.mxu0 %v6899
  %6916 = vmatprep.subr.bf16.mxu0 0
  %6917 = vmatpush1.bf16.msra.mxu0 %v6898
  %6918 = vmatprep.subr.bf16.mxu0 0
  %6919 = vmatpush1.bf16.msra.mxu0 %v6897
  %6920 = vmatprep.subr.bf16.mxu0 0
  %6921 = vmatpush1.bf16.msra.mxu0 %v6896
  %6922 = vmatprep.subr.bf16.mxu0 0
  %6923 = vmatpush1.bf16.msra.mxu0 %v6895
  %6924 = vmatprep.subr.bf16.mxu0 0
  %6925 = vmatpush1.bf16.msra.mxu0 %v6894
  %6926 = vmatprep.subr.bf16.mxu0 0
  %6927 = vmatpush2.bf16.msra.mxu0 0
  %6928 = vmatprep.subr.bf16.mxu0 0
  %6929 = vmatpush2.bf16.msra.mxu0 0
  %6930 = vmatprep.subr.bf16.mxu0 0
  %6931 = vmatpush2.bf16.msra.mxu0 0
  %6932 = vmatprep.subr.bf16.mxu0 0
  %6933 = vmatpush2.bf16.msra.mxu0 0
  %6934 = vmatprep.subr.bf16.mxu0 0
  %6935 = vmatpush2.bf16.msra.mxu0 0
  %6936 = vmatprep.subr.bf16.mxu0 0
  %6937 = vmatpush2.bf16.msra.mxu0 0
  %6938 = vmatprep.subr.bf16.mxu0 0
  %6939 = vmatpush2.bf16.msra.mxu0 0
  %6940 = vmatprep.subr.bf16.mxu0 0
  %6941 = vmatpush2.bf16.msra.mxu0 0
  %6942 = vmatprep.mubr.bf16.mxu0 0
  %6943 = vmatmul.mubr.bf16.gmra.mxu0 %v6829
  %v6944 = vpop.f32.mrf.mxu0
  %v6945 = vadd.f32 0.0, %v6944
  %v6946 = vpop.f32.mrf.mxu0
  %v6947 = vpop.f32.mrf.mxu0
  %v6948 = vadd.f32 0.0, %v6947
  %v6949 = vpop.f32.mrf.mxu0
  %6950 = vmatprep.mubr.bf16.mxu0 0
  %6951 = vmatmul.mubr.bf16.gmra.mxu0 %v6837
  %v6952 = vpop.f32.mrf.mxu0
  %v6953 = vadd.f32 0.0, %v6952
  %v6954 = vpop.f32.mrf.mxu0
  %v6955 = vpop.f32.mrf.mxu0
  %v6956 = vadd.f32 0.0, %v6955
  %v6957 = vpop.f32.mrf.mxu0
  %6958 = vmatprep.mubr.bf16.mxu0 0
  %6959 = vmatmul.mubr.bf16.gmra.mxu0 %v6845
  %v6960 = vpop.f32.mrf.mxu0
  %v6961 = vadd.f32 0.0, %v6960
  %v6962 = vpop.f32.mrf.mxu0
  %v6963 = vpop.f32.mrf.mxu0
  %v6964 = vadd.f32 0.0, %v6963
  %v6965 = vpop.f32.mrf.mxu0
  %6966 = vmatprep.mubr.bf16.mxu0 0
  %6967 = vmatmul.mubr.bf16.gmra.mxu0 %v6853
  %v6968 = vpop.f32.mrf.mxu0
  %v6969 = vadd.f32 0.0, %v6968
  %v6970 = vpop.f32.mrf.mxu0
  %v6971 = vpop.f32.mrf.mxu0
  %v6972 = vadd.f32 0.0, %v6971
  %v6973 = vpop.f32.mrf.mxu0
  %6974 = vmatprep.mubr.bf16.mxu0 0
  %6975 = vmatmul.mubr.bf16.gmra.mxu0 %v6856
  %v6976 = vpop.f32.mrf.mxu0
  %v6977 = vadd.f32 0.0, %v6976
  %v6978 = vpop.f32.mrf.mxu0
  %v6979 = vpop.f32.mrf.mxu0
  %v6980 = vpop.f32.mrf.mxu0
  %6981 = vdwg.mxu0
  %v6982 = vadd.f32 %v6757, %v6945
  %v6983 = vadd.f32 %v6758, %v6948
  %v6984 = vadd.f32 %v6759, %v6953
  %v6985 = vadd.f32 %v6760, %v6956
  %v6986 = vadd.f32 %v6761, %v6961
  %v6987 = vadd.f32 %v6762, %v6964
  %v6988 = vadd.f32 %v6763, %v6969
  %v6989 = vadd.f32 %v6764, %v6972
  %v6990 = vadd.f32 %v6765, %v6977
  %v6991 = vld [vmem:[%s0 + $0x28] sm:$0xe]
  %s6992 = scalar_lea.vmem %s1, 2240
  %v6993 = vld [vmem:[%s6992] sm:$0xf]
  %v6994 = vld [vmem:[%s6992 + $0x4] sm:$0xf]
  %v6995 = vld [vmem:[%s6992 + $0x8] sm:$0xf]
  %v6996 = vld [vmem:[%s6992 + $0xc] sm:$0xf]
  %v6997 = vld [vmem:[%s6992 + $0x10] sm:$0xf]
  %v6998 = vld [vmem:[%s6992 + $0x14] sm:$0xf]
  %v6999 = vld [vmem:[%s6992 + $0x18] sm:$0xf]
  %v7000 = vld [vmem:[%s6992 + $0x1c] sm:$0xf]
  %v7001 = vld [vmem:[%s6992 + $0x20] sm:$0xf]
  %v7002 = vld [vmem:[%s6992 + $0x24] sm:$0xf]
  %v7003 = vld [vmem:[%s6992 + $0x28] sm:$0xf]
  %v7004 = vld [vmem:[%s6992 + $0x2c] sm:$0xf]
  %v7005 = vld [vmem:[%s6992 + $0x30] sm:$0xf]
  %v7006 = vld [vmem:[%s6992 + $0x34] sm:$0xf]
  %v7007 = vld [vmem:[%s6992 + $0x38] sm:$0xf]
  %v7008 = vld [vmem:[%s6992 + $0x3c] sm:$0xf]
  %v7010 = vunpack.c.l.b16 %v6991
  %v7011 = vpack.c.b16 %v6579, %v7010
  %v7012 = vrot.slane %v7011, 1
  %v7013 = vrot.slane %v6589, 1
  %v7014 = vsel %vm1650, %v7012, %v7013
  %v7015 = vrot.slane %v6590, 1
  %v7016 = vsel %vm1650, %v7013, %v7015
  %v7017 = vrot.slane %v6591, 1
  %v7018 = vsel %vm1650, %v7015, %v7017
  %v7019 = vrot.slane %v6592, 1
  %v7020 = vsel %vm1650, %v7017, %v7019
  %v7042 = vunpack.c.l.b16 %v6993
  %v7043 = vunpack.c.l.b16 %v6994
  %v7044 = vunpack.c.l.b16 %v6995
  %v7045 = vunpack.c.l.b16 %v6996
  %v7046 = vunpack.c.l.b16 %v6997
  %v7047 = vunpack.c.l.b16 %v6998
  %v7048 = vunpack.c.l.b16 %v6999
  %v7049 = vunpack.c.l.b16 %v7000
  %v7050 = vunpack.c.l.b16 %v7001
  %v7051 = vunpack.c.l.b16 %v7002
  %v7052 = vunpack.c.l.b16 %v7003
  %v7053 = vunpack.c.l.b16 %v7004
  %v7054 = vunpack.c.l.b16 %v7005
  %v7055 = vunpack.c.l.b16 %v7006
  %v7056 = vunpack.c.l.b16 %v7007
  %v7057 = vunpack.c.l.b16 %v7008
  %v7058 = vpack.c.b16 %v7043, %v7042
  %v7059 = vpack.c.b16 %v7045, %v7044
  %v7060 = vpack.c.b16 %v7047, %v7046
  %v7061 = vpack.c.b16 %v7049, %v7048
  %v7062 = vpack.c.b16 %v7051, %v7050
  %v7063 = vpack.c.b16 %v7053, %v7052
  %v7064 = vpack.c.b16 %v7055, %v7054
  %v7065 = vpack.c.b16 %v7057, %v7056
  %7074 = vmatprep.subr.bf16.mxu0 0
  %7075 = vmatpush1.bf16.msra.mxu0 %v7065
  %7076 = vmatprep.subr.bf16.mxu0 0
  %7077 = vmatpush1.bf16.msra.mxu0 %v7064
  %7078 = vmatprep.subr.bf16.mxu0 0
  %7079 = vmatpush1.bf16.msra.mxu0 %v7063
  %7080 = vmatprep.subr.bf16.mxu0 0
  %7081 = vmatpush1.bf16.msra.mxu0 %v7062
  %7082 = vmatprep.subr.bf16.mxu0 0
  %7083 = vmatpush1.bf16.msra.mxu0 %v7061
  %7084 = vmatprep.subr.bf16.mxu0 0
  %7085 = vmatpush1.bf16.msra.mxu0 %v7060
  %7086 = vmatprep.subr.bf16.mxu0 0
  %7087 = vmatpush1.bf16.msra.mxu0 %v7059
  %7088 = vmatprep.subr.bf16.mxu0 0
  %7089 = vmatpush1.bf16.msra.mxu0 %v7058
  %7090 = vmatprep.subr.bf16.mxu0 0
  %7091 = vmatpush2.bf16.msra.mxu0 0
  %7092 = vmatprep.subr.bf16.mxu0 0
  %7093 = vmatpush2.bf16.msra.mxu0 0
  %7094 = vmatprep.subr.bf16.mxu0 0
  %7095 = vmatpush2.bf16.msra.mxu0 0
  %7096 = vmatprep.subr.bf16.mxu0 0
  %7097 = vmatpush2.bf16.msra.mxu0 0
  %7098 = vmatprep.subr.bf16.mxu0 0
  %7099 = vmatpush2.bf16.msra.mxu0 0
  %7100 = vmatprep.subr.bf16.mxu0 0
  %7101 = vmatpush2.bf16.msra.mxu0 0
  %7102 = vmatprep.subr.bf16.mxu0 0
  %7103 = vmatpush2.bf16.msra.mxu0 0
  %7104 = vmatprep.subr.bf16.mxu0 0
  %7105 = vmatpush2.bf16.msra.mxu0 0
  %7106 = vmatprep.mubr.bf16.mxu0 0
  %7107 = vmatmul.mubr.bf16.gmra.mxu0 %v7014
  %v7108 = vpop.f32.mrf.mxu0
  %v7109 = vadd.f32 0.0, %v7108
  %v7110 = vpop.f32.mrf.mxu0
  %v7111 = vpop.f32.mrf.mxu0
  %v7112 = vadd.f32 0.0, %v7111
  %v7113 = vpop.f32.mrf.mxu0
  %7114 = vmatprep.mubr.bf16.mxu0 0
  %7115 = vmatmul.mubr.bf16.gmra.mxu0 %v7016
  %v7116 = vpop.f32.mrf.mxu0
  %v7117 = vadd.f32 0.0, %v7116
  %v7118 = vpop.f32.mrf.mxu0
  %v7119 = vpop.f32.mrf.mxu0
  %v7120 = vadd.f32 0.0, %v7119
  %v7121 = vpop.f32.mrf.mxu0
  %7122 = vmatprep.mubr.bf16.mxu0 0
  %7123 = vmatmul.mubr.bf16.gmra.mxu0 %v7018
  %v7124 = vpop.f32.mrf.mxu0
  %v7125 = vadd.f32 0.0, %v7124
  %v7126 = vpop.f32.mrf.mxu0
  %v7127 = vpop.f32.mrf.mxu0
  %v7128 = vadd.f32 0.0, %v7127
  %v7129 = vpop.f32.mrf.mxu0
  %7130 = vmatprep.mubr.bf16.mxu0 0
  %7131 = vmatmul.mubr.bf16.gmra.mxu0 %v7020
  %v7132 = vpop.f32.mrf.mxu0
  %v7133 = vadd.f32 0.0, %v7132
  %v7134 = vpop.f32.mrf.mxu0
  %v7135 = vpop.f32.mrf.mxu0
  %v7136 = vadd.f32 0.0, %v7135
  %v7137 = vpop.f32.mrf.mxu0
  %7138 = vmatprep.mubr.bf16.mxu0 0
  %7139 = vmatmul.mubr.bf16.gmra.mxu0 %v7019
  %v7140 = vpop.f32.mrf.mxu0
  %v7141 = vadd.f32 0.0, %v7140
  %v7142 = vpop.f32.mrf.mxu0
  %v7143 = vpop.f32.mrf.mxu0
  %v7144 = vpop.f32.mrf.mxu0
  %7145 = vdwg.mxu0
  %v7146 = vadd.f32 %v6982, %v7109
  %v7147 = vadd.f32 %v6983, %v7112
  %v7148 = vadd.f32 %v6984, %v7117
  %v7149 = vadd.f32 %v6985, %v7120
  %v7150 = vadd.f32 %v6986, %v7125
  %v7151 = vadd.f32 %v6987, %v7128
  %v7152 = vadd.f32 %v6988, %v7133
  %v7153 = vadd.f32 %v6989, %v7136
  %v7154 = vadd.f32 %v6990, %v7141
  %7155 = vst [vmem:[%s2 + $0x18] sm:$0xff] %v7146
  %7156 = vst [vmem:[%s2 + $0x50] sm:$0xff] %v7147
  %7157 = vst [vmem:[%s2 + $0x88] sm:$0xff] %v7148
  %7158 = vst [vmem:[%s2 + $0xc0] sm:$0xff] %v7149
  %7159 = vst [vmem:[%s2 + $0xf8] sm:$0xff] %v7150
  %7160 = vst [vmem:[%s2 + $0x130] sm:$0xff] %v7151
  %7161 = vst [vmem:[%s2 + $0x168] sm:$0xff] %v7152
  %7162 = vst [vmem:[%s2 + $0x1a0] sm:$0xff] %v7153
  %7163 = vst [vmem:[%s2 + $0x1d8] sm:$0xff] %v7154
  %v7164 = vld [vmem:[%s0 + $0x10] sm:$0xf]
  %v7165 = vld [vmem:[%s0 + $0x2c] sm:$0xf]
  %v7166 = vld [vmem:[%s0 + $0x48] sm:$0xf]
  %v7167 = vld [vmem:[%s0 + $0x64] sm:$0xf]
  %v7168 = vld [vmem:[%s0 + $0x80] sm:$0xf]
  %v7169 = vld [vmem:[%s0 + $0x9c] sm:$0xf]
  %v7170 = vld [vmem:[%s0 + $0xb8] sm:$0xf]
  %v7171 = vld [vmem:[%s0 + $0xd4] sm:$0xf]
  %v7172 = vld [vmem:[%s0 + $0xf0] sm:$0xf]
  %s7173 = scalar_lea.vmem %s1, 2304
  %v7174 = vld [vmem:[%s7173] sm:$0xf]
  %v7175 = vld [vmem:[%s7173 + $0x4] sm:$0xf]
  %v7176 = vld [vmem:[%s7173 + $0x8] sm:$0xf]
  %v7177 = vld [vmem:[%s7173 + $0xc] sm:$0xf]
  %v7178 = vld [vmem:[%s7173 + $0x10] sm:$0xf]
  %v7179 = vld [vmem:[%s7173 + $0x14] sm:$0xf]
  %v7180 = vld [vmem:[%s7173 + $0x18] sm:$0xf]
  %v7181 = vld [vmem:[%s7173 + $0x1c] sm:$0xf]
  %v7182 = vld [vmem:[%s7173 + $0x20] sm:$0xf]
  %v7183 = vld [vmem:[%s7173 + $0x24] sm:$0xf]
  %v7184 = vld [vmem:[%s7173 + $0x28] sm:$0xf]
  %v7185 = vld [vmem:[%s7173 + $0x2c] sm:$0xf]
  %v7186 = vld [vmem:[%s7173 + $0x30] sm:$0xf]
  %v7187 = vld [vmem:[%s7173 + $0x34] sm:$0xf]
  %v7188 = vld [vmem:[%s7173 + $0x38] sm:$0xf]
  %v7189 = vld [vmem:[%s7173 + $0x3c] sm:$0xf]
  %v7190 = vld [vmem:[%s37 + $0x10] sm:$0xf]
  %v7191 = vld [vmem:[%s37 + $0x2c] sm:$0xf]
  %v7192 = vld [vmem:[%s37 + $0x48] sm:$0xf]
  %v7193 = vld [vmem:[%s37 + $0x64] sm:$0xf]
  %v7194 = vld [vmem:[%s37 + $0x80] sm:$0xf]
  %v7195 = vld [vmem:[%s37 + $0x9c] sm:$0xf]
  %v7196 = vld [vmem:[%s37 + $0xb8] sm:$0xf]
  %v7197 = vld [vmem:[%s37 + $0xd4] sm:$0xf]
  %v7198 = vld [vmem:[%s37 + $0xf0] sm:$0xf]
  %s7199 = scalar_lea.vmem %s1, 2368
  %v7200 = vld [vmem:[%s7199] sm:$0xf]
  %v7201 = vld [vmem:[%s7199 + $0x4] sm:$0xf]
  %v7202 = vld [vmem:[%s7199 + $0x8] sm:$0xf]
  %v7203 = vld [vmem:[%s7199 + $0xc] sm:$0xf]
  %v7204 = vld [vmem:[%s7199 + $0x10] sm:$0xf]
  %v7205 = vld [vmem:[%s7199 + $0x14] sm:$0xf]
  %v7206 = vld [vmem:[%s7199 + $0x18] sm:$0xf]
  %v7207 = vld [vmem:[%s7199 + $0x1c] sm:$0xf]
  %v7208 = vld [vmem:[%s7199 + $0x20] sm:$0xf]
  %v7209 = vld [vmem:[%s7199 + $0x24] sm:$0xf]
  %v7210 = vld [vmem:[%s7199 + $0x28] sm:$0xf]
  %v7211 = vld [vmem:[%s7199 + $0x2c] sm:$0xf]
  %v7212 = vld [vmem:[%s7199 + $0x30] sm:$0xf]
  %v7213 = vld [vmem:[%s7199 + $0x34] sm:$0xf]
  %v7214 = vld [vmem:[%s7199 + $0x38] sm:$0xf]
  %v7215 = vld [vmem:[%s7199 + $0x3c] sm:$0xf]
  %v7225 = vunpack.c.l.b16 %v7190
  %v7226 = vunpack.c.l.b16 %v7191
  %v7227 = vunpack.c.l.b16 %v7192
  %v7228 = vunpack.c.l.b16 %v7193
  %v7229 = vunpack.c.l.b16 %v7194
  %v7230 = vunpack.c.l.b16 %v7195
  %v7231 = vunpack.c.l.b16 %v7196
  %v7232 = vunpack.c.l.b16 %v7197
  %v7233 = vunpack.c.l.b16 %v7198
  %v7234 = vpack.c.b16 %v7226, %v7225
  %v7235 = vpack.c.b16 %v7228, %v7227
  %v7236 = vpack.c.b16 %v7230, %v7229
  %v7237 = vpack.c.b16 %v7232, %v7231
  %v7238 = vpack.c.b16 %v7233, %v7233
  %v7260 = vunpack.c.l.b16 %v7200
  %v7261 = vunpack.c.l.b16 %v7201
  %v7262 = vunpack.c.l.b16 %v7202
  %v7263 = vunpack.c.l.b16 %v7203
  %v7264 = vunpack.c.l.b16 %v7204
  %v7265 = vunpack.c.l.b16 %v7205
  %v7266 = vunpack.c.l.b16 %v7206
  %v7267 = vunpack.c.l.b16 %v7207
  %v7268 = vunpack.c.l.b16 %v7208
  %v7269 = vunpack.c.l.b16 %v7209
  %v7270 = vunpack.c.l.b16 %v7210
  %v7271 = vunpack.c.l.b16 %v7211
  %v7272 = vunpack.c.l.b16 %v7212
  %v7273 = vunpack.c.l.b16 %v7213
  %v7274 = vunpack.c.l.b16 %v7214
  %v7275 = vunpack.c.l.b16 %v7215
  %v7276 = vpack.c.b16 %v7261, %v7260
  %v7277 = vpack.c.b16 %v7263, %v7262
  %v7278 = vpack.c.b16 %v7265, %v7264
  %v7279 = vpack.c.b16 %v7267, %v7266
  %v7280 = vpack.c.b16 %v7269, %v7268
  %v7281 = vpack.c.b16 %v7271, %v7270
  %v7282 = vpack.c.b16 %v7273, %v7272
  %v7283 = vpack.c.b16 %v7275, %v7274
  %7292 = vmatprep.subr.bf16.mxu0 0
  %7293 = vmatpush1.bf16.msra.mxu0 %v7283
  %7294 = vmatprep.subr.bf16.mxu0 0
  %7295 = vmatpush1.bf16.msra.mxu0 %v7282
  %7296 = vmatprep.subr.bf16.mxu0 0
  %7297 = vmatpush1.bf16.msra.mxu0 %v7281
  %7298 = vmatprep.subr.bf16.mxu0 0
  %7299 = vmatpush1.bf16.msra.mxu0 %v7280
  %7300 = vmatprep.subr.bf16.mxu0 0
  %7301 = vmatpush1.bf16.msra.mxu0 %v7279
  %7302 = vmatprep.subr.bf16.mxu0 0
  %7303 = vmatpush1.bf16.msra.mxu0 %v7278
  %7304 = vmatprep.subr.bf16.mxu0 0
  %7305 = vmatpush1.bf16.msra.mxu0 %v7277
  %7306 = vmatprep.subr.bf16.mxu0 0
  %7307 = vmatpush1.bf16.msra.mxu0 %v7276
  %7308 = vmatprep.subr.bf16.mxu0 0
  %7309 = vmatpush2.bf16.msra.mxu0 0
  %7310 = vmatprep.subr.bf16.mxu0 0
  %7311 = vmatpush2.bf16.msra.mxu0 0
  %7312 = vmatprep.subr.bf16.mxu0 0
  %7313 = vmatpush2.bf16.msra.mxu0 0
  %7314 = vmatprep.subr.bf16.mxu0 0
  %7315 = vmatpush2.bf16.msra.mxu0 0
  %7316 = vmatprep.subr.bf16.mxu0 0
  %7317 = vmatpush2.bf16.msra.mxu0 0
  %7318 = vmatprep.subr.bf16.mxu0 0
  %7319 = vmatpush2.bf16.msra.mxu0 0
  %7320 = vmatprep.subr.bf16.mxu0 0
  %7321 = vmatpush2.bf16.msra.mxu0 0
  %7322 = vmatprep.subr.bf16.mxu0 0
  %7323 = vmatpush2.bf16.msra.mxu0 0
  %7324 = vmatprep.mubr.bf16.mxu0 0
  %7325 = vmatmul.mubr.bf16.gmra.mxu0 %v7234
  %v7326 = vpop.f32.mrf.mxu0
  %v7327 = vadd.f32 0.0, %v7326
  %v7328 = vpop.f32.mrf.mxu0
  %v7329 = vpop.f32.mrf.mxu0
  %v7330 = vadd.f32 0.0, %v7329
  %v7331 = vpop.f32.mrf.mxu0
  %7332 = vmatprep.mubr.bf16.mxu0 0
  %7333 = vmatmul.mubr.bf16.gmra.mxu0 %v7235
  %v7334 = vpop.f32.mrf.mxu0
  %v7335 = vadd.f32 0.0, %v7334
  %v7336 = vpop.f32.mrf.mxu0
  %v7337 = vpop.f32.mrf.mxu0
  %v7338 = vadd.f32 0.0, %v7337
  %v7339 = vpop.f32.mrf.mxu0
  %7340 = vmatprep.mubr.bf16.mxu0 0
  %7341 = vmatmul.mubr.bf16.gmra.mxu0 %v7236
  %v7342 = vpop.f32.mrf.mxu0
  %v7343 = vadd.f32 0.0, %v7342
  %v7344 = vpop.f32.mrf.mxu0
  %v7345 = vpop.f32.mrf.mxu0
  %v7346 = vadd.f32 0.0, %v7345
  %v7347 = vpop.f32.mrf.mxu0
  %7348 = vmatprep.mubr.bf16.mxu0 0
  %7349 = vmatmul.mubr.bf16.gmra.mxu0 %v7237
  %v7350 = vpop.f32.mrf.mxu0
  %v7351 = vadd.f32 0.0, %v7350
  %v7352 = vpop.f32.mrf.mxu0
  %v7353 = vpop.f32.mrf.mxu0
  %v7354 = vadd.f32 0.0, %v7353
  %v7355 = vpop.f32.mrf.mxu0
  %7356 = vmatprep.mubr.bf16.mxu0 0
  %7357 = vmatmul.mubr.bf16.gmra.mxu0 %v7238
  %v7358 = vpop.f32.mrf.mxu0
  %v7359 = vadd.f32 0.0, %v7358
  %v7360 = vpop.f32.mrf.mxu0
  %v7361 = vpop.f32.mrf.mxu0
  %v7362 = vpop.f32.mrf.mxu0
  %7363 = vdwg.mxu0
  %v7373 = vunpack.c.l.b16 %v7164
  %v7374 = vunpack.c.l.b16 %v7165
  %v7375 = vunpack.c.l.b16 %v7166
  %v7376 = vunpack.c.l.b16 %v7167
  %v7377 = vunpack.c.l.b16 %v7168
  %v7378 = vunpack.c.l.b16 %v7169
  %v7379 = vunpack.c.l.b16 %v7170
  %v7380 = vunpack.c.l.b16 %v7171
  %v7381 = vunpack.c.l.b16 %v7172
  %v7382 = vpack.c.b16 %v7374, %v7373
  %v7383 = vpack.c.b16 %v7376, %v7375
  %v7384 = vpack.c.b16 %v7378, %v7377
  %v7385 = vpack.c.b16 %v7380, %v7379
  %v7386 = vpack.c.b16 %v7381, %v7381
  %v7408 = vunpack.c.l.b16 %v7174
  %v7409 = vunpack.c.l.b16 %v7175
  %v7410 = vunpack.c.l.b16 %v7176
  %v7411 = vunpack.c.l.b16 %v7177
  %v7412 = vunpack.c.l.b16 %v7178
  %v7413 = vunpack.c.l.b16 %v7179
  %v7414 = vunpack.c.l.b16 %v7180
  %v7415 = vunpack.c.l.b16 %v7181
  %v7416 = vunpack.c.l.b16 %v7182
  %v7417 = vunpack.c.l.b16 %v7183
  %v7418 = vunpack.c.l.b16 %v7184
  %v7419 = vunpack.c.l.b16 %v7185
  %v7420 = vunpack.c.l.b16 %v7186
  %v7421 = vunpack.c.l.b16 %v7187
  %v7422 = vunpack.c.l.b16 %v7188
  %v7423 = vunpack.c.l.b16 %v7189
  %v7424 = vpack.c.b16 %v7409, %v7408
  %v7425 = vpack.c.b16 %v7411, %v7410
  %v7426 = vpack.c.b16 %v7413, %v7412
  %v7427 = vpack.c.b16 %v7415, %v7414
  %v7428 = vpack.c.b16 %v7417, %v7416
  %v7429 = vpack.c.b16 %v7419, %v7418
  %v7430 = vpack.c.b16 %v7421, %v7420
  %v7431 = vpack.c.b16 %v7423, %v7422
  %7440 = vmatprep.subr.bf16.mxu0 0
  %7441 = vmatpush1.bf16.msra.mxu0 %v7431
  %7442 = vmatprep.subr.bf16.mxu0 0
  %7443 = vmatpush1.bf16.msra.mxu0 %v7430
  %7444 = vmatprep.subr.bf16.mxu0 0
  %7445 = vmatpush1.bf16.msra.mxu0 %v7429
  %7446 = vmatprep.subr.bf16.mxu0 0
  %7447 = vmatpush1.bf16.msra.mxu0 %v7428
  %7448 = vmatprep.subr.bf16.mxu0 0
  %7449 = vmatpush1.bf16.msra.mxu0 %v7427
  %7450 = vmatprep.subr.bf16.mxu0 0
  %7451 = vmatpush1.bf16.msra.mxu0 %v7426
  %7452 = vmatprep.subr.bf16.mxu0 0
  %7453 = vmatpush1.bf16.msra.mxu0 %v7425
  %7454 = vmatprep.subr.bf16.mxu0 0
  %7455 = vmatpush1.bf16.msra.mxu0 %v7424
  %7456 = vmatprep.subr.bf16.mxu0 0
  %7457 = vmatpush2.bf16.msra.mxu0 0
  %7458 = vmatprep.subr.bf16.mxu0 0
  %7459 = vmatpush2.bf16.msra.mxu0 0
  %7460 = vmatprep.subr.bf16.mxu0 0
  %7461 = vmatpush2.bf16.msra.mxu0 0
  %7462 = vmatprep.subr.bf16.mxu0 0
  %7463 = vmatpush2.bf16.msra.mxu0 0
  %7464 = vmatprep.subr.bf16.mxu0 0
  %7465 = vmatpush2.bf16.msra.mxu0 0
  %7466 = vmatprep.subr.bf16.mxu0 0
  %7467 = vmatpush2.bf16.msra.mxu0 0
  %7468 = vmatprep.subr.bf16.mxu0 0
  %7469 = vmatpush2.bf16.msra.mxu0 0
  %7470 = vmatprep.subr.bf16.mxu0 0
  %7471 = vmatpush2.bf16.msra.mxu0 0
  %7472 = vmatprep.mubr.bf16.mxu0 0
  %7473 = vmatmul.mubr.bf16.gmra.mxu0 %v7382
  %v7474 = vpop.f32.mrf.mxu0
  %v7475 = vadd.f32 %v7327, %v7474
  %v7476 = vpop.f32.mrf.mxu0
  %v7477 = vpop.f32.mrf.mxu0
  %v7478 = vadd.f32 %v7330, %v7477
  %v7479 = vpop.f32.mrf.mxu0
  %7480 = vmatprep.mubr.bf16.mxu0 0
  %7481 = vmatmul.mubr.bf16.gmra.mxu0 %v7383
  %v7482 = vpop.f32.mrf.mxu0
  %v7483 = vadd.f32 %v7335, %v7482
  %v7484 = vpop.f32.mrf.mxu0
  %v7485 = vpop.f32.mrf.mxu0
  %v7486 = vadd.f32 %v7338, %v7485
  %v7487 = vpop.f32.mrf.mxu0
  %7488 = vmatprep.mubr.bf16.mxu0 0
  %7489 = vmatmul.mubr.bf16.gmra.mxu0 %v7384
  %v7490 = vpop.f32.mrf.mxu0
  %v7491 = vadd.f32 %v7343, %v7490
  %v7492 = vpop.f32.mrf.mxu0
  %v7493 = vpop.f32.mrf.mxu0
  %v7494 = vadd.f32 %v7346, %v7493
  %v7495 = vpop.f32.mrf.mxu0
  %7496 = vmatprep.mubr.bf16.mxu0 0
  %7497 = vmatmul.mubr.bf16.gmra.mxu0 %v7385
  %v7498 = vpop.f32.mrf.mxu0
  %v7499 = vadd.f32 %v7351, %v7498
  %v7500 = vpop.f32.mrf.mxu0
  %v7501 = vpop.f32.mrf.mxu0
  %v7502 = vadd.f32 %v7354, %v7501
  %v7503 = vpop.f32.mrf.mxu0
  %7504 = vmatprep.mubr.bf16.mxu0 0
  %7505 = vmatmul.mubr.bf16.gmra.mxu0 %v7386
  %v7506 = vpop.f32.mrf.mxu0
  %v7507 = vadd.f32 %v7359, %v7506
  %v7508 = vpop.f32.mrf.mxu0
  %v7509 = vpop.f32.mrf.mxu0
  %v7510 = vpop.f32.mrf.mxu0
  %7511 = vdwg.mxu0
  %v7512 = vld [vmem:[%s0 + $0x10] sm:$0xf]
  %v7513 = vld [vmem:[%s0 + $0x2c] sm:$0xf]
  %v7514 = vld [vmem:[%s0 + $0x48] sm:$0xf]
  %v7515 = vld [vmem:[%s0 + $0x64] sm:$0xf]
  %v7516 = vld [vmem:[%s0 + $0x80] sm:$0xf]
  %v7517 = vld [vmem:[%s0 + $0x9c] sm:$0xf]
  %v7518 = vld [vmem:[%s0 + $0xb8] sm:$0xf]
  %v7519 = vld [vmem:[%s0 + $0xd4] sm:$0xf]
  %v7520 = vld [vmem:[%s0 + $0xf0] sm:$0xf]
  %v7521 = vld [vmem:[%s0 + $0x10c] sm:$0x1]
  %s7522 = scalar_lea.vmem %s1, 2432
  %v7523 = vld [vmem:[%s7522] sm:$0xf]
  %v7524 = vld [vmem:[%s7522 + $0x4] sm:$0xf]
  %v7525 = vld [vmem:[%s7522 + $0x8] sm:$0xf]
  %v7526 = vld [vmem:[%s7522 + $0xc] sm:$0xf]
  %v7527 = vld [vmem:[%s7522 + $0x10] sm:$0xf]
  %v7528 = vld [vmem:[%s7522 + $0x14] sm:$0xf]
  %v7529 = vld [vmem:[%s7522 + $0x18] sm:$0xf]
  %v7530 = vld [vmem:[%s7522 + $0x1c] sm:$0xf]
  %v7531 = vld [vmem:[%s7522 + $0x20] sm:$0xf]
  %v7532 = vld [vmem:[%s7522 + $0x24] sm:$0xf]
  %v7533 = vld [vmem:[%s7522 + $0x28] sm:$0xf]
  %v7534 = vld [vmem:[%s7522 + $0x2c] sm:$0xf]
  %v7535 = vld [vmem:[%s7522 + $0x30] sm:$0xf]
  %v7536 = vld [vmem:[%s7522 + $0x34] sm:$0xf]
  %v7537 = vld [vmem:[%s7522 + $0x38] sm:$0xf]
  %v7538 = vld [vmem:[%s7522 + $0x3c] sm:$0xf]
  %v7549 = vunpack.c.l.b16 %v7512
  %v7550 = vunpack.c.l.b16 %v7513
  %v7551 = vunpack.c.l.b16 %v7514
  %v7552 = vunpack.c.l.b16 %v7515
  %v7553 = vunpack.c.l.b16 %v7516
  %v7554 = vunpack.c.l.b16 %v7517
  %v7555 = vunpack.c.l.b16 %v7518
  %v7556 = vunpack.c.l.b16 %v7519
  %v7557 = vunpack.c.l.b16 %v7520
  %v7558 = vunpack.c.l.b16 %v7521
  %v7559 = vpack.c.b16 %v7550, %v7549
  %v7560 = vpack.c.b16 %v7552, %v7551
  %v7561 = vpack.c.b16 %v7554, %v7553
  %v7562 = vpack.c.b16 %v7556, %v7555
  %v7563 = vpack.c.b16 %v7558, %v7557
  %v7565 = vshrl.u32 %v7559, 16
  %v7567 = vshll.u32 %v7559, 16
  %v7569 = vrot.slane %v7567, 1
  %v7570 = vor.u32 %v7565, %v7569
  %v7572 = vshll.u32 %v7560, 16
  %v7574 = vrot.slane %v7572, 1
  %v7575 = vsel %vm412, %v7570, %v7574
  %v7576 = vshrl.u32 %v7560, 16
  %v7578 = vor.u32 %v7576, %v7574
  %v7580 = vshll.u32 %v7561, 16
  %v7582 = vrot.slane %v7580, 1
  %v7583 = vsel %vm412, %v7578, %v7582
  %v7584 = vshrl.u32 %v7561, 16
  %v7586 = vor.u32 %v7584, %v7582
  %v7588 = vshll.u32 %v7562, 16
  %v7590 = vrot.slane %v7588, 1
  %v7591 = vsel %vm412, %v7586, %v7590
  %v7592 = vshrl.u32 %v7562, 16
  %v7594 = vor.u32 %v7592, %v7590
  %v7596 = vshll.u32 %v7563, 16
  %v7598 = vrot.slane %v7596, 1
  %v7599 = vsel %vm412, %v7594, %v7598
  %v7600 = vshrl.u32 %v7563, 16
  %v7602 = vor.u32 %v7600, %v7598
  %v7624 = vunpack.c.l.b16 %v7523
  %v7625 = vunpack.c.l.b16 %v7524
  %v7626 = vunpack.c.l.b16 %v7525
  %v7627 = vunpack.c.l.b16 %v7526
  %v7628 = vunpack.c.l.b16 %v7527
  %v7629 = vunpack.c.l.b16 %v7528
  %v7630 = vunpack.c.l.b16 %v7529
  %v7631 = vunpack.c.l.b16 %v7530
  %v7632 = vunpack.c.l.b16 %v7531
  %v7633 = vunpack.c.l.b16 %v7532
  %v7634 = vunpack.c.l.b16 %v7533
  %v7635 = vunpack.c.l.b16 %v7534
  %v7636 = vunpack.c.l.b16 %v7535
  %v7637 = vunpack.c.l.b16 %v7536
  %v7638 = vunpack.c.l.b16 %v7537
  %v7639 = vunpack.c.l.b16 %v7538
  %v7640 = vpack.c.b16 %v7625, %v7624
  %v7641 = vpack.c.b16 %v7627, %v7626
  %v7642 = vpack.c.b16 %v7629, %v7628
  %v7643 = vpack.c.b16 %v7631, %v7630
  %v7644 = vpack.c.b16 %v7633, %v7632
  %v7645 = vpack.c.b16 %v7635, %v7634
  %v7646 = vpack.c.b16 %v7637, %v7636
  %v7647 = vpack.c.b16 %v7639, %v7638
  %7656 = vmatprep.subr.bf16.mxu0 0
  %7657 = vmatpush1.bf16.msra.mxu0 %v7647
  %7658 = vmatprep.subr.bf16.mxu0 0
  %7659 = vmatpush1.bf16.msra.mxu0 %v7646
  %7660 = vmatprep.subr.bf16.mxu0 0
  %7661 = vmatpush1.bf16.msra.mxu0 %v7645
  %7662 = vmatprep.subr.bf16.mxu0 0
  %7663 = vmatpush1.bf16.msra.mxu0 %v7644
  %7664 = vmatprep.subr.bf16.mxu0 0
  %7665 = vmatpush1.bf16.msra.mxu0 %v7643
  %7666 = vmatprep.subr.bf16.mxu0 0
  %7667 = vmatpush1.bf16.msra.mxu0 %v7642
  %7668 = vmatprep.subr.bf16.mxu0 0
  %7669 = vmatpush1.bf16.msra.mxu0 %v7641
  %7670 = vmatprep.subr.bf16.mxu0 0
  %7671 = vmatpush1.bf16.msra.mxu0 %v7640
  %7672 = vmatprep.subr.bf16.mxu0 0
  %7673 = vmatpush2.bf16.msra.mxu0 0
  %7674 = vmatprep.subr.bf16.mxu0 0
  %7675 = vmatpush2.bf16.msra.mxu0 0
  %7676 = vmatprep.subr.bf16.mxu0 0
  %7677 = vmatpush2.bf16.msra.mxu0 0
  %7678 = vmatprep.subr.bf16.mxu0 0
  %7679 = vmatpush2.bf16.msra.mxu0 0
  %7680 = vmatprep.subr.bf16.mxu0 0
  %7681 = vmatpush2.bf16.msra.mxu0 0
  %7682 = vmatprep.subr.bf16.mxu0 0
  %7683 = vmatpush2.bf16.msra.mxu0 0
  %7684 = vmatprep.subr.bf16.mxu0 0
  %7685 = vmatpush2.bf16.msra.mxu0 0
  %7686 = vmatprep.subr.bf16.mxu0 0
  %7687 = vmatpush2.bf16.msra.mxu0 0
  %7688 = vmatprep.mubr.bf16.mxu0 0
  %7689 = vmatmul.mubr.bf16.gmra.mxu0 %v7575
  %v7690 = vpop.f32.mrf.mxu0
  %v7691 = vadd.f32 0.0, %v7690
  %v7692 = vpop.f32.mrf.mxu0
  %v7693 = vpop.f32.mrf.mxu0
  %v7694 = vadd.f32 0.0, %v7693
  %v7695 = vpop.f32.mrf.mxu0
  %7696 = vmatprep.mubr.bf16.mxu0 0
  %7697 = vmatmul.mubr.bf16.gmra.mxu0 %v7583
  %v7698 = vpop.f32.mrf.mxu0
  %v7699 = vadd.f32 0.0, %v7698
  %v7700 = vpop.f32.mrf.mxu0
  %v7701 = vpop.f32.mrf.mxu0
  %v7702 = vadd.f32 0.0, %v7701
  %v7703 = vpop.f32.mrf.mxu0
  %7704 = vmatprep.mubr.bf16.mxu0 0
  %7705 = vmatmul.mubr.bf16.gmra.mxu0 %v7591
  %v7706 = vpop.f32.mrf.mxu0
  %v7707 = vadd.f32 0.0, %v7706
  %v7708 = vpop.f32.mrf.mxu0
  %v7709 = vpop.f32.mrf.mxu0
  %v7710 = vadd.f32 0.0, %v7709
  %v7711 = vpop.f32.mrf.mxu0
  %7712 = vmatprep.mubr.bf16.mxu0 0
  %7713 = vmatmul.mubr.bf16.gmra.mxu0 %v7599
  %v7714 = vpop.f32.mrf.mxu0
  %v7715 = vadd.f32 0.0, %v7714
  %v7716 = vpop.f32.mrf.mxu0
  %v7717 = vpop.f32.mrf.mxu0
  %v7718 = vadd.f32 0.0, %v7717
  %v7719 = vpop.f32.mrf.mxu0
  %7720 = vmatprep.mubr.bf16.mxu0 0
  %7721 = vmatmul.mubr.bf16.gmra.mxu0 %v7602
  %v7722 = vpop.f32.mrf.mxu0
  %v7723 = vadd.f32 0.0, %v7722
  %v7724 = vpop.f32.mrf.mxu0
  %v7725 = vpop.f32.mrf.mxu0
  %v7726 = vpop.f32.mrf.mxu0
  %7727 = vdwg.mxu0
  %v7728 = vadd.f32 %v7475, %v7691
  %v7729 = vadd.f32 %v7478, %v7694
  %v7730 = vadd.f32 %v7483, %v7699
  %v7731 = vadd.f32 %v7486, %v7702
  %v7732 = vadd.f32 %v7491, %v7707
  %v7733 = vadd.f32 %v7494, %v7710
  %v7734 = vadd.f32 %v7499, %v7715
  %v7735 = vadd.f32 %v7502, %v7718
  %v7736 = vadd.f32 %v7507, %v7723
  %v7737 = vld [vmem:[%s586 + $0x10] sm:$0xf]
  %v7738 = vld [vmem:[%s586 + $0x2c] sm:$0xf]
  %v7739 = vld [vmem:[%s586 + $0x48] sm:$0xf]
  %v7740 = vld [vmem:[%s586 + $0x64] sm:$0xf]
  %v7741 = vld [vmem:[%s586 + $0x80] sm:$0xf]
  %v7742 = vld [vmem:[%s586 + $0x9c] sm:$0xf]
  %v7743 = vld [vmem:[%s586 + $0xb8] sm:$0xf]
  %v7744 = vld [vmem:[%s586 + $0xd4] sm:$0xf]
  %v7745 = vld [vmem:[%s586 + $0xf0] sm:$0xf]
  %s7746 = scalar_lea.vmem %s1, 2496
  %v7747 = vld [vmem:[%s7746] sm:$0xf]
  %v7748 = vld [vmem:[%s7746 + $0x4] sm:$0xf]
  %v7749 = vld [vmem:[%s7746 + $0x8] sm:$0xf]
  %v7750 = vld [vmem:[%s7746 + $0xc] sm:$0xf]
  %v7751 = vld [vmem:[%s7746 + $0x10] sm:$0xf]
  %v7752 = vld [vmem:[%s7746 + $0x14] sm:$0xf]
  %v7753 = vld [vmem:[%s7746 + $0x18] sm:$0xf]
  %v7754 = vld [vmem:[%s7746 + $0x1c] sm:$0xf]
  %v7755 = vld [vmem:[%s7746 + $0x20] sm:$0xf]
  %v7756 = vld [vmem:[%s7746 + $0x24] sm:$0xf]
  %v7757 = vld [vmem:[%s7746 + $0x28] sm:$0xf]
  %v7758 = vld [vmem:[%s7746 + $0x2c] sm:$0xf]
  %v7759 = vld [vmem:[%s7746 + $0x30] sm:$0xf]
  %v7760 = vld [vmem:[%s7746 + $0x34] sm:$0xf]
  %v7761 = vld [vmem:[%s7746 + $0x38] sm:$0xf]
  %v7762 = vld [vmem:[%s7746 + $0x3c] sm:$0xf]
  %v7772 = vunpack.c.l.b16 %v7737
  %v7773 = vunpack.c.l.b16 %v7738
  %v7774 = vunpack.c.l.b16 %v7739
  %v7775 = vunpack.c.l.b16 %v7740
  %v7776 = vunpack.c.l.b16 %v7741
  %v7777 = vunpack.c.l.b16 %v7742
  %v7778 = vunpack.c.l.b16 %v7743
  %v7779 = vunpack.c.l.b16 %v7744
  %v7780 = vunpack.c.l.b16 %v7745
  %v7781 = vpack.c.b16 %v7773, %v7772
  %v7782 = vpack.c.b16 %v7775, %v7774
  %v7783 = vpack.c.b16 %v7777, %v7776
  %v7784 = vpack.c.b16 %v7779, %v7778
  %v7785 = vpack.c.b16 %v7780, %v7780
  %v7807 = vunpack.c.l.b16 %v7747
  %v7808 = vunpack.c.l.b16 %v7748
  %v7809 = vunpack.c.l.b16 %v7749
  %v7810 = vunpack.c.l.b16 %v7750
  %v7811 = vunpack.c.l.b16 %v7751
  %v7812 = vunpack.c.l.b16 %v7752
  %v7813 = vunpack.c.l.b16 %v7753
  %v7814 = vunpack.c.l.b16 %v7754
  %v7815 = vunpack.c.l.b16 %v7755
  %v7816 = vunpack.c.l.b16 %v7756
  %v7817 = vunpack.c.l.b16 %v7757
  %v7818 = vunpack.c.l.b16 %v7758
  %v7819 = vunpack.c.l.b16 %v7759
  %v7820 = vunpack.c.l.b16 %v7760
  %v7821 = vunpack.c.l.b16 %v7761
  %v7822 = vunpack.c.l.b16 %v7762
  %v7823 = vpack.c.b16 %v7808, %v7807
  %v7824 = vpack.c.b16 %v7810, %v7809
  %v7825 = vpack.c.b16 %v7812, %v7811
  %v7826 = vpack.c.b16 %v7814, %v7813
  %v7827 = vpack.c.b16 %v7816, %v7815
  %v7828 = vpack.c.b16 %v7818, %v7817
  %v7829 = vpack.c.b16 %v7820, %v7819
  %v7830 = vpack.c.b16 %v7822, %v7821
  %7839 = vmatprep.subr.bf16.mxu0 0
  %7840 = vmatpush1.bf16.msra.mxu0 %v7830
  %7841 = vmatprep.subr.bf16.mxu0 0
  %7842 = vmatpush1.bf16.msra.mxu0 %v7829
  %7843 = vmatprep.subr.bf16.mxu0 0
  %7844 = vmatpush1.bf16.msra.mxu0 %v7828
  %7845 = vmatprep.subr.bf16.mxu0 0
  %7846 = vmatpush1.bf16.msra.mxu0 %v7827
  %7847 = vmatprep.subr.bf16.mxu0 0
  %7848 = vmatpush1.bf16.msra.mxu0 %v7826
  %7849 = vmatprep.subr.bf16.mxu0 0
  %7850 = vmatpush1.bf16.msra.mxu0 %v7825
  %7851 = vmatprep.subr.bf16.mxu0 0
  %7852 = vmatpush1.bf16.msra.mxu0 %v7824
  %7853 = vmatprep.subr.bf16.mxu0 0
  %7854 = vmatpush1.bf16.msra.mxu0 %v7823
  %7855 = vmatprep.subr.bf16.mxu0 0
  %7856 = vmatpush2.bf16.msra.mxu0 0
  %7857 = vmatprep.subr.bf16.mxu0 0
  %7858 = vmatpush2.bf16.msra.mxu0 0
  %7859 = vmatprep.subr.bf16.mxu0 0
  %7860 = vmatpush2.bf16.msra.mxu0 0
  %7861 = vmatprep.subr.bf16.mxu0 0
  %7862 = vmatpush2.bf16.msra.mxu0 0
  %7863 = vmatprep.subr.bf16.mxu0 0
  %7864 = vmatpush2.bf16.msra.mxu0 0
  %7865 = vmatprep.subr.bf16.mxu0 0
  %7866 = vmatpush2.bf16.msra.mxu0 0
  %7867 = vmatprep.subr.bf16.mxu0 0
  %7868 = vmatpush2.bf16.msra.mxu0 0
  %7869 = vmatprep.subr.bf16.mxu0 0
  %7870 = vmatpush2.bf16.msra.mxu0 0
  %7871 = vmatprep.mubr.bf16.mxu0 0
  %7872 = vmatmul.mubr.bf16.gmra.mxu0 %v7781
  %v7873 = vpop.f32.mrf.mxu0
  %v7874 = vadd.f32 0.0, %v7873
  %v7875 = vpop.f32.mrf.mxu0
  %v7876 = vpop.f32.mrf.mxu0
  %v7877 = vadd.f32 0.0, %v7876
  %v7878 = vpop.f32.mrf.mxu0
  %7879 = vmatprep.mubr.bf16.mxu0 0
  %7880 = vmatmul.mubr.bf16.gmra.mxu0 %v7782
  %v7881 = vpop.f32.mrf.mxu0
  %v7882 = vadd.f32 0.0, %v7881
  %v7883 = vpop.f32.mrf.mxu0
  %v7884 = vpop.f32.mrf.mxu0
  %v7885 = vadd.f32 0.0, %v7884
  %v7886 = vpop.f32.mrf.mxu0
  %7887 = vmatprep.mubr.bf16.mxu0 0
  %7888 = vmatmul.mubr.bf16.gmra.mxu0 %v7783
  %v7889 = vpop.f32.mrf.mxu0
  %v7890 = vadd.f32 0.0, %v7889
  %v7891 = vpop.f32.mrf.mxu0
  %v7892 = vpop.f32.mrf.mxu0
  %v7893 = vadd.f32 0.0, %v7892
  %v7894 = vpop.f32.mrf.mxu0
  %7895 = vmatprep.mubr.bf16.mxu0 0
  %7896 = vmatmul.mubr.bf16.gmra.mxu0 %v7784
  %v7897 = vpop.f32.mrf.mxu0
  %v7898 = vadd.f32 0.0, %v7897
  %v7899 = vpop.f32.mrf.mxu0
  %v7900 = vpop.f32.mrf.mxu0
  %v7901 = vadd.f32 0.0, %v7900
  %v7902 = vpop.f32.mrf.mxu0
  %7903 = vmatprep.mubr.bf16.mxu0 0
  %7904 = vmatmul.mubr.bf16.gmra.mxu0 %v7785
  %v7905 = vpop.f32.mrf.mxu0
  %v7906 = vadd.f32 0.0, %v7905
  %v7907 = vpop.f32.mrf.mxu0
  %v7908 = vpop.f32.mrf.mxu0
  %v7909 = vpop.f32.mrf.mxu0
  %7910 = vdwg.mxu0
  %v7911 = vadd.f32 %v7728, %v7874
  %v7912 = vadd.f32 %v7729, %v7877
  %v7913 = vadd.f32 %v7730, %v7882
  %v7914 = vadd.f32 %v7731, %v7885
  %v7915 = vadd.f32 %v7732, %v7890
  %v7916 = vadd.f32 %v7733, %v7893
  %v7917 = vadd.f32 %v7734, %v7898
  %v7918 = vadd.f32 %v7735, %v7901
  %v7919 = vadd.f32 %v7736, %v7906
  %v7920 = vld [vmem:[%s770 + $0x10] sm:$0xf]
  %v7921 = vld [vmem:[%s770 + $0x2c] sm:$0xf]
  %v7922 = vld [vmem:[%s770 + $0x48] sm:$0xf]
  %v7923 = vld [vmem:[%s770 + $0x64] sm:$0xf]
  %v7924 = vld [vmem:[%s770 + $0x80] sm:$0xf]
  %v7925 = vld [vmem:[%s770 + $0x9c] sm:$0xf]
  %v7926 = vld [vmem:[%s770 + $0xb8] sm:$0xf]
  %v7927 = vld [vmem:[%s770 + $0xd4] sm:$0xf]
  %v7928 = vld [vmem:[%s770 + $0xf0] sm:$0xf]
  %s7929 = scalar_lea.vmem %s1, 2560
  %v7930 = vld [vmem:[%s7929] sm:$0xf]
  %v7931 = vld [vmem:[%s7929 + $0x4] sm:$0xf]
  %v7932 = vld [vmem:[%s7929 + $0x8] sm:$0xf]
  %v7933 = vld [vmem:[%s7929 + $0xc] sm:$0xf]
  %v7934 = vld [vmem:[%s7929 + $0x10] sm:$0xf]
  %v7935 = vld [vmem:[%s7929 + $0x14] sm:$0xf]
  %v7936 = vld [vmem:[%s7929 + $0x18] sm:$0xf]
  %v7937 = vld [vmem:[%s7929 + $0x1c] sm:$0xf]
  %v7938 = vld [vmem:[%s7929 + $0x20] sm:$0xf]
  %v7939 = vld [vmem:[%s7929 + $0x24] sm:$0xf]
  %v7940 = vld [vmem:[%s7929 + $0x28] sm:$0xf]
  %v7941 = vld [vmem:[%s7929 + $0x2c] sm:$0xf]
  %v7942 = vld [vmem:[%s7929 + $0x30] sm:$0xf]
  %v7943 = vld [vmem:[%s7929 + $0x34] sm:$0xf]
  %v7944 = vld [vmem:[%s7929 + $0x38] sm:$0xf]
  %v7945 = vld [vmem:[%s7929 + $0x3c] sm:$0xf]
  %v7955 = vunpack.c.l.b16 %v7920
  %v7956 = vunpack.c.l.b16 %v7921
  %v7957 = vunpack.c.l.b16 %v7922
  %v7958 = vunpack.c.l.b16 %v7923
  %v7959 = vunpack.c.l.b16 %v7924
  %v7960 = vunpack.c.l.b16 %v7925
  %v7961 = vunpack.c.l.b16 %v7926
  %v7962 = vunpack.c.l.b16 %v7927
  %v7963 = vunpack.c.l.b16 %v7928
  %v7964 = vpack.c.b16 %v7956, %v7955
  %v7965 = vpack.c.b16 %v7958, %v7957
  %v7966 = vpack.c.b16 %v7960, %v7959
  %v7967 = vpack.c.b16 %v7962, %v7961
  %v7968 = vpack.c.b16 %v7963, %v7963
  %v7990 = vunpack.c.l.b16 %v7930
  %v7991 = vunpack.c.l.b16 %v7931
  %v7992 = vunpack.c.l.b16 %v7932
  %v7993 = vunpack.c.l.b16 %v7933
  %v7994 = vunpack.c.l.b16 %v7934
  %v7995 = vunpack.c.l.b16 %v7935
  %v7996 = vunpack.c.l.b16 %v7936
  %v7997 = vunpack.c.l.b16 %v7937
  %v7998 = vunpack.c.l.b16 %v7938
  %v7999 = vunpack.c.l.b16 %v7939
  %v8000 = vunpack.c.l.b16 %v7940
  %v8001 = vunpack.c.l.b16 %v7941
  %v8002 = vunpack.c.l.b16 %v7942
  %v8003 = vunpack.c.l.b16 %v7943
  %v8004 = vunpack.c.l.b16 %v7944
  %v8005 = vunpack.c.l.b16 %v7945
  %v8006 = vpack.c.b16 %v7991, %v7990
  %v8007 = vpack.c.b16 %v7993, %v7992
  %v8008 = vpack.c.b16 %v7995, %v7994
  %v8009 = vpack.c.b16 %v7997, %v7996
  %v8010 = vpack.c.b16 %v7999, %v7998
  %v8011 = vpack.c.b16 %v8001, %v8000
  %v8012 = vpack.c.b16 %v8003, %v8002
  %v8013 = vpack.c.b16 %v8005, %v8004
  %8022 = vmatprep.subr.bf16.mxu0 0
  %8023 = vmatpush1.bf16.msra.mxu0 %v8013
  %8024 = vmatprep.subr.bf16.mxu0 0
  %8025 = vmatpush1.bf16.msra.mxu0 %v8012
  %8026 = vmatprep.subr.bf16.mxu0 0
  %8027 = vmatpush1.bf16.msra.mxu0 %v8011
  %8028 = vmatprep.subr.bf16.mxu0 0
  %8029 = vmatpush1.bf16.msra.mxu0 %v8010
  %8030 = vmatprep.subr.bf16.mxu0 0
  %8031 = vmatpush1.bf16.msra.mxu0 %v8009
  %8032 = vmatprep.subr.bf16.mxu0 0
  %8033 = vmatpush1.bf16.msra.mxu0 %v8008
  %8034 = vmatprep.subr.bf16.mxu0 0
  %8035 = vmatpush1.bf16.msra.mxu0 %v8007
  %8036 = vmatprep.subr.bf16.mxu0 0
  %8037 = vmatpush1.bf16.msra.mxu0 %v8006
  %8038 = vmatprep.subr.bf16.mxu0 0
  %8039 = vmatpush2.bf16.msra.mxu0 0
  %8040 = vmatprep.subr.bf16.mxu0 0
  %8041 = vmatpush2.bf16.msra.mxu0 0
  %8042 = vmatprep.subr.bf16.mxu0 0
  %8043 = vmatpush2.bf16.msra.mxu0 0
  %8044 = vmatprep.subr.bf16.mxu0 0
  %8045 = vmatpush2.bf16.msra.mxu0 0
  %8046 = vmatprep.subr.bf16.mxu0 0
  %8047 = vmatpush2.bf16.msra.mxu0 0
  %8048 = vmatprep.subr.bf16.mxu0 0
  %8049 = vmatpush2.bf16.msra.mxu0 0
  %8050 = vmatprep.subr.bf16.mxu0 0
  %8051 = vmatpush2.bf16.msra.mxu0 0
  %8052 = vmatprep.subr.bf16.mxu0 0
  %8053 = vmatpush2.bf16.msra.mxu0 0
  %8054 = vmatprep.mubr.bf16.mxu0 0
  %8055 = vmatmul.mubr.bf16.gmra.mxu0 %v7964
  %v8056 = vpop.f32.mrf.mxu0
  %v8057 = vadd.f32 0.0, %v8056
  %v8058 = vpop.f32.mrf.mxu0
  %v8059 = vpop.f32.mrf.mxu0
  %v8060 = vadd.f32 0.0, %v8059
  %v8061 = vpop.f32.mrf.mxu0
  %8062 = vmatprep.mubr.bf16.mxu0 0
  %8063 = vmatmul.mubr.bf16.gmra.mxu0 %v7965
  %v8064 = vpop.f32.mrf.mxu0
  %v8065 = vadd.f32 0.0, %v8064
  %v8066 = vpop.f32.mrf.mxu0
  %v8067 = vpop.f32.mrf.mxu0
  %v8068 = vadd.f32 0.0, %v8067
  %v8069 = vpop.f32.mrf.mxu0
  %8070 = vmatprep.mubr.bf16.mxu0 0
  %8071 = vmatmul.mubr.bf16.gmra.mxu0 %v7966
  %v8072 = vpop.f32.mrf.mxu0
  %v8073 = vadd.f32 0.0, %v8072
  %v8074 = vpop.f32.mrf.mxu0
  %v8075 = vpop.f32.mrf.mxu0
  %v8076 = vadd.f32 0.0, %v8075
  %v8077 = vpop.f32.mrf.mxu0
  %8078 = vmatprep.mubr.bf16.mxu0 0
  %8079 = vmatmul.mubr.bf16.gmra.mxu0 %v7967
  %v8080 = vpop.f32.mrf.mxu0
  %v8081 = vadd.f32 0.0, %v8080
  %v8082 = vpop.f32.mrf.mxu0
  %v8083 = vpop.f32.mrf.mxu0
  %v8084 = vadd.f32 0.0, %v8083
  %v8085 = vpop.f32.mrf.mxu0
  %8086 = vmatprep.mubr.bf16.mxu0 0
  %8087 = vmatmul.mubr.bf16.gmra.mxu0 %v7968
  %v8088 = vpop.f32.mrf.mxu0
  %v8089 = vadd.f32 0.0, %v8088
  %v8090 = vpop.f32.mrf.mxu0
  %v8091 = vpop.f32.mrf.mxu0
  %v8092 = vpop.f32.mrf.mxu0
  %8093 = vdwg.mxu0
  %v8094 = vadd.f32 %v7911, %v8057
  %v8095 = vadd.f32 %v7912, %v8060
  %v8096 = vadd.f32 %v7913, %v8065
  %v8097 = vadd.f32 %v7914, %v8068
  %v8098 = vadd.f32 %v7915, %v8073
  %v8099 = vadd.f32 %v7916, %v8076
  %v8100 = vadd.f32 %v7917, %v8081
  %v8101 = vadd.f32 %v7918, %v8084
  %v8102 = vadd.f32 %v7919, %v8089
  %v8103 = vld [vmem:[%s586 + $0x10] sm:$0xf]
  %v8104 = vld [vmem:[%s586 + $0x2c] sm:$0xf]
  %v8105 = vld [vmem:[%s586 + $0x48] sm:$0xf]
  %v8106 = vld [vmem:[%s586 + $0x64] sm:$0xf]
  %v8107 = vld [vmem:[%s586 + $0x80] sm:$0xf]
  %v8108 = vld [vmem:[%s586 + $0x9c] sm:$0xf]
  %v8109 = vld [vmem:[%s586 + $0xb8] sm:$0xf]
  %v8110 = vld [vmem:[%s586 + $0xd4] sm:$0xf]
  %v8111 = vld [vmem:[%s586 + $0xf0] sm:$0xf]
  %v8112 = vld [vmem:[%s586 + $0x10c] sm:$0x1]
  %s8113 = scalar_lea.vmem %s1, 2624
  %v8114 = vld [vmem:[%s8113] sm:$0xf]
  %v8115 = vld [vmem:[%s8113 + $0x4] sm:$0xf]
  %v8116 = vld [vmem:[%s8113 + $0x8] sm:$0xf]
  %v8117 = vld [vmem:[%s8113 + $0xc] sm:$0xf]
  %v8118 = vld [vmem:[%s8113 + $0x10] sm:$0xf]
  %v8119 = vld [vmem:[%s8113 + $0x14] sm:$0xf]
  %v8120 = vld [vmem:[%s8113 + $0x18] sm:$0xf]
  %v8121 = vld [vmem:[%s8113 + $0x1c] sm:$0xf]
  %v8122 = vld [vmem:[%s8113 + $0x20] sm:$0xf]
  %v8123 = vld [vmem:[%s8113 + $0x24] sm:$0xf]
  %v8124 = vld [vmem:[%s8113 + $0x28] sm:$0xf]
  %v8125 = vld [vmem:[%s8113 + $0x2c] sm:$0xf]
  %v8126 = vld [vmem:[%s8113 + $0x30] sm:$0xf]
  %v8127 = vld [vmem:[%s8113 + $0x34] sm:$0xf]
  %v8128 = vld [vmem:[%s8113 + $0x38] sm:$0xf]
  %v8129 = vld [vmem:[%s8113 + $0x3c] sm:$0xf]
  %v8140 = vunpack.c.l.b16 %v8103
  %v8141 = vunpack.c.l.b16 %v8104
  %v8142 = vunpack.c.l.b16 %v8105
  %v8143 = vunpack.c.l.b16 %v8106
  %v8144 = vunpack.c.l.b16 %v8107
  %v8145 = vunpack.c.l.b16 %v8108
  %v8146 = vunpack.c.l.b16 %v8109
  %v8147 = vunpack.c.l.b16 %v8110
  %v8148 = vunpack.c.l.b16 %v8111
  %v8149 = vunpack.c.l.b16 %v8112
  %v8150 = vpack.c.b16 %v8141, %v8140
  %v8151 = vpack.c.b16 %v8143, %v8142
  %v8152 = vpack.c.b16 %v8145, %v8144
  %v8153 = vpack.c.b16 %v8147, %v8146
  %v8154 = vpack.c.b16 %v8149, %v8148
  %v8156 = vshrl.u32 %v8150, 16
  %v8158 = vshll.u32 %v8150, 16
  %v8160 = vrot.slane %v8158, 1
  %v8161 = vor.u32 %v8156, %v8160
  %v8163 = vshll.u32 %v8151, 16
  %v8165 = vrot.slane %v8163, 1
  %v8166 = vsel %vm412, %v8161, %v8165
  %v8167 = vshrl.u32 %v8151, 16
  %v8169 = vor.u32 %v8167, %v8165
  %v8171 = vshll.u32 %v8152, 16
  %v8173 = vrot.slane %v8171, 1
  %v8174 = vsel %vm412, %v8169, %v8173
  %v8175 = vshrl.u32 %v8152, 16
  %v8177 = vor.u32 %v8175, %v8173
  %v8179 = vshll.u32 %v8153, 16
  %v8181 = vrot.slane %v8179, 1
  %v8182 = vsel %vm412, %v8177, %v8181
  %v8183 = vshrl.u32 %v8153, 16
  %v8185 = vor.u32 %v8183, %v8181
  %v8187 = vshll.u32 %v8154, 16
  %v8189 = vrot.slane %v8187, 1
  %v8190 = vsel %vm412, %v8185, %v8189
  %v8191 = vshrl.u32 %v8154, 16
  %v8193 = vor.u32 %v8191, %v8189
  %v8215 = vunpack.c.l.b16 %v8114
  %v8216 = vunpack.c.l.b16 %v8115
  %v8217 = vunpack.c.l.b16 %v8116
  %v8218 = vunpack.c.l.b16 %v8117
  %v8219 = vunpack.c.l.b16 %v8118
  %v8220 = vunpack.c.l.b16 %v8119
  %v8221 = vunpack.c.l.b16 %v8120
  %v8222 = vunpack.c.l.b16 %v8121
  %v8223 = vunpack.c.l.b16 %v8122
  %v8224 = vunpack.c.l.b16 %v8123
  %v8225 = vunpack.c.l.b16 %v8124
  %v8226 = vunpack.c.l.b16 %v8125
  %v8227 = vunpack.c.l.b16 %v8126
  %v8228 = vunpack.c.l.b16 %v8127
  %v8229 = vunpack.c.l.b16 %v8128
  %v8230 = vunpack.c.l.b16 %v8129
  %v8231 = vpack.c.b16 %v8216, %v8215
  %v8232 = vpack.c.b16 %v8218, %v8217
  %v8233 = vpack.c.b16 %v8220, %v8219
  %v8234 = vpack.c.b16 %v8222, %v8221
  %v8235 = vpack.c.b16 %v8224, %v8223
  %v8236 = vpack.c.b16 %v8226, %v8225
  %v8237 = vpack.c.b16 %v8228, %v8227
  %v8238 = vpack.c.b16 %v8230, %v8229
  %8247 = vmatprep.subr.bf16.mxu0 0
  %8248 = vmatpush1.bf16.msra.mxu0 %v8238
  %8249 = vmatprep.subr.bf16.mxu0 0
  %8250 = vmatpush1.bf16.msra.mxu0 %v8237
  %8251 = vmatprep.subr.bf16.mxu0 0
  %8252 = vmatpush1.bf16.msra.mxu0 %v8236
  %8253 = vmatprep.subr.bf16.mxu0 0
  %8254 = vmatpush1.bf16.msra.mxu0 %v8235
  %8255 = vmatprep.subr.bf16.mxu0 0
  %8256 = vmatpush1.bf16.msra.mxu0 %v8234
  %8257 = vmatprep.subr.bf16.mxu0 0
  %8258 = vmatpush1.bf16.msra.mxu0 %v8233
  %8259 = vmatprep.subr.bf16.mxu0 0
  %8260 = vmatpush1.bf16.msra.mxu0 %v8232
  %8261 = vmatprep.subr.bf16.mxu0 0
  %8262 = vmatpush1.bf16.msra.mxu0 %v8231
  %8263 = vmatprep.subr.bf16.mxu0 0
  %8264 = vmatpush2.bf16.msra.mxu0 0
  %8265 = vmatprep.subr.bf16.mxu0 0
  %8266 = vmatpush2.bf16.msra.mxu0 0
  %8267 = vmatprep.subr.bf16.mxu0 0
  %8268 = vmatpush2.bf16.msra.mxu0 0
  %8269 = vmatprep.subr.bf16.mxu0 0
  %8270 = vmatpush2.bf16.msra.mxu0 0
  %8271 = vmatprep.subr.bf16.mxu0 0
  %8272 = vmatpush2.bf16.msra.mxu0 0
  %8273 = vmatprep.subr.bf16.mxu0 0
  %8274 = vmatpush2.bf16.msra.mxu0 0
  %8275 = vmatprep.subr.bf16.mxu0 0
  %8276 = vmatpush2.bf16.msra.mxu0 0
  %8277 = vmatprep.subr.bf16.mxu0 0
  %8278 = vmatpush2.bf16.msra.mxu0 0
  %8279 = vmatprep.mubr.bf16.mxu0 0
  %8280 = vmatmul.mubr.bf16.gmra.mxu0 %v8166
  %v8281 = vpop.f32.mrf.mxu0
  %v8282 = vadd.f32 0.0, %v8281
  %v8283 = vpop.f32.mrf.mxu0
  %v8284 = vpop.f32.mrf.mxu0
  %v8285 = vadd.f32 0.0, %v8284
  %v8286 = vpop.f32.mrf.mxu0
  %8287 = vmatprep.mubr.bf16.mxu0 0
  %8288 = vmatmul.mubr.bf16.gmra.mxu0 %v8174
  %v8289 = vpop.f32.mrf.mxu0
  %v8290 = vadd.f32 0.0, %v8289
  %v8291 = vpop.f32.mrf.mxu0
  %v8292 = vpop.f32.mrf.mxu0
  %v8293 = vadd.f32 0.0, %v8292
  %v8294 = vpop.f32.mrf.mxu0
  %8295 = vmatprep.mubr.bf16.mxu0 0
  %8296 = vmatmul.mubr.bf16.gmra.mxu0 %v8182
  %v8297 = vpop.f32.mrf.mxu0
  %v8298 = vadd.f32 0.0, %v8297
  %v8299 = vpop.f32.mrf.mxu0
  %v8300 = vpop.f32.mrf.mxu0
  %v8301 = vadd.f32 0.0, %v8300
  %v8302 = vpop.f32.mrf.mxu0
  %8303 = vmatprep.mubr.bf16.mxu0 0
  %8304 = vmatmul.mubr.bf16.gmra.mxu0 %v8190
  %v8305 = vpop.f32.mrf.mxu0
  %v8306 = vadd.f32 0.0, %v8305
  %v8307 = vpop.f32.mrf.mxu0
  %v8308 = vpop.f32.mrf.mxu0
  %v8309 = vadd.f32 0.0, %v8308
  %v8310 = vpop.f32.mrf.mxu0
  %8311 = vmatprep.mubr.bf16.mxu0 0
  %8312 = vmatmul.mubr.bf16.gmra.mxu0 %v8193
  %v8313 = vpop.f32.mrf.mxu0
  %v8314 = vadd.f32 0.0, %v8313
  %v8315 = vpop.f32.mrf.mxu0
  %v8316 = vpop.f32.mrf.mxu0
  %v8317 = vpop.f32.mrf.mxu0
  %8318 = vdwg.mxu0
  %v8319 = vadd.f32 %v8094, %v8282
  %v8320 = vadd.f32 %v8095, %v8285
  %v8321 = vadd.f32 %v8096, %v8290
  %v8322 = vadd.f32 %v8097, %v8293
  %v8323 = vadd.f32 %v8098, %v8298
  %v8324 = vadd.f32 %v8099, %v8301
  %v8325 = vadd.f32 %v8100, %v8306
  %v8326 = vadd.f32 %v8101, %v8309
  %v8327 = vadd.f32 %v8102, %v8314
  %v8328 = vld [vmem:[%s0 + $0x2c] sm:$0xf]
  %v8329 = vld [vmem:[%s0 + $0x48] sm:$0xf]
  %v8330 = vld [vmem:[%s0 + $0x64] sm:$0xf]
  %v8331 = vld [vmem:[%s0 + $0x80] sm:$0xf]
  %v8332 = vld [vmem:[%s0 + $0x9c] sm:$0xf]
  %v8333 = vld [vmem:[%s0 + $0xb8] sm:$0xf]
  %v8334 = vld [vmem:[%s0 + $0xd4] sm:$0xf]
  %v8335 = vld [vmem:[%s0 + $0xf0] sm:$0xf]
  %v8336 = vld [vmem:[%s0 + $0x10c] sm:$0xf]
  %v8337 = vld [vmem:[%s0 + $0x128] sm:$0x1]
  %s8338 = scalar_lea.vmem %s1, 2688
  %v8339 = vld [vmem:[%s8338] sm:$0xf]
  %v8340 = vld [vmem:[%s8338 + $0x4] sm:$0xf]
  %v8341 = vld [vmem:[%s8338 + $0x8] sm:$0xf]
  %v8342 = vld [vmem:[%s8338 + $0xc] sm:$0xf]
  %v8343 = vld [vmem:[%s8338 + $0x10] sm:$0xf]
  %v8344 = vld [vmem:[%s8338 + $0x14] sm:$0xf]
  %v8345 = vld [vmem:[%s8338 + $0x18] sm:$0xf]
  %v8346 = vld [vmem:[%s8338 + $0x1c] sm:$0xf]
  %v8347 = vld [vmem:[%s8338 + $0x20] sm:$0xf]
  %v8348 = vld [vmem:[%s8338 + $0x24] sm:$0xf]
  %v8349 = vld [vmem:[%s8338 + $0x28] sm:$0xf]
  %v8350 = vld [vmem:[%s8338 + $0x2c] sm:$0xf]
  %v8351 = vld [vmem:[%s8338 + $0x30] sm:$0xf]
  %v8352 = vld [vmem:[%s8338 + $0x34] sm:$0xf]
  %v8353 = vld [vmem:[%s8338 + $0x38] sm:$0xf]
  %v8354 = vld [vmem:[%s8338 + $0x3c] sm:$0xf]
  %v8365 = vunpack.c.l.b16 %v8328
  %v8366 = vunpack.c.l.b16 %v8329
  %v8367 = vunpack.c.l.b16 %v8330
  %v8368 = vunpack.c.l.b16 %v8331
  %v8369 = vunpack.c.l.b16 %v8332
  %v8370 = vunpack.c.l.b16 %v8333
  %v8371 = vunpack.c.l.b16 %v8334
  %v8372 = vunpack.c.l.b16 %v8335
  %v8373 = vunpack.c.l.b16 %v8336
  %v8374 = vunpack.c.l.b16 %v8337
  %v8375 = vpack.c.b16 %v8366, %v8365
  %v8376 = vpack.c.b16 %v8368, %v8367
  %v8377 = vpack.c.b16 %v8370, %v8369
  %v8378 = vpack.c.b16 %v8372, %v8371
  %v8379 = vpack.c.b16 %v8374, %v8373
  %v8381 = vshrl.u32 %v8375, 16
  %v8383 = vshll.u32 %v8375, 16
  %v8385 = vrot.slane %v8383, 1
  %v8386 = vor.u32 %v8381, %v8385
  %v8388 = vshll.u32 %v8376, 16
  %v8390 = vrot.slane %v8388, 1
  %v8391 = vsel %vm412, %v8386, %v8390
  %v8392 = vshrl.u32 %v8376, 16
  %v8394 = vor.u32 %v8392, %v8390
  %v8396 = vshll.u32 %v8377, 16
  %v8398 = vrot.slane %v8396, 1
  %v8399 = vsel %vm412, %v8394, %v8398
  %v8400 = vshrl.u32 %v8377, 16
  %v8402 = vor.u32 %v8400, %v8398
  %v8404 = vshll.u32 %v8378, 16
  %v8406 = vrot.slane %v8404, 1
  %v8407 = vsel %vm412, %v8402, %v8406
  %v8408 = vshrl.u32 %v8378, 16
  %v8410 = vor.u32 %v8408, %v8406
  %v8412 = vshll.u32 %v8379, 16
  %v8414 = vrot.slane %v8412, 1
  %v8415 = vsel %vm412, %v8410, %v8414
  %v8416 = vshrl.u32 %v8379, 16
  %v8418 = vor.u32 %v8416, %v8414
  %v8440 = vunpack.c.l.b16 %v8339
  %v8441 = vunpack.c.l.b16 %v8340
  %v8442 = vunpack.c.l.b16 %v8341
  %v8443 = vunpack.c.l.b16 %v8342
  %v8444 = vunpack.c.l.b16 %v8343
  %v8445 = vunpack.c.l.b16 %v8344
  %v8446 = vunpack.c.l.b16 %v8345
  %v8447 = vunpack.c.l.b16 %v8346
  %v8448 = vunpack.c.l.b16 %v8347
  %v8449 = vunpack.c.l.b16 %v8348
  %v8450 = vunpack.c.l.b16 %v8349
  %v8451 = vunpack.c.l.b16 %v8350
  %v8452 = vunpack.c.l.b16 %v8351
  %v8453 = vunpack.c.l.b16 %v8352
  %v8454 = vunpack.c.l.b16 %v8353
  %v8455 = vunpack.c.l.b16 %v8354
  %v8456 = vpack.c.b16 %v8441, %v8440
  %v8457 = vpack.c.b16 %v8443, %v8442
  %v8458 = vpack.c.b16 %v8445, %v8444
  %v8459 = vpack.c.b16 %v8447, %v8446
  %v8460 = vpack.c.b16 %v8449, %v8448
  %v8461 = vpack.c.b16 %v8451, %v8450
  %v8462 = vpack.c.b16 %v8453, %v8452
  %v8463 = vpack.c.b16 %v8455, %v8454
  %8472 = vmatprep.subr.bf16.mxu0 0
  %8473 = vmatpush1.bf16.msra.mxu0 %v8463
  %8474 = vmatprep.subr.bf16.mxu0 0
  %8475 = vmatpush1.bf16.msra.mxu0 %v8462
  %8476 = vmatprep.subr.bf16.mxu0 0
  %8477 = vmatpush1.bf16.msra.mxu0 %v8461
  %8478 = vmatprep.subr.bf16.mxu0 0
  %8479 = vmatpush1.bf16.msra.mxu0 %v8460
  %8480 = vmatprep.subr.bf16.mxu0 0
  %8481 = vmatpush1.bf16.msra.mxu0 %v8459
  %8482 = vmatprep.subr.bf16.mxu0 0
  %8483 = vmatpush1.bf16.msra.mxu0 %v8458
  %8484 = vmatprep.subr.bf16.mxu0 0
  %8485 = vmatpush1.bf16.msra.mxu0 %v8457
  %8486 = vmatprep.subr.bf16.mxu0 0
  %8487 = vmatpush1.bf16.msra.mxu0 %v8456
  %8488 = vmatprep.subr.bf16.mxu0 0
  %8489 = vmatpush2.bf16.msra.mxu0 0
  %8490 = vmatprep.subr.bf16.mxu0 0
  %8491 = vmatpush2.bf16.msra.mxu0 0
  %8492 = vmatprep.subr.bf16.mxu0 0
  %8493 = vmatpush2.bf16.msra.mxu0 0
  %8494 = vmatprep.subr.bf16.mxu0 0
  %8495 = vmatpush2.bf16.msra.mxu0 0
  %8496 = vmatprep.subr.bf16.mxu0 0
  %8497 = vmatpush2.bf16.msra.mxu0 0
  %8498 = vmatprep.subr.bf16.mxu0 0
  %8499 = vmatpush2.bf16.msra.mxu0 0
  %8500 = vmatprep.subr.bf16.mxu0 0
  %8501 = vmatpush2.bf16.msra.mxu0 0
  %8502 = vmatprep.subr.bf16.mxu0 0
  %8503 = vmatpush2.bf16.msra.mxu0 0
  %8504 = vmatprep.mubr.bf16.mxu0 0
  %8505 = vmatmul.mubr.bf16.gmra.mxu0 %v8391
  %v8506 = vpop.f32.mrf.mxu0
  %v8507 = vadd.f32 0.0, %v8506
  %v8508 = vpop.f32.mrf.mxu0
  %v8509 = vpop.f32.mrf.mxu0
  %v8510 = vadd.f32 0.0, %v8509
  %v8511 = vpop.f32.mrf.mxu0
  %8512 = vmatprep.mubr.bf16.mxu0 0
  %8513 = vmatmul.mubr.bf16.gmra.mxu0 %v8399
  %v8514 = vpop.f32.mrf.mxu0
  %v8515 = vadd.f32 0.0, %v8514
  %v8516 = vpop.f32.mrf.mxu0
  %v8517 = vpop.f32.mrf.mxu0
  %v8518 = vadd.f32 0.0, %v8517
  %v8519 = vpop.f32.mrf.mxu0
  %8520 = vmatprep.mubr.bf16.mxu0 0
  %8521 = vmatmul.mubr.bf16.gmra.mxu0 %v8407
  %v8522 = vpop.f32.mrf.mxu0
  %v8523 = vadd.f32 0.0, %v8522
  %v8524 = vpop.f32.mrf.mxu0
  %v8525 = vpop.f32.mrf.mxu0
  %v8526 = vadd.f32 0.0, %v8525
  %v8527 = vpop.f32.mrf.mxu0
  %8528 = vmatprep.mubr.bf16.mxu0 0
  %8529 = vmatmul.mubr.bf16.gmra.mxu0 %v8415
  %v8530 = vpop.f32.mrf.mxu0
  %v8531 = vadd.f32 0.0, %v8530
  %v8532 = vpop.f32.mrf.mxu0
  %v8533 = vpop.f32.mrf.mxu0
  %v8534 = vadd.f32 0.0, %v8533
  %v8535 = vpop.f32.mrf.mxu0
  %8536 = vmatprep.mubr.bf16.mxu0 0
  %8537 = vmatmul.mubr.bf16.gmra.mxu0 %v8418
  %v8538 = vpop.f32.mrf.mxu0
  %v8539 = vadd.f32 0.0, %v8538
  %v8540 = vpop.f32.mrf.mxu0
  %v8541 = vpop.f32.mrf.mxu0
  %v8542 = vpop.f32.mrf.mxu0
  %8543 = vdwg.mxu0
  %v8544 = vadd.f32 %v8319, %v8507
  %v8545 = vadd.f32 %v8320, %v8510
  %v8546 = vadd.f32 %v8321, %v8515
  %v8547 = vadd.f32 %v8322, %v8518
  %v8548 = vadd.f32 %v8323, %v8523
  %v8549 = vadd.f32 %v8324, %v8526
  %v8550 = vadd.f32 %v8325, %v8531
  %v8551 = vadd.f32 %v8326, %v8534
  %v8552 = vadd.f32 %v8327, %v8539
  %v8553 = vld [vmem:[%s37 + $0x2c] sm:$0xf]
  %v8554 = vld [vmem:[%s37 + $0x48] sm:$0xf]
  %v8555 = vld [vmem:[%s37 + $0x64] sm:$0xf]
  %v8556 = vld [vmem:[%s37 + $0x80] sm:$0xf]
  %v8557 = vld [vmem:[%s37 + $0x9c] sm:$0xf]
  %v8558 = vld [vmem:[%s37 + $0xb8] sm:$0xf]
  %v8559 = vld [vmem:[%s37 + $0xd4] sm:$0xf]
  %v8560 = vld [vmem:[%s37 + $0xf0] sm:$0xf]
  %v8561 = vld [vmem:[%s37 + $0x10c] sm:$0xf]
  %v8562 = vld [vmem:[%s37 + $0x128] sm:$0x1]
  %s8563 = scalar_lea.vmem %s1, 2752
  %v8564 = vld [vmem:[%s8563] sm:$0xf]
  %v8565 = vld [vmem:[%s8563 + $0x4] sm:$0xf]
  %v8566 = vld [vmem:[%s8563 + $0x8] sm:$0xf]
  %v8567 = vld [vmem:[%s8563 + $0xc] sm:$0xf]
  %v8568 = vld [vmem:[%s8563 + $0x10] sm:$0xf]
  %v8569 = vld [vmem:[%s8563 + $0x14] sm:$0xf]
  %v8570 = vld [vmem:[%s8563 + $0x18] sm:$0xf]
  %v8571 = vld [vmem:[%s8563 + $0x1c] sm:$0xf]
  %v8572 = vld [vmem:[%s8563 + $0x20] sm:$0xf]
  %v8573 = vld [vmem:[%s8563 + $0x24] sm:$0xf]
  %v8574 = vld [vmem:[%s8563 + $0x28] sm:$0xf]
  %v8575 = vld [vmem:[%s8563 + $0x2c] sm:$0xf]
  %v8576 = vld [vmem:[%s8563 + $0x30] sm:$0xf]
  %v8577 = vld [vmem:[%s8563 + $0x34] sm:$0xf]
  %v8578 = vld [vmem:[%s8563 + $0x38] sm:$0xf]
  %v8579 = vld [vmem:[%s8563 + $0x3c] sm:$0xf]
  %v8590 = vunpack.c.l.b16 %v8553
  %v8591 = vunpack.c.l.b16 %v8554
  %v8592 = vunpack.c.l.b16 %v8555
  %v8593 = vunpack.c.l.b16 %v8556
  %v8594 = vunpack.c.l.b16 %v8557
  %v8595 = vunpack.c.l.b16 %v8558
  %v8596 = vunpack.c.l.b16 %v8559
  %v8597 = vunpack.c.l.b16 %v8560
  %v8598 = vunpack.c.l.b16 %v8561
  %v8599 = vunpack.c.l.b16 %v8562
  %v8600 = vpack.c.b16 %v8591, %v8590
  %v8601 = vpack.c.b16 %v8593, %v8592
  %v8602 = vpack.c.b16 %v8595, %v8594
  %v8603 = vpack.c.b16 %v8597, %v8596
  %v8604 = vpack.c.b16 %v8599, %v8598
  %v8606 = vshrl.u32 %v8600, 16
  %v8608 = vshll.u32 %v8600, 16
  %v8610 = vrot.slane %v8608, 1
  %v8611 = vor.u32 %v8606, %v8610
  %v8613 = vshll.u32 %v8601, 16
  %v8615 = vrot.slane %v8613, 1
  %v8616 = vsel %vm412, %v8611, %v8615
  %v8617 = vshrl.u32 %v8601, 16
  %v8619 = vor.u32 %v8617, %v8615
  %v8621 = vshll.u32 %v8602, 16
  %v8623 = vrot.slane %v8621, 1
  %v8624 = vsel %vm412, %v8619, %v8623
  %v8625 = vshrl.u32 %v8602, 16
  %v8627 = vor.u32 %v8625, %v8623
  %v8629 = vshll.u32 %v8603, 16
  %v8631 = vrot.slane %v8629, 1
  %v8632 = vsel %vm412, %v8627, %v8631
  %v8633 = vshrl.u32 %v8603, 16
  %v8635 = vor.u32 %v8633, %v8631
  %v8637 = vshll.u32 %v8604, 16
  %v8639 = vrot.slane %v8637, 1
  %v8640 = vsel %vm412, %v8635, %v8639
  %v8641 = vshrl.u32 %v8604, 16
  %v8643 = vor.u32 %v8641, %v8639
  %v8665 = vunpack.c.l.b16 %v8564
  %v8666 = vunpack.c.l.b16 %v8565
  %v8667 = vunpack.c.l.b16 %v8566
  %v8668 = vunpack.c.l.b16 %v8567
  %v8669 = vunpack.c.l.b16 %v8568
  %v8670 = vunpack.c.l.b16 %v8569
  %v8671 = vunpack.c.l.b16 %v8570
  %v8672 = vunpack.c.l.b16 %v8571
  %v8673 = vunpack.c.l.b16 %v8572
  %v8674 = vunpack.c.l.b16 %v8573
  %v8675 = vunpack.c.l.b16 %v8574
  %v8676 = vunpack.c.l.b16 %v8575
  %v8677 = vunpack.c.l.b16 %v8576
  %v8678 = vunpack.c.l.b16 %v8577
  %v8679 = vunpack.c.l.b16 %v8578
  %v8680 = vunpack.c.l.b16 %v8579
  %v8681 = vpack.c.b16 %v8666, %v8665
  %v8682 = vpack.c.b16 %v8668, %v8667
  %v8683 = vpack.c.b16 %v8670, %v8669
  %v8684 = vpack.c.b16 %v8672, %v8671
  %v8685 = vpack.c.b16 %v8674, %v8673
  %v8686 = vpack.c.b16 %v8676, %v8675
  %v8687 = vpack.c.b16 %v8678, %v8677
  %v8688 = vpack.c.b16 %v8680, %v8679
  %8697 = vmatprep.subr.bf16.mxu0 0
  %8698 = vmatpush1.bf16.msra.mxu0 %v8688
  %8699 = vmatprep.subr.bf16.mxu0 0
  %8700 = vmatpush1.bf16.msra.mxu0 %v8687
  %8701 = vmatprep.subr.bf16.mxu0 0
  %8702 = vmatpush1.bf16.msra.mxu0 %v8686
  %8703 = vmatprep.subr.bf16.mxu0 0
  %8704 = vmatpush1.bf16.msra.mxu0 %v8685
  %8705 = vmatprep.subr.bf16.mxu0 0
  %8706 = vmatpush1.bf16.msra.mxu0 %v8684
  %8707 = vmatprep.subr.bf16.mxu0 0
  %8708 = vmatpush1.bf16.msra.mxu0 %v8683
  %8709 = vmatprep.subr.bf16.mxu0 0
  %8710 = vmatpush1.bf16.msra.mxu0 %v8682
  %8711 = vmatprep.subr.bf16.mxu0 0
  %8712 = vmatpush1.bf16.msra.mxu0 %v8681
  %8713 = vmatprep.subr.bf16.mxu0 0
  %8714 = vmatpush2.bf16.msra.mxu0 0
  %8715 = vmatprep.subr.bf16.mxu0 0
  %8716 = vmatpush2.bf16.msra.mxu0 0
  %8717 = vmatprep.subr.bf16.mxu0 0
  %8718 = vmatpush2.bf16.msra.mxu0 0
  %8719 = vmatprep.subr.bf16.mxu0 0
  %8720 = vmatpush2.bf16.msra.mxu0 0
  %8721 = vmatprep.subr.bf16.mxu0 0
  %8722 = vmatpush2.bf16.msra.mxu0 0
  %8723 = vmatprep.subr.bf16.mxu0 0
  %8724 = vmatpush2.bf16.msra.mxu0 0
  %8725 = vmatprep.subr.bf16.mxu0 0
  %8726 = vmatpush2.bf16.msra.mxu0 0
  %8727 = vmatprep.subr.bf16.mxu0 0
  %8728 = vmatpush2.bf16.msra.mxu0 0
  %8729 = vmatprep.mubr.bf16.mxu0 0
  %8730 = vmatmul.mubr.bf16.gmra.mxu0 %v8616
  %v8731 = vpop.f32.mrf.mxu0
  %v8732 = vadd.f32 0.0, %v8731
  %v8733 = vpop.f32.mrf.mxu0
  %v8734 = vpop.f32.mrf.mxu0
  %v8735 = vadd.f32 0.0, %v8734
  %v8736 = vpop.f32.mrf.mxu0
  %8737 = vmatprep.mubr.bf16.mxu0 0
  %8738 = vmatmul.mubr.bf16.gmra.mxu0 %v8624
  %v8739 = vpop.f32.mrf.mxu0
  %v8740 = vadd.f32 0.0, %v8739
  %v8741 = vpop.f32.mrf.mxu0
  %v8742 = vpop.f32.mrf.mxu0
  %v8743 = vadd.f32 0.0, %v8742
  %v8744 = vpop.f32.mrf.mxu0
  %8745 = vmatprep.mubr.bf16.mxu0 0
  %8746 = vmatmul.mubr.bf16.gmra.mxu0 %v8632
  %v8747 = vpop.f32.mrf.mxu0
  %v8748 = vadd.f32 0.0, %v8747
  %v8749 = vpop.f32.mrf.mxu0
  %v8750 = vpop.f32.mrf.mxu0
  %v8751 = vadd.f32 0.0, %v8750
  %v8752 = vpop.f32.mrf.mxu0
  %8753 = vmatprep.mubr.bf16.mxu0 0
  %8754 = vmatmul.mubr.bf16.gmra.mxu0 %v8640
  %v8755 = vpop.f32.mrf.mxu0
  %v8756 = vadd.f32 0.0, %v8755
  %v8757 = vpop.f32.mrf.mxu0
  %v8758 = vpop.f32.mrf.mxu0
  %v8759 = vadd.f32 0.0, %v8758
  %v8760 = vpop.f32.mrf.mxu0
  %8761 = vmatprep.mubr.bf16.mxu0 0
  %8762 = vmatmul.mubr.bf16.gmra.mxu0 %v8643
  %v8763 = vpop.f32.mrf.mxu0
  %v8764 = vadd.f32 0.0, %v8763
  %v8765 = vpop.f32.mrf.mxu0
  %v8766 = vpop.f32.mrf.mxu0
  %v8767 = vpop.f32.mrf.mxu0
  %8768 = vdwg.mxu0
  %v8769 = vadd.f32 %v8544, %v8732
  %v8770 = vadd.f32 %v8545, %v8735
  %v8771 = vadd.f32 %v8546, %v8740
  %v8772 = vadd.f32 %v8547, %v8743
  %v8773 = vadd.f32 %v8548, %v8748
  %v8774 = vadd.f32 %v8549, %v8751
  %v8775 = vadd.f32 %v8550, %v8756
  %v8776 = vadd.f32 %v8551, %v8759
  %v8777 = vadd.f32 %v8552, %v8764
  %v8778 = vld [vmem:[%s0 + $0x2c] sm:$0xe]
  %s8779 = scalar_lea.vmem %s1, 2816
  %v8780 = vld [vmem:[%s8779] sm:$0xf]
  %v8781 = vld [vmem:[%s8779 + $0x4] sm:$0xf]
  %v8782 = vld [vmem:[%s8779 + $0x8] sm:$0xf]
  %v8783 = vld [vmem:[%s8779 + $0xc] sm:$0xf]
  %v8784 = vld [vmem:[%s8779 + $0x10] sm:$0xf]
  %v8785 = vld [vmem:[%s8779 + $0x14] sm:$0xf]
  %v8786 = vld [vmem:[%s8779 + $0x18] sm:$0xf]
  %v8787 = vld [vmem:[%s8779 + $0x1c] sm:$0xf]
  %v8788 = vld [vmem:[%s8779 + $0x20] sm:$0xf]
  %v8789 = vld [vmem:[%s8779 + $0x24] sm:$0xf]
  %v8790 = vld [vmem:[%s8779 + $0x28] sm:$0xf]
  %v8791 = vld [vmem:[%s8779 + $0x2c] sm:$0xf]
  %v8792 = vld [vmem:[%s8779 + $0x30] sm:$0xf]
  %v8793 = vld [vmem:[%s8779 + $0x34] sm:$0xf]
  %v8794 = vld [vmem:[%s8779 + $0x38] sm:$0xf]
  %v8795 = vld [vmem:[%s8779 + $0x3c] sm:$0xf]
  %v8797 = vunpack.c.l.b16 %v8778
  %v8798 = vpack.c.b16 %v8366, %v8797
  %v8799 = vrot.slane %v8798, 1
  %v8800 = vrot.slane %v8376, 1
  %v8801 = vsel %vm1650, %v8799, %v8800
  %v8802 = vrot.slane %v8377, 1
  %v8803 = vsel %vm1650, %v8800, %v8802
  %v8804 = vrot.slane %v8378, 1
  %v8805 = vsel %vm1650, %v8802, %v8804
  %v8806 = vrot.slane %v8379, 1
  %v8807 = vsel %vm1650, %v8804, %v8806
  %v8829 = vunpack.c.l.b16 %v8780
  %v8830 = vunpack.c.l.b16 %v8781
  %v8831 = vunpack.c.l.b16 %v8782
  %v8832 = vunpack.c.l.b16 %v8783
  %v8833 = vunpack.c.l.b16 %v8784
  %v8834 = vunpack.c.l.b16 %v8785
  %v8835 = vunpack.c.l.b16 %v8786
  %v8836 = vunpack.c.l.b16 %v8787
  %v8837 = vunpack.c.l.b16 %v8788
  %v8838 = vunpack.c.l.b16 %v8789
  %v8839 = vunpack.c.l.b16 %v8790
  %v8840 = vunpack.c.l.b16 %v8791
  %v8841 = vunpack.c.l.b16 %v8792
  %v8842 = vunpack.c.l.b16 %v8793
  %v8843 = vunpack.c.l.b16 %v8794
  %v8844 = vunpack.c.l.b16 %v8795
  %v8845 = vpack.c.b16 %v8830, %v8829
  %v8846 = vpack.c.b16 %v8832, %v8831
  %v8847 = vpack.c.b16 %v8834, %v8833
  %v8848 = vpack.c.b16 %v8836, %v8835
  %v8849 = vpack.c.b16 %v8838, %v8837
  %v8850 = vpack.c.b16 %v8840, %v8839
  %v8851 = vpack.c.b16 %v8842, %v8841
  %v8852 = vpack.c.b16 %v8844, %v8843
  %8861 = vmatprep.subr.bf16.mxu0 0
  %8862 = vmatpush1.bf16.msra.mxu0 %v8852
  %8863 = vmatprep.subr.bf16.mxu0 0
  %8864 = vmatpush1.bf16.msra.mxu0 %v8851
  %8865 = vmatprep.subr.bf16.mxu0 0
  %8866 = vmatpush1.bf16.msra.mxu0 %v8850
  %8867 = vmatprep.subr.bf16.mxu0 0
  %8868 = vmatpush1.bf16.msra.mxu0 %v8849
  %8869 = vmatprep.subr.bf16.mxu0 0
  %8870 = vmatpush1.bf16.msra.mxu0 %v8848
  %8871 = vmatprep.subr.bf16.mxu0 0
  %8872 = vmatpush1.bf16.msra.mxu0 %v8847
  %8873 = vmatprep.subr.bf16.mxu0 0
  %8874 = vmatpush1.bf16.msra.mxu0 %v8846
  %8875 = vmatprep.subr.bf16.mxu0 0
  %8876 = vmatpush1.bf16.msra.mxu0 %v8845
  %8877 = vmatprep.subr.bf16.mxu0 0
  %8878 = vmatpush2.bf16.msra.mxu0 0
  %8879 = vmatprep.subr.bf16.mxu0 0
  %8880 = vmatpush2.bf16.msra.mxu0 0
  %8881 = vmatprep.subr.bf16.mxu0 0
  %8882 = vmatpush2.bf16.msra.mxu0 0
  %8883 = vmatprep.subr.bf16.mxu0 0
  %8884 = vmatpush2.bf16.msra.mxu0 0
  %8885 = vmatprep.subr.bf16.mxu0 0
  %8886 = vmatpush2.bf16.msra.mxu0 0
  %8887 = vmatprep.subr.bf16.mxu0 0
  %8888 = vmatpush2.bf16.msra.mxu0 0
  %8889 = vmatprep.subr.bf16.mxu0 0
  %8890 = vmatpush2.bf16.msra.mxu0 0
  %8891 = vmatprep.subr.bf16.mxu0 0
  %8892 = vmatpush2.bf16.msra.mxu0 0
  %8893 = vmatprep.mubr.bf16.mxu0 0
  %8894 = vmatmul.mubr.bf16.gmra.mxu0 %v8801
  %v8895 = vpop.f32.mrf.mxu0
  %v8896 = vadd.f32 0.0, %v8895
  %v8897 = vpop.f32.mrf.mxu0
  %v8898 = vpop.f32.mrf.mxu0
  %v8899 = vadd.f32 0.0, %v8898
  %v8900 = vpop.f32.mrf.mxu0
  %8901 = vmatprep.mubr.bf16.mxu0 0
  %8902 = vmatmul.mubr.bf16.gmra.mxu0 %v8803
  %v8903 = vpop.f32.mrf.mxu0
  %v8904 = vadd.f32 0.0, %v8903
  %v8905 = vpop.f32.mrf.mxu0
  %v8906 = vpop.f32.mrf.mxu0
  %v8907 = vadd.f32 0.0, %v8906
  %v8908 = vpop.f32.mrf.mxu0
  %8909 = vmatprep.mubr.bf16.mxu0 0
  %8910 = vmatmul.mubr.bf16.gmra.mxu0 %v8805
  %v8911 = vpop.f32.mrf.mxu0
  %v8912 = vadd.f32 0.0, %v8911
  %v8913 = vpop.f32.mrf.mxu0
  %v8914 = vpop.f32.mrf.mxu0
  %v8915 = vadd.f32 0.0, %v8914
  %v8916 = vpop.f32.mrf.mxu0
  %8917 = vmatprep.mubr.bf16.mxu0 0
  %8918 = vmatmul.mubr.bf16.gmra.mxu0 %v8807
  %v8919 = vpop.f32.mrf.mxu0
  %v8920 = vadd.f32 0.0, %v8919
  %v8921 = vpop.f32.mrf.mxu0
  %v8922 = vpop.f32.mrf.mxu0
  %v8923 = vadd.f32 0.0, %v8922
  %v8924 = vpop.f32.mrf.mxu0
  %8925 = vmatprep.mubr.bf16.mxu0 0
  %8926 = vmatmul.mubr.bf16.gmra.mxu0 %v8806
  %v8927 = vpop.f32.mrf.mxu0
  %v8928 = vadd.f32 0.0, %v8927
  %v8929 = vpop.f32.mrf.mxu0
  %v8930 = vpop.f32.mrf.mxu0
  %v8931 = vpop.f32.mrf.mxu0
  %8932 = vdwg.mxu0
  %v8933 = vadd.f32 %v8769, %v8896
  %v8934 = vadd.f32 %v8770, %v8899
  %v8935 = vadd.f32 %v8771, %v8904
  %v8936 = vadd.f32 %v8772, %v8907
  %v8937 = vadd.f32 %v8773, %v8912
  %v8938 = vadd.f32 %v8774, %v8915
  %v8939 = vadd.f32 %v8775, %v8920
  %v8940 = vadd.f32 %v8776, %v8923
  %v8941 = vadd.f32 %v8777, %v8928
  %8942 = vst [vmem:[%s2 + $0x20] sm:$0xff] %v8933
  %8943 = vst [vmem:[%s2 + $0x58] sm:$0xff] %v8934
  %8944 = vst [vmem:[%s2 + $0x90] sm:$0xff] %v8935
  %8945 = vst [vmem:[%s2 + $0xc8] sm:$0xff] %v8936
  %8946 = vst [vmem:[%s2 + $0x100] sm:$0xff] %v8937
  %8947 = vst [vmem:[%s2 + $0x138] sm:$0xff] %v8938
  %8948 = vst [vmem:[%s2 + $0x170] sm:$0xff] %v8939
  %8949 = vst [vmem:[%s2 + $0x1a8] sm:$0xff] %v8940
  %8950 = vst [vmem:[%s2 + $0x1e0] sm:$0xff] %v8941
  %v8951 = vld [vmem:[%s0 + $0x14] sm:$0xf]
  %v8952 = vld [vmem:[%s0 + $0x30] sm:$0xf]
  %v8953 = vld [vmem:[%s0 + $0x4c] sm:$0xf]
  %v8954 = vld [vmem:[%s0 + $0x68] sm:$0xf]
  %v8955 = vld [vmem:[%s0 + $0x84] sm:$0xf]
  %v8956 = vld [vmem:[%s0 + $0xa0] sm:$0xf]
  %v8957 = vld [vmem:[%s0 + $0xbc] sm:$0xf]
  %v8958 = vld [vmem:[%s0 + $0xd8] sm:$0xf]
  %v8959 = vld [vmem:[%s0 + $0xf4] sm:$0xf]
  %s8960 = scalar_lea.vmem %s1, 2880
  %v8961 = vld [vmem:[%s8960] sm:$0xf]
  %v8962 = vld [vmem:[%s8960 + $0x4] sm:$0xf]
  %v8963 = vld [vmem:[%s8960 + $0x8] sm:$0xf]
  %v8964 = vld [vmem:[%s8960 + $0xc] sm:$0xf]
  %v8965 = vld [vmem:[%s8960 + $0x10] sm:$0xf]
  %v8966 = vld [vmem:[%s8960 + $0x14] sm:$0xf]
  %v8967 = vld [vmem:[%s8960 + $0x18] sm:$0xf]
  %v8968 = vld [vmem:[%s8960 + $0x1c] sm:$0xf]
  %v8969 = vld [vmem:[%s8960 + $0x20] sm:$0xf]
  %v8970 = vld [vmem:[%s8960 + $0x24] sm:$0xf]
  %v8971 = vld [vmem:[%s8960 + $0x28] sm:$0xf]
  %v8972 = vld [vmem:[%s8960 + $0x2c] sm:$0xf]
  %v8973 = vld [vmem:[%s8960 + $0x30] sm:$0xf]
  %v8974 = vld [vmem:[%s8960 + $0x34] sm:$0xf]
  %v8975 = vld [vmem:[%s8960 + $0x38] sm:$0xf]
  %v8976 = vld [vmem:[%s8960 + $0x3c] sm:$0xf]
  %v8977 = vld [vmem:[%s37 + $0x14] sm:$0xf]
  %v8978 = vld [vmem:[%s37 + $0x30] sm:$0xf]
  %v8979 = vld [vmem:[%s37 + $0x4c] sm:$0xf]
  %v8980 = vld [vmem:[%s37 + $0x68] sm:$0xf]
  %v8981 = vld [vmem:[%s37 + $0x84] sm:$0xf]
  %v8982 = vld [vmem:[%s37 + $0xa0] sm:$0xf]
  %v8983 = vld [vmem:[%s37 + $0xbc] sm:$0xf]
  %v8984 = vld [vmem:[%s37 + $0xd8] sm:$0xf]
  %v8985 = vld [vmem:[%s37 + $0xf4] sm:$0xf]
  %s8986 = scalar_lea.vmem %s1, 2944
  %v8987 = vld [vmem:[%s8986] sm:$0xf]
  %v8988 = vld [vmem:[%s8986 + $0x4] sm:$0xf]
  %v8989 = vld [vmem:[%s8986 + $0x8] sm:$0xf]
  %v8990 = vld [vmem:[%s8986 + $0xc] sm:$0xf]
  %v8991 = vld [vmem:[%s8986 + $0x10] sm:$0xf]
  %v8992 = vld [vmem:[%s8986 + $0x14] sm:$0xf]
  %v8993 = vld [vmem:[%s8986 + $0x18] sm:$0xf]
  %v8994 = vld [vmem:[%s8986 + $0x1c] sm:$0xf]
  %v8995 = vld [vmem:[%s8986 + $0x20] sm:$0xf]
  %v8996 = vld [vmem:[%s8986 + $0x24] sm:$0xf]
  %v8997 = vld [vmem:[%s8986 + $0x28] sm:$0xf]
  %v8998 = vld [vmem:[%s8986 + $0x2c] sm:$0xf]
  %v8999 = vld [vmem:[%s8986 + $0x30] sm:$0xf]
  %v9000 = vld [vmem:[%s8986 + $0x34] sm:$0xf]
  %v9001 = vld [vmem:[%s8986 + $0x38] sm:$0xf]
  %v9002 = vld [vmem:[%s8986 + $0x3c] sm:$0xf]
  %v9012 = vunpack.c.l.b16 %v8977
  %v9013 = vunpack.c.l.b16 %v8978
  %v9014 = vunpack.c.l.b16 %v8979
  %v9015 = vunpack.c.l.b16 %v8980
  %v9016 = vunpack.c.l.b16 %v8981
  %v9017 = vunpack.c.l.b16 %v8982
  %v9018 = vunpack.c.l.b16 %v8983
  %v9019 = vunpack.c.l.b16 %v8984
  %v9020 = vunpack.c.l.b16 %v8985
  %v9021 = vpack.c.b16 %v9013, %v9012
  %v9022 = vpack.c.b16 %v9015, %v9014
  %v9023 = vpack.c.b16 %v9017, %v9016
  %v9024 = vpack.c.b16 %v9019, %v9018
  %v9025 = vpack.c.b16 %v9020, %v9020
  %v9047 = vunpack.c.l.b16 %v8987
  %v9048 = vunpack.c.l.b16 %v8988
  %v9049 = vunpack.c.l.b16 %v8989
  %v9050 = vunpack.c.l.b16 %v8990
  %v9051 = vunpack.c.l.b16 %v8991
  %v9052 = vunpack.c.l.b16 %v8992
  %v9053 = vunpack.c.l.b16 %v8993
  %v9054 = vunpack.c.l.b16 %v8994
  %v9055 = vunpack.c.l.b16 %v8995
  %v9056 = vunpack.c.l.b16 %v8996
  %v9057 = vunpack.c.l.b16 %v8997
  %v9058 = vunpack.c.l.b16 %v8998
  %v9059 = vunpack.c.l.b16 %v8999
  %v9060 = vunpack.c.l.b16 %v9000
  %v9061 = vunpack.c.l.b16 %v9001
  %v9062 = vunpack.c.l.b16 %v9002
  %v9063 = vpack.c.b16 %v9048, %v9047
  %v9064 = vpack.c.b16 %v9050, %v9049
  %v9065 = vpack.c.b16 %v9052, %v9051
  %v9066 = vpack.c.b16 %v9054, %v9053
  %v9067 = vpack.c.b16 %v9056, %v9055
  %v9068 = vpack.c.b16 %v9058, %v9057
  %v9069 = vpack.c.b16 %v9060, %v9059
  %v9070 = vpack.c.b16 %v9062, %v9061
  %9079 = vmatprep.subr.bf16.mxu0 0
  %9080 = vmatpush1.bf16.msra.mxu0 %v9070
  %9081 = vmatprep.subr.bf16.mxu0 0
  %9082 = vmatpush1.bf16.msra.mxu0 %v9069
  %9083 = vmatprep.subr.bf16.mxu0 0
  %9084 = vmatpush1.bf16.msra.mxu0 %v9068
  %9085 = vmatprep.subr.bf16.mxu0 0
  %9086 = vmatpush1.bf16.msra.mxu0 %v9067
  %9087 = vmatprep.subr.bf16.mxu0 0
  %9088 = vmatpush1.bf16.msra.mxu0 %v9066
  %9089 = vmatprep.subr.bf16.mxu0 0
  %9090 = vmatpush1.bf16.msra.mxu0 %v9065
  %9091 = vmatprep.subr.bf16.mxu0 0
  %9092 = vmatpush1.bf16.msra.mxu0 %v9064
  %9093 = vmatprep.subr.bf16.mxu0 0
  %9094 = vmatpush1.bf16.msra.mxu0 %v9063
  %9095 = vmatprep.subr.bf16.mxu0 0
  %9096 = vmatpush2.bf16.msra.mxu0 0
  %9097 = vmatprep.subr.bf16.mxu0 0
  %9098 = vmatpush2.bf16.msra.mxu0 0
  %9099 = vmatprep.subr.bf16.mxu0 0
  %9100 = vmatpush2.bf16.msra.mxu0 0
  %9101 = vmatprep.subr.bf16.mxu0 0
  %9102 = vmatpush2.bf16.msra.mxu0 0
  %9103 = vmatprep.subr.bf16.mxu0 0
  %9104 = vmatpush2.bf16.msra.mxu0 0
  %9105 = vmatprep.subr.bf16.mxu0 0
  %9106 = vmatpush2.bf16.msra.mxu0 0
  %9107 = vmatprep.subr.bf16.mxu0 0
  %9108 = vmatpush2.bf16.msra.mxu0 0
  %9109 = vmatprep.subr.bf16.mxu0 0
  %9110 = vmatpush2.bf16.msra.mxu0 0
  %9111 = vmatprep.mubr.bf16.mxu0 0
  %9112 = vmatmul.mubr.bf16.gmra.mxu0 %v9021
  %v9113 = vpop.f32.mrf.mxu0
  %v9114 = vadd.f32 0.0, %v9113
  %v9115 = vpop.f32.mrf.mxu0
  %v9116 = vpop.f32.mrf.mxu0
  %v9117 = vadd.f32 0.0, %v9116
  %v9118 = vpop.f32.mrf.mxu0
  %9119 = vmatprep.mubr.bf16.mxu0 0
  %9120 = vmatmul.mubr.bf16.gmra.mxu0 %v9022
  %v9121 = vpop.f32.mrf.mxu0
  %v9122 = vadd.f32 0.0, %v9121
  %v9123 = vpop.f32.mrf.mxu0
  %v9124 = vpop.f32.mrf.mxu0
  %v9125 = vadd.f32 0.0, %v9124
  %v9126 = vpop.f32.mrf.mxu0
  %9127 = vmatprep.mubr.bf16.mxu0 0
  %9128 = vmatmul.mubr.bf16.gmra.mxu0 %v9023
  %v9129 = vpop.f32.mrf.mxu0
  %v9130 = vadd.f32 0.0, %v9129
  %v9131 = vpop.f32.mrf.mxu0
  %v9132 = vpop.f32.mrf.mxu0
  %v9133 = vadd.f32 0.0, %v9132
  %v9134 = vpop.f32.mrf.mxu0
  %9135 = vmatprep.mubr.bf16.mxu0 0
  %9136 = vmatmul.mubr.bf16.gmra.mxu0 %v9024
  %v9137 = vpop.f32.mrf.mxu0
  %v9138 = vadd.f32 0.0, %v9137
  %v9139 = vpop.f32.mrf.mxu0
  %v9140 = vpop.f32.mrf.mxu0
  %v9141 = vadd.f32 0.0, %v9140
  %v9142 = vpop.f32.mrf.mxu0
  %9143 = vmatprep.mubr.bf16.mxu0 0
  %9144 = vmatmul.mubr.bf16.gmra.mxu0 %v9025
  %v9145 = vpop.f32.mrf.mxu0
  %v9146 = vadd.f32 0.0, %v9145
  %v9147 = vpop.f32.mrf.mxu0
  %v9148 = vpop.f32.mrf.mxu0
  %v9149 = vpop.f32.mrf.mxu0
  %9150 = vdwg.mxu0
  %v9160 = vunpack.c.l.b16 %v8951
  %v9161 = vunpack.c.l.b16 %v8952
  %v9162 = vunpack.c.l.b16 %v8953
  %v9163 = vunpack.c.l.b16 %v8954
  %v9164 = vunpack.c.l.b16 %v8955
  %v9165 = vunpack.c.l.b16 %v8956
  %v9166 = vunpack.c.l.b16 %v8957
  %v9167 = vunpack.c.l.b16 %v8958
  %v9168 = vunpack.c.l.b16 %v8959
  %v9169 = vpack.c.b16 %v9161, %v9160
  %v9170 = vpack.c.b16 %v9163, %v9162
  %v9171 = vpack.c.b16 %v9165, %v9164
  %v9172 = vpack.c.b16 %v9167, %v9166
  %v9173 = vpack.c.b16 %v9168, %v9168
  %v9195 = vunpack.c.l.b16 %v8961
  %v9196 = vunpack.c.l.b16 %v8962
  %v9197 = vunpack.c.l.b16 %v8963
  %v9198 = vunpack.c.l.b16 %v8964
  %v9199 = vunpack.c.l.b16 %v8965
  %v9200 = vunpack.c.l.b16 %v8966
  %v9201 = vunpack.c.l.b16 %v8967
  %v9202 = vunpack.c.l.b16 %v8968
  %v9203 = vunpack.c.l.b16 %v8969
  %v9204 = vunpack.c.l.b16 %v8970
  %v9205 = vunpack.c.l.b16 %v8971
  %v9206 = vunpack.c.l.b16 %v8972
  %v9207 = vunpack.c.l.b16 %v8973
  %v9208 = vunpack.c.l.b16 %v8974
  %v9209 = vunpack.c.l.b16 %v8975
  %v9210 = vunpack.c.l.b16 %v8976
  %v9211 = vpack.c.b16 %v9196, %v9195
  %v9212 = vpack.c.b16 %v9198, %v9197
  %v9213 = vpack.c.b16 %v9200, %v9199
  %v9214 = vpack.c.b16 %v9202, %v9201
  %v9215 = vpack.c.b16 %v9204, %v9203
  %v9216 = vpack.c.b16 %v9206, %v9205
  %v9217 = vpack.c.b16 %v9208, %v9207
  %v9218 = vpack.c.b16 %v9210, %v9209
  %9227 = vmatprep.subr.bf16.mxu0 0
  %9228 = vmatpush1.bf16.msra.mxu0 %v9218
  %9229 = vmatprep.subr.bf16.mxu0 0
  %9230 = vmatpush1.bf16.msra.mxu0 %v9217
  %9231 = vmatprep.subr.bf16.mxu0 0
  %9232 = vmatpush1.bf16.msra.mxu0 %v9216
  %9233 = vmatprep.subr.bf16.mxu0 0
  %9234 = vmatpush1.bf16.msra.mxu0 %v9215
  %9235 = vmatprep.subr.bf16.mxu0 0
  %9236 = vmatpush1.bf16.msra.mxu0 %v9214
  %9237 = vmatprep.subr.bf16.mxu0 0
  %9238 = vmatpush1.bf16.msra.mxu0 %v9213
  %9239 = vmatprep.subr.bf16.mxu0 0
  %9240 = vmatpush1.bf16.msra.mxu0 %v9212
  %9241 = vmatprep.subr.bf16.mxu0 0
  %9242 = vmatpush1.bf16.msra.mxu0 %v9211
  %9243 = vmatprep.subr.bf16.mxu0 0
  %9244 = vmatpush2.bf16.msra.mxu0 0
  %9245 = vmatprep.subr.bf16.mxu0 0
  %9246 = vmatpush2.bf16.msra.mxu0 0
  %9247 = vmatprep.subr.bf16.mxu0 0
  %9248 = vmatpush2.bf16.msra.mxu0 0
  %9249 = vmatprep.subr.bf16.mxu0 0
  %9250 = vmatpush2.bf16.msra.mxu0 0
  %9251 = vmatprep.subr.bf16.mxu0 0
  %9252 = vmatpush2.bf16.msra.mxu0 0
  %9253 = vmatprep.subr.bf16.mxu0 0
  %9254 = vmatpush2.bf16.msra.mxu0 0
  %9255 = vmatprep.subr.bf16.mxu0 0
  %9256 = vmatpush2.bf16.msra.mxu0 0
  %9257 = vmatprep.subr.bf16.mxu0 0
  %9258 = vmatpush2.bf16.msra.mxu0 0
  %9259 = vmatprep.mubr.bf16.mxu0 0
  %9260 = vmatmul.mubr.bf16.gmra.mxu0 %v9169
  %v9261 = vpop.f32.mrf.mxu0
  %v9262 = vadd.f32 %v9114, %v9261
  %v9263 = vpop.f32.mrf.mxu0
  %v9264 = vpop.f32.mrf.mxu0
  %v9265 = vadd.f32 %v9117, %v9264
  %v9266 = vpop.f32.mrf.mxu0
  %9267 = vmatprep.mubr.bf16.mxu0 0
  %9268 = vmatmul.mubr.bf16.gmra.mxu0 %v9170
  %v9269 = vpop.f32.mrf.mxu0
  %v9270 = vadd.f32 %v9122, %v9269
  %v9271 = vpop.f32.mrf.mxu0
  %v9272 = vpop.f32.mrf.mxu0
  %v9273 = vadd.f32 %v9125, %v9272
  %v9274 = vpop.f32.mrf.mxu0
  %9275 = vmatprep.mubr.bf16.mxu0 0
  %9276 = vmatmul.mubr.bf16.gmra.mxu0 %v9171
  %v9277 = vpop.f32.mrf.mxu0
  %v9278 = vadd.f32 %v9130, %v9277
  %v9279 = vpop.f32.mrf.mxu0
  %v9280 = vpop.f32.mrf.mxu0
  %v9281 = vadd.f32 %v9133, %v9280
  %v9282 = vpop.f32.mrf.mxu0
  %9283 = vmatprep.mubr.bf16.mxu0 0
  %9284 = vmatmul.mubr.bf16.gmra.mxu0 %v9172
  %v9285 = vpop.f32.mrf.mxu0
  %v9286 = vadd.f32 %v9138, %v9285
  %v9287 = vpop.f32.mrf.mxu0
  %v9288 = vpop.f32.mrf.mxu0
  %v9289 = vadd.f32 %v9141, %v9288
  %v9290 = vpop.f32.mrf.mxu0
  %9291 = vmatprep.mubr.bf16.mxu0 0
  %9292 = vmatmul.mubr.bf16.gmra.mxu0 %v9173
  %v9293 = vpop.f32.mrf.mxu0
  %v9294 = vadd.f32 %v9146, %v9293
  %v9295 = vpop.f32.mrf.mxu0
  %v9296 = vpop.f32.mrf.mxu0
  %v9297 = vpop.f32.mrf.mxu0
  %9298 = vdwg.mxu0
  %v9299 = vld [vmem:[%s0 + $0x14] sm:$0xf]
  %v9300 = vld [vmem:[%s0 + $0x30] sm:$0xf]
  %v9301 = vld [vmem:[%s0 + $0x4c] sm:$0xf]
  %v9302 = vld [vmem:[%s0 + $0x68] sm:$0xf]
  %v9303 = vld [vmem:[%s0 + $0x84] sm:$0xf]
  %v9304 = vld [vmem:[%s0 + $0xa0] sm:$0xf]
  %v9305 = vld [vmem:[%s0 + $0xbc] sm:$0xf]
  %v9306 = vld [vmem:[%s0 + $0xd8] sm:$0xf]
  %v9307 = vld [vmem:[%s0 + $0xf4] sm:$0xf]
  %v9308 = vld [vmem:[%s0 + $0x110] sm:$0x1]
  %s9309 = scalar_lea.vmem %s1, 3008
  %v9310 = vld [vmem:[%s9309] sm:$0xf]
  %v9311 = vld [vmem:[%s9309 + $0x4] sm:$0xf]
  %v9312 = vld [vmem:[%s9309 + $0x8] sm:$0xf]
  %v9313 = vld [vmem:[%s9309 + $0xc] sm:$0xf]
  %v9314 = vld [vmem:[%s9309 + $0x10] sm:$0xf]
  %v9315 = vld [vmem:[%s9309 + $0x14] sm:$0xf]
  %v9316 = vld [vmem:[%s9309 + $0x18] sm:$0xf]
  %v9317 = vld [vmem:[%s9309 + $0x1c] sm:$0xf]
  %v9318 = vld [vmem:[%s9309 + $0x20] sm:$0xf]
  %v9319 = vld [vmem:[%s9309 + $0x24] sm:$0xf]
  %v9320 = vld [vmem:[%s9309 + $0x28] sm:$0xf]
  %v9321 = vld [vmem:[%s9309 + $0x2c] sm:$0xf]
  %v9322 = vld [vmem:[%s9309 + $0x30] sm:$0xf]
  %v9323 = vld [vmem:[%s9309 + $0x34] sm:$0xf]
  %v9324 = vld [vmem:[%s9309 + $0x38] sm:$0xf]
  %v9325 = vld [vmem:[%s9309 + $0x3c] sm:$0xf]
  %v9336 = vunpack.c.l.b16 %v9299
  %v9337 = vunpack.c.l.b16 %v9300
  %v9338 = vunpack.c.l.b16 %v9301
  %v9339 = vunpack.c.l.b16 %v9302
  %v9340 = vunpack.c.l.b16 %v9303
  %v9341 = vunpack.c.l.b16 %v9304
  %v9342 = vunpack.c.l.b16 %v9305
  %v9343 = vunpack.c.l.b16 %v9306
  %v9344 = vunpack.c.l.b16 %v9307
  %v9345 = vunpack.c.l.b16 %v9308
  %v9346 = vpack.c.b16 %v9337, %v9336
  %v9347 = vpack.c.b16 %v9339, %v9338
  %v9348 = vpack.c.b16 %v9341, %v9340
  %v9349 = vpack.c.b16 %v9343, %v9342
  %v9350 = vpack.c.b16 %v9345, %v9344
  %v9352 = vshrl.u32 %v9346, 16
  %v9354 = vshll.u32 %v9346, 16
  %v9356 = vrot.slane %v9354, 1
  %v9357 = vor.u32 %v9352, %v9356
  %v9359 = vshll.u32 %v9347, 16
  %v9361 = vrot.slane %v9359, 1
  %v9362 = vsel %vm412, %v9357, %v9361
  %v9363 = vshrl.u32 %v9347, 16
  %v9365 = vor.u32 %v9363, %v9361
  %v9367 = vshll.u32 %v9348, 16
  %v9369 = vrot.slane %v9367, 1
  %v9370 = vsel %vm412, %v9365, %v9369
  %v9371 = vshrl.u32 %v9348, 16
  %v9373 = vor.u32 %v9371, %v9369
  %v9375 = vshll.u32 %v9349, 16
  %v9377 = vrot.slane %v9375, 1
  %v9378 = vsel %vm412, %v9373, %v9377
  %v9379 = vshrl.u32 %v9349, 16
  %v9381 = vor.u32 %v9379, %v9377
  %v9383 = vshll.u32 %v9350, 16
  %v9385 = vrot.slane %v9383, 1
  %v9386 = vsel %vm412, %v9381, %v9385
  %v9387 = vshrl.u32 %v9350, 16
  %v9389 = vor.u32 %v9387, %v9385
  %v9411 = vunpack.c.l.b16 %v9310
  %v9412 = vunpack.c.l.b16 %v9311
  %v9413 = vunpack.c.l.b16 %v9312
  %v9414 = vunpack.c.l.b16 %v9313
  %v9415 = vunpack.c.l.b16 %v9314
  %v9416 = vunpack.c.l.b16 %v9315
  %v9417 = vunpack.c.l.b16 %v9316
  %v9418 = vunpack.c.l.b16 %v9317
  %v9419 = vunpack.c.l.b16 %v9318
  %v9420 = vunpack.c.l.b16 %v9319
  %v9421 = vunpack.c.l.b16 %v9320
  %v9422 = vunpack.c.l.b16 %v9321
  %v9423 = vunpack.c.l.b16 %v9322
  %v9424 = vunpack.c.l.b16 %v9323
  %v9425 = vunpack.c.l.b16 %v9324
  %v9426 = vunpack.c.l.b16 %v9325
  %v9427 = vpack.c.b16 %v9412, %v9411
  %v9428 = vpack.c.b16 %v9414, %v9413
  %v9429 = vpack.c.b16 %v9416, %v9415
  %v9430 = vpack.c.b16 %v9418, %v9417
  %v9431 = vpack.c.b16 %v9420, %v9419
  %v9432 = vpack.c.b16 %v9422, %v9421
  %v9433 = vpack.c.b16 %v9424, %v9423
  %v9434 = vpack.c.b16 %v9426, %v9425
  %9443 = vmatprep.subr.bf16.mxu0 0
  %9444 = vmatpush1.bf16.msra.mxu0 %v9434
  %9445 = vmatprep.subr.bf16.mxu0 0
  %9446 = vmatpush1.bf16.msra.mxu0 %v9433
  %9447 = vmatprep.subr.bf16.mxu0 0
  %9448 = vmatpush1.bf16.msra.mxu0 %v9432
  %9449 = vmatprep.subr.bf16.mxu0 0
  %9450 = vmatpush1.bf16.msra.mxu0 %v9431
  %9451 = vmatprep.subr.bf16.mxu0 0
  %9452 = vmatpush1.bf16.msra.mxu0 %v9430
  %9453 = vmatprep.subr.bf16.mxu0 0
  %9454 = vmatpush1.bf16.msra.mxu0 %v9429
  %9455 = vmatprep.subr.bf16.mxu0 0
  %9456 = vmatpush1.bf16.msra.mxu0 %v9428
  %9457 = vmatprep.subr.bf16.mxu0 0
  %9458 = vmatpush1.bf16.msra.mxu0 %v9427
  %9459 = vmatprep.subr.bf16.mxu0 0
  %9460 = vmatpush2.bf16.msra.mxu0 0
  %9461 = vmatprep.subr.bf16.mxu0 0
  %9462 = vmatpush2.bf16.msra.mxu0 0
  %9463 = vmatprep.subr.bf16.mxu0 0
  %9464 = vmatpush2.bf16.msra.mxu0 0
  %9465 = vmatprep.subr.bf16.mxu0 0
  %9466 = vmatpush2.bf16.msra.mxu0 0
  %9467 = vmatprep.subr.bf16.mxu0 0
  %9468 = vmatpush2.bf16.msra.mxu0 0
  %9469 = vmatprep.subr.bf16.mxu0 0
  %9470 = vmatpush2.bf16.msra.mxu0 0
  %9471 = vmatprep.subr.bf16.mxu0 0
  %9472 = vmatpush2.bf16.msra.mxu0 0
  %9473 = vmatprep.subr.bf16.mxu0 0
  %9474 = vmatpush2.bf16.msra.mxu0 0
  %9475 = vmatprep.mubr.bf16.mxu0 0
  %9476 = vmatmul.mubr.bf16.gmra.mxu0 %v9362
  %v9477 = vpop.f32.mrf.mxu0
  %v9478 = vadd.f32 0.0, %v9477
  %v9479 = vpop.f32.mrf.mxu0
  %v9480 = vpop.f32.mrf.mxu0
  %v9481 = vadd.f32 0.0, %v9480
  %v9482 = vpop.f32.mrf.mxu0
  %9483 = vmatprep.mubr.bf16.mxu0 0
  %9484 = vmatmul.mubr.bf16.gmra.mxu0 %v9370
  %v9485 = vpop.f32.mrf.mxu0
  %v9486 = vadd.f32 0.0, %v9485
  %v9487 = vpop.f32.mrf.mxu0
  %v9488 = vpop.f32.mrf.mxu0
  %v9489 = vadd.f32 0.0, %v9488
  %v9490 = vpop.f32.mrf.mxu0
  %9491 = vmatprep.mubr.bf16.mxu0 0
  %9492 = vmatmul.mubr.bf16.gmra.mxu0 %v9378
  %v9493 = vpop.f32.mrf.mxu0
  %v9494 = vadd.f32 0.0, %v9493
  %v9495 = vpop.f32.mrf.mxu0
  %v9496 = vpop.f32.mrf.mxu0
  %v9497 = vadd.f32 0.0, %v9496
  %v9498 = vpop.f32.mrf.mxu0
  %9499 = vmatprep.mubr.bf16.mxu0 0
  %9500 = vmatmul.mubr.bf16.gmra.mxu0 %v9386
  %v9501 = vpop.f32.mrf.mxu0
  %v9502 = vadd.f32 0.0, %v9501
  %v9503 = vpop.f32.mrf.mxu0
  %v9504 = vpop.f32.mrf.mxu0
  %v9505 = vadd.f32 0.0, %v9504
  %v9506 = vpop.f32.mrf.mxu0
  %9507 = vmatprep.mubr.bf16.mxu0 0
  %9508 = vmatmul.mubr.bf16.gmra.mxu0 %v9389
  %v9509 = vpop.f32.mrf.mxu0
  %v9510 = vadd.f32 0.0, %v9509
  %v9511 = vpop.f32.mrf.mxu0
  %v9512 = vpop.f32.mrf.mxu0
  %v9513 = vpop.f32.mrf.mxu0
  %9514 = vdwg.mxu0
  %v9515 = vadd.f32 %v9262, %v9478
  %v9516 = vadd.f32 %v9265, %v9481
  %v9517 = vadd.f32 %v9270, %v9486
  %v9518 = vadd.f32 %v9273, %v9489
  %v9519 = vadd.f32 %v9278, %v9494
  %v9520 = vadd.f32 %v9281, %v9497
  %v9521 = vadd.f32 %v9286, %v9502
  %v9522 = vadd.f32 %v9289, %v9505
  %v9523 = vadd.f32 %v9294, %v9510
  %v9524 = vld [vmem:[%s586 + $0x14] sm:$0xf]
  %v9525 = vld [vmem:[%s586 + $0x30] sm:$0xf]
  %v9526 = vld [vmem:[%s586 + $0x4c] sm:$0xf]
  %v9527 = vld [vmem:[%s586 + $0x68] sm:$0xf]
  %v9528 = vld [vmem:[%s586 + $0x84] sm:$0xf]
  %v9529 = vld [vmem:[%s586 + $0xa0] sm:$0xf]
  %v9530 = vld [vmem:[%s586 + $0xbc] sm:$0xf]
  %v9531 = vld [vmem:[%s586 + $0xd8] sm:$0xf]
  %v9532 = vld [vmem:[%s586 + $0xf4] sm:$0xf]
  %s9533 = scalar_lea.vmem %s1, 3072
  %v9534 = vld [vmem:[%s9533] sm:$0xf]
  %v9535 = vld [vmem:[%s9533 + $0x4] sm:$0xf]
  %v9536 = vld [vmem:[%s9533 + $0x8] sm:$0xf]
  %v9537 = vld [vmem:[%s9533 + $0xc] sm:$0xf]
  %v9538 = vld [vmem:[%s9533 + $0x10] sm:$0xf]
  %v9539 = vld [vmem:[%s9533 + $0x14] sm:$0xf]
  %v9540 = vld [vmem:[%s9533 + $0x18] sm:$0xf]
  %v9541 = vld [vmem:[%s9533 + $0x1c] sm:$0xf]
  %v9542 = vld [vmem:[%s9533 + $0x20] sm:$0xf]
  %v9543 = vld [vmem:[%s9533 + $0x24] sm:$0xf]
  %v9544 = vld [vmem:[%s9533 + $0x28] sm:$0xf]
  %v9545 = vld [vmem:[%s9533 + $0x2c] sm:$0xf]
  %v9546 = vld [vmem:[%s9533 + $0x30] sm:$0xf]
  %v9547 = vld [vmem:[%s9533 + $0x34] sm:$0xf]
  %v9548 = vld [vmem:[%s9533 + $0x38] sm:$0xf]
  %v9549 = vld [vmem:[%s9533 + $0x3c] sm:$0xf]
  %v9559 = vunpack.c.l.b16 %v9524
  %v9560 = vunpack.c.l.b16 %v9525
  %v9561 = vunpack.c.l.b16 %v9526
  %v9562 = vunpack.c.l.b16 %v9527
  %v9563 = vunpack.c.l.b16 %v9528
  %v9564 = vunpack.c.l.b16 %v9529
  %v9565 = vunpack.c.l.b16 %v9530
  %v9566 = vunpack.c.l.b16 %v9531
  %v9567 = vunpack.c.l.b16 %v9532
  %v9568 = vpack.c.b16 %v9560, %v9559
  %v9569 = vpack.c.b16 %v9562, %v9561
  %v9570 = vpack.c.b16 %v9564, %v9563
  %v9571 = vpack.c.b16 %v9566, %v9565
  %v9572 = vpack.c.b16 %v9567, %v9567
  %v9594 = vunpack.c.l.b16 %v9534
  %v9595 = vunpack.c.l.b16 %v9535
  %v9596 = vunpack.c.l.b16 %v9536
  %v9597 = vunpack.c.l.b16 %v9537
  %v9598 = vunpack.c.l.b16 %v9538
  %v9599 = vunpack.c.l.b16 %v9539
  %v9600 = vunpack.c.l.b16 %v9540
  %v9601 = vunpack.c.l.b16 %v9541
  %v9602 = vunpack.c.l.b16 %v9542
  %v9603 = vunpack.c.l.b16 %v9543
  %v9604 = vunpack.c.l.b16 %v9544
  %v9605 = vunpack.c.l.b16 %v9545
  %v9606 = vunpack.c.l.b16 %v9546
  %v9607 = vunpack.c.l.b16 %v9547
  %v9608 = vunpack.c.l.b16 %v9548
  %v9609 = vunpack.c.l.b16 %v9549
  %v9610 = vpack.c.b16 %v9595, %v9594
  %v9611 = vpack.c.b16 %v9597, %v9596
  %v9612 = vpack.c.b16 %v9599, %v9598
  %v9613 = vpack.c.b16 %v9601, %v9600
  %v9614 = vpack.c.b16 %v9603, %v9602
  %v9615 = vpack.c.b16 %v9605, %v9604
  %v9616 = vpack.c.b16 %v9607, %v9606
  %v9617 = vpack.c.b16 %v9609, %v9608
  %9626 = vmatprep.subr.bf16.mxu0 0
  %9627 = vmatpush1.bf16.msra.mxu0 %v9617
  %9628 = vmatprep.subr.bf16.mxu0 0
  %9629 = vmatpush1.bf16.msra.mxu0 %v9616
  %9630 = vmatprep.subr.bf16.mxu0 0
  %9631 = vmatpush1.bf16.msra.mxu0 %v9615
  %9632 = vmatprep.subr.bf16.mxu0 0
  %9633 = vmatpush1.bf16.msra.mxu0 %v9614
  %9634 = vmatprep.subr.bf16.mxu0 0
  %9635 = vmatpush1.bf16.msra.mxu0 %v9613
  %9636 = vmatprep.subr.bf16.mxu0 0
  %9637 = vmatpush1.bf16.msra.mxu0 %v9612
  %9638 = vmatprep.subr.bf16.mxu0 0
  %9639 = vmatpush1.bf16.msra.mxu0 %v9611
  %9640 = vmatprep.subr.bf16.mxu0 0
  %9641 = vmatpush1.bf16.msra.mxu0 %v9610
  %9642 = vmatprep.subr.bf16.mxu0 0
  %9643 = vmatpush2.bf16.msra.mxu0 0
  %9644 = vmatprep.subr.bf16.mxu0 0
  %9645 = vmatpush2.bf16.msra.mxu0 0
  %9646 = vmatprep.subr.bf16.mxu0 0
  %9647 = vmatpush2.bf16.msra.mxu0 0
  %9648 = vmatprep.subr.bf16.mxu0 0
  %9649 = vmatpush2.bf16.msra.mxu0 0
  %9650 = vmatprep.subr.bf16.mxu0 0
  %9651 = vmatpush2.bf16.msra.mxu0 0
  %9652 = vmatprep.subr.bf16.mxu0 0
  %9653 = vmatpush2.bf16.msra.mxu0 0
  %9654 = vmatprep.subr.bf16.mxu0 0
  %9655 = vmatpush2.bf16.msra.mxu0 0
  %9656 = vmatprep.subr.bf16.mxu0 0
  %9657 = vmatpush2.bf16.msra.mxu0 0
  %9658 = vmatprep.mubr.bf16.mxu0 0
  %9659 = vmatmul.mubr.bf16.gmra.mxu0 %v9568
  %v9660 = vpop.f32.mrf.mxu0
  %v9661 = vadd.f32 0.0, %v9660
  %v9662 = vpop.f32.mrf.mxu0
  %v9663 = vpop.f32.mrf.mxu0
  %v9664 = vadd.f32 0.0, %v9663
  %v9665 = vpop.f32.mrf.mxu0
  %9666 = vmatprep.mubr.bf16.mxu0 0
  %9667 = vmatmul.mubr.bf16.gmra.mxu0 %v9569
  %v9668 = vpop.f32.mrf.mxu0
  %v9669 = vadd.f32 0.0, %v9668
  %v9670 = vpop.f32.mrf.mxu0
  %v9671 = vpop.f32.mrf.mxu0
  %v9672 = vadd.f32 0.0, %v9671
  %v9673 = vpop.f32.mrf.mxu0
  %9674 = vmatprep.mubr.bf16.mxu0 0
  %9675 = vmatmul.mubr.bf16.gmra.mxu0 %v9570
  %v9676 = vpop.f32.mrf.mxu0
  %v9677 = vadd.f32 0.0, %v9676
  %v9678 = vpop.f32.mrf.mxu0
  %v9679 = vpop.f32.mrf.mxu0
  %v9680 = vadd.f32 0.0, %v9679
  %v9681 = vpop.f32.mrf.mxu0
  %9682 = vmatprep.mubr.bf16.mxu0 0
  %9683 = vmatmul.mubr.bf16.gmra.mxu0 %v9571
  %v9684 = vpop.f32.mrf.mxu0
  %v9685 = vadd.f32 0.0, %v9684
  %v9686 = vpop.f32.mrf.mxu0
  %v9687 = vpop.f32.mrf.mxu0
  %v9688 = vadd.f32 0.0, %v9687
  %v9689 = vpop.f32.mrf.mxu0
  %9690 = vmatprep.mubr.bf16.mxu0 0
  %9691 = vmatmul.mubr.bf16.gmra.mxu0 %v9572
  %v9692 = vpop.f32.mrf.mxu0
  %v9693 = vadd.f32 0.0, %v9692
  %v9694 = vpop.f32.mrf.mxu0
  %v9695 = vpop.f32.mrf.mxu0
  %v9696 = vpop.f32.mrf.mxu0
  %9697 = vdwg.mxu0
  %v9698 = vadd.f32 %v9515, %v9661
  %v9699 = vadd.f32 %v9516, %v9664
  %v9700 = vadd.f32 %v9517, %v9669
  %v9701 = vadd.f32 %v9518, %v9672
  %v9702 = vadd.f32 %v9519, %v9677
  %v9703 = vadd.f32 %v9520, %v9680
  %v9704 = vadd.f32 %v9521, %v9685
  %v9705 = vadd.f32 %v9522, %v9688
  %v9706 = vadd.f32 %v9523, %v9693
  %v9707 = vld [vmem:[%s770 + $0x14] sm:$0xf]
  %v9708 = vld [vmem:[%s770 + $0x30] sm:$0xf]
  %v9709 = vld [vmem:[%s770 + $0x4c] sm:$0xf]
  %v9710 = vld [vmem:[%s770 + $0x68] sm:$0xf]
  %v9711 = vld [vmem:[%s770 + $0x84] sm:$0xf]
  %v9712 = vld [vmem:[%s770 + $0xa0] sm:$0xf]
  %v9713 = vld [vmem:[%s770 + $0xbc] sm:$0xf]
  %v9714 = vld [vmem:[%s770 + $0xd8] sm:$0xf]
  %v9715 = vld [vmem:[%s770 + $0xf4] sm:$0xf]
  %s9716 = scalar_lea.vmem %s1, 3136
  %v9717 = vld [vmem:[%s9716] sm:$0xf]
  %v9718 = vld [vmem:[%s9716 + $0x4] sm:$0xf]
  %v9719 = vld [vmem:[%s9716 + $0x8] sm:$0xf]
  %v9720 = vld [vmem:[%s9716 + $0xc] sm:$0xf]
  %v9721 = vld [vmem:[%s9716 + $0x10] sm:$0xf]
  %v9722 = vld [vmem:[%s9716 + $0x14] sm:$0xf]
  %v9723 = vld [vmem:[%s9716 + $0x18] sm:$0xf]
  %v9724 = vld [vmem:[%s9716 + $0x1c] sm:$0xf]
  %v9725 = vld [vmem:[%s9716 + $0x20] sm:$0xf]
  %v9726 = vld [vmem:[%s9716 + $0x24] sm:$0xf]
  %v9727 = vld [vmem:[%s9716 + $0x28] sm:$0xf]
  %v9728 = vld [vmem:[%s9716 + $0x2c] sm:$0xf]
  %v9729 = vld [vmem:[%s9716 + $0x30] sm:$0xf]
  %v9730 = vld [vmem:[%s9716 + $0x34] sm:$0xf]
  %v9731 = vld [vmem:[%s9716 + $0x38] sm:$0xf]
  %v9732 = vld [vmem:[%s9716 + $0x3c] sm:$0xf]
  %v9742 = vunpack.c.l.b16 %v9707
  %v9743 = vunpack.c.l.b16 %v9708
  %v9744 = vunpack.c.l.b16 %v9709
  %v9745 = vunpack.c.l.b16 %v9710
  %v9746 = vunpack.c.l.b16 %v9711
  %v9747 = vunpack.c.l.b16 %v9712
  %v9748 = vunpack.c.l.b16 %v9713
  %v9749 = vunpack.c.l.b16 %v9714
  %v9750 = vunpack.c.l.b16 %v9715
  %v9751 = vpack.c.b16 %v9743, %v9742
  %v9752 = vpack.c.b16 %v9745, %v9744
  %v9753 = vpack.c.b16 %v9747, %v9746
  %v9754 = vpack.c.b16 %v9749, %v9748
  %v9755 = vpack.c.b16 %v9750, %v9750
  %v9777 = vunpack.c.l.b16 %v9717
  %v9778 = vunpack.c.l.b16 %v9718
  %v9779 = vunpack.c.l.b16 %v9719
  %v9780 = vunpack.c.l.b16 %v9720
  %v9781 = vunpack.c.l.b16 %v9721
  %v9782 = vunpack.c.l.b16 %v9722
  %v9783 = vunpack.c.l.b16 %v9723
  %v9784 = vunpack.c.l.b16 %v9724
  %v9785 = vunpack.c.l.b16 %v9725
  %v9786 = vunpack.c.l.b16 %v9726
  %v9787 = vunpack.c.l.b16 %v9727
  %v9788 = vunpack.c.l.b16 %v9728
  %v9789 = vunpack.c.l.b16 %v9729
  %v9790 = vunpack.c.l.b16 %v9730
  %v9791 = vunpack.c.l.b16 %v9731
  %v9792 = vunpack.c.l.b16 %v9732
  %v9793 = vpack.c.b16 %v9778, %v9777
  %v9794 = vpack.c.b16 %v9780, %v9779
  %v9795 = vpack.c.b16 %v9782, %v9781
  %v9796 = vpack.c.b16 %v9784, %v9783
  %v9797 = vpack.c.b16 %v9786, %v9785
  %v9798 = vpack.c.b16 %v9788, %v9787
  %v9799 = vpack.c.b16 %v9790, %v9789
  %v9800 = vpack.c.b16 %v9792, %v9791
  %9809 = vmatprep.subr.bf16.mxu0 0
  %9810 = vmatpush1.bf16.msra.mxu0 %v9800
  %9811 = vmatprep.subr.bf16.mxu0 0
  %9812 = vmatpush1.bf16.msra.mxu0 %v9799
  %9813 = vmatprep.subr.bf16.mxu0 0
  %9814 = vmatpush1.bf16.msra.mxu0 %v9798
  %9815 = vmatprep.subr.bf16.mxu0 0
  %9816 = vmatpush1.bf16.msra.mxu0 %v9797
  %9817 = vmatprep.subr.bf16.mxu0 0
  %9818 = vmatpush1.bf16.msra.mxu0 %v9796
  %9819 = vmatprep.subr.bf16.mxu0 0
  %9820 = vmatpush1.bf16.msra.mxu0 %v9795
  %9821 = vmatprep.subr.bf16.mxu0 0
  %9822 = vmatpush1.bf16.msra.mxu0 %v9794
  %9823 = vmatprep.subr.bf16.mxu0 0
  %9824 = vmatpush1.bf16.msra.mxu0 %v9793
  %9825 = vmatprep.subr.bf16.mxu0 0
  %9826 = vmatpush2.bf16.msra.mxu0 0
  %9827 = vmatprep.subr.bf16.mxu0 0
  %9828 = vmatpush2.bf16.msra.mxu0 0
  %9829 = vmatprep.subr.bf16.mxu0 0
  %9830 = vmatpush2.bf16.msra.mxu0 0
  %9831 = vmatprep.subr.bf16.mxu0 0
  %9832 = vmatpush2.bf16.msra.mxu0 0
  %9833 = vmatprep.subr.bf16.mxu0 0
  %9834 = vmatpush2.bf16.msra.mxu0 0
  %9835 = vmatprep.subr.bf16.mxu0 0
  %9836 = vmatpush2.bf16.msra.mxu0 0
  %9837 = vmatprep.subr.bf16.mxu0 0
  %9838 = vmatpush2.bf16.msra.mxu0 0
  %9839 = vmatprep.subr.bf16.mxu0 0
  %9840 = vmatpush2.bf16.msra.mxu0 0
  %9841 = vmatprep.mubr.bf16.mxu0 0
  %9842 = vmatmul.mubr.bf16.gmra.mxu0 %v9751
  %v9843 = vpop.f32.mrf.mxu0
  %v9844 = vadd.f32 0.0, %v9843
  %v9845 = vpop.f32.mrf.mxu0
  %v9846 = vpop.f32.mrf.mxu0
  %v9847 = vadd.f32 0.0, %v9846
  %v9848 = vpop.f32.mrf.mxu0
  %9849 = vmatprep.mubr.bf16.mxu0 0
  %9850 = vmatmul.mubr.bf16.gmra.mxu0 %v9752
  %v9851 = vpop.f32.mrf.mxu0
  %v9852 = vadd.f32 0.0, %v9851
  %v9853 = vpop.f32.mrf.mxu0
  %v9854 = vpop.f32.mrf.mxu0
  %v9855 = vadd.f32 0.0, %v9854
  %v9856 = vpop.f32.mrf.mxu0
  %9857 = vmatprep.mubr.bf16.mxu0 0
  %9858 = vmatmul.mubr.bf16.gmra.mxu0 %v9753
  %v9859 = vpop.f32.mrf.mxu0
  %v9860 = vadd.f32 0.0, %v9859
  %v9861 = vpop.f32.mrf.mxu0
  %v9862 = vpop.f32.mrf.mxu0
  %v9863 = vadd.f32 0.0, %v9862
  %v9864 = vpop.f32.mrf.mxu0
  %9865 = vmatprep.mubr.bf16.mxu0 0
  %9866 = vmatmul.mubr.bf16.gmra.mxu0 %v9754
  %v9867 = vpop.f32.mrf.mxu0
  %v9868 = vadd.f32 0.0, %v9867
  %v9869 = vpop.f32.mrf.mxu0
  %v9870 = vpop.f32.mrf.mxu0
  %v9871 = vadd.f32 0.0, %v9870
  %v9872 = vpop.f32.mrf.mxu0
  %9873 = vmatprep.mubr.bf16.mxu0 0
  %9874 = vmatmul.mubr.bf16.gmra.mxu0 %v9755
  %v9875 = vpop.f32.mrf.mxu0
  %v9876 = vadd.f32 0.0, %v9875
  %v9877 = vpop.f32.mrf.mxu0
  %v9878 = vpop.f32.mrf.mxu0
  %v9879 = vpop.f32.mrf.mxu0
  %9880 = vdwg.mxu0
  %v9881 = vadd.f32 %v9698, %v9844
  %v9882 = vadd.f32 %v9699, %v9847
  %v9883 = vadd.f32 %v9700, %v9852
  %v9884 = vadd.f32 %v9701, %v9855
  %v9885 = vadd.f32 %v9702, %v9860
  %v9886 = vadd.f32 %v9703, %v9863
  %v9887 = vadd.f32 %v9704, %v9868
  %v9888 = vadd.f32 %v9705, %v9871
  %v9889 = vadd.f32 %v9706, %v9876
  %v9890 = vld [vmem:[%s586 + $0x14] sm:$0xf]
  %v9891 = vld [vmem:[%s586 + $0x30] sm:$0xf]
  %v9892 = vld [vmem:[%s586 + $0x4c] sm:$0xf]
  %v9893 = vld [vmem:[%s586 + $0x68] sm:$0xf]
  %v9894 = vld [vmem:[%s586 + $0x84] sm:$0xf]
  %v9895 = vld [vmem:[%s586 + $0xa0] sm:$0xf]
  %v9896 = vld [vmem:[%s586 + $0xbc] sm:$0xf]
  %v9897 = vld [vmem:[%s586 + $0xd8] sm:$0xf]
  %v9898 = vld [vmem:[%s586 + $0xf4] sm:$0xf]
  %v9899 = vld [vmem:[%s586 + $0x110] sm:$0x1]
  %s9900 = scalar_lea.vmem %s1, 3200
  %v9901 = vld [vmem:[%s9900] sm:$0xf]
  %v9902 = vld [vmem:[%s9900 + $0x4] sm:$0xf]
  %v9903 = vld [vmem:[%s9900 + $0x8] sm:$0xf]
  %v9904 = vld [vmem:[%s9900 + $0xc] sm:$0xf]
  %v9905 = vld [vmem:[%s9900 + $0x10] sm:$0xf]
  %v9906 = vld [vmem:[%s9900 + $0x14] sm:$0xf]
  %v9907 = vld [vmem:[%s9900 + $0x18] sm:$0xf]
  %v9908 = vld [vmem:[%s9900 + $0x1c] sm:$0xf]
  %v9909 = vld [vmem:[%s9900 + $0x20] sm:$0xf]
  %v9910 = vld [vmem:[%s9900 + $0x24] sm:$0xf]
  %v9911 = vld [vmem:[%s9900 + $0x28] sm:$0xf]
  %v9912 = vld [vmem:[%s9900 + $0x2c] sm:$0xf]
  %v9913 = vld [vmem:[%s9900 + $0x30] sm:$0xf]
  %v9914 = vld [vmem:[%s9900 + $0x34] sm:$0xf]
  %v9915 = vld [vmem:[%s9900 + $0x38] sm:$0xf]
  %v9916 = vld [vmem:[%s9900 + $0x3c] sm:$0xf]
  %v9927 = vunpack.c.l.b16 %v9890
  %v9928 = vunpack.c.l.b16 %v9891
  %v9929 = vunpack.c.l.b16 %v9892
  %v9930 = vunpack.c.l.b16 %v9893
  %v9931 = vunpack.c.l.b16 %v9894
  %v9932 = vunpack.c.l.b16 %v9895
  %v9933 = vunpack.c.l.b16 %v9896
  %v9934 = vunpack.c.l.b16 %v9897
  %v9935 = vunpack.c.l.b16 %v9898
  %v9936 = vunpack.c.l.b16 %v9899
  %v9937 = vpack.c.b16 %v9928, %v9927
  %v9938 = vpack.c.b16 %v9930, %v9929
  %v9939 = vpack.c.b16 %v9932, %v9931
  %v9940 = vpack.c.b16 %v9934, %v9933
  %v9941 = vpack.c.b16 %v9936, %v9935
  %v9943 = vshrl.u32 %v9937, 16
  %v9945 = vshll.u32 %v9937, 16
  %v9947 = vrot.slane %v9945, 1
  %v9948 = vor.u32 %v9943, %v9947
  %v9950 = vshll.u32 %v9938, 16
  %v9952 = vrot.slane %v9950, 1
  %v9953 = vsel %vm412, %v9948, %v9952
  %v9954 = vshrl.u32 %v9938, 16
  %v9956 = vor.u32 %v9954, %v9952
  %v9958 = vshll.u32 %v9939, 16
  %v9960 = vrot.slane %v9958, 1
  %v9961 = vsel %vm412, %v9956, %v9960
  %v9962 = vshrl.u32 %v9939, 16
  %v9964 = vor.u32 %v9962, %v9960
  %v9966 = vshll.u32 %v9940, 16
  %v9968 = vrot.slane %v9966, 1
  %v9969 = vsel %vm412, %v9964, %v9968
  %v9970 = vshrl.u32 %v9940, 16
  %v9972 = vor.u32 %v9970, %v9968
  %v9974 = vshll.u32 %v9941, 16
  %v9976 = vrot.slane %v9974, 1
  %v9977 = vsel %vm412, %v9972, %v9976
  %v9978 = vshrl.u32 %v9941, 16
  %v9980 = vor.u32 %v9978, %v9976
  %v10002 = vunpack.c.l.b16 %v9901
  %v10003 = vunpack.c.l.b16 %v9902
  %v10004 = vunpack.c.l.b16 %v9903
  %v10005 = vunpack.c.l.b16 %v9904
  %v10006 = vunpack.c.l.b16 %v9905
  %v10007 = vunpack.c.l.b16 %v9906
  %v10008 = vunpack.c.l.b16 %v9907
  %v10009 = vunpack.c.l.b16 %v9908
  %v10010 = vunpack.c.l.b16 %v9909
  %v10011 = vunpack.c.l.b16 %v9910
  %v10012 = vunpack.c.l.b16 %v9911
  %v10013 = vunpack.c.l.b16 %v9912
  %v10014 = vunpack.c.l.b16 %v9913
  %v10015 = vunpack.c.l.b16 %v9914
  %v10016 = vunpack.c.l.b16 %v9915
  %v10017 = vunpack.c.l.b16 %v9916
  %v10018 = vpack.c.b16 %v10003, %v10002
  %v10019 = vpack.c.b16 %v10005, %v10004
  %v10020 = vpack.c.b16 %v10007, %v10006
  %v10021 = vpack.c.b16 %v10009, %v10008
  %v10022 = vpack.c.b16 %v10011, %v10010
  %v10023 = vpack.c.b16 %v10013, %v10012
  %v10024 = vpack.c.b16 %v10015, %v10014
  %v10025 = vpack.c.b16 %v10017, %v10016
  %10034 = vmatprep.subr.bf16.mxu0 0
  %10035 = vmatpush1.bf16.msra.mxu0 %v10025
  %10036 = vmatprep.subr.bf16.mxu0 0
  %10037 = vmatpush1.bf16.msra.mxu0 %v10024
  %10038 = vmatprep.subr.bf16.mxu0 0
  %10039 = vmatpush1.bf16.msra.mxu0 %v10023
  %10040 = vmatprep.subr.bf16.mxu0 0
  %10041 = vmatpush1.bf16.msra.mxu0 %v10022
  %10042 = vmatprep.subr.bf16.mxu0 0
  %10043 = vmatpush1.bf16.msra.mxu0 %v10021
  %10044 = vmatprep.subr.bf16.mxu0 0
  %10045 = vmatpush1.bf16.msra.mxu0 %v10020
  %10046 = vmatprep.subr.bf16.mxu0 0
  %10047 = vmatpush1.bf16.msra.mxu0 %v10019
  %10048 = vmatprep.subr.bf16.mxu0 0
  %10049 = vmatpush1.bf16.msra.mxu0 %v10018
  %10050 = vmatprep.subr.bf16.mxu0 0
  %10051 = vmatpush2.bf16.msra.mxu0 0
  %10052 = vmatprep.subr.bf16.mxu0 0
  %10053 = vmatpush2.bf16.msra.mxu0 0
  %10054 = vmatprep.subr.bf16.mxu0 0
  %10055 = vmatpush2.bf16.msra.mxu0 0
  %10056 = vmatprep.subr.bf16.mxu0 0
  %10057 = vmatpush2.bf16.msra.mxu0 0
  %10058 = vmatprep.subr.bf16.mxu0 0
  %10059 = vmatpush2.bf16.msra.mxu0 0
  %10060 = vmatprep.subr.bf16.mxu0 0
  %10061 = vmatpush2.bf16.msra.mxu0 0
  %10062 = vmatprep.subr.bf16.mxu0 0
  %10063 = vmatpush2.bf16.msra.mxu0 0
  %10064 = vmatprep.subr.bf16.mxu0 0
  %10065 = vmatpush2.bf16.msra.mxu0 0
  %10066 = vmatprep.mubr.bf16.mxu0 0
  %10067 = vmatmul.mubr.bf16.gmra.mxu0 %v9953
  %v10068 = vpop.f32.mrf.mxu0
  %v10069 = vadd.f32 0.0, %v10068
  %v10070 = vpop.f32.mrf.mxu0
  %v10071 = vpop.f32.mrf.mxu0
  %v10072 = vadd.f32 0.0, %v10071
  %v10073 = vpop.f32.mrf.mxu0
  %10074 = vmatprep.mubr.bf16.mxu0 0
  %10075 = vmatmul.mubr.bf16.gmra.mxu0 %v9961
  %v10076 = vpop.f32.mrf.mxu0
  %v10077 = vadd.f32 0.0, %v10076
  %v10078 = vpop.f32.mrf.mxu0
  %v10079 = vpop.f32.mrf.mxu0
  %v10080 = vadd.f32 0.0, %v10079
  %v10081 = vpop.f32.mrf.mxu0
  %10082 = vmatprep.mubr.bf16.mxu0 0
  %10083 = vmatmul.mubr.bf16.gmra.mxu0 %v9969
  %v10084 = vpop.f32.mrf.mxu0
  %v10085 = vadd.f32 0.0, %v10084
  %v10086 = vpop.f32.mrf.mxu0
  %v10087 = vpop.f32.mrf.mxu0
  %v10088 = vadd.f32 0.0, %v10087
  %v10089 = vpop.f32.mrf.mxu0
  %10090 = vmatprep.mubr.bf16.mxu0 0
  %10091 = vmatmul.mubr.bf16.gmra.mxu0 %v9977
  %v10092 = vpop.f32.mrf.mxu0
  %v10093 = vadd.f32 0.0, %v10092
  %v10094 = vpop.f32.mrf.mxu0
  %v10095 = vpop.f32.mrf.mxu0
  %v10096 = vadd.f32 0.0, %v10095
  %v10097 = vpop.f32.mrf.mxu0
  %10098 = vmatprep.mubr.bf16.mxu0 0
  %10099 = vmatmul.mubr.bf16.gmra.mxu0 %v9980
  %v10100 = vpop.f32.mrf.mxu0
  %v10101 = vadd.f32 0.0, %v10100
  %v10102 = vpop.f32.mrf.mxu0
  %v10103 = vpop.f32.mrf.mxu0
  %v10104 = vpop.f32.mrf.mxu0
  %10105 = vdwg.mxu0
  %v10106 = vadd.f32 %v9881, %v10069
  %v10107 = vadd.f32 %v9882, %v10072
  %v10108 = vadd.f32 %v9883, %v10077
  %v10109 = vadd.f32 %v9884, %v10080
  %v10110 = vadd.f32 %v9885, %v10085
  %v10111 = vadd.f32 %v9886, %v10088
  %v10112 = vadd.f32 %v9887, %v10093
  %v10113 = vadd.f32 %v9888, %v10096
  %v10114 = vadd.f32 %v9889, %v10101
  %v10115 = vld [vmem:[%s0 + $0x30] sm:$0xf]
  %v10116 = vld [vmem:[%s0 + $0x4c] sm:$0xf]
  %v10117 = vld [vmem:[%s0 + $0x68] sm:$0xf]
  %v10118 = vld [vmem:[%s0 + $0x84] sm:$0xf]
  %v10119 = vld [vmem:[%s0 + $0xa0] sm:$0xf]
  %v10120 = vld [vmem:[%s0 + $0xbc] sm:$0xf]
  %v10121 = vld [vmem:[%s0 + $0xd8] sm:$0xf]
  %v10122 = vld [vmem:[%s0 + $0xf4] sm:$0xf]
  %v10123 = vld [vmem:[%s0 + $0x110] sm:$0xf]
  %v10124 = vld [vmem:[%s0 + $0x12c] sm:$0x1]
  %s10125 = scalar_lea.vmem %s1, 3264
  %v10126 = vld [vmem:[%s10125] sm:$0xf]
  %v10127 = vld [vmem:[%s10125 + $0x4] sm:$0xf]
  %v10128 = vld [vmem:[%s10125 + $0x8] sm:$0xf]
  %v10129 = vld [vmem:[%s10125 + $0xc] sm:$0xf]
  %v10130 = vld [vmem:[%s10125 + $0x10] sm:$0xf]
  %v10131 = vld [vmem:[%s10125 + $0x14] sm:$0xf]
  %v10132 = vld [vmem:[%s10125 + $0x18] sm:$0xf]
  %v10133 = vld [vmem:[%s10125 + $0x1c] sm:$0xf]
  %v10134 = vld [vmem:[%s10125 + $0x20] sm:$0xf]
  %v10135 = vld [vmem:[%s10125 + $0x24] sm:$0xf]
  %v10136 = vld [vmem:[%s10125 + $0x28] sm:$0xf]
  %v10137 = vld [vmem:[%s10125 + $0x2c] sm:$0xf]
  %v10138 = vld [vmem:[%s10125 + $0x30] sm:$0xf]
  %v10139 = vld [vmem:[%s10125 + $0x34] sm:$0xf]
  %v10140 = vld [vmem:[%s10125 + $0x38] sm:$0xf]
  %v10141 = vld [vmem:[%s10125 + $0x3c] sm:$0xf]
  %v10152 = vunpack.c.l.b16 %v10115
  %v10153 = vunpack.c.l.b16 %v10116
  %v10154 = vunpack.c.l.b16 %v10117
  %v10155 = vunpack.c.l.b16 %v10118
  %v10156 = vunpack.c.l.b16 %v10119
  %v10157 = vunpack.c.l.b16 %v10120
  %v10158 = vunpack.c.l.b16 %v10121
  %v10159 = vunpack.c.l.b16 %v10122
  %v10160 = vunpack.c.l.b16 %v10123
  %v10161 = vunpack.c.l.b16 %v10124
  %v10162 = vpack.c.b16 %v10153, %v10152
  %v10163 = vpack.c.b16 %v10155, %v10154
  %v10164 = vpack.c.b16 %v10157, %v10156
  %v10165 = vpack.c.b16 %v10159, %v10158
  %v10166 = vpack.c.b16 %v10161, %v10160
  %v10168 = vshrl.u32 %v10162, 16
  %v10170 = vshll.u32 %v10162, 16
  %v10172 = vrot.slane %v10170, 1
  %v10173 = vor.u32 %v10168, %v10172
  %v10175 = vshll.u32 %v10163, 16
  %v10177 = vrot.slane %v10175, 1
  %v10178 = vsel %vm412, %v10173, %v10177
  %v10179 = vshrl.u32 %v10163, 16
  %v10181 = vor.u32 %v10179, %v10177
  %v10183 = vshll.u32 %v10164, 16
  %v10185 = vrot.slane %v10183, 1
  %v10186 = vsel %vm412, %v10181, %v10185
  %v10187 = vshrl.u32 %v10164, 16
  %v10189 = vor.u32 %v10187, %v10185
  %v10191 = vshll.u32 %v10165, 16
  %v10193 = vrot.slane %v10191, 1
  %v10194 = vsel %vm412, %v10189, %v10193
  %v10195 = vshrl.u32 %v10165, 16
  %v10197 = vor.u32 %v10195, %v10193
  %v10199 = vshll.u32 %v10166, 16
  %v10201 = vrot.slane %v10199, 1
  %v10202 = vsel %vm412, %v10197, %v10201
  %v10203 = vshrl.u32 %v10166, 16
  %v10205 = vor.u32 %v10203, %v10201
  %v10227 = vunpack.c.l.b16 %v10126
  %v10228 = vunpack.c.l.b16 %v10127
  %v10229 = vunpack.c.l.b16 %v10128
  %v10230 = vunpack.c.l.b16 %v10129
  %v10231 = vunpack.c.l.b16 %v10130
  %v10232 = vunpack.c.l.b16 %v10131
  %v10233 = vunpack.c.l.b16 %v10132
  %v10234 = vunpack.c.l.b16 %v10133
  %v10235 = vunpack.c.l.b16 %v10134
  %v10236 = vunpack.c.l.b16 %v10135
  %v10237 = vunpack.c.l.b16 %v10136
  %v10238 = vunpack.c.l.b16 %v10137
  %v10239 = vunpack.c.l.b16 %v10138
  %v10240 = vunpack.c.l.b16 %v10139
  %v10241 = vunpack.c.l.b16 %v10140
  %v10242 = vunpack.c.l.b16 %v10141
  %v10243 = vpack.c.b16 %v10228, %v10227
  %v10244 = vpack.c.b16 %v10230, %v10229
  %v10245 = vpack.c.b16 %v10232, %v10231
  %v10246 = vpack.c.b16 %v10234, %v10233
  %v10247 = vpack.c.b16 %v10236, %v10235
  %v10248 = vpack.c.b16 %v10238, %v10237
  %v10249 = vpack.c.b16 %v10240, %v10239
  %v10250 = vpack.c.b16 %v10242, %v10241
  %10259 = vmatprep.subr.bf16.mxu0 0
  %10260 = vmatpush1.bf16.msra.mxu0 %v10250
  %10261 = vmatprep.subr.bf16.mxu0 0
  %10262 = vmatpush1.bf16.msra.mxu0 %v10249
  %10263 = vmatprep.subr.bf16.mxu0 0
  %10264 = vmatpush1.bf16.msra.mxu0 %v10248
  %10265 = vmatprep.subr.bf16.mxu0 0
  %10266 = vmatpush1.bf16.msra.mxu0 %v10247
  %10267 = vmatprep.subr.bf16.mxu0 0
  %10268 = vmatpush1.bf16.msra.mxu0 %v10246
  %10269 = vmatprep.subr.bf16.mxu0 0
  %10270 = vmatpush1.bf16.msra.mxu0 %v10245
  %10271 = vmatprep.subr.bf16.mxu0 0
  %10272 = vmatpush1.bf16.msra.mxu0 %v10244
  %10273 = vmatprep.subr.bf16.mxu0 0
  %10274 = vmatpush1.bf16.msra.mxu0 %v10243
  %10275 = vmatprep.subr.bf16.mxu0 0
  %10276 = vmatpush2.bf16.msra.mxu0 0
  %10277 = vmatprep.subr.bf16.mxu0 0
  %10278 = vmatpush2.bf16.msra.mxu0 0
  %10279 = vmatprep.subr.bf16.mxu0 0
  %10280 = vmatpush2.bf16.msra.mxu0 0
  %10281 = vmatprep.subr.bf16.mxu0 0
  %10282 = vmatpush2.bf16.msra.mxu0 0
  %10283 = vmatprep.subr.bf16.mxu0 0
  %10284 = vmatpush2.bf16.msra.mxu0 0
  %10285 = vmatprep.subr.bf16.mxu0 0
  %10286 = vmatpush2.bf16.msra.mxu0 0
  %10287 = vmatprep.subr.bf16.mxu0 0
  %10288 = vmatpush2.bf16.msra.mxu0 0
  %10289 = vmatprep.subr.bf16.mxu0 0
  %10290 = vmatpush2.bf16.msra.mxu0 0
  %10291 = vmatprep.mubr.bf16.mxu0 0
  %10292 = vmatmul.mubr.bf16.gmra.mxu0 %v10178
  %v10293 = vpop.f32.mrf.mxu0
  %v10294 = vadd.f32 0.0, %v10293
  %v10295 = vpop.f32.mrf.mxu0
  %v10296 = vpop.f32.mrf.mxu0
  %v10297 = vadd.f32 0.0, %v10296
  %v10298 = vpop.f32.mrf.mxu0
  %10299 = vmatprep.mubr.bf16.mxu0 0
  %10300 = vmatmul.mubr.bf16.gmra.mxu0 %v10186
  %v10301 = vpop.f32.mrf.mxu0
  %v10302 = vadd.f32 0.0, %v10301
  %v10303 = vpop.f32.mrf.mxu0
  %v10304 = vpop.f32.mrf.mxu0
  %v10305 = vadd.f32 0.0, %v10304
  %v10306 = vpop.f32.mrf.mxu0
  %10307 = vmatprep.mubr.bf16.mxu0 0
  %10308 = vmatmul.mubr.bf16.gmra.mxu0 %v10194
  %v10309 = vpop.f32.mrf.mxu0
  %v10310 = vadd.f32 0.0, %v10309
  %v10311 = vpop.f32.mrf.mxu0
  %v10312 = vpop.f32.mrf.mxu0
  %v10313 = vadd.f32 0.0, %v10312
  %v10314 = vpop.f32.mrf.mxu0
  %10315 = vmatprep.mubr.bf16.mxu0 0
  %10316 = vmatmul.mubr.bf16.gmra.mxu0 %v10202
  %v10317 = vpop.f32.mrf.mxu0
  %v10318 = vadd.f32 0.0, %v10317
  %v10319 = vpop.f32.mrf.mxu0
  %v10320 = vpop.f32.mrf.mxu0
  %v10321 = vadd.f32 0.0, %v10320
  %v10322 = vpop.f32.mrf.mxu0
  %10323 = vmatprep.mubr.bf16.mxu0 0
  %10324 = vmatmul.mubr.bf16.gmra.mxu0 %v10205
  %v10325 = vpop.f32.mrf.mxu0
  %v10326 = vadd.f32 0.0, %v10325
  %v10327 = vpop.f32.mrf.mxu0
  %v10328 = vpop.f32.mrf.mxu0
  %v10329 = vpop.f32.mrf.mxu0
  %10330 = vdwg.mxu0
  %v10331 = vadd.f32 %v10106, %v10294
  %v10332 = vadd.f32 %v10107, %v10297
  %v10333 = vadd.f32 %v10108, %v10302
  %v10334 = vadd.f32 %v10109, %v10305
  %v10335 = vadd.f32 %v10110, %v10310
  %v10336 = vadd.f32 %v10111, %v10313
  %v10337 = vadd.f32 %v10112, %v10318
  %v10338 = vadd.f32 %v10113, %v10321
  %v10339 = vadd.f32 %v10114, %v10326
  %v10340 = vld [vmem:[%s37 + $0x30] sm:$0xf]
  %v10341 = vld [vmem:[%s37 + $0x4c] sm:$0xf]
  %v10342 = vld [vmem:[%s37 + $0x68] sm:$0xf]
  %v10343 = vld [vmem:[%s37 + $0x84] sm:$0xf]
  %v10344 = vld [vmem:[%s37 + $0xa0] sm:$0xf]
  %v10345 = vld [vmem:[%s37 + $0xbc] sm:$0xf]
  %v10346 = vld [vmem:[%s37 + $0xd8] sm:$0xf]
  %v10347 = vld [vmem:[%s37 + $0xf4] sm:$0xf]
  %v10348 = vld [vmem:[%s37 + $0x110] sm:$0xf]
  %v10349 = vld [vmem:[%s37 + $0x12c] sm:$0x1]
  %s10350 = scalar_lea.vmem %s1, 3328
  %v10351 = vld [vmem:[%s10350] sm:$0xf]
  %v10352 = vld [vmem:[%s10350 + $0x4] sm:$0xf]
  %v10353 = vld [vmem:[%s10350 + $0x8] sm:$0xf]
  %v10354 = vld [vmem:[%s10350 + $0xc] sm:$0xf]
  %v10355 = vld [vmem:[%s10350 + $0x10] sm:$0xf]
  %v10356 = vld [vmem:[%s10350 + $0x14] sm:$0xf]
  %v10357 = vld [vmem:[%s10350 + $0x18] sm:$0xf]
  %v10358 = vld [vmem:[%s10350 + $0x1c] sm:$0xf]
  %v10359 = vld [vmem:[%s10350 + $0x20] sm:$0xf]
  %v10360 = vld [vmem:[%s10350 + $0x24] sm:$0xf]
  %v10361 = vld [vmem:[%s10350 + $0x28] sm:$0xf]
  %v10362 = vld [vmem:[%s10350 + $0x2c] sm:$0xf]
  %v10363 = vld [vmem:[%s10350 + $0x30] sm:$0xf]
  %v10364 = vld [vmem:[%s10350 + $0x34] sm:$0xf]
  %v10365 = vld [vmem:[%s10350 + $0x38] sm:$0xf]
  %v10366 = vld [vmem:[%s10350 + $0x3c] sm:$0xf]
  %v10377 = vunpack.c.l.b16 %v10340
  %v10378 = vunpack.c.l.b16 %v10341
  %v10379 = vunpack.c.l.b16 %v10342
  %v10380 = vunpack.c.l.b16 %v10343
  %v10381 = vunpack.c.l.b16 %v10344
  %v10382 = vunpack.c.l.b16 %v10345
  %v10383 = vunpack.c.l.b16 %v10346
  %v10384 = vunpack.c.l.b16 %v10347
  %v10385 = vunpack.c.l.b16 %v10348
  %v10386 = vunpack.c.l.b16 %v10349
  %v10387 = vpack.c.b16 %v10378, %v10377
  %v10388 = vpack.c.b16 %v10380, %v10379
  %v10389 = vpack.c.b16 %v10382, %v10381
  %v10390 = vpack.c.b16 %v10384, %v10383
  %v10391 = vpack.c.b16 %v10386, %v10385
  %v10393 = vshrl.u32 %v10387, 16
  %v10395 = vshll.u32 %v10387, 16
  %v10397 = vrot.slane %v10395, 1
  %v10398 = vor.u32 %v10393, %v10397
  %v10400 = vshll.u32 %v10388, 16
  %v10402 = vrot.slane %v10400, 1
  %v10403 = vsel %vm412, %v10398, %v10402
  %v10404 = vshrl.u32 %v10388, 16
  %v10406 = vor.u32 %v10404, %v10402
  %v10408 = vshll.u32 %v10389, 16
  %v10410 = vrot.slane %v10408, 1
  %v10411 = vsel %vm412, %v10406, %v10410
  %v10412 = vshrl.u32 %v10389, 16
  %v10414 = vor.u32 %v10412, %v10410
  %v10416 = vshll.u32 %v10390, 16
  %v10418 = vrot.slane %v10416, 1
  %v10419 = vsel %vm412, %v10414, %v10418
  %v10420 = vshrl.u32 %v10390, 16
  %v10422 = vor.u32 %v10420, %v10418
  %v10424 = vshll.u32 %v10391, 16
  %v10426 = vrot.slane %v10424, 1
  %v10427 = vsel %vm412, %v10422, %v10426
  %v10428 = vshrl.u32 %v10391, 16
  %v10430 = vor.u32 %v10428, %v10426
  %v10452 = vunpack.c.l.b16 %v10351
  %v10453 = vunpack.c.l.b16 %v10352
  %v10454 = vunpack.c.l.b16 %v10353
  %v10455 = vunpack.c.l.b16 %v10354
  %v10456 = vunpack.c.l.b16 %v10355
  %v10457 = vunpack.c.l.b16 %v10356
  %v10458 = vunpack.c.l.b16 %v10357
  %v10459 = vunpack.c.l.b16 %v10358
  %v10460 = vunpack.c.l.b16 %v10359
  %v10461 = vunpack.c.l.b16 %v10360
  %v10462 = vunpack.c.l.b16 %v10361
  %v10463 = vunpack.c.l.b16 %v10362
  %v10464 = vunpack.c.l.b16 %v10363
  %v10465 = vunpack.c.l.b16 %v10364
  %v10466 = vunpack.c.l.b16 %v10365
  %v10467 = vunpack.c.l.b16 %v10366
  %v10468 = vpack.c.b16 %v10453, %v10452
  %v10469 = vpack.c.b16 %v10455, %v10454
  %v10470 = vpack.c.b16 %v10457, %v10456
  %v10471 = vpack.c.b16 %v10459, %v10458
  %v10472 = vpack.c.b16 %v10461, %v10460
  %v10473 = vpack.c.b16 %v10463, %v10462
  %v10474 = vpack.c.b16 %v10465, %v10464
  %v10475 = vpack.c.b16 %v10467, %v10466
  %10484 = vmatprep.subr.bf16.mxu0 0
  %10485 = vmatpush1.bf16.msra.mxu0 %v10475
  %10486 = vmatprep.subr.bf16.mxu0 0
  %10487 = vmatpush1.bf16.msra.mxu0 %v10474
  %10488 = vmatprep.subr.bf16.mxu0 0
  %10489 = vmatpush1.bf16.msra.mxu0 %v10473
  %10490 = vmatprep.subr.bf16.mxu0 0
  %10491 = vmatpush1.bf16.msra.mxu0 %v10472
  %10492 = vmatprep.subr.bf16.mxu0 0
  %10493 = vmatpush1.bf16.msra.mxu0 %v10471
  %10494 = vmatprep.subr.bf16.mxu0 0
  %10495 = vmatpush1.bf16.msra.mxu0 %v10470
  %10496 = vmatprep.subr.bf16.mxu0 0
  %10497 = vmatpush1.bf16.msra.mxu0 %v10469
  %10498 = vmatprep.subr.bf16.mxu0 0
  %10499 = vmatpush1.bf16.msra.mxu0 %v10468
  %10500 = vmatprep.subr.bf16.mxu0 0
  %10501 = vmatpush2.bf16.msra.mxu0 0
  %10502 = vmatprep.subr.bf16.mxu0 0
  %10503 = vmatpush2.bf16.msra.mxu0 0
  %10504 = vmatprep.subr.bf16.mxu0 0
  %10505 = vmatpush2.bf16.msra.mxu0 0
  %10506 = vmatprep.subr.bf16.mxu0 0
  %10507 = vmatpush2.bf16.msra.mxu0 0
  %10508 = vmatprep.subr.bf16.mxu0 0
  %10509 = vmatpush2.bf16.msra.mxu0 0
  %10510 = vmatprep.subr.bf16.mxu0 0
  %10511 = vmatpush2.bf16.msra.mxu0 0
  %10512 = vmatprep.subr.bf16.mxu0 0
  %10513 = vmatpush2.bf16.msra.mxu0 0
  %10514 = vmatprep.subr.bf16.mxu0 0
  %10515 = vmatpush2.bf16.msra.mxu0 0
  %10516 = vmatprep.mubr.bf16.mxu0 0
  %10517 = vmatmul.mubr.bf16.gmra.mxu0 %v10403
  %v10518 = vpop.f32.mrf.mxu0
  %v10519 = vadd.f32 0.0, %v10518
  %v10520 = vpop.f32.mrf.mxu0
  %v10521 = vpop.f32.mrf.mxu0
  %v10522 = vadd.f32 0.0, %v10521
  %v10523 = vpop.f32.mrf.mxu0
  %10524 = vmatprep.mubr.bf16.mxu0 0
  %10525 = vmatmul.mubr.bf16.gmra.mxu0 %v10411
  %v10526 = vpop.f32.mrf.mxu0
  %v10527 = vadd.f32 0.0, %v10526
  %v10528 = vpop.f32.mrf.mxu0
  %v10529 = vpop.f32.mrf.mxu0
  %v10530 = vadd.f32 0.0, %v10529
  %v10531 = vpop.f32.mrf.mxu0
  %10532 = vmatprep.mubr.bf16.mxu0 0
  %10533 = vmatmul.mubr.bf16.gmra.mxu0 %v10419
  %v10534 = vpop.f32.mrf.mxu0
  %v10535 = vadd.f32 0.0, %v10534
  %v10536 = vpop.f32.mrf.mxu0
  %v10537 = vpop.f32.mrf.mxu0
  %v10538 = vadd.f32 0.0, %v10537
  %v10539 = vpop.f32.mrf.mxu0
  %10540 = vmatprep.mubr.bf16.mxu0 0
  %10541 = vmatmul.mubr.bf16.gmra.mxu0 %v10427
  %v10542 = vpop.f32.mrf.mxu0
  %v10543 = vadd.f32 0.0, %v10542
  %v10544 = vpop.f32.mrf.mxu0
  %v10545 = vpop.f32.mrf.mxu0
  %v10546 = vadd.f32 0.0, %v10545
  %v10547 = vpop.f32.mrf.mxu0
  %10548 = vmatprep.mubr.bf16.mxu0 0
  %10549 = vmatmul.mubr.bf16.gmra.mxu0 %v10430
  %v10550 = vpop.f32.mrf.mxu0
  %v10551 = vadd.f32 0.0, %v10550
  %v10552 = vpop.f32.mrf.mxu0
  %v10553 = vpop.f32.mrf.mxu0
  %v10554 = vpop.f32.mrf.mxu0
  %10555 = vdwg.mxu0
  %v10556 = vadd.f32 %v10331, %v10519
  %v10557 = vadd.f32 %v10332, %v10522
  %v10558 = vadd.f32 %v10333, %v10527
  %v10559 = vadd.f32 %v10334, %v10530
  %v10560 = vadd.f32 %v10335, %v10535
  %v10561 = vadd.f32 %v10336, %v10538
  %v10562 = vadd.f32 %v10337, %v10543
  %v10563 = vadd.f32 %v10338, %v10546
  %v10564 = vadd.f32 %v10339, %v10551
  %v10565 = vld [vmem:[%s0 + $0x30] sm:$0xe]
  %s10566 = scalar_lea.vmem %s1, 3392
  %v10567 = vld [vmem:[%s10566] sm:$0xf]
  %v10568 = vld [vmem:[%s10566 + $0x4] sm:$0xf]
  %v10569 = vld [vmem:[%s10566 + $0x8] sm:$0xf]
  %v10570 = vld [vmem:[%s10566 + $0xc] sm:$0xf]
  %v10571 = vld [vmem:[%s10566 + $0x10] sm:$0xf]
  %v10572 = vld [vmem:[%s10566 + $0x14] sm:$0xf]
  %v10573 = vld [vmem:[%s10566 + $0x18] sm:$0xf]
  %v10574 = vld [vmem:[%s10566 + $0x1c] sm:$0xf]
  %v10575 = vld [vmem:[%s10566 + $0x20] sm:$0xf]
  %v10576 = vld [vmem:[%s10566 + $0x24] sm:$0xf]
  %v10577 = vld [vmem:[%s10566 + $0x28] sm:$0xf]
  %v10578 = vld [vmem:[%s10566 + $0x2c] sm:$0xf]
  %v10579 = vld [vmem:[%s10566 + $0x30] sm:$0xf]
  %v10580 = vld [vmem:[%s10566 + $0x34] sm:$0xf]
  %v10581 = vld [vmem:[%s10566 + $0x38] sm:$0xf]
  %v10582 = vld [vmem:[%s10566 + $0x3c] sm:$0xf]
  %v10584 = vunpack.c.l.b16 %v10565
  %v10585 = vpack.c.b16 %v10153, %v10584
  %v10586 = vrot.slane %v10585, 1
  %v10587 = vrot.slane %v10163, 1
  %v10588 = vsel %vm1650, %v10586, %v10587
  %v10589 = vrot.slane %v10164, 1
  %v10590 = vsel %vm1650, %v10587, %v10589
  %v10591 = vrot.slane %v10165, 1
  %v10592 = vsel %vm1650, %v10589, %v10591
  %v10593 = vrot.slane %v10166, 1
  %v10594 = vsel %vm1650, %v10591, %v10593
  %v10616 = vunpack.c.l.b16 %v10567
  %v10617 = vunpack.c.l.b16 %v10568
  %v10618 = vunpack.c.l.b16 %v10569
  %v10619 = vunpack.c.l.b16 %v10570
  %v10620 = vunpack.c.l.b16 %v10571
  %v10621 = vunpack.c.l.b16 %v10572
  %v10622 = vunpack.c.l.b16 %v10573
  %v10623 = vunpack.c.l.b16 %v10574
  %v10624 = vunpack.c.l.b16 %v10575
  %v10625 = vunpack.c.l.b16 %v10576
  %v10626 = vunpack.c.l.b16 %v10577
  %v10627 = vunpack.c.l.b16 %v10578
  %v10628 = vunpack.c.l.b16 %v10579
  %v10629 = vunpack.c.l.b16 %v10580
  %v10630 = vunpack.c.l.b16 %v10581
  %v10631 = vunpack.c.l.b16 %v10582
  %v10632 = vpack.c.b16 %v10617, %v10616
  %v10633 = vpack.c.b16 %v10619, %v10618
  %v10634 = vpack.c.b16 %v10621, %v10620
  %v10635 = vpack.c.b16 %v10623, %v10622
  %v10636 = vpack.c.b16 %v10625, %v10624
  %v10637 = vpack.c.b16 %v10627, %v10626
  %v10638 = vpack.c.b16 %v10629, %v10628
  %v10639 = vpack.c.b16 %v10631, %v10630
  %10648 = vmatprep.subr.bf16.mxu0 0
  %10649 = vmatpush1.bf16.msra.mxu0 %v10639
  %10650 = vmatprep.subr.bf16.mxu0 0
  %10651 = vmatpush1.bf16.msra.mxu0 %v10638
  %10652 = vmatprep.subr.bf16.mxu0 0
  %10653 = vmatpush1.bf16.msra.mxu0 %v10637
  %10654 = vmatprep.subr.bf16.mxu0 0
  %10655 = vmatpush1.bf16.msra.mxu0 %v10636
  %10656 = vmatprep.subr.bf16.mxu0 0
  %10657 = vmatpush1.bf16.msra.mxu0 %v10635
  %10658 = vmatprep.subr.bf16.mxu0 0
  %10659 = vmatpush1.bf16.msra.mxu0 %v10634
  %10660 = vmatprep.subr.bf16.mxu0 0
  %10661 = vmatpush1.bf16.msra.mxu0 %v10633
  %10662 = vmatprep.subr.bf16.mxu0 0
  %10663 = vmatpush1.bf16.msra.mxu0 %v10632
  %10664 = vmatprep.subr.bf16.mxu0 0
  %10665 = vmatpush2.bf16.msra.mxu0 0
  %10666 = vmatprep.subr.bf16.mxu0 0
  %10667 = vmatpush2.bf16.msra.mxu0 0
  %10668 = vmatprep.subr.bf16.mxu0 0
  %10669 = vmatpush2.bf16.msra.mxu0 0
  %10670 = vmatprep.subr.bf16.mxu0 0
  %10671 = vmatpush2.bf16.msra.mxu0 0
  %10672 = vmatprep.subr.bf16.mxu0 0
  %10673 = vmatpush2.bf16.msra.mxu0 0
  %10674 = vmatprep.subr.bf16.mxu0 0
  %10675 = vmatpush2.bf16.msra.mxu0 0
  %10676 = vmatprep.subr.bf16.mxu0 0
  %10677 = vmatpush2.bf16.msra.mxu0 0
  %10678 = vmatprep.subr.bf16.mxu0 0
  %10679 = vmatpush2.bf16.msra.mxu0 0
  %10680 = vmatprep.mubr.bf16.mxu0 0
  %10681 = vmatmul.mubr.bf16.gmra.mxu0 %v10588
  %v10682 = vpop.f32.mrf.mxu0
  %v10683 = vadd.f32 0.0, %v10682
  %v10684 = vpop.f32.mrf.mxu0
  %v10685 = vpop.f32.mrf.mxu0
  %v10686 = vadd.f32 0.0, %v10685
  %v10687 = vpop.f32.mrf.mxu0
  %10688 = vmatprep.mubr.bf16.mxu0 0
  %10689 = vmatmul.mubr.bf16.gmra.mxu0 %v10590
  %v10690 = vpop.f32.mrf.mxu0
  %v10691 = vadd.f32 0.0, %v10690
  %v10692 = vpop.f32.mrf.mxu0
  %v10693 = vpop.f32.mrf.mxu0
  %v10694 = vadd.f32 0.0, %v10693
  %v10695 = vpop.f32.mrf.mxu0
  %10696 = vmatprep.mubr.bf16.mxu0 0
  %10697 = vmatmul.mubr.bf16.gmra.mxu0 %v10592
  %v10698 = vpop.f32.mrf.mxu0
  %v10699 = vadd.f32 0.0, %v10698
  %v10700 = vpop.f32.mrf.mxu0
  %v10701 = vpop.f32.mrf.mxu0
  %v10702 = vadd.f32 0.0, %v10701
  %v10703 = vpop.f32.mrf.mxu0
  %10704 = vmatprep.mubr.bf16.mxu0 0
  %10705 = vmatmul.mubr.bf16.gmra.mxu0 %v10594
  %v10706 = vpop.f32.mrf.mxu0
  %v10707 = vadd.f32 0.0, %v10706
  %v10708 = vpop.f32.mrf.mxu0
  %v10709 = vpop.f32.mrf.mxu0
  %v10710 = vadd.f32 0.0, %v10709
  %v10711 = vpop.f32.mrf.mxu0
  %10712 = vmatprep.mubr.bf16.mxu0 0
  %10713 = vmatmul.mubr.bf16.gmra.mxu0 %v10593
  %v10714 = vpop.f32.mrf.mxu0
  %v10715 = vadd.f32 0.0, %v10714
  %v10716 = vpop.f32.mrf.mxu0
  %v10717 = vpop.f32.mrf.mxu0
  %v10718 = vpop.f32.mrf.mxu0
  %10719 = vdwg.mxu0
  %v10720 = vadd.f32 %v10556, %v10683
  %v10721 = vadd.f32 %v10557, %v10686
  %v10722 = vadd.f32 %v10558, %v10691
  %v10723 = vadd.f32 %v10559, %v10694
  %v10724 = vadd.f32 %v10560, %v10699
  %v10725 = vadd.f32 %v10561, %v10702
  %v10726 = vadd.f32 %v10562, %v10707
  %v10727 = vadd.f32 %v10563, %v10710
  %v10728 = vadd.f32 %v10564, %v10715
  %10729 = vst [vmem:[%s2 + $0x28] sm:$0xff] %v10720
  %10730 = vst [vmem:[%s2 + $0x60] sm:$0xff] %v10721
  %10731 = vst [vmem:[%s2 + $0x98] sm:$0xff] %v10722
  %10732 = vst [vmem:[%s2 + $0xd0] sm:$0xff] %v10723
  %10733 = vst [vmem:[%s2 + $0x108] sm:$0xff] %v10724
  %10734 = vst [vmem:[%s2 + $0x140] sm:$0xff] %v10725
  %10735 = vst [vmem:[%s2 + $0x178] sm:$0xff] %v10726
  %10736 = vst [vmem:[%s2 + $0x1b0] sm:$0xff] %v10727
  %10737 = vst [vmem:[%s2 + $0x1e8] sm:$0xff] %v10728
  %v10738 = vld [vmem:[%s0 + $0x18] sm:$0xf]
  %v10739 = vld [vmem:[%s0 + $0x34] sm:$0xf]
  %v10740 = vld [vmem:[%s0 + $0x50] sm:$0xf]
  %v10741 = vld [vmem:[%s0 + $0x6c] sm:$0xf]
  %v10742 = vld [vmem:[%s0 + $0x88] sm:$0xf]
  %v10743 = vld [vmem:[%s0 + $0xa4] sm:$0xf]
  %v10744 = vld [vmem:[%s0 + $0xc0] sm:$0xf]
  %v10745 = vld [vmem:[%s0 + $0xdc] sm:$0xf]
  %v10746 = vld [vmem:[%s0 + $0xf8] sm:$0xf]
  %s10747 = scalar_lea.vmem %s1, 3456
  %v10748 = vld [vmem:[%s10747] sm:$0xf]
  %v10749 = vld [vmem:[%s10747 + $0x4] sm:$0xf]
  %v10750 = vld [vmem:[%s10747 + $0x8] sm:$0xf]
  %v10751 = vld [vmem:[%s10747 + $0xc] sm:$0xf]
  %v10752 = vld [vmem:[%s10747 + $0x10] sm:$0xf]
  %v10753 = vld [vmem:[%s10747 + $0x14] sm:$0xf]
  %v10754 = vld [vmem:[%s10747 + $0x18] sm:$0xf]
  %v10755 = vld [vmem:[%s10747 + $0x1c] sm:$0xf]
  %v10756 = vld [vmem:[%s10747 + $0x20] sm:$0xf]
  %v10757 = vld [vmem:[%s10747 + $0x24] sm:$0xf]
  %v10758 = vld [vmem:[%s10747 + $0x28] sm:$0xf]
  %v10759 = vld [vmem:[%s10747 + $0x2c] sm:$0xf]
  %v10760 = vld [vmem:[%s10747 + $0x30] sm:$0xf]
  %v10761 = vld [vmem:[%s10747 + $0x34] sm:$0xf]
  %v10762 = vld [vmem:[%s10747 + $0x38] sm:$0xf]
  %v10763 = vld [vmem:[%s10747 + $0x3c] sm:$0xf]
  %v10764 = vld [vmem:[%s37 + $0x18] sm:$0xf]
  %v10765 = vld [vmem:[%s37 + $0x34] sm:$0xf]
  %v10766 = vld [vmem:[%s37 + $0x50] sm:$0xf]
  %v10767 = vld [vmem:[%s37 + $0x6c] sm:$0xf]
  %v10768 = vld [vmem:[%s37 + $0x88] sm:$0xf]
  %v10769 = vld [vmem:[%s37 + $0xa4] sm:$0xf]
  %v10770 = vld [vmem:[%s37 + $0xc0] sm:$0xf]
  %v10771 = vld [vmem:[%s37 + $0xdc] sm:$0xf]
  %v10772 = vld [vmem:[%s37 + $0xf8] sm:$0xf]
  %s10773 = scalar_lea.vmem %s1, 3520
  %v10774 = vld [vmem:[%s10773] sm:$0xf]
  %v10775 = vld [vmem:[%s10773 + $0x4] sm:$0xf]
  %v10776 = vld [vmem:[%s10773 + $0x8] sm:$0xf]
  %v10777 = vld [vmem:[%s10773 + $0xc] sm:$0xf]
  %v10778 = vld [vmem:[%s10773 + $0x10] sm:$0xf]
  %v10779 = vld [vmem:[%s10773 + $0x14] sm:$0xf]
  %v10780 = vld [vmem:[%s10773 + $0x18] sm:$0xf]
  %v10781 = vld [vmem:[%s10773 + $0x1c] sm:$0xf]
  %v10782 = vld [vmem:[%s10773 + $0x20] sm:$0xf]
  %v10783 = vld [vmem:[%s10773 + $0x24] sm:$0xf]
  %v10784 = vld [vmem:[%s10773 + $0x28] sm:$0xf]
  %v10785 = vld [vmem:[%s10773 + $0x2c] sm:$0xf]
  %v10786 = vld [vmem:[%s10773 + $0x30] sm:$0xf]
  %v10787 = vld [vmem:[%s10773 + $0x34] sm:$0xf]
  %v10788 = vld [vmem:[%s10773 + $0x38] sm:$0xf]
  %v10789 = vld [vmem:[%s10773 + $0x3c] sm:$0xf]
  %v10799 = vunpack.c.l.b16 %v10764
  %v10800 = vunpack.c.l.b16 %v10765
  %v10801 = vunpack.c.l.b16 %v10766
  %v10802 = vunpack.c.l.b16 %v10767
  %v10803 = vunpack.c.l.b16 %v10768
  %v10804 = vunpack.c.l.b16 %v10769
  %v10805 = vunpack.c.l.b16 %v10770
  %v10806 = vunpack.c.l.b16 %v10771
  %v10807 = vunpack.c.l.b16 %v10772
  %v10808 = vpack.c.b16 %v10800, %v10799
  %v10809 = vpack.c.b16 %v10802, %v10801
  %v10810 = vpack.c.b16 %v10804, %v10803
  %v10811 = vpack.c.b16 %v10806, %v10805
  %v10812 = vpack.c.b16 %v10807, %v10807
  %v10834 = vunpack.c.l.b16 %v10774
  %v10835 = vunpack.c.l.b16 %v10775
  %v10836 = vunpack.c.l.b16 %v10776
  %v10837 = vunpack.c.l.b16 %v10777
  %v10838 = vunpack.c.l.b16 %v10778
  %v10839 = vunpack.c.l.b16 %v10779
  %v10840 = vunpack.c.l.b16 %v10780
  %v10841 = vunpack.c.l.b16 %v10781
  %v10842 = vunpack.c.l.b16 %v10782
  %v10843 = vunpack.c.l.b16 %v10783
  %v10844 = vunpack.c.l.b16 %v10784
  %v10845 = vunpack.c.l.b16 %v10785
  %v10846 = vunpack.c.l.b16 %v10786
  %v10847 = vunpack.c.l.b16 %v10787
  %v10848 = vunpack.c.l.b16 %v10788
  %v10849 = vunpack.c.l.b16 %v10789
  %v10850 = vpack.c.b16 %v10835, %v10834
  %v10851 = vpack.c.b16 %v10837, %v10836
  %v10852 = vpack.c.b16 %v10839, %v10838
  %v10853 = vpack.c.b16 %v10841, %v10840
  %v10854 = vpack.c.b16 %v10843, %v10842
  %v10855 = vpack.c.b16 %v10845, %v10844
  %v10856 = vpack.c.b16 %v10847, %v10846
  %v10857 = vpack.c.b16 %v10849, %v10848
  %10866 = vmatprep.subr.bf16.mxu0 0
  %10867 = vmatpush1.bf16.msra.mxu0 %v10857
  %10868 = vmatprep.subr.bf16.mxu0 0
  %10869 = vmatpush1.bf16.msra.mxu0 %v10856
  %10870 = vmatprep.subr.bf16.mxu0 0
  %10871 = vmatpush1.bf16.msra.mxu0 %v10855
  %10872 = vmatprep.subr.bf16.mxu0 0
  %10873 = vmatpush1.bf16.msra.mxu0 %v10854
  %10874 = vmatprep.subr.bf16.mxu0 0
  %10875 = vmatpush1.bf16.msra.mxu0 %v10853
  %10876 = vmatprep.subr.bf16.mxu0 0
  %10877 = vmatpush1.bf16.msra.mxu0 %v10852
  %10878 = vmatprep.subr.bf16.mxu0 0
  %10879 = vmatpush1.bf16.msra.mxu0 %v10851
  %10880 = vmatprep.subr.bf16.mxu0 0
  %10881 = vmatpush1.bf16.msra.mxu0 %v10850
  %10882 = vmatprep.subr.bf16.mxu0 0
  %10883 = vmatpush2.bf16.msra.mxu0 0
  %10884 = vmatprep.subr.bf16.mxu0 0
  %10885 = vmatpush2.bf16.msra.mxu0 0
  %10886 = vmatprep.subr.bf16.mxu0 0
  %10887 = vmatpush2.bf16.msra.mxu0 0
  %10888 = vmatprep.subr.bf16.mxu0 0
  %10889 = vmatpush2.bf16.msra.mxu0 0
  %10890 = vmatprep.subr.bf16.mxu0 0
  %10891 = vmatpush2.bf16.msra.mxu0 0
  %10892 = vmatprep.subr.bf16.mxu0 0
  %10893 = vmatpush2.bf16.msra.mxu0 0
  %10894 = vmatprep.subr.bf16.mxu0 0
  %10895 = vmatpush2.bf16.msra.mxu0 0
  %10896 = vmatprep.subr.bf16.mxu0 0
  %10897 = vmatpush2.bf16.msra.mxu0 0
  %10898 = vmatprep.mubr.bf16.mxu0 0
  %10899 = vmatmul.mubr.bf16.gmra.mxu0 %v10808
  %v10900 = vpop.f32.mrf.mxu0
  %v10901 = vadd.f32 0.0, %v10900
  %v10902 = vpop.f32.mrf.mxu0
  %v10903 = vpop.f32.mrf.mxu0
  %v10904 = vadd.f32 0.0, %v10903
  %v10905 = vpop.f32.mrf.mxu0
  %10906 = vmatprep.mubr.bf16.mxu0 0
  %10907 = vmatmul.mubr.bf16.gmra.mxu0 %v10809
  %v10908 = vpop.f32.mrf.mxu0
  %v10909 = vadd.f32 0.0, %v10908
  %v10910 = vpop.f32.mrf.mxu0
  %v10911 = vpop.f32.mrf.mxu0
  %v10912 = vadd.f32 0.0, %v10911
  %v10913 = vpop.f32.mrf.mxu0
  %10914 = vmatprep.mubr.bf16.mxu0 0
  %10915 = vmatmul.mubr.bf16.gmra.mxu0 %v10810
  %v10916 = vpop.f32.mrf.mxu0
  %v10917 = vadd.f32 0.0, %v10916
  %v10918 = vpop.f32.mrf.mxu0
  %v10919 = vpop.f32.mrf.mxu0
  %v10920 = vadd.f32 0.0, %v10919
  %v10921 = vpop.f32.mrf.mxu0
  %10922 = vmatprep.mubr.bf16.mxu0 0
  %10923 = vmatmul.mubr.bf16.gmra.mxu0 %v10811
  %v10924 = vpop.f32.mrf.mxu0
  %v10925 = vadd.f32 0.0, %v10924
  %v10926 = vpop.f32.mrf.mxu0
  %v10927 = vpop.f32.mrf.mxu0
  %v10928 = vadd.f32 0.0, %v10927
  %v10929 = vpop.f32.mrf.mxu0
  %10930 = vmatprep.mubr.bf16.mxu0 0
  %10931 = vmatmul.mubr.bf16.gmra.mxu0 %v10812
  %v10932 = vpop.f32.mrf.mxu0
  %v10933 = vadd.f32 0.0, %v10932
  %v10934 = vpop.f32.mrf.mxu0
  %v10935 = vpop.f32.mrf.mxu0
  %v10936 = vpop.f32.mrf.mxu0
  %10937 = vdwg.mxu0
  %v10947 = vunpack.c.l.b16 %v10738
  %v10948 = vunpack.c.l.b16 %v10739
  %v10949 = vunpack.c.l.b16 %v10740
  %v10950 = vunpack.c.l.b16 %v10741
  %v10951 = vunpack.c.l.b16 %v10742
  %v10952 = vunpack.c.l.b16 %v10743
  %v10953 = vunpack.c.l.b16 %v10744
  %v10954 = vunpack.c.l.b16 %v10745
  %v10955 = vunpack.c.l.b16 %v10746
  %v10956 = vpack.c.b16 %v10948, %v10947
  %v10957 = vpack.c.b16 %v10950, %v10949
  %v10958 = vpack.c.b16 %v10952, %v10951
  %v10959 = vpack.c.b16 %v10954, %v10953
  %v10960 = vpack.c.b16 %v10955, %v10955
  %v10982 = vunpack.c.l.b16 %v10748
  %v10983 = vunpack.c.l.b16 %v10749
  %v10984 = vunpack.c.l.b16 %v10750
  %v10985 = vunpack.c.l.b16 %v10751
  %v10986 = vunpack.c.l.b16 %v10752
  %v10987 = vunpack.c.l.b16 %v10753
  %v10988 = vunpack.c.l.b16 %v10754
  %v10989 = vunpack.c.l.b16 %v10755
  %v10990 = vunpack.c.l.b16 %v10756
  %v10991 = vunpack.c.l.b16 %v10757
  %v10992 = vunpack.c.l.b16 %v10758
  %v10993 = vunpack.c.l.b16 %v10759
  %v10994 = vunpack.c.l.b16 %v10760
  %v10995 = vunpack.c.l.b16 %v10761
  %v10996 = vunpack.c.l.b16 %v10762
  %v10997 = vunpack.c.l.b16 %v10763
  %v10998 = vpack.c.b16 %v10983, %v10982
  %v10999 = vpack.c.b16 %v10985, %v10984
  %v11000 = vpack.c.b16 %v10987, %v10986
  %v11001 = vpack.c.b16 %v10989, %v10988
  %v11002 = vpack.c.b16 %v10991, %v10990
  %v11003 = vpack.c.b16 %v10993, %v10992
  %v11004 = vpack.c.b16 %v10995, %v10994
  %v11005 = vpack.c.b16 %v10997, %v10996
  %11014 = vmatprep.subr.bf16.mxu0 0
  %11015 = vmatpush1.bf16.msra.mxu0 %v11005
  %11016 = vmatprep.subr.bf16.mxu0 0
  %11017 = vmatpush1.bf16.msra.mxu0 %v11004
  %11018 = vmatprep.subr.bf16.mxu0 0
  %11019 = vmatpush1.bf16.msra.mxu0 %v11003
  %11020 = vmatprep.subr.bf16.mxu0 0
  %11021 = vmatpush1.bf16.msra.mxu0 %v11002
  %11022 = vmatprep.subr.bf16.mxu0 0
  %11023 = vmatpush1.bf16.msra.mxu0 %v11001
  %11024 = vmatprep.subr.bf16.mxu0 0
  %11025 = vmatpush1.bf16.msra.mxu0 %v11000
  %11026 = vmatprep.subr.bf16.mxu0 0
  %11027 = vmatpush1.bf16.msra.mxu0 %v10999
  %11028 = vmatprep.subr.bf16.mxu0 0
  %11029 = vmatpush1.bf16.msra.mxu0 %v10998
  %11030 = vmatprep.subr.bf16.mxu0 0
  %11031 = vmatpush2.bf16.msra.mxu0 0
  %11032 = vmatprep.subr.bf16.mxu0 0
  %11033 = vmatpush2.bf16.msra.mxu0 0
  %11034 = vmatprep.subr.bf16.mxu0 0
  %11035 = vmatpush2.bf16.msra.mxu0 0
  %11036 = vmatprep.subr.bf16.mxu0 0
  %11037 = vmatpush2.bf16.msra.mxu0 0
  %11038 = vmatprep.subr.bf16.mxu0 0
  %11039 = vmatpush2.bf16.msra.mxu0 0
  %11040 = vmatprep.subr.bf16.mxu0 0
  %11041 = vmatpush2.bf16.msra.mxu0 0
  %11042 = vmatprep.subr.bf16.mxu0 0
  %11043 = vmatpush2.bf16.msra.mxu0 0
  %11044 = vmatprep.subr.bf16.mxu0 0
  %11045 = vmatpush2.bf16.msra.mxu0 0
  %11046 = vmatprep.mubr.bf16.mxu0 0
  %11047 = vmatmul.mubr.bf16.gmra.mxu0 %v10956
  %v11048 = vpop.f32.mrf.mxu0
  %v11049 = vadd.f32 %v10901, %v11048
  %v11050 = vpop.f32.mrf.mxu0
  %v11051 = vpop.f32.mrf.mxu0
  %v11052 = vadd.f32 %v10904, %v11051
  %v11053 = vpop.f32.mrf.mxu0
  %11054 = vmatprep.mubr.bf16.mxu0 0
  %11055 = vmatmul.mubr.bf16.gmra.mxu0 %v10957
  %v11056 = vpop.f32.mrf.mxu0
  %v11057 = vadd.f32 %v10909, %v11056
  %v11058 = vpop.f32.mrf.mxu0
  %v11059 = vpop.f32.mrf.mxu0
  %v11060 = vadd.f32 %v10912, %v11059
  %v11061 = vpop.f32.mrf.mxu0
  %11062 = vmatprep.mubr.bf16.mxu0 0
  %11063 = vmatmul.mubr.bf16.gmra.mxu0 %v10958
  %v11064 = vpop.f32.mrf.mxu0
  %v11065 = vadd.f32 %v10917, %v11064
  %v11066 = vpop.f32.mrf.mxu0
  %v11067 = vpop.f32.mrf.mxu0
  %v11068 = vadd.f32 %v10920, %v11067
  %v11069 = vpop.f32.mrf.mxu0
  %11070 = vmatprep.mubr.bf16.mxu0 0
  %11071 = vmatmul.mubr.bf16.gmra.mxu0 %v10959
  %v11072 = vpop.f32.mrf.mxu0
  %v11073 = vadd.f32 %v10925, %v11072
  %v11074 = vpop.f32.mrf.mxu0
  %v11075 = vpop.f32.mrf.mxu0
  %v11076 = vadd.f32 %v10928, %v11075
  %v11077 = vpop.f32.mrf.mxu0
  %11078 = vmatprep.mubr.bf16.mxu0 0
  %11079 = vmatmul.mubr.bf16.gmra.mxu0 %v10960
  %v11080 = vpop.f32.mrf.mxu0
  %v11081 = vadd.f32 %v10933, %v11080
  %v11082 = vpop.f32.mrf.mxu0
  %v11083 = vpop.f32.mrf.mxu0
  %v11084 = vpop.f32.mrf.mxu0
  %11085 = vdwg.mxu0
  %v11086 = vld [vmem:[%s0 + $0x18] sm:$0xf]
  %v11087 = vld [vmem:[%s0 + $0x34] sm:$0xf]
  %v11088 = vld [vmem:[%s0 + $0x50] sm:$0xf]
  %v11089 = vld [vmem:[%s0 + $0x6c] sm:$0xf]
  %v11090 = vld [vmem:[%s0 + $0x88] sm:$0xf]
  %v11091 = vld [vmem:[%s0 + $0xa4] sm:$0xf]
  %v11092 = vld [vmem:[%s0 + $0xc0] sm:$0xf]
  %v11093 = vld [vmem:[%s0 + $0xdc] sm:$0xf]
  %v11094 = vld [vmem:[%s0 + $0xf8] sm:$0xf]
  %v11095 = vld [vmem:[%s0 + $0x114] sm:$0x1]
  %s11096 = scalar_lea.vmem %s1, 3584
  %v11097 = vld [vmem:[%s11096] sm:$0xf]
  %v11098 = vld [vmem:[%s11096 + $0x4] sm:$0xf]
  %v11099 = vld [vmem:[%s11096 + $0x8] sm:$0xf]
  %v11100 = vld [vmem:[%s11096 + $0xc] sm:$0xf]
  %v11101 = vld [vmem:[%s11096 + $0x10] sm:$0xf]
  %v11102 = vld [vmem:[%s11096 + $0x14] sm:$0xf]
  %v11103 = vld [vmem:[%s11096 + $0x18] sm:$0xf]
  %v11104 = vld [vmem:[%s11096 + $0x1c] sm:$0xf]
  %v11105 = vld [vmem:[%s11096 + $0x20] sm:$0xf]
  %v11106 = vld [vmem:[%s11096 + $0x24] sm:$0xf]
  %v11107 = vld [vmem:[%s11096 + $0x28] sm:$0xf]
  %v11108 = vld [vmem:[%s11096 + $0x2c] sm:$0xf]
  %v11109 = vld [vmem:[%s11096 + $0x30] sm:$0xf]
  %v11110 = vld [vmem:[%s11096 + $0x34] sm:$0xf]
  %v11111 = vld [vmem:[%s11096 + $0x38] sm:$0xf]
  %v11112 = vld [vmem:[%s11096 + $0x3c] sm:$0xf]
  %v11123 = vunpack.c.l.b16 %v11086
  %v11124 = vunpack.c.l.b16 %v11087
  %v11125 = vunpack.c.l.b16 %v11088
  %v11126 = vunpack.c.l.b16 %v11089
  %v11127 = vunpack.c.l.b16 %v11090
  %v11128 = vunpack.c.l.b16 %v11091
  %v11129 = vunpack.c.l.b16 %v11092
  %v11130 = vunpack.c.l.b16 %v11093
  %v11131 = vunpack.c.l.b16 %v11094
  %v11132 = vunpack.c.l.b16 %v11095
  %v11133 = vpack.c.b16 %v11124, %v11123
  %v11134 = vpack.c.b16 %v11126, %v11125
  %v11135 = vpack.c.b16 %v11128, %v11127
  %v11136 = vpack.c.b16 %v11130, %v11129
  %v11137 = vpack.c.b16 %v11132, %v11131
  %v11139 = vshrl.u32 %v11133, 16
  %v11141 = vshll.u32 %v11133, 16
  %v11143 = vrot.slane %v11141, 1
  %v11144 = vor.u32 %v11139, %v11143
  %v11146 = vshll.u32 %v11134, 16
  %v11148 = vrot.slane %v11146, 1
  %v11149 = vsel %vm412, %v11144, %v11148
  %v11150 = vshrl.u32 %v11134, 16
  %v11152 = vor.u32 %v11150, %v11148
  %v11154 = vshll.u32 %v11135, 16
  %v11156 = vrot.slane %v11154, 1
  %v11157 = vsel %vm412, %v11152, %v11156
  %v11158 = vshrl.u32 %v11135, 16
  %v11160 = vor.u32 %v11158, %v11156
  %v11162 = vshll.u32 %v11136, 16
  %v11164 = vrot.slane %v11162, 1
  %v11165 = vsel %vm412, %v11160, %v11164
  %v11166 = vshrl.u32 %v11136, 16
  %v11168 = vor.u32 %v11166, %v11164
  %v11170 = vshll.u32 %v11137, 16
  %v11172 = vrot.slane %v11170, 1
  %v11173 = vsel %vm412, %v11168, %v11172
  %v11174 = vshrl.u32 %v11137, 16
  %v11176 = vor.u32 %v11174, %v11172
  %v11198 = vunpack.c.l.b16 %v11097
  %v11199 = vunpack.c.l.b16 %v11098
  %v11200 = vunpack.c.l.b16 %v11099
  %v11201 = vunpack.c.l.b16 %v11100
  %v11202 = vunpack.c.l.b16 %v11101
  %v11203 = vunpack.c.l.b16 %v11102
  %v11204 = vunpack.c.l.b16 %v11103
  %v11205 = vunpack.c.l.b16 %v11104
  %v11206 = vunpack.c.l.b16 %v11105
  %v11207 = vunpack.c.l.b16 %v11106
  %v11208 = vunpack.c.l.b16 %v11107
  %v11209 = vunpack.c.l.b16 %v11108
  %v11210 = vunpack.c.l.b16 %v11109
  %v11211 = vunpack.c.l.b16 %v11110
  %v11212 = vunpack.c.l.b16 %v11111
  %v11213 = vunpack.c.l.b16 %v11112
  %v11214 = vpack.c.b16 %v11199, %v11198
  %v11215 = vpack.c.b16 %v11201, %v11200
  %v11216 = vpack.c.b16 %v11203, %v11202
  %v11217 = vpack.c.b16 %v11205, %v11204
  %v11218 = vpack.c.b16 %v11207, %v11206
  %v11219 = vpack.c.b16 %v11209, %v11208
  %v11220 = vpack.c.b16 %v11211, %v11210
  %v11221 = vpack.c.b16 %v11213, %v11212
  %11230 = vmatprep.subr.bf16.mxu0 0
  %11231 = vmatpush1.bf16.msra.mxu0 %v11221
  %11232 = vmatprep.subr.bf16.mxu0 0
  %11233 = vmatpush1.bf16.msra.mxu0 %v11220
  %11234 = vmatprep.subr.bf16.mxu0 0
  %11235 = vmatpush1.bf16.msra.mxu0 %v11219
  %11236 = vmatprep.subr.bf16.mxu0 0
  %11237 = vmatpush1.bf16.msra.mxu0 %v11218
  %11238 = vmatprep.subr.bf16.mxu0 0
  %11239 = vmatpush1.bf16.msra.mxu0 %v11217
  %11240 = vmatprep.subr.bf16.mxu0 0
  %11241 = vmatpush1.bf16.msra.mxu0 %v11216
  %11242 = vmatprep.subr.bf16.mxu0 0
  %11243 = vmatpush1.bf16.msra.mxu0 %v11215
  %11244 = vmatprep.subr.bf16.mxu0 0
  %11245 = vmatpush1.bf16.msra.mxu0 %v11214
  %11246 = vmatprep.subr.bf16.mxu0 0
  %11247 = vmatpush2.bf16.msra.mxu0 0
  %11248 = vmatprep.subr.bf16.mxu0 0
  %11249 = vmatpush2.bf16.msra.mxu0 0
  %11250 = vmatprep.subr.bf16.mxu0 0
  %11251 = vmatpush2.bf16.msra.mxu0 0
  %11252 = vmatprep.subr.bf16.mxu0 0
  %11253 = vmatpush2.bf16.msra.mxu0 0
  %11254 = vmatprep.subr.bf16.mxu0 0
  %11255 = vmatpush2.bf16.msra.mxu0 0
  %11256 = vmatprep.subr.bf16.mxu0 0
  %11257 = vmatpush2.bf16.msra.mxu0 0
  %11258 = vmatprep.subr.bf16.mxu0 0
  %11259 = vmatpush2.bf16.msra.mxu0 0
  %11260 = vmatprep.subr.bf16.mxu0 0
  %11261 = vmatpush2.bf16.msra.mxu0 0
  %11262 = vmatprep.mubr.bf16.mxu0 0
  %11263 = vmatmul.mubr.bf16.gmra.mxu0 %v11149
  %v11264 = vpop.f32.mrf.mxu0
  %v11265 = vadd.f32 0.0, %v11264
  %v11266 = vpop.f32.mrf.mxu0
  %v11267 = vpop.f32.mrf.mxu0
  %v11268 = vadd.f32 0.0, %v11267
  %v11269 = vpop.f32.mrf.mxu0
  %11270 = vmatprep.mubr.bf16.mxu0 0
  %11271 = vmatmul.mubr.bf16.gmra.mxu0 %v11157
  %v11272 = vpop.f32.mrf.mxu0
  %v11273 = vadd.f32 0.0, %v11272
  %v11274 = vpop.f32.mrf.mxu0
  %v11275 = vpop.f32.mrf.mxu0
  %v11276 = vadd.f32 0.0, %v11275
  %v11277 = vpop.f32.mrf.mxu0
  %11278 = vmatprep.mubr.bf16.mxu0 0
  %11279 = vmatmul.mubr.bf16.gmra.mxu0 %v11165
  %v11280 = vpop.f32.mrf.mxu0
  %v11281 = vadd.f32 0.0, %v11280
  %v11282 = vpop.f32.mrf.mxu0
  %v11283 = vpop.f32.mrf.mxu0
  %v11284 = vadd.f32 0.0, %v11283
  %v11285 = vpop.f32.mrf.mxu0
  %11286 = vmatprep.mubr.bf16.mxu0 0
  %11287 = vmatmul.mubr.bf16.gmra.mxu0 %v11173
  %v11288 = vpop.f32.mrf.mxu0
  %v11289 = vadd.f32 0.0, %v11288
  %v11290 = vpop.f32.mrf.mxu0
  %v11291 = vpop.f32.mrf.mxu0
  %v11292 = vadd.f32 0.0, %v11291
  %v11293 = vpop.f32.mrf.mxu0
  %11294 = vmatprep.mubr.bf16.mxu0 0
  %11295 = vmatmul.mubr.bf16.gmra.mxu0 %v11176
  %v11296 = vpop.f32.mrf.mxu0
  %v11297 = vadd.f32 0.0, %v11296
  %v11298 = vpop.f32.mrf.mxu0
  %v11299 = vpop.f32.mrf.mxu0
  %v11300 = vpop.f32.mrf.mxu0
  %11301 = vdwg.mxu0
  %v11302 = vadd.f32 %v11049, %v11265
  %v11303 = vadd.f32 %v11052, %v11268
  %v11304 = vadd.f32 %v11057, %v11273
  %v11305 = vadd.f32 %v11060, %v11276
  %v11306 = vadd.f32 %v11065, %v11281
  %v11307 = vadd.f32 %v11068, %v11284
  %v11308 = vadd.f32 %v11073, %v11289
  %v11309 = vadd.f32 %v11076, %v11292
  %v11310 = vadd.f32 %v11081, %v11297
  %v11311 = vld [vmem:[%s586 + $0x18] sm:$0xf]
  %v11312 = vld [vmem:[%s586 + $0x34] sm:$0xf]
  %v11313 = vld [vmem:[%s586 + $0x50] sm:$0xf]
  %v11314 = vld [vmem:[%s586 + $0x6c] sm:$0xf]
  %v11315 = vld [vmem:[%s586 + $0x88] sm:$0xf]
  %v11316 = vld [vmem:[%s586 + $0xa4] sm:$0xf]
  %v11317 = vld [vmem:[%s586 + $0xc0] sm:$0xf]
  %v11318 = vld [vmem:[%s586 + $0xdc] sm:$0xf]
  %v11319 = vld [vmem:[%s586 + $0xf8] sm:$0xf]
  %s11320 = scalar_lea.vmem %s1, 3648
  %v11321 = vld [vmem:[%s11320] sm:$0xf]
  %v11322 = vld [vmem:[%s11320 + $0x4] sm:$0xf]
  %v11323 = vld [vmem:[%s11320 + $0x8] sm:$0xf]
  %v11324 = vld [vmem:[%s11320 + $0xc] sm:$0xf]
  %v11325 = vld [vmem:[%s11320 + $0x10] sm:$0xf]
  %v11326 = vld [vmem:[%s11320 + $0x14] sm:$0xf]
  %v11327 = vld [vmem:[%s11320 + $0x18] sm:$0xf]
  %v11328 = vld [vmem:[%s11320 + $0x1c] sm:$0xf]
  %v11329 = vld [vmem:[%s11320 + $0x20] sm:$0xf]
  %v11330 = vld [vmem:[%s11320 + $0x24] sm:$0xf]
  %v11331 = vld [vmem:[%s11320 + $0x28] sm:$0xf]
  %v11332 = vld [vmem:[%s11320 + $0x2c] sm:$0xf]
  %v11333 = vld [vmem:[%s11320 + $0x30] sm:$0xf]
  %v11334 = vld [vmem:[%s11320 + $0x34] sm:$0xf]
  %v11335 = vld [vmem:[%s11320 + $0x38] sm:$0xf]
  %v11336 = vld [vmem:[%s11320 + $0x3c] sm:$0xf]
  %v11346 = vunpack.c.l.b16 %v11311
  %v11347 = vunpack.c.l.b16 %v11312
  %v11348 = vunpack.c.l.b16 %v11313
  %v11349 = vunpack.c.l.b16 %v11314
  %v11350 = vunpack.c.l.b16 %v11315
  %v11351 = vunpack.c.l.b16 %v11316
  %v11352 = vunpack.c.l.b16 %v11317
  %v11353 = vunpack.c.l.b16 %v11318
  %v11354 = vunpack.c.l.b16 %v11319
  %v11355 = vpack.c.b16 %v11347, %v11346
  %v11356 = vpack.c.b16 %v11349, %v11348
  %v11357 = vpack.c.b16 %v11351, %v11350
  %v11358 = vpack.c.b16 %v11353, %v11352
  %v11359 = vpack.c.b16 %v11354, %v11354
  %v11381 = vunpack.c.l.b16 %v11321
  %v11382 = vunpack.c.l.b16 %v11322
  %v11383 = vunpack.c.l.b16 %v11323
  %v11384 = vunpack.c.l.b16 %v11324
  %v11385 = vunpack.c.l.b16 %v11325
  %v11386 = vunpack.c.l.b16 %v11326
  %v11387 = vunpack.c.l.b16 %v11327
  %v11388 = vunpack.c.l.b16 %v11328
  %v11389 = vunpack.c.l.b16 %v11329
  %v11390 = vunpack.c.l.b16 %v11330
  %v11391 = vunpack.c.l.b16 %v11331
  %v11392 = vunpack.c.l.b16 %v11332
  %v11393 = vunpack.c.l.b16 %v11333
  %v11394 = vunpack.c.l.b16 %v11334
  %v11395 = vunpack.c.l.b16 %v11335
  %v11396 = vunpack.c.l.b16 %v11336
  %v11397 = vpack.c.b16 %v11382, %v11381
  %v11398 = vpack.c.b16 %v11384, %v11383
  %v11399 = vpack.c.b16 %v11386, %v11385
  %v11400 = vpack.c.b16 %v11388, %v11387
  %v11401 = vpack.c.b16 %v11390, %v11389
  %v11402 = vpack.c.b16 %v11392, %v11391
  %v11403 = vpack.c.b16 %v11394, %v11393
  %v11404 = vpack.c.b16 %v11396, %v11395
  %11413 = vmatprep.subr.bf16.mxu0 0
  %11414 = vmatpush1.bf16.msra.mxu0 %v11404
  %11415 = vmatprep.subr.bf16.mxu0 0
  %11416 = vmatpush1.bf16.msra.mxu0 %v11403
  %11417 = vmatprep.subr.bf16.mxu0 0
  %11418 = vmatpush1.bf16.msra.mxu0 %v11402
  %11419 = vmatprep.subr.bf16.mxu0 0
  %11420 = vmatpush1.bf16.msra.mxu0 %v11401
  %11421 = vmatprep.subr.bf16.mxu0 0
  %11422 = vmatpush1.bf16.msra.mxu0 %v11400
  %11423 = vmatprep.subr.bf16.mxu0 0
  %11424 = vmatpush1.bf16.msra.mxu0 %v11399
  %11425 = vmatprep.subr.bf16.mxu0 0
  %11426 = vmatpush1.bf16.msra.mxu0 %v11398
  %11427 = vmatprep.subr.bf16.mxu0 0
  %11428 = vmatpush1.bf16.msra.mxu0 %v11397
  %11429 = vmatprep.subr.bf16.mxu0 0
  %11430 = vmatpush2.bf16.msra.mxu0 0
  %11431 = vmatprep.subr.bf16.mxu0 0
  %11432 = vmatpush2.bf16.msra.mxu0 0
  %11433 = vmatprep.subr.bf16.mxu0 0
  %11434 = vmatpush2.bf16.msra.mxu0 0
  %11435 = vmatprep.subr.bf16.mxu0 0
  %11436 = vmatpush2.bf16.msra.mxu0 0
  %11437 = vmatprep.subr.bf16.mxu0 0
  %11438 = vmatpush2.bf16.msra.mxu0 0
  %11439 = vmatprep.subr.bf16.mxu0 0
  %11440 = vmatpush2.bf16.msra.mxu0 0
  %11441 = vmatprep.subr.bf16.mxu0 0
  %11442 = vmatpush2.bf16.msra.mxu0 0
  %11443 = vmatprep.subr.bf16.mxu0 0
  %11444 = vmatpush2.bf16.msra.mxu0 0
  %11445 = vmatprep.mubr.bf16.mxu0 0
  %11446 = vmatmul.mubr.bf16.gmra.mxu0 %v11355
  %v11447 = vpop.f32.mrf.mxu0
  %v11448 = vadd.f32 0.0, %v11447
  %v11449 = vpop.f32.mrf.mxu0
  %v11450 = vpop.f32.mrf.mxu0
  %v11451 = vadd.f32 0.0, %v11450
  %v11452 = vpop.f32.mrf.mxu0
  %11453 = vmatprep.mubr.bf16.mxu0 0
  %11454 = vmatmul.mubr.bf16.gmra.mxu0 %v11356
  %v11455 = vpop.f32.mrf.mxu0
  %v11456 = vadd.f32 0.0, %v11455
  %v11457 = vpop.f32.mrf.mxu0
  %v11458 = vpop.f32.mrf.mxu0
  %v11459 = vadd.f32 0.0, %v11458
  %v11460 = vpop.f32.mrf.mxu0
  %11461 = vmatprep.mubr.bf16.mxu0 0
  %11462 = vmatmul.mubr.bf16.gmra.mxu0 %v11357
  %v11463 = vpop.f32.mrf.mxu0
  %v11464 = vadd.f32 0.0, %v11463
  %v11465 = vpop.f32.mrf.mxu0
  %v11466 = vpop.f32.mrf.mxu0
  %v11467 = vadd.f32 0.0, %v11466
  %v11468 = vpop.f32.mrf.mxu0
  %11469 = vmatprep.mubr.bf16.mxu0 0
  %11470 = vmatmul.mubr.bf16.gmra.mxu0 %v11358
  %v11471 = vpop.f32.mrf.mxu0
  %v11472 = vadd.f32 0.0, %v11471
  %v11473 = vpop.f32.mrf.mxu0
  %v11474 = vpop.f32.mrf.mxu0
  %v11475 = vadd.f32 0.0, %v11474
  %v11476 = vpop.f32.mrf.mxu0
  %11477 = vmatprep.mubr.bf16.mxu0 0
  %11478 = vmatmul.mubr.bf16.gmra.mxu0 %v11359
  %v11479 = vpop.f32.mrf.mxu0
  %v11480 = vadd.f32 0.0, %v11479
  %v11481 = vpop.f32.mrf.mxu0
  %v11482 = vpop.f32.mrf.mxu0
  %v11483 = vpop.f32.mrf.mxu0
  %11484 = vdwg.mxu0
  %v11485 = vadd.f32 %v11302, %v11448
  %v11486 = vadd.f32 %v11303, %v11451
  %v11487 = vadd.f32 %v11304, %v11456
  %v11488 = vadd.f32 %v11305, %v11459
  %v11489 = vadd.f32 %v11306, %v11464
  %v11490 = vadd.f32 %v11307, %v11467
  %v11491 = vadd.f32 %v11308, %v11472
  %v11492 = vadd.f32 %v11309, %v11475
  %v11493 = vadd.f32 %v11310, %v11480
  %v11494 = vld [vmem:[%s770 + $0x18] sm:$0xf]
  %v11495 = vld [vmem:[%s770 + $0x34] sm:$0xf]
  %v11496 = vld [vmem:[%s770 + $0x50] sm:$0xf]
  %v11497 = vld [vmem:[%s770 + $0x6c] sm:$0xf]
  %v11498 = vld [vmem:[%s770 + $0x88] sm:$0xf]
  %v11499 = vld [vmem:[%s770 + $0xa4] sm:$0xf]
  %v11500 = vld [vmem:[%s770 + $0xc0] sm:$0xf]
  %v11501 = vld [vmem:[%s770 + $0xdc] sm:$0xf]
  %v11502 = vld [vmem:[%s770 + $0xf8] sm:$0xf]
  %s11503 = scalar_lea.vmem %s1, 3712
  %v11504 = vld [vmem:[%s11503] sm:$0xf]
  %v11505 = vld [vmem:[%s11503 + $0x4] sm:$0xf]
  %v11506 = vld [vmem:[%s11503 + $0x8] sm:$0xf]
  %v11507 = vld [vmem:[%s11503 + $0xc] sm:$0xf]
  %v11508 = vld [vmem:[%s11503 + $0x10] sm:$0xf]
  %v11509 = vld [vmem:[%s11503 + $0x14] sm:$0xf]
  %v11510 = vld [vmem:[%s11503 + $0x18] sm:$0xf]
  %v11511 = vld [vmem:[%s11503 + $0x1c] sm:$0xf]
  %v11512 = vld [vmem:[%s11503 + $0x20] sm:$0xf]
  %v11513 = vld [vmem:[%s11503 + $0x24] sm:$0xf]
  %v11514 = vld [vmem:[%s11503 + $0x28] sm:$0xf]
  %v11515 = vld [vmem:[%s11503 + $0x2c] sm:$0xf]
  %v11516 = vld [vmem:[%s11503 + $0x30] sm:$0xf]
  %v11517 = vld [vmem:[%s11503 + $0x34] sm:$0xf]
  %v11518 = vld [vmem:[%s11503 + $0x38] sm:$0xf]
  %v11519 = vld [vmem:[%s11503 + $0x3c] sm:$0xf]
  %v11529 = vunpack.c.l.b16 %v11494
  %v11530 = vunpack.c.l.b16 %v11495
  %v11531 = vunpack.c.l.b16 %v11496
  %v11532 = vunpack.c.l.b16 %v11497
  %v11533 = vunpack.c.l.b16 %v11498
  %v11534 = vunpack.c.l.b16 %v11499
  %v11535 = vunpack.c.l.b16 %v11500
  %v11536 = vunpack.c.l.b16 %v11501
  %v11537 = vunpack.c.l.b16 %v11502
  %v11538 = vpack.c.b16 %v11530, %v11529
  %v11539 = vpack.c.b16 %v11532, %v11531
  %v11540 = vpack.c.b16 %v11534, %v11533
  %v11541 = vpack.c.b16 %v11536, %v11535
  %v11542 = vpack.c.b16 %v11537, %v11537
  %v11564 = vunpack.c.l.b16 %v11504
  %v11565 = vunpack.c.l.b16 %v11505
  %v11566 = vunpack.c.l.b16 %v11506
  %v11567 = vunpack.c.l.b16 %v11507
  %v11568 = vunpack.c.l.b16 %v11508
  %v11569 = vunpack.c.l.b16 %v11509
  %v11570 = vunpack.c.l.b16 %v11510
  %v11571 = vunpack.c.l.b16 %v11511
  %v11572 = vunpack.c.l.b16 %v11512
  %v11573 = vunpack.c.l.b16 %v11513
  %v11574 = vunpack.c.l.b16 %v11514
  %v11575 = vunpack.c.l.b16 %v11515
  %v11576 = vunpack.c.l.b16 %v11516
  %v11577 = vunpack.c.l.b16 %v11517
  %v11578 = vunpack.c.l.b16 %v11518
  %v11579 = vunpack.c.l.b16 %v11519
  %v11580 = vpack.c.b16 %v11565, %v11564
  %v11581 = vpack.c.b16 %v11567, %v11566
  %v11582 = vpack.c.b16 %v11569, %v11568
  %v11583 = vpack.c.b16 %v11571, %v11570
  %v11584 = vpack.c.b16 %v11573, %v11572
  %v11585 = vpack.c.b16 %v11575, %v11574
  %v11586 = vpack.c.b16 %v11577, %v11576
  %v11587 = vpack.c.b16 %v11579, %v11578
  %11596 = vmatprep.subr.bf16.mxu0 0
  %11597 = vmatpush1.bf16.msra.mxu0 %v11587
  %11598 = vmatprep.subr.bf16.mxu0 0
  %11599 = vmatpush1.bf16.msra.mxu0 %v11586
  %11600 = vmatprep.subr.bf16.mxu0 0
  %11601 = vmatpush1.bf16.msra.mxu0 %v11585
  %11602 = vmatprep.subr.bf16.mxu0 0
  %11603 = vmatpush1.bf16.msra.mxu0 %v11584
  %11604 = vmatprep.subr.bf16.mxu0 0
  %11605 = vmatpush1.bf16.msra.mxu0 %v11583
  %11606 = vmatprep.subr.bf16.mxu0 0
  %11607 = vmatpush1.bf16.msra.mxu0 %v11582
  %11608 = vmatprep.subr.bf16.mxu0 0
  %11609 = vmatpush1.bf16.msra.mxu0 %v11581
  %11610 = vmatprep.subr.bf16.mxu0 0
  %11611 = vmatpush1.bf16.msra.mxu0 %v11580
  %11612 = vmatprep.subr.bf16.mxu0 0
  %11613 = vmatpush2.bf16.msra.mxu0 0
  %11614 = vmatprep.subr.bf16.mxu0 0
  %11615 = vmatpush2.bf16.msra.mxu0 0
  %11616 = vmatprep.subr.bf16.mxu0 0
  %11617 = vmatpush2.bf16.msra.mxu0 0
  %11618 = vmatprep.subr.bf16.mxu0 0
  %11619 = vmatpush2.bf16.msra.mxu0 0
  %11620 = vmatprep.subr.bf16.mxu0 0
  %11621 = vmatpush2.bf16.msra.mxu0 0
  %11622 = vmatprep.subr.bf16.mxu0 0
  %11623 = vmatpush2.bf16.msra.mxu0 0
  %11624 = vmatprep.subr.bf16.mxu0 0
  %11625 = vmatpush2.bf16.msra.mxu0 0
  %11626 = vmatprep.subr.bf16.mxu0 0
  %11627 = vmatpush2.bf16.msra.mxu0 0
  %11628 = vmatprep.mubr.bf16.mxu0 0
  %11629 = vmatmul.mubr.bf16.gmra.mxu0 %v11538
  %v11630 = vpop.f32.mrf.mxu0
  %v11631 = vadd.f32 0.0, %v11630
  %v11632 = vpop.f32.mrf.mxu0
  %v11633 = vpop.f32.mrf.mxu0
  %v11634 = vadd.f32 0.0, %v11633
  %v11635 = vpop.f32.mrf.mxu0
  %11636 = vmatprep.mubr.bf16.mxu0 0
  %11637 = vmatmul.mubr.bf16.gmra.mxu0 %v11539
  %v11638 = vpop.f32.mrf.mxu0
  %v11639 = vadd.f32 0.0, %v11638
  %v11640 = vpop.f32.mrf.mxu0
  %v11641 = vpop.f32.mrf.mxu0
  %v11642 = vadd.f32 0.0, %v11641
  %v11643 = vpop.f32.mrf.mxu0
  %11644 = vmatprep.mubr.bf16.mxu0 0
  %11645 = vmatmul.mubr.bf16.gmra.mxu0 %v11540
  %v11646 = vpop.f32.mrf.mxu0
  %v11647 = vadd.f32 0.0, %v11646
  %v11648 = vpop.f32.mrf.mxu0
  %v11649 = vpop.f32.mrf.mxu0
  %v11650 = vadd.f32 0.0, %v11649
  %v11651 = vpop.f32.mrf.mxu0
  %11652 = vmatprep.mubr.bf16.mxu0 0
  %11653 = vmatmul.mubr.bf16.gmra.mxu0 %v11541
  %v11654 = vpop.f32.mrf.mxu0
  %v11655 = vadd.f32 0.0, %v11654
  %v11656 = vpop.f32.mrf.mxu0
  %v11657 = vpop.f32.mrf.mxu0
  %v11658 = vadd.f32 0.0, %v11657
  %v11659 = vpop.f32.mrf.mxu0
  %11660 = vmatprep.mubr.bf16.mxu0 0
  %11661 = vmatmul.mubr.bf16.gmra.mxu0 %v11542
  %v11662 = vpop.f32.mrf.mxu0
  %v11663 = vadd.f32 0.0, %v11662
  %v11664 = vpop.f32.mrf.mxu0
  %v11665 = vpop.f32.mrf.mxu0
  %v11666 = vpop.f32.mrf.mxu0
  %11667 = vdwg.mxu0
  %v11668 = vadd.f32 %v11485, %v11631
  %v11669 = vadd.f32 %v11486, %v11634
  %v11670 = vadd.f32 %v11487, %v11639
  %v11671 = vadd.f32 %v11488, %v11642
  %v11672 = vadd.f32 %v11489, %v11647
  %v11673 = vadd.f32 %v11490, %v11650
  %v11674 = vadd.f32 %v11491, %v11655
  %v11675 = vadd.f32 %v11492, %v11658
  %v11676 = vadd.f32 %v11493, %v11663
  %v11677 = vld [vmem:[%s586 + $0x18] sm:$0xf]
  %v11678 = vld [vmem:[%s586 + $0x34] sm:$0xf]
  %v11679 = vld [vmem:[%s586 + $0x50] sm:$0xf]
  %v11680 = vld [vmem:[%s586 + $0x6c] sm:$0xf]
  %v11681 = vld [vmem:[%s586 + $0x88] sm:$0xf]
  %v11682 = vld [vmem:[%s586 + $0xa4] sm:$0xf]
  %v11683 = vld [vmem:[%s586 + $0xc0] sm:$0xf]
  %v11684 = vld [vmem:[%s586 + $0xdc] sm:$0xf]
  %v11685 = vld [vmem:[%s586 + $0xf8] sm:$0xf]
  %v11686 = vld [vmem:[%s586 + $0x114] sm:$0x1]
  %s11687 = scalar_lea.vmem %s1, 3776
  %v11688 = vld [vmem:[%s11687] sm:$0xf]
  %v11689 = vld [vmem:[%s11687 + $0x4] sm:$0xf]
  %v11690 = vld [vmem:[%s11687 + $0x8] sm:$0xf]
  %v11691 = vld [vmem:[%s11687 + $0xc] sm:$0xf]
  %v11692 = vld [vmem:[%s11687 + $0x10] sm:$0xf]
  %v11693 = vld [vmem:[%s11687 + $0x14] sm:$0xf]
  %v11694 = vld [vmem:[%s11687 + $0x18] sm:$0xf]
  %v11695 = vld [vmem:[%s11687 + $0x1c] sm:$0xf]
  %v11696 = vld [vmem:[%s11687 + $0x20] sm:$0xf]
  %v11697 = vld [vmem:[%s11687 + $0x24] sm:$0xf]
  %v11698 = vld [vmem:[%s11687 + $0x28] sm:$0xf]
  %v11699 = vld [vmem:[%s11687 + $0x2c] sm:$0xf]
  %v11700 = vld [vmem:[%s11687 + $0x30] sm:$0xf]
  %v11701 = vld [vmem:[%s11687 + $0x34] sm:$0xf]
  %v11702 = vld [vmem:[%s11687 + $0x38] sm:$0xf]
  %v11703 = vld [vmem:[%s11687 + $0x3c] sm:$0xf]
  %v11714 = vunpack.c.l.b16 %v11677
  %v11715 = vunpack.c.l.b16 %v11678
  %v11716 = vunpack.c.l.b16 %v11679
  %v11717 = vunpack.c.l.b16 %v11680
  %v11718 = vunpack.c.l.b16 %v11681
  %v11719 = vunpack.c.l.b16 %v11682
  %v11720 = vunpack.c.l.b16 %v11683
  %v11721 = vunpack.c.l.b16 %v11684
  %v11722 = vunpack.c.l.b16 %v11685
  %v11723 = vunpack.c.l.b16 %v11686
  %v11724 = vpack.c.b16 %v11715, %v11714
  %v11725 = vpack.c.b16 %v11717, %v11716
  %v11726 = vpack.c.b16 %v11719, %v11718
  %v11727 = vpack.c.b16 %v11721, %v11720
  %v11728 = vpack.c.b16 %v11723, %v11722
  %v11730 = vshrl.u32 %v11724, 16
  %v11732 = vshll.u32 %v11724, 16
  %v11734 = vrot.slane %v11732, 1
  %v11735 = vor.u32 %v11730, %v11734
  %v11737 = vshll.u32 %v11725, 16
  %v11739 = vrot.slane %v11737, 1
  %v11740 = vsel %vm412, %v11735, %v11739
  %v11741 = vshrl.u32 %v11725, 16
  %v11743 = vor.u32 %v11741, %v11739
  %v11745 = vshll.u32 %v11726, 16
  %v11747 = vrot.slane %v11745, 1
  %v11748 = vsel %vm412, %v11743, %v11747
  %v11749 = vshrl.u32 %v11726, 16
  %v11751 = vor.u32 %v11749, %v11747
  %v11753 = vshll.u32 %v11727, 16
  %v11755 = vrot.slane %v11753, 1
  %v11756 = vsel %vm412, %v11751, %v11755
  %v11757 = vshrl.u32 %v11727, 16
  %v11759 = vor.u32 %v11757, %v11755
  %v11761 = vshll.u32 %v11728, 16
  %v11763 = vrot.slane %v11761, 1
  %v11764 = vsel %vm412, %v11759, %v11763
  %v11765 = vshrl.u32 %v11728, 16
  %v11767 = vor.u32 %v11765, %v11763
  %v11789 = vunpack.c.l.b16 %v11688
  %v11790 = vunpack.c.l.b16 %v11689
  %v11791 = vunpack.c.l.b16 %v11690
  %v11792 = vunpack.c.l.b16 %v11691
  %v11793 = vunpack.c.l.b16 %v11692
  %v11794 = vunpack.c.l.b16 %v11693
  %v11795 = vunpack.c.l.b16 %v11694
  %v11796 = vunpack.c.l.b16 %v11695
  %v11797 = vunpack.c.l.b16 %v11696
  %v11798 = vunpack.c.l.b16 %v11697
  %v11799 = vunpack.c.l.b16 %v11698
  %v11800 = vunpack.c.l.b16 %v11699
  %v11801 = vunpack.c.l.b16 %v11700
  %v11802 = vunpack.c.l.b16 %v11701
  %v11803 = vunpack.c.l.b16 %v11702
  %v11804 = vunpack.c.l.b16 %v11703
  %v11805 = vpack.c.b16 %v11790, %v11789
  %v11806 = vpack.c.b16 %v11792, %v11791
  %v11807 = vpack.c.b16 %v11794, %v11793
  %v11808 = vpack.c.b16 %v11796, %v11795
  %v11809 = vpack.c.b16 %v11798, %v11797
  %v11810 = vpack.c.b16 %v11800, %v11799
  %v11811 = vpack.c.b16 %v11802, %v11801
  %v11812 = vpack.c.b16 %v11804, %v11803
  %11821 = vmatprep.subr.bf16.mxu0 0
  %11822 = vmatpush1.bf16.msra.mxu0 %v11812
  %11823 = vmatprep.subr.bf16.mxu0 0
  %11824 = vmatpush1.bf16.msra.mxu0 %v11811
  %11825 = vmatprep.subr.bf16.mxu0 0
  %11826 = vmatpush1.bf16.msra.mxu0 %v11810
  %11827 = vmatprep.subr.bf16.mxu0 0
  %11828 = vmatpush1.bf16.msra.mxu0 %v11809
  %11829 = vmatprep.subr.bf16.mxu0 0
  %11830 = vmatpush1.bf16.msra.mxu0 %v11808
  %11831 = vmatprep.subr.bf16.mxu0 0
  %11832 = vmatpush1.bf16.msra.mxu0 %v11807
  %11833 = vmatprep.subr.bf16.mxu0 0
  %11834 = vmatpush1.bf16.msra.mxu0 %v11806
  %11835 = vmatprep.subr.bf16.mxu0 0
  %11836 = vmatpush1.bf16.msra.mxu0 %v11805
  %11837 = vmatprep.subr.bf16.mxu0 0
  %11838 = vmatpush2.bf16.msra.mxu0 0
  %11839 = vmatprep.subr.bf16.mxu0 0
  %11840 = vmatpush2.bf16.msra.mxu0 0
  %11841 = vmatprep.subr.bf16.mxu0 0
  %11842 = vmatpush2.bf16.msra.mxu0 0
  %11843 = vmatprep.subr.bf16.mxu0 0
  %11844 = vmatpush2.bf16.msra.mxu0 0
  %11845 = vmatprep.subr.bf16.mxu0 0
  %11846 = vmatpush2.bf16.msra.mxu0 0
  %11847 = vmatprep.subr.bf16.mxu0 0
  %11848 = vmatpush2.bf16.msra.mxu0 0
  %11849 = vmatprep.subr.bf16.mxu0 0
  %11850 = vmatpush2.bf16.msra.mxu0 0
  %11851 = vmatprep.subr.bf16.mxu0 0
  %11852 = vmatpush2.bf16.msra.mxu0 0
  %11853 = vmatprep.mubr.bf16.mxu0 0
  %11854 = vmatmul.mubr.bf16.gmra.mxu0 %v11740
  %v11855 = vpop.f32.mrf.mxu0
  %v11856 = vadd.f32 0.0, %v11855
  %v11857 = vpop.f32.mrf.mxu0
  %v11858 = vpop.f32.mrf.mxu0
  %v11859 = vadd.f32 0.0, %v11858
  %v11860 = vpop.f32.mrf.mxu0
  %11861 = vmatprep.mubr.bf16.mxu0 0
  %11862 = vmatmul.mubr.bf16.gmra.mxu0 %v11748
  %v11863 = vpop.f32.mrf.mxu0
  %v11864 = vadd.f32 0.0, %v11863
  %v11865 = vpop.f32.mrf.mxu0
  %v11866 = vpop.f32.mrf.mxu0
  %v11867 = vadd.f32 0.0, %v11866
  %v11868 = vpop.f32.mrf.mxu0
  %11869 = vmatprep.mubr.bf16.mxu0 0
  %11870 = vmatmul.mubr.bf16.gmra.mxu0 %v11756
  %v11871 = vpop.f32.mrf.mxu0
  %v11872 = vadd.f32 0.0, %v11871
  %v11873 = vpop.f32.mrf.mxu0
  %v11874 = vpop.f32.mrf.mxu0
  %v11875 = vadd.f32 0.0, %v11874
  %v11876 = vpop.f32.mrf.mxu0
  %11877 = vmatprep.mubr.bf16.mxu0 0
  %11878 = vmatmul.mubr.bf16.gmra.mxu0 %v11764
  %v11879 = vpop.f32.mrf.mxu0
  %v11880 = vadd.f32 0.0, %v11879
  %v11881 = vpop.f32.mrf.mxu0
  %v11882 = vpop.f32.mrf.mxu0
  %v11883 = vadd.f32 0.0, %v11882
  %v11884 = vpop.f32.mrf.mxu0
  %11885 = vmatprep.mubr.bf16.mxu0 0
  %11886 = vmatmul.mubr.bf16.gmra.mxu0 %v11767
  %v11887 = vpop.f32.mrf.mxu0
  %v11888 = vadd.f32 0.0, %v11887
  %v11889 = vpop.f32.mrf.mxu0
  %v11890 = vpop.f32.mrf.mxu0
  %v11891 = vpop.f32.mrf.mxu0
  %11892 = vdwg.mxu0
  %v11893 = vadd.f32 %v11668, %v11856
  %v11894 = vadd.f32 %v11669, %v11859
  %v11895 = vadd.f32 %v11670, %v11864
  %v11896 = vadd.f32 %v11671, %v11867
  %v11897 = vadd.f32 %v11672, %v11872
  %v11898 = vadd.f32 %v11673, %v11875
  %v11899 = vadd.f32 %v11674, %v11880
  %v11900 = vadd.f32 %v11675, %v11883
  %v11901 = vadd.f32 %v11676, %v11888
  %v11902 = vld [vmem:[%s0 + $0x34] sm:$0xf]
  %v11903 = vld [vmem:[%s0 + $0x50] sm:$0xf]
  %v11904 = vld [vmem:[%s0 + $0x6c] sm:$0xf]
  %v11905 = vld [vmem:[%s0 + $0x88] sm:$0xf]
  %v11906 = vld [vmem:[%s0 + $0xa4] sm:$0xf]
  %v11907 = vld [vmem:[%s0 + $0xc0] sm:$0xf]
  %v11908 = vld [vmem:[%s0 + $0xdc] sm:$0xf]
  %v11909 = vld [vmem:[%s0 + $0xf8] sm:$0xf]
  %v11910 = vld [vmem:[%s0 + $0x114] sm:$0xf]
  %v11911 = vld [vmem:[%s0 + $0x130] sm:$0x1]
  %s11912 = scalar_lea.vmem %s1, 3840
  %v11913 = vld [vmem:[%s11912] sm:$0xf]
  %v11914 = vld [vmem:[%s11912 + $0x4] sm:$0xf]
  %v11915 = vld [vmem:[%s11912 + $0x8] sm:$0xf]
  %v11916 = vld [vmem:[%s11912 + $0xc] sm:$0xf]
  %v11917 = vld [vmem:[%s11912 + $0x10] sm:$0xf]
  %v11918 = vld [vmem:[%s11912 + $0x14] sm:$0xf]
  %v11919 = vld [vmem:[%s11912 + $0x18] sm:$0xf]
  %v11920 = vld [vmem:[%s11912 + $0x1c] sm:$0xf]
  %v11921 = vld [vmem:[%s11912 + $0x20] sm:$0xf]
  %v11922 = vld [vmem:[%s11912 + $0x24] sm:$0xf]
  %v11923 = vld [vmem:[%s11912 + $0x28] sm:$0xf]
  %v11924 = vld [vmem:[%s11912 + $0x2c] sm:$0xf]
  %v11925 = vld [vmem:[%s11912 + $0x30] sm:$0xf]
  %v11926 = vld [vmem:[%s11912 + $0x34] sm:$0xf]
  %v11927 = vld [vmem:[%s11912 + $0x38] sm:$0xf]
  %v11928 = vld [vmem:[%s11912 + $0x3c] sm:$0xf]
  %v11939 = vunpack.c.l.b16 %v11902
  %v11940 = vunpack.c.l.b16 %v11903
  %v11941 = vunpack.c.l.b16 %v11904
  %v11942 = vunpack.c.l.b16 %v11905
  %v11943 = vunpack.c.l.b16 %v11906
  %v11944 = vunpack.c.l.b16 %v11907
  %v11945 = vunpack.c.l.b16 %v11908
  %v11946 = vunpack.c.l.b16 %v11909
  %v11947 = vunpack.c.l.b16 %v11910
  %v11948 = vunpack.c.l.b16 %v11911
  %v11949 = vpack.c.b16 %v11940, %v11939
  %v11950 = vpack.c.b16 %v11942, %v11941
  %v11951 = vpack.c.b16 %v11944, %v11943
  %v11952 = vpack.c.b16 %v11946, %v11945
  %v11953 = vpack.c.b16 %v11948, %v11947
  %v11955 = vshrl.u32 %v11949, 16
  %v11957 = vshll.u32 %v11949, 16
  %v11959 = vrot.slane %v11957, 1
  %v11960 = vor.u32 %v11955, %v11959
  %v11962 = vshll.u32 %v11950, 16
  %v11964 = vrot.slane %v11962, 1
  %v11965 = vsel %vm412, %v11960, %v11964
  %v11966 = vshrl.u32 %v11950, 16
  %v11968 = vor.u32 %v11966, %v11964
  %v11970 = vshll.u32 %v11951, 16
  %v11972 = vrot.slane %v11970, 1
  %v11973 = vsel %vm412, %v11968, %v11972
  %v11974 = vshrl.u32 %v11951, 16
  %v11976 = vor.u32 %v11974, %v11972
  %v11978 = vshll.u32 %v11952, 16
  %v11980 = vrot.slane %v11978, 1
  %v11981 = vsel %vm412, %v11976, %v11980
  %v11982 = vshrl.u32 %v11952, 16
  %v11984 = vor.u32 %v11982, %v11980
  %v11986 = vshll.u32 %v11953, 16
  %v11988 = vrot.slane %v11986, 1
  %v11989 = vsel %vm412, %v11984, %v11988
  %v11990 = vshrl.u32 %v11953, 16
  %v11992 = vor.u32 %v11990, %v11988
  %v12014 = vunpack.c.l.b16 %v11913
  %v12015 = vunpack.c.l.b16 %v11914
  %v12016 = vunpack.c.l.b16 %v11915
  %v12017 = vunpack.c.l.b16 %v11916
  %v12018 = vunpack.c.l.b16 %v11917
  %v12019 = vunpack.c.l.b16 %v11918
  %v12020 = vunpack.c.l.b16 %v11919
  %v12021 = vunpack.c.l.b16 %v11920
  %v12022 = vunpack.c.l.b16 %v11921
  %v12023 = vunpack.c.l.b16 %v11922
  %v12024 = vunpack.c.l.b16 %v11923
  %v12025 = vunpack.c.l.b16 %v11924
  %v12026 = vunpack.c.l.b16 %v11925
  %v12027 = vunpack.c.l.b16 %v11926
  %v12028 = vunpack.c.l.b16 %v11927
  %v12029 = vunpack.c.l.b16 %v11928
  %v12030 = vpack.c.b16 %v12015, %v12014
  %v12031 = vpack.c.b16 %v12017, %v12016
  %v12032 = vpack.c.b16 %v12019, %v12018
  %v12033 = vpack.c.b16 %v12021, %v12020
  %v12034 = vpack.c.b16 %v12023, %v12022
  %v12035 = vpack.c.b16 %v12025, %v12024
  %v12036 = vpack.c.b16 %v12027, %v12026
  %v12037 = vpack.c.b16 %v12029, %v12028
  %12046 = vmatprep.subr.bf16.mxu0 0
  %12047 = vmatpush1.bf16.msra.mxu0 %v12037
  %12048 = vmatprep.subr.bf16.mxu0 0
  %12049 = vmatpush1.bf16.msra.mxu0 %v12036
  %12050 = vmatprep.subr.bf16.mxu0 0
  %12051 = vmatpush1.bf16.msra.mxu0 %v12035
  %12052 = vmatprep.subr.bf16.mxu0 0
  %12053 = vmatpush1.bf16.msra.mxu0 %v12034
  %12054 = vmatprep.subr.bf16.mxu0 0
  %12055 = vmatpush1.bf16.msra.mxu0 %v12033
  %12056 = vmatprep.subr.bf16.mxu0 0
  %12057 = vmatpush1.bf16.msra.mxu0 %v12032
  %12058 = vmatprep.subr.bf16.mxu0 0
  %12059 = vmatpush1.bf16.msra.mxu0 %v12031
  %12060 = vmatprep.subr.bf16.mxu0 0
  %12061 = vmatpush1.bf16.msra.mxu0 %v12030
  %12062 = vmatprep.subr.bf16.mxu0 0
  %12063 = vmatpush2.bf16.msra.mxu0 0
  %12064 = vmatprep.subr.bf16.mxu0 0
  %12065 = vmatpush2.bf16.msra.mxu0 0
  %12066 = vmatprep.subr.bf16.mxu0 0
  %12067 = vmatpush2.bf16.msra.mxu0 0
  %12068 = vmatprep.subr.bf16.mxu0 0
  %12069 = vmatpush2.bf16.msra.mxu0 0
  %12070 = vmatprep.subr.bf16.mxu0 0
  %12071 = vmatpush2.bf16.msra.mxu0 0
  %12072 = vmatprep.subr.bf16.mxu0 0
  %12073 = vmatpush2.bf16.msra.mxu0 0
  %12074 = vmatprep.subr.bf16.mxu0 0
  %12075 = vmatpush2.bf16.msra.mxu0 0
  %12076 = vmatprep.subr.bf16.mxu0 0
  %12077 = vmatpush2.bf16.msra.mxu0 0
  %12078 = vmatprep.mubr.bf16.mxu0 0
  %12079 = vmatmul.mubr.bf16.gmra.mxu0 %v11965
  %v12080 = vpop.f32.mrf.mxu0
  %v12081 = vadd.f32 0.0, %v12080
  %v12082 = vpop.f32.mrf.mxu0
  %v12083 = vpop.f32.mrf.mxu0
  %v12084 = vadd.f32 0.0, %v12083
  %v12085 = vpop.f32.mrf.mxu0
  %12086 = vmatprep.mubr.bf16.mxu0 0
  %12087 = vmatmul.mubr.bf16.gmra.mxu0 %v11973
  %v12088 = vpop.f32.mrf.mxu0
  %v12089 = vadd.f32 0.0, %v12088
  %v12090 = vpop.f32.mrf.mxu0
  %v12091 = vpop.f32.mrf.mxu0
  %v12092 = vadd.f32 0.0, %v12091
  %v12093 = vpop.f32.mrf.mxu0
  %12094 = vmatprep.mubr.bf16.mxu0 0
  %12095 = vmatmul.mubr.bf16.gmra.mxu0 %v11981
  %v12096 = vpop.f32.mrf.mxu0
  %v12097 = vadd.f32 0.0, %v12096
  %v12098 = vpop.f32.mrf.mxu0
  %v12099 = vpop.f32.mrf.mxu0
  %v12100 = vadd.f32 0.0, %v12099
  %v12101 = vpop.f32.mrf.mxu0
  %12102 = vmatprep.mubr.bf16.mxu0 0
  %12103 = vmatmul.mubr.bf16.gmra.mxu0 %v11989
  %v12104 = vpop.f32.mrf.mxu0
  %v12105 = vadd.f32 0.0, %v12104
  %v12106 = vpop.f32.mrf.mxu0
  %v12107 = vpop.f32.mrf.mxu0
  %v12108 = vadd.f32 0.0, %v12107
  %v12109 = vpop.f32.mrf.mxu0
  %12110 = vmatprep.mubr.bf16.mxu0 0
  %12111 = vmatmul.mubr.bf16.gmra.mxu0 %v11992
  %v12112 = vpop.f32.mrf.mxu0
  %v12113 = vadd.f32 0.0, %v12112
  %v12114 = vpop.f32.mrf.mxu0
  %v12115 = vpop.f32.mrf.mxu0
  %v12116 = vpop.f32.mrf.mxu0
  %12117 = vdwg.mxu0
  %v12118 = vadd.f32 %v11893, %v12081
  %v12119 = vadd.f32 %v11894, %v12084
  %v12120 = vadd.f32 %v11895, %v12089
  %v12121 = vadd.f32 %v11896, %v12092
  %v12122 = vadd.f32 %v11897, %v12097
  %v12123 = vadd.f32 %v11898, %v12100
  %v12124 = vadd.f32 %v11899, %v12105
  %v12125 = vadd.f32 %v11900, %v12108
  %v12126 = vadd.f32 %v11901, %v12113
  %v12127 = vld [vmem:[%s37 + $0x34] sm:$0xf]
  %v12128 = vld [vmem:[%s37 + $0x50] sm:$0xf]
  %v12129 = vld [vmem:[%s37 + $0x6c] sm:$0xf]
  %v12130 = vld [vmem:[%s37 + $0x88] sm:$0xf]
  %v12131 = vld [vmem:[%s37 + $0xa4] sm:$0xf]
  %v12132 = vld [vmem:[%s37 + $0xc0] sm:$0xf]
  %v12133 = vld [vmem:[%s37 + $0xdc] sm:$0xf]
  %v12134 = vld [vmem:[%s37 + $0xf8] sm:$0xf]
  %v12135 = vld [vmem:[%s37 + $0x114] sm:$0xf]
  %v12136 = vld [vmem:[%s37 + $0x130] sm:$0x1]
  %s12137 = scalar_lea.vmem %s1, 3904
  %v12138 = vld [vmem:[%s12137] sm:$0xf]
  %v12139 = vld [vmem:[%s12137 + $0x4] sm:$0xf]
  %v12140 = vld [vmem:[%s12137 + $0x8] sm:$0xf]
  %v12141 = vld [vmem:[%s12137 + $0xc] sm:$0xf]
  %v12142 = vld [vmem:[%s12137 + $0x10] sm:$0xf]
  %v12143 = vld [vmem:[%s12137 + $0x14] sm:$0xf]
  %v12144 = vld [vmem:[%s12137 + $0x18] sm:$0xf]
  %v12145 = vld [vmem:[%s12137 + $0x1c] sm:$0xf]
  %v12146 = vld [vmem:[%s12137 + $0x20] sm:$0xf]
  %v12147 = vld [vmem:[%s12137 + $0x24] sm:$0xf]
  %v12148 = vld [vmem:[%s12137 + $0x28] sm:$0xf]
  %v12149 = vld [vmem:[%s12137 + $0x2c] sm:$0xf]
  %v12150 = vld [vmem:[%s12137 + $0x30] sm:$0xf]
  %v12151 = vld [vmem:[%s12137 + $0x34] sm:$0xf]
  %v12152 = vld [vmem:[%s12137 + $0x38] sm:$0xf]
  %v12153 = vld [vmem:[%s12137 + $0x3c] sm:$0xf]
  %v12164 = vunpack.c.l.b16 %v12127
  %v12165 = vunpack.c.l.b16 %v12128
  %v12166 = vunpack.c.l.b16 %v12129
  %v12167 = vunpack.c.l.b16 %v12130
  %v12168 = vunpack.c.l.b16 %v12131
  %v12169 = vunpack.c.l.b16 %v12132
  %v12170 = vunpack.c.l.b16 %v12133
  %v12171 = vunpack.c.l.b16 %v12134
  %v12172 = vunpack.c.l.b16 %v12135
  %v12173 = vunpack.c.l.b16 %v12136
  %v12174 = vpack.c.b16 %v12165, %v12164
  %v12175 = vpack.c.b16 %v12167, %v12166
  %v12176 = vpack.c.b16 %v12169, %v12168
  %v12177 = vpack.c.b16 %v12171, %v12170
  %v12178 = vpack.c.b16 %v12173, %v12172
  %v12180 = vshrl.u32 %v12174, 16
  %v12182 = vshll.u32 %v12174, 16
  %v12184 = vrot.slane %v12182, 1
  %v12185 = vor.u32 %v12180, %v12184
  %v12187 = vshll.u32 %v12175, 16
  %v12189 = vrot.slane %v12187, 1
  %v12190 = vsel %vm412, %v12185, %v12189
  %v12191 = vshrl.u32 %v12175, 16
  %v12193 = vor.u32 %v12191, %v12189
  %v12195 = vshll.u32 %v12176, 16
  %v12197 = vrot.slane %v12195, 1
  %v12198 = vsel %vm412, %v12193, %v12197
  %v12199 = vshrl.u32 %v12176, 16
  %v12201 = vor.u32 %v12199, %v12197
  %v12203 = vshll.u32 %v12177, 16
  %v12205 = vrot.slane %v12203, 1
  %v12206 = vsel %vm412, %v12201, %v12205
  %v12207 = vshrl.u32 %v12177, 16
  %v12209 = vor.u32 %v12207, %v12205
  %v12211 = vshll.u32 %v12178, 16
  %v12213 = vrot.slane %v12211, 1
  %v12214 = vsel %vm412, %v12209, %v12213
  %v12215 = vshrl.u32 %v12178, 16
  %v12217 = vor.u32 %v12215, %v12213
  %v12239 = vunpack.c.l.b16 %v12138
  %v12240 = vunpack.c.l.b16 %v12139
  %v12241 = vunpack.c.l.b16 %v12140
  %v12242 = vunpack.c.l.b16 %v12141
  %v12243 = vunpack.c.l.b16 %v12142
  %v12244 = vunpack.c.l.b16 %v12143
  %v12245 = vunpack.c.l.b16 %v12144
  %v12246 = vunpack.c.l.b16 %v12145
  %v12247 = vunpack.c.l.b16 %v12146
  %v12248 = vunpack.c.l.b16 %v12147
  %v12249 = vunpack.c.l.b16 %v12148
  %v12250 = vunpack.c.l.b16 %v12149
  %v12251 = vunpack.c.l.b16 %v12150
  %v12252 = vunpack.c.l.b16 %v12151
  %v12253 = vunpack.c.l.b16 %v12152
  %v12254 = vunpack.c.l.b16 %v12153
  %v12255 = vpack.c.b16 %v12240, %v12239
  %v12256 = vpack.c.b16 %v12242, %v12241
  %v12257 = vpack.c.b16 %v12244, %v12243
  %v12258 = vpack.c.b16 %v12246, %v12245
  %v12259 = vpack.c.b16 %v12248, %v12247
  %v12260 = vpack.c.b16 %v12250, %v12249
  %v12261 = vpack.c.b16 %v12252, %v12251
  %v12262 = vpack.c.b16 %v12254, %v12253
  %12271 = vmatprep.subr.bf16.mxu0 0
  %12272 = vmatpush1.bf16.msra.mxu0 %v12262
  %12273 = vmatprep.subr.bf16.mxu0 0
  %12274 = vmatpush1.bf16.msra.mxu0 %v12261
  %12275 = vmatprep.subr.bf16.mxu0 0
  %12276 = vmatpush1.bf16.msra.mxu0 %v12260
  %12277 = vmatprep.subr.bf16.mxu0 0
  %12278 = vmatpush1.bf16.msra.mxu0 %v12259
  %12279 = vmatprep.subr.bf16.mxu0 0
  %12280 = vmatpush1.bf16.msra.mxu0 %v12258
  %12281 = vmatprep.subr.bf16.mxu0 0
  %12282 = vmatpush1.bf16.msra.mxu0 %v12257
  %12283 = vmatprep.subr.bf16.mxu0 0
  %12284 = vmatpush1.bf16.msra.mxu0 %v12256
  %12285 = vmatprep.subr.bf16.mxu0 0
  %12286 = vmatpush1.bf16.msra.mxu0 %v12255
  %12287 = vmatprep.subr.bf16.mxu0 0
  %12288 = vmatpush2.bf16.msra.mxu0 0
  %12289 = vmatprep.subr.bf16.mxu0 0
  %12290 = vmatpush2.bf16.msra.mxu0 0
  %12291 = vmatprep.subr.bf16.mxu0 0
  %12292 = vmatpush2.bf16.msra.mxu0 0
  %12293 = vmatprep.subr.bf16.mxu0 0
  %12294 = vmatpush2.bf16.msra.mxu0 0
  %12295 = vmatprep.subr.bf16.mxu0 0
  %12296 = vmatpush2.bf16.msra.mxu0 0
  %12297 = vmatprep.subr.bf16.mxu0 0
  %12298 = vmatpush2.bf16.msra.mxu0 0
  %12299 = vmatprep.subr.bf16.mxu0 0
  %12300 = vmatpush2.bf16.msra.mxu0 0
  %12301 = vmatprep.subr.bf16.mxu0 0
  %12302 = vmatpush2.bf16.msra.mxu0 0
  %12303 = vmatprep.mubr.bf16.mxu0 0
  %12304 = vmatmul.mubr.bf16.gmra.mxu0 %v12190
  %v12305 = vpop.f32.mrf.mxu0
  %v12306 = vadd.f32 0.0, %v12305
  %v12307 = vpop.f32.mrf.mxu0
  %v12308 = vpop.f32.mrf.mxu0
  %v12309 = vadd.f32 0.0, %v12308
  %v12310 = vpop.f32.mrf.mxu0
  %12311 = vmatprep.mubr.bf16.mxu0 0
  %12312 = vmatmul.mubr.bf16.gmra.mxu0 %v12198
  %v12313 = vpop.f32.mrf.mxu0
  %v12314 = vadd.f32 0.0, %v12313
  %v12315 = vpop.f32.mrf.mxu0
  %v12316 = vpop.f32.mrf.mxu0
  %v12317 = vadd.f32 0.0, %v12316
  %v12318 = vpop.f32.mrf.mxu0
  %12319 = vmatprep.mubr.bf16.mxu0 0
  %12320 = vmatmul.mubr.bf16.gmra.mxu0 %v12206
  %v12321 = vpop.f32.mrf.mxu0
  %v12322 = vadd.f32 0.0, %v12321
  %v12323 = vpop.f32.mrf.mxu0
  %v12324 = vpop.f32.mrf.mxu0
  %v12325 = vadd.f32 0.0, %v12324
  %v12326 = vpop.f32.mrf.mxu0
  %12327 = vmatprep.mubr.bf16.mxu0 0
  %12328 = vmatmul.mubr.bf16.gmra.mxu0 %v12214
  %v12329 = vpop.f32.mrf.mxu0
  %v12330 = vadd.f32 0.0, %v12329
  %v12331 = vpop.f32.mrf.mxu0
  %v12332 = vpop.f32.mrf.mxu0
  %v12333 = vadd.f32 0.0, %v12332
  %v12334 = vpop.f32.mrf.mxu0
  %12335 = vmatprep.mubr.bf16.mxu0 0
  %12336 = vmatmul.mubr.bf16.gmra.mxu0 %v12217
  %v12337 = vpop.f32.mrf.mxu0
  %v12338 = vadd.f32 0.0, %v12337
  %v12339 = vpop.f32.mrf.mxu0
  %v12340 = vpop.f32.mrf.mxu0
  %v12341 = vpop.f32.mrf.mxu0
  %12342 = vdwg.mxu0
  %v12343 = vadd.f32 %v12118, %v12306
  %v12344 = vadd.f32 %v12119, %v12309
  %v12345 = vadd.f32 %v12120, %v12314
  %v12346 = vadd.f32 %v12121, %v12317
  %v12347 = vadd.f32 %v12122, %v12322
  %v12348 = vadd.f32 %v12123, %v12325
  %v12349 = vadd.f32 %v12124, %v12330
  %v12350 = vadd.f32 %v12125, %v12333
  %v12351 = vadd.f32 %v12126, %v12338
  %v12352 = vld [vmem:[%s0 + $0x34] sm:$0xe]
  %s12353 = scalar_lea.vmem %s1, 3968
  %v12354 = vld [vmem:[%s12353] sm:$0xf]
  %v12355 = vld [vmem:[%s12353 + $0x4] sm:$0xf]
  %v12356 = vld [vmem:[%s12353 + $0x8] sm:$0xf]
  %v12357 = vld [vmem:[%s12353 + $0xc] sm:$0xf]
  %v12358 = vld [vmem:[%s12353 + $0x10] sm:$0xf]
  %v12359 = vld [vmem:[%s12353 + $0x14] sm:$0xf]
  %v12360 = vld [vmem:[%s12353 + $0x18] sm:$0xf]
  %v12361 = vld [vmem:[%s12353 + $0x1c] sm:$0xf]
  %v12362 = vld [vmem:[%s12353 + $0x20] sm:$0xf]
  %v12363 = vld [vmem:[%s12353 + $0x24] sm:$0xf]
  %v12364 = vld [vmem:[%s12353 + $0x28] sm:$0xf]
  %v12365 = vld [vmem:[%s12353 + $0x2c] sm:$0xf]
  %v12366 = vld [vmem:[%s12353 + $0x30] sm:$0xf]
  %v12367 = vld [vmem:[%s12353 + $0x34] sm:$0xf]
  %v12368 = vld [vmem:[%s12353 + $0x38] sm:$0xf]
  %v12369 = vld [vmem:[%s12353 + $0x3c] sm:$0xf]
  %v12371 = vunpack.c.l.b16 %v12352
  %v12372 = vpack.c.b16 %v11940, %v12371
  %v12373 = vrot.slane %v12372, 1
  %v12374 = vrot.slane %v11950, 1
  %v12375 = vsel %vm1650, %v12373, %v12374
  %v12376 = vrot.slane %v11951, 1
  %v12377 = vsel %vm1650, %v12374, %v12376
  %v12378 = vrot.slane %v11952, 1
  %v12379 = vsel %vm1650, %v12376, %v12378
  %v12380 = vrot.slane %v11953, 1
  %v12381 = vsel %vm1650, %v12378, %v12380
  %v12403 = vunpack.c.l.b16 %v12354
  %v12404 = vunpack.c.l.b16 %v12355
  %v12405 = vunpack.c.l.b16 %v12356
  %v12406 = vunpack.c.l.b16 %v12357
  %v12407 = vunpack.c.l.b16 %v12358
  %v12408 = vunpack.c.l.b16 %v12359
  %v12409 = vunpack.c.l.b16 %v12360
  %v12410 = vunpack.c.l.b16 %v12361
  %v12411 = vunpack.c.l.b16 %v12362
  %v12412 = vunpack.c.l.b16 %v12363
  %v12413 = vunpack.c.l.b16 %v12364
  %v12414 = vunpack.c.l.b16 %v12365
  %v12415 = vunpack.c.l.b16 %v12366
  %v12416 = vunpack.c.l.b16 %v12367
  %v12417 = vunpack.c.l.b16 %v12368
  %v12418 = vunpack.c.l.b16 %v12369
  %v12419 = vpack.c.b16 %v12404, %v12403
  %v12420 = vpack.c.b16 %v12406, %v12405
  %v12421 = vpack.c.b16 %v12408, %v12407
  %v12422 = vpack.c.b16 %v12410, %v12409
  %v12423 = vpack.c.b16 %v12412, %v12411
  %v12424 = vpack.c.b16 %v12414, %v12413
  %v12425 = vpack.c.b16 %v12416, %v12415
  %v12426 = vpack.c.b16 %v12418, %v12417
  %12435 = vmatprep.subr.bf16.mxu0 0
  %12436 = vmatpush1.bf16.msra.mxu0 %v12426
  %12437 = vmatprep.subr.bf16.mxu0 0
  %12438 = vmatpush1.bf16.msra.mxu0 %v12425
  %12439 = vmatprep.subr.bf16.mxu0 0
  %12440 = vmatpush1.bf16.msra.mxu0 %v12424
  %12441 = vmatprep.subr.bf16.mxu0 0
  %12442 = vmatpush1.bf16.msra.mxu0 %v12423
  %12443 = vmatprep.subr.bf16.mxu0 0
  %12444 = vmatpush1.bf16.msra.mxu0 %v12422
  %12445 = vmatprep.subr.bf16.mxu0 0
  %12446 = vmatpush1.bf16.msra.mxu0 %v12421
  %12447 = vmatprep.subr.bf16.mxu0 0
  %12448 = vmatpush1.bf16.msra.mxu0 %v12420
  %12449 = vmatprep.subr.bf16.mxu0 0
  %12450 = vmatpush1.bf16.msra.mxu0 %v12419
  %12451 = vmatprep.subr.bf16.mxu0 0
  %12452 = vmatpush2.bf16.msra.mxu0 0
  %12453 = vmatprep.subr.bf16.mxu0 0
  %12454 = vmatpush2.bf16.msra.mxu0 0
  %12455 = vmatprep.subr.bf16.mxu0 0
  %12456 = vmatpush2.bf16.msra.mxu0 0
  %12457 = vmatprep.subr.bf16.mxu0 0
  %12458 = vmatpush2.bf16.msra.mxu0 0
  %12459 = vmatprep.subr.bf16.mxu0 0
  %12460 = vmatpush2.bf16.msra.mxu0 0
  %12461 = vmatprep.subr.bf16.mxu0 0
  %12462 = vmatpush2.bf16.msra.mxu0 0
  %12463 = vmatprep.subr.bf16.mxu0 0
  %12464 = vmatpush2.bf16.msra.mxu0 0
  %12465 = vmatprep.subr.bf16.mxu0 0
  %12466 = vmatpush2.bf16.msra.mxu0 0
  %12467 = vmatprep.mubr.bf16.mxu0 0
  %12468 = vmatmul.mubr.bf16.gmra.mxu0 %v12375
  %v12469 = vpop.f32.mrf.mxu0
  %v12470 = vadd.f32 0.0, %v12469
  %v12471 = vpop.f32.mrf.mxu0
  %v12472 = vpop.f32.mrf.mxu0
  %v12473 = vadd.f32 0.0, %v12472
  %v12474 = vpop.f32.mrf.mxu0
  %12475 = vmatprep.mubr.bf16.mxu0 0
  %12476 = vmatmul.mubr.bf16.gmra.mxu0 %v12377
  %v12477 = vpop.f32.mrf.mxu0
  %v12478 = vadd.f32 0.0, %v12477
  %v12479 = vpop.f32.mrf.mxu0
  %v12480 = vpop.f32.mrf.mxu0
  %v12481 = vadd.f32 0.0, %v12480
  %v12482 = vpop.f32.mrf.mxu0
  %12483 = vmatprep.mubr.bf16.mxu0 0
  %12484 = vmatmul.mubr.bf16.gmra.mxu0 %v12379
  %v12485 = vpop.f32.mrf.mxu0
  %v12486 = vadd.f32 0.0, %v12485
  %v12487 = vpop.f32.mrf.mxu0
  %v12488 = vpop.f32.mrf.mxu0
  %v12489 = vadd.f32 0.0, %v12488
  %v12490 = vpop.f32.mrf.mxu0
  %12491 = vmatprep.mubr.bf16.mxu0 0
  %12492 = vmatmul.mubr.bf16.gmra.mxu0 %v12381
  %v12493 = vpop.f32.mrf.mxu0
  %v12494 = vadd.f32 0.0, %v12493
  %v12495 = vpop.f32.mrf.mxu0
  %v12496 = vpop.f32.mrf.mxu0
  %v12497 = vadd.f32 0.0, %v12496
  %v12498 = vpop.f32.mrf.mxu0
  %12499 = vmatprep.mubr.bf16.mxu0 0
  %12500 = vmatmul.mubr.bf16.gmra.mxu0 %v12380
  %v12501 = vpop.f32.mrf.mxu0
  %v12502 = vadd.f32 0.0, %v12501
  %v12503 = vpop.f32.mrf.mxu0
  %v12504 = vpop.f32.mrf.mxu0
  %v12505 = vpop.f32.mrf.mxu0
  %12506 = vdwg.mxu0
  %v12507 = vadd.f32 %v12343, %v12470
  %v12508 = vadd.f32 %v12344, %v12473
  %v12509 = vadd.f32 %v12345, %v12478
  %v12510 = vadd.f32 %v12346, %v12481
  %v12511 = vadd.f32 %v12347, %v12486
  %v12512 = vadd.f32 %v12348, %v12489
  %v12513 = vadd.f32 %v12349, %v12494
  %v12514 = vadd.f32 %v12350, %v12497
  %v12515 = vadd.f32 %v12351, %v12502
  %12516 = vst [vmem:[%s2 + $0x30] sm:$0xff] %v12507
  %12517 = vst [vmem:[%s2 + $0x68] sm:$0xff] %v12508
  %12518 = vst [vmem:[%s2 + $0xa0] sm:$0xff] %v12509
  %12519 = vst [vmem:[%s2 + $0xd8] sm:$0xff] %v12510
  %12520 = vst [vmem:[%s2 + $0x110] sm:$0xff] %v12511
  %12521 = vst [vmem:[%s2 + $0x148] sm:$0xff] %v12512
  %12522 = vst [vmem:[%s2 + $0x180] sm:$0xff] %v12513
  %12523 = vst [vmem:[%s2 + $0x1b8] sm:$0xff] %v12514
  %12524 = vst [vmem:[%s2 + $0x1f0] sm:$0xff] %v12515
  // Predicated region
  $region10: #{_conv.1} parent=0 // pred_check
    _
  $region11: #{_conv.1} parent=0 // pred_check_branch
    %12526 = sbr.rel (0) target = $region13
  $region12: #{_conv.1} parent=0 // pred_region
    _
  $region13: #{_conv.1} parent=0 // pred_fallthru
    _
  // Predicated region
  $region14: #{_conv.1} parent=0 // pred_check
    _
  $region15: #{_conv.1} parent=0 // pred_check_branch
    %12528 = sbr.rel (0) target = $region17
  $region16: #{_conv.1} parent=0 // pred_region
    _
  $region17: #{_conv.1} parent=0 // pred_fallthru
    _

</llo_original>
